<compile_context>
chip_gen: v6e
topology: v6e:2x2x1
jax: 0.10.0
libtpu: 0.0.40
codegen_flags: <defaults>
</compile_context>

<pallas_src>
import jax
import jax.numpy as jnp
from jax import lax
from jax.experimental import pallas as pl
from jax.experimental.pallas import tpu as pltpu

_EPS = 1e-5

_D = 8                   # input spatial extent (D = H = W)
_M = _D ** 3             # 512 flattened spatial positions (lane axis)
_DH = _D // 2            # 4: pooled spatial extent
_MP = 128                # pooled lane domain: 4 x 4 x 8 (W padded 4 -> 8)

# Tap offsets for a 3x3x3 conv, in the same order the weights are flattened.
_TAPS = [(kd, kh, kw) for kd in (-1, 0, 1) for kh in (-1, 0, 1)
         for kw in (-1, 0, 1)]


# ---------------------------------------------------------------------------
# Fused whole-encoder Pallas kernel (one grid step == one batch element)
# ---------------------------------------------------------------------------
def _encoder_kernel(x_ref, masks8_ref, masks4_ref, pool_ref,
                    w_stem, off_stem, w_proj, b_proj,
                    w_b1c1, off_b1c1, w_b1c2, off_b1c2,
                    w_b2c1, off_b2c1, w_b2c2, off_b2c2,
                    w_final, b_final,
                    o_ref,
                    patch8, patch4):
    f32 = jnp.float32

    def build_patch(act, cin_p, patch_ref, masks_ref, lane_len, sd, sh):
        """im2col on the lane axis: 27 rolled+masked copies of act -> patch."""
        for t, (ad, ah, aw) in enumerate(_TAPS):
            delta = ad * sd + ah * sh + aw
            if delta == 0:
                val = act                                   # centre tap
            else:
                rolled = pltpu.roll(act, (-delta) % lane_len, 1)
                val = rolled * masks_ref[t][None, :]
            patch_ref[t * cin_p:(t + 1) * cin_p, :] = val   # aligned row block

    def conv_gemm(w_ref, off_ref, patch_ref, residual=None, relu=True):
        """Single MXU GEMM: (Cout, K) @ (K, L) + offset (+residual), ReLU."""
        y = jnp.dot(w_ref[...], patch_ref[...], preferred_element_type=f32)
        y = y + off_ref[...]
        if residual is not None:
            y = y + residual
        if relu:
            y = jnp.maximum(y, 0.0)
        return y

    x = x_ref[0]                                            # (8, 512)

    # ---- stem: Conv3d(1->4, bias) + BN + ReLU -------------------------------
    build_patch(x, 8, patch8, masks8_ref, _M, _D * _D, _D)
    h0 = conv_gemm(w_stem, off_stem, patch8)                # (8, 512)

    # ---- block-1 projection shortcut (1x1 conv) -----------------------------
    sc = jnp.dot(w_proj[...], h0, preferred_element_type=f32) + b_proj[...]

    # ---- block-1 conv1 (+ AvgPool3d(1) == identity) -------------------------
    build_patch(h0, 8, patch8, masks8_ref, _M, _D * _D, _D)
    t1 = conv_gemm(w_b1c1, off_b1c1, patch8)                # (8, 512)

    # ---- block-1 conv2 + shortcut + ReLU -------------------------------------
    build_patch(t1, 8, patch8, masks8_ref, _M, _D * _D, _D)
    h1 = conv_gemm(w_b1c2, off_b1c2, patch8, residual=sc)   # (8, 512)

    # ---- block-2 conv1 -------------------------------------------------------
    build_patch(h1, 8, patch8, masks8_ref, _M, _D * _D, _D)
    t2 = conv_gemm(w_b2c1, off_b2c1, patch8)                # (16, 512)

    # ---- AvgPool3d(2): one GEMM onto the padded 4x4x8 (128-lane) domain -----
    pooled = jnp.dot(t2, pool_ref[...], preferred_element_type=f32)  # (16,128)

    # ---- block-2 conv2 on the pooled domain only -----------------------------
    build_patch(pooled, 16, patch4, masks4_ref, _MP, 4 * _D, _D)
    h2 = conv_gemm(w_b2c2, off_b2c2, patch4)                # (16, 128)

    # ---- final 1x1 conv (16 -> 1, bias) --------------------------------------
    y = jnp.sum(h2 * w_final[...], axis=0, keepdims=True) + b_final[...]
    o_ref[...] = y[None].astype(o_ref.dtype)                # (1, 1, 128)


# ---------------------------------------------------------------------------
# Wrapper-side constants (masks, pool matrix) and parameter folding
# ---------------------------------------------------------------------------
def _make_masks_8():
    """(27, 512) boundary masks for the 8^3 lane domain (p = d*64 + h*8 + w)."""
    p = jnp.arange(_M)
    d, h, w = p // (_D * _D), (p // _D) % _D, p % _D
    rows = []
    for (ad, ah, aw) in _TAPS:
        ok = ((d + ad >= 0) & (d + ad < _D) & (h + ah >= 0) & (h + ah < _D)
              & (w + aw >= 0) & (w + aw < _D))
        rows.append(ok)
    return jnp.stack(rows).astype(jnp.float32)


def _make_masks_4():
    """(27, 128) boundary masks for the padded 4x4x8 pooled lane domain."""
    q = jnp.arange(_MP)
    d, h, w = q // 32, (q // 8) % 4, q % 8
    rows = []
    for (ad, ah, aw) in _TAPS:
        ok = ((d + ad >= 0) & (d + ad < _DH) & (h + ah >= 0) & (h + ah < _DH)
              & (w + aw >= 0) & (w + aw < _DH))
        rows.append(ok)
    return jnp.stack(rows).astype(jnp.float32)


def _make_pool_matrix():
    """(512, 128) AvgPool3d(2) matrix onto the padded 4x4x8 lane domain."""
    p = jnp.arange(_M)
    d, h, w = p // (_D * _D), (p // _D) % _D, p % _D
    q = jnp.arange(_MP)
    dq, hq, wq = q // 32, (q // 8) % 4, q % 8
    sel = ((d[:, None] // 2 == dq[None, :]) &
           (h[:, None] // 2 == hq[None, :]) &
           (w[:, None] // 2 == wq[None, :]) &
           (wq[None, :] < _DH))
    return sel.astype(jnp.float32) / 8.0


def _prep_conv(w, scale, cin_p, cout_p):
    """(3,3,3,Cin,Cout) + BN scale -> (Cout_p, 27*Cin_p), zero-padded channels."""
    cin, cout = w.shape[3], w.shape[4]
    w = w * scale
    w = jnp.pad(w, ((0, 0), (0, 0), (0, 0),
                    (0, cin_p - cin), (0, cout_p - cout)))
    return w.reshape(27 * cin_p, cout_p).T


def _prep_off(off, cout_p):
    cout = off.shape[0]
    return jnp.pad(off, (0, cout_p - cout)).reshape(cout_p, 1)


def encoder_forward(p, x):
    """x: (N, 8, 8, 8, 1) float32 (NDHWC) -> (N, 4, 4, 4, 1)."""
    N = x.shape[0]
    f32 = jnp.float32

    # Stem input as (N, 8, 512): channel row 0 = data, rows 1..7 = 0.
    x_rows = jnp.pad(x.reshape(N, 1, _M), ((0, 0), (0, 7), (0, 0)))

    consts = [
        _make_masks_8(),                                   # (27, 512)
        _make_masks_4(),                                   # (27, 128)
        _make_pool_matrix(),                               # (512, 128)
        _prep_conv(p['stem_w'], p['stem_scale'], 8, 8),    # (8, 216)
        _prep_off(p['stem_off'], 8),                       # (8, 1)
        jnp.pad(p['proj_w'], ((0, 4), (0, 0))).T,          # (8, 8)  [out, in]
        p['proj_b'].reshape(8, 1),
        _prep_conv(p['b1c1_w'], p['b1c1_scale'], 8, 8),    # (8, 216)
        _prep_off(p['b1c1_off'], 8),
        _prep_conv(p['b1c2_w'], p['b1c2_scale'], 8, 8),    # (8, 216)
        _prep_off(p['b1c2_off'], 8),
        _prep_conv(p['b2c1_w'], p['b2c1_scale'], 8, 16),   # (16, 216)
        _prep_off(p['b2c1_off'], 16),
        _prep_conv(p['b2c2_w'], p['b2c2_scale'], 16, 16),  # (16, 432)
        _prep_off(p['b2c2_off'], 16),
        p['final_w'].reshape(16, 1),
        p['final_b'].reshape(1, 1),
    ]

    def bcast(arr):
        nd = arr.ndim
        return pl.BlockSpec(arr.shape, lambda n: (0,) * nd)

    in_specs = ([pl.BlockSpec((1, 8, _M), lambda n: (n, 0, 0))]
                + [bcast(c) for c in consts])

    out = pl.pallas_call(
        _encoder_kernel,
        out_shape=jax.ShapeDtypeStruct((N, 1, _MP), x.dtype),
        grid=(N,),
        in_specs=in_specs,
        out_specs=pl.BlockSpec((1, 1, _MP), lambda n: (n, 0, 0)),
        scratch_shapes=[pltpu.VMEM((27 * 8, _M), f32),     # im2col patch, 8^3
                        pltpu.VMEM((27 * 16, _MP), f32)],  # im2col patch, pooled
        compiler_params=pltpu.CompilerParams(
            dimension_semantics=("parallel",)),
    )(x_rows, *consts)

    # Valid pooled outputs: lanes q = dq*32 + hq*8 + wq with wq < 4.
    out = out.reshape(N, _DH, _DH, _D)[..., :_DH]
    return out[..., None]                                   # (N, 4, 4, 4, 1)


# ---------------------------------------------------------------------------
# Parameters:  ResNetEncoder(in_ch=4, block_setting=[[8,1,1],[16,1,2]])
# ---------------------------------------------------------------------------
def _fold_bn(gamma, beta, mean, var, conv_bias=None):
    scale = gamma / jnp.sqrt(var + _EPS)
    b = jnp.zeros_like(mean) if conv_bias is None else conv_bias
    offset = scale * (b - mean) + beta
    return scale, offset


def init_params(key):
    keys = iter(jax.random.split(key, 64))

    def nrm(shape, s=0.1):
        return s * jax.random.normal(next(keys), shape, jnp.float32)

    def bn(c):
        gamma = 1.0 + nrm((c,))
        beta = nrm((c,))
        mean = nrm((c,))
        var = 0.5 + jnp.abs(nrm((c,), 1.0))
        return gamma, beta, mean, var

    p = {}
    # stem: Conv3d(1,4,k=3,bias=True) + BN(4) + ReLU
    p['stem_w'] = nrm((3, 3, 3, 1, 4))
    stem_b = nrm((4,))
    p['stem_scale'], p['stem_off'] = _fold_bn(*bn(4), conv_bias=stem_b)
    # block 1: BuildingBlock(4 -> 8, stride=1)  (residual, 1x1 projection)
    p['b1c1_w'] = nrm((3, 3, 3, 4, 8))
    p['b1c1_scale'], p['b1c1_off'] = _fold_bn(*bn(8))
    p['b1c2_w'] = nrm((3, 3, 3, 8, 8))
    p['b1c2_scale'], p['b1c2_off'] = _fold_bn(*bn(8))
    p['proj_w'] = nrm((4, 8))
    p['proj_b'] = nrm((8,))
    # block 2: BuildingBlock(8 -> 16, stride=2)  (no residual, AvgPool3d(2))
    p['b2c1_w'] = nrm((3, 3, 3, 8, 16))
    p['b2c1_scale'], p['b2c1_off'] = _fold_bn(*bn(16))
    p['b2c2_w'] = nrm((3, 3, 3, 16, 16))
    p['b2c2_scale'], p['b2c2_off'] = _fold_bn(*bn(16))
    # final: Conv3d(16, 1, k=1, bias=True)
    p['final_w'] = nrm((16, 1))
    p['final_b'] = nrm((1,))
    return p


# ---------------------------------------------------------------------------
# Pure-JAX reference
# ---------------------------------------------------------------------------
def _ref_conv3(x, w, scale, offset, relu, residual=None):
    y = lax.conv_general_dilated(x, w, (1, 1, 1), ((1, 1), (1, 1), (1, 1)),
                                 dimension_numbers=('NDHWC', 'DHWIO', 'NDHWC'))
    y = y * scale + offset
    if residual is not None:
        y = y + residual
    return jnp.maximum(y, 0.0) if relu else y


def _ref_pool2(x):
    N, D, H, W, C = x.shape
    return x.reshape(N, D // 2, 2, H // 2, 2, W // 2, 2, C).mean(axis=(2, 4, 6))


def reference_forward(p, x):
    h = _ref_conv3(x, p['stem_w'], p['stem_scale'], p['stem_off'], True)
    sc = jnp.einsum('ndhwc,co->ndhwo', h, p['proj_w']) + p['proj_b']
    t = _ref_conv3(h, p['b1c1_w'], p['b1c1_scale'], p['b1c1_off'], True)
    h = _ref_conv3(t, p['b1c2_w'], p['b1c2_scale'], p['b1c2_off'], True,
                   residual=sc)
    t = _ref_conv3(h, p['b2c1_w'], p['b2c1_scale'], p['b2c1_off'], True)
    t = _ref_pool2(t)
    h = _ref_conv3(t, p['b2c2_w'], p['b2c2_scale'], p['b2c2_off'], True)
    return jnp.einsum('ndhwc,co->ndhwo', h, p['final_w']) + p['final_b']


# ---------------------------------------------------------------------------
if __name__ == "__main__":
    key = jax.random.PRNGKey(0)
    kx, kp = jax.random.split(key)

    # PyTorch-style input: NCDHW = (2, 1, 8, 8, 8)
    x_ncdhw = jax.random.normal(kx, (2, 1, 8, 8, 8), jnp.float32)
    x = jnp.transpose(x_ncdhw, (0, 2, 3, 4, 1))          # -> NDHWC

    params = init_params(kp)

    out = jax.jit(encoder_forward)(params, x)
    out = jax.block_until_ready(out)

    # back to PyTorch layout NCDHW: (2, 1, 4, 4, 4)
    out_ncdhw = jnp.transpose(out, (0, 4, 1, 2, 3))
    assert out_ncdhw.shape == (2, 1, 4, 4, 4), out_ncdhw.shape

    ref = reference_forward(params, x)
    max_err = float(jnp.max(jnp.abs(out - ref)))
    assert max_err < 2e-3, f"Pallas vs reference mismatch: {max_err}"

    print("KERNEL_OK")
</pallas_src>

<mosaic_0001>
module attributes {stable_mosaic.version = 11 : i64} {
  func.func @_encoder_kernel(%arg0: i32, %arg1: memref<1x8x512xf32, #tpu.memory_space<vmem>>, %arg2: memref<27x512xf32, #tpu.memory_space<vmem>>, %arg3: memref<27x128xf32, #tpu.memory_space<vmem>>, %arg4: memref<512x128xf32, #tpu.memory_space<vmem>>, %arg5: memref<8x216xf32, #tpu.memory_space<vmem>>, %arg6: memref<8x1xf32, #tpu.memory_space<vmem>>, %arg7: memref<8x8xf32, #tpu.memory_space<vmem>>, %arg8: memref<8x1xf32, #tpu.memory_space<vmem>>, %arg9: memref<8x216xf32, #tpu.memory_space<vmem>>, %arg10: memref<8x1xf32, #tpu.memory_space<vmem>>, %arg11: memref<8x216xf32, #tpu.memory_space<vmem>>, %arg12: memref<8x1xf32, #tpu.memory_space<vmem>>, %arg13: memref<16x216xf32, #tpu.memory_space<vmem>>, %arg14: memref<16x1xf32, #tpu.memory_space<vmem>>, %arg15: memref<16x432xf32, #tpu.memory_space<vmem>>, %arg16: memref<16x1xf32, #tpu.memory_space<vmem>>, %arg17: memref<16x1xf32, #tpu.memory_space<vmem>>, %arg18: memref<1x1xf32, #tpu.memory_space<vmem>>, %arg19: memref<1x1x128xf32, #tpu.memory_space<vmem>>, %arg20: memref<216x512xf32, #tpu.memory_space<vmem>>, %arg21: memref<432x128xf32, #tpu.memory_space<vmem>>) attributes {dimension_semantics = [#tpu.dimension_semantics<parallel>], iteration_bounds = array<i64: 2>, scalar_prefetch = 0 : i64, scratch_operands = 2 : i64, tpu.core_type = #tpu.core_type<tc>, window_params = [{transform_indices = @transform_0, window_bounds = array<i64: 1, 8, 512>}, {pipeline_mode = #tpu.pipeline_mode<synchronous>, transform_indices = @transform_1, window_bounds = array<i64: 27, 512>}, {pipeline_mode = #tpu.pipeline_mode<synchronous>, transform_indices = @transform_2, window_bounds = array<i64: 27, 128>}, {pipeline_mode = #tpu.pipeline_mode<synchronous>, transform_indices = @transform_3, window_bounds = array<i64: 512, 128>}, {pipeline_mode = #tpu.pipeline_mode<synchronous>, transform_indices = @transform_4, window_bounds = array<i64: 8, 216>}, {pipeline_mode = #tpu.pipeline_mode<synchronous>, transform_indices = @transform_5, window_bounds = array<i64: 8, 1>}, {pipeline_mode = #tpu.pipeline_mode<synchronous>, transform_indices = @transform_6, window_bounds = array<i64: 8, 8>}, {pipeline_mode = #tpu.pipeline_mode<synchronous>, transform_indices = @transform_7, window_bounds = array<i64: 8, 1>}, {pipeline_mode = #tpu.pipeline_mode<synchronous>, transform_indices = @transform_8, window_bounds = array<i64: 8, 216>}, {pipeline_mode = #tpu.pipeline_mode<synchronous>, transform_indices = @transform_9, window_bounds = array<i64: 8, 1>}, {pipeline_mode = #tpu.pipeline_mode<synchronous>, transform_indices = @transform_10, window_bounds = array<i64: 8, 216>}, {pipeline_mode = #tpu.pipeline_mode<synchronous>, transform_indices = @transform_11, window_bounds = array<i64: 8, 1>}, {pipeline_mode = #tpu.pipeline_mode<synchronous>, transform_indices = @transform_12, window_bounds = array<i64: 16, 216>}, {pipeline_mode = #tpu.pipeline_mode<synchronous>, transform_indices = @transform_13, window_bounds = array<i64: 16, 1>}, {pipeline_mode = #tpu.pipeline_mode<synchronous>, transform_indices = @transform_14, window_bounds = array<i64: 16, 432>}, {pipeline_mode = #tpu.pipeline_mode<synchronous>, transform_indices = @transform_15, window_bounds = array<i64: 16, 1>}, {pipeline_mode = #tpu.pipeline_mode<synchronous>, transform_indices = @transform_16, window_bounds = array<i64: 16, 1>}, {pipeline_mode = #tpu.pipeline_mode<synchronous>, transform_indices = @transform_17, window_bounds = array<i64: 1, 1>}, {transform_indices = @transform_18, window_bounds = array<i64: 1, 1, 128>}]} {
    %c0 = arith.constant 0 : index
    %c0_0 = arith.constant 0 : index
    %c0_1 = arith.constant 0 : index
    %0 = vector.load %arg1[%c0, %c0_0, %c0_1] : memref<1x8x512xf32, #tpu.memory_space<vmem>>, vector<1x8x512xf32>
    %1 = vector.shape_cast %0 : vector<1x8x512xf32> to vector<8x512xf32>
    %c73_i32 = arith.constant 73 : i32
    %2 = tpu.dynamic_rotate %1 by %c73_i32 dim 1 : vector<8x512xf32>, i32 -> vector<8x512xf32>
    %c0_2 = arith.constant 0 : index
    %c0_3 = arith.constant 0 : index
    %3 = vector.load %arg2[%c0_2, %c0_3] : memref<27x512xf32, #tpu.memory_space<vmem>>, vector<1x512xf32>
    %4 = vector.shape_cast %3 : vector<1x512xf32> to vector<512xf32>
    %5 = vector.shape_cast %4 : vector<512xf32> to vector<1x512xf32>
    %6 = vector.broadcast %5 : vector<1x512xf32> to vector<8x512xf32>
    %7 = arith.mulf %2, %6 : vector<8x512xf32>
    %c0_4 = arith.constant 0 : index
    %c0_5 = arith.constant 0 : index
    %8 = vector.load %arg20[%c0_4, %c0_5] : memref<216x512xf32, #tpu.memory_space<vmem>>, vector<8x512xf32>
    tpu.vector_store %arg20[%c0_4, %c0_5], %7 {strides = array<i32>} : memref<216x512xf32, #tpu.memory_space<vmem>>, vector<8x512xf32>,
    %c72_i32 = arith.constant 72 : i32
    %9 = tpu.dynamic_rotate %1 by %c72_i32 dim 1 : vector<8x512xf32>, i32 -> vector<8x512xf32>
    %c1 = arith.constant 1 : index
    %c0_6 = arith.constant 0 : index
    %10 = vector.load %arg2[%c1, %c0_6] : memref<27x512xf32, #tpu.memory_space<vmem>>, vector<1x512xf32>
    %11 = vector.shape_cast %10 : vector<1x512xf32> to vector<512xf32>
    %12 = vector.shape_cast %11 : vector<512xf32> to vector<1x512xf32>
    %13 = vector.broadcast %12 : vector<1x512xf32> to vector<8x512xf32>
    %14 = arith.mulf %9, %13 : vector<8x512xf32>
    %c8 = arith.constant 8 : index
    %c0_7 = arith.constant 0 : index
    %15 = vector.load %arg20[%c8, %c0_7] : memref<216x512xf32, #tpu.memory_space<vmem>>, vector<8x512xf32>
    tpu.vector_store %arg20[%c8, %c0_7], %14 {strides = array<i32>} : memref<216x512xf32, #tpu.memory_space<vmem>>, vector<8x512xf32>,
    %c71_i32 = arith.constant 71 : i32
    %16 = tpu.dynamic_rotate %1 by %c71_i32 dim 1 : vector<8x512xf32>, i32 -> vector<8x512xf32>
    %c2 = arith.constant 2 : index
    %c0_8 = arith.constant 0 : index
    %17 = vector.load %arg2[%c2, %c0_8] : memref<27x512xf32, #tpu.memory_space<vmem>>, vector<1x512xf32>
    %18 = vector.shape_cast %17 : vector<1x512xf32> to vector<512xf32>
    %19 = vector.shape_cast %18 : vector<512xf32> to vector<1x512xf32>
    %20 = vector.broadcast %19 : vector<1x512xf32> to vector<8x512xf32>
    %21 = arith.mulf %16, %20 : vector<8x512xf32>
    %c16 = arith.constant 16 : index
    %c0_9 = arith.constant 0 : index
    %22 = vector.load %arg20[%c16, %c0_9] : memref<216x512xf32, #tpu.memory_space<vmem>>, vector<8x512xf32>
    tpu.vector_store %arg20[%c16, %c0_9], %21 {strides = array<i32>} : memref<216x512xf32, #tpu.memory_space<vmem>>, vector<8x512xf32>,
    %c65_i32 = arith.constant 65 : i32
    %23 = tpu.dynamic_rotate %1 by %c65_i32 dim 1 : vector<8x512xf32>, i32 -> vector<8x512xf32>
    %c3 = arith.constant 3 : index
    %c0_10 = arith.constant 0 : index
    %24 = vector.load %arg2[%c3, %c0_10] : memref<27x512xf32, #tpu.memory_space<vmem>>, vector<1x512xf32>
    %25 = vector.shape_cast %24 : vector<1x512xf32> to vector<512xf32>
    %26 = vector.shape_cast %25 : vector<512xf32> to vector<1x512xf32>
    %27 = vector.broadcast %26 : vector<1x512xf32> to vector<8x512xf32>
    %28 = arith.mulf %23, %27 : vector<8x512xf32>
    %c24 = arith.constant 24 : index
    %c0_11 = arith.constant 0 : index
    %29 = vector.load %arg20[%c24, %c0_11] : memref<216x512xf32, #tpu.memory_space<vmem>>, vector<8x512xf32>
    tpu.vector_store %arg20[%c24, %c0_11], %28 {strides = array<i32>} : memref<216x512xf32, #tpu.memory_space<vmem>>, vector<8x512xf32>,
    %c64_i32 = arith.constant 64 : i32
    %30 = tpu.dynamic_rotate %1 by %c64_i32 dim 1 : vector<8x512xf32>, i32 -> vector<8x512xf32>
    %c4 = arith.constant 4 : index
    %c0_12 = arith.constant 0 : index
    %31 = vector.load %arg2[%c4, %c0_12] : memref<27x512xf32, #tpu.memory_space<vmem>>, vector<1x512xf32>
    %32 = vector.shape_cast %31 : vector<1x512xf32> to vector<512xf32>
    %33 = vector.shape_cast %32 : vector<512xf32> to vector<1x512xf32>
    %34 = vector.broadcast %33 : vector<1x512xf32> to vector<8x512xf32>
    %35 = arith.mulf %30, %34 : vector<8x512xf32>
    %c32 = arith.constant 32 : index
    %c0_13 = arith.constant 0 : index
    %36 = vector.load %arg20[%c32, %c0_13] : memref<216x512xf32, #tpu.memory_space<vmem>>, vector<8x512xf32>
    tpu.vector_store %arg20[%c32, %c0_13], %35 {strides = array<i32>} : memref<216x512xf32, #tpu.memory_space<vmem>>, vector<8x512xf32>,
    %c63_i32 = arith.constant 63 : i32
    %37 = tpu.dynamic_rotate %1 by %c63_i32 dim 1 : vector<8x512xf32>, i32 -> vector<8x512xf32>
    %c5 = arith.constant 5 : index
    %c0_14 = arith.constant 0 : index
    %38 = vector.load %arg2[%c5, %c0_14] : memref<27x512xf32, #tpu.memory_space<vmem>>, vector<1x512xf32>
    %39 = vector.shape_cast %38 : vector<1x512xf32> to vector<512xf32>
    %40 = vector.shape_cast %39 : vector<512xf32> to vector<1x512xf32>
    %41 = vector.broadcast %40 : vector<1x512xf32> to vector<8x512xf32>
    %42 = arith.mulf %37, %41 : vector<8x512xf32>
    %c40 = arith.constant 40 : index
    %c0_15 = arith.constant 0 : index
    %43 = vector.load %arg20[%c40, %c0_15] : memref<216x512xf32, #tpu.memory_space<vmem>>, vector<8x512xf32>
    tpu.vector_store %arg20[%c40, %c0_15], %42 {strides = array<i32>} : memref<216x512xf32, #tpu.memory_space<vmem>>, vector<8x512xf32>,
    %c57_i32 = arith.constant 57 : i32
    %44 = tpu.dynamic_rotate %1 by %c57_i32 dim 1 : vector<8x512xf32>, i32 -> vector<8x512xf32>
    %c6 = arith.constant 6 : index
    %c0_16 = arith.constant 0 : index
    %45 = vector.load %arg2[%c6, %c0_16] : memref<27x512xf32, #tpu.memory_space<vmem>>, vector<1x512xf32>
    %46 = vector.shape_cast %45 : vector<1x512xf32> to vector<512xf32>
    %47 = vector.shape_cast %46 : vector<512xf32> to vector<1x512xf32>
    %48 = vector.broadcast %47 : vector<1x512xf32> to vector<8x512xf32>
    %49 = arith.mulf %44, %48 : vector<8x512xf32>
    %c48 = arith.constant 48 : index
    %c0_17 = arith.constant 0 : index
    %50 = vector.load %arg20[%c48, %c0_17] : memref<216x512xf32, #tpu.memory_space<vmem>>, vector<8x512xf32>
    tpu.vector_store %arg20[%c48, %c0_17], %49 {strides = array<i32>} : memref<216x512xf32, #tpu.memory_space<vmem>>, vector<8x512xf32>,
    %c56_i32 = arith.constant 56 : i32
    %51 = tpu.dynamic_rotate %1 by %c56_i32 dim 1 : vector<8x512xf32>, i32 -> vector<8x512xf32>
    %c7 = arith.constant 7 : index
    %c0_18 = arith.constant 0 : index
    %52 = vector.load %arg2[%c7, %c0_18] : memref<27x512xf32, #tpu.memory_space<vmem>>, vector<1x512xf32>
    %53 = vector.shape_cast %52 : vector<1x512xf32> to vector<512xf32>
    %54 = vector.shape_cast %53 : vector<512xf32> to vector<1x512xf32>
    %55 = vector.broadcast %54 : vector<1x512xf32> to vector<8x512xf32>
    %56 = arith.mulf %51, %55 : vector<8x512xf32>
    %c56 = arith.constant 56 : index
    %c0_19 = arith.constant 0 : index
    %57 = vector.load %arg20[%c56, %c0_19] : memref<216x512xf32, #tpu.memory_space<vmem>>, vector<8x512xf32>
    tpu.vector_store %arg20[%c56, %c0_19], %56 {strides = array<i32>} : memref<216x512xf32, #tpu.memory_space<vmem>>, vector<8x512xf32>,
    %c55_i32 = arith.constant 55 : i32
    %58 = tpu.dynamic_rotate %1 by %c55_i32 dim 1 : vector<8x512xf32>, i32 -> vector<8x512xf32>
    %c8_20 = arith.constant 8 : index
    %c0_21 = arith.constant 0 : index
    %59 = vector.load %arg2[%c8_20, %c0_21] : memref<27x512xf32, #tpu.memory_space<vmem>>, vector<1x512xf32>
    %60 = vector.shape_cast %59 : vector<1x512xf32> to vector<512xf32>
    %61 = vector.shape_cast %60 : vector<512xf32> to vector<1x512xf32>
    %62 = vector.broadcast %61 : vector<1x512xf32> to vector<8x512xf32>
    %63 = arith.mulf %58, %62 : vector<8x512xf32>
    %c64 = arith.constant 64 : index
    %c0_22 = arith.constant 0 : index
    %64 = vector.load %arg20[%c64, %c0_22] : memref<216x512xf32, #tpu.memory_space<vmem>>, vector<8x512xf32>
    tpu.vector_store %arg20[%c64, %c0_22], %63 {strides = array<i32>} : memref<216x512xf32, #tpu.memory_space<vmem>>, vector<8x512xf32>,
    %c9_i32 = arith.constant 9 : i32
    %65 = tpu.dynamic_rotate %1 by %c9_i32 dim 1 : vector<8x512xf32>, i32 -> vector<8x512xf32>
    %c9 = arith.constant 9 : index
    %c0_23 = arith.constant 0 : index
    %66 = vector.load %arg2[%c9, %c0_23] : memref<27x512xf32, #tpu.memory_space<vmem>>, vector<1x512xf32>
    %67 = vector.shape_cast %66 : vector<1x512xf32> to vector<512xf32>
    %68 = vector.shape_cast %67 : vector<512xf32> to vector<1x512xf32>
    %69 = vector.broadcast %68 : vector<1x512xf32> to vector<8x512xf32>
    %70 = arith.mulf %65, %69 : vector<8x512xf32>
    %c72 = arith.constant 72 : index
    %c0_24 = arith.constant 0 : index
    %71 = vector.load %arg20[%c72, %c0_24] : memref<216x512xf32, #tpu.memory_space<vmem>>, vector<8x512xf32>
    tpu.vector_store %arg20[%c72, %c0_24], %70 {strides = array<i32>} : memref<216x512xf32, #tpu.memory_space<vmem>>, vector<8x512xf32>,
    %c8_i32 = arith.constant 8 : i32
    %72 = tpu.dynamic_rotate %1 by %c8_i32 dim 1 : vector<8x512xf32>, i32 -> vector<8x512xf32>
    %c10 = arith.constant 10 : index
    %c0_25 = arith.constant 0 : index
    %73 = vector.load %arg2[%c10, %c0_25] : memref<27x512xf32, #tpu.memory_space<vmem>>, vector<1x512xf32>
    %74 = vector.shape_cast %73 : vector<1x512xf32> to vector<512xf32>
    %75 = vector.shape_cast %74 : vector<512xf32> to vector<1x512xf32>
    %76 = vector.broadcast %75 : vector<1x512xf32> to vector<8x512xf32>
    %77 = arith.mulf %72, %76 : vector<8x512xf32>
    %c80 = arith.constant 80 : index
    %c0_26 = arith.constant 0 : index
    %78 = vector.load %arg20[%c80, %c0_26] : memref<216x512xf32, #tpu.memory_space<vmem>>, vector<8x512xf32>
    tpu.vector_store %arg20[%c80, %c0_26], %77 {strides = array<i32>} : memref<216x512xf32, #tpu.memory_space<vmem>>, vector<8x512xf32>,
    %c7_i32 = arith.constant 7 : i32
    %79 = tpu.dynamic_rotate %1 by %c7_i32 dim 1 : vector<8x512xf32>, i32 -> vector<8x512xf32>
    %c11 = arith.constant 11 : index
    %c0_27 = arith.constant 0 : index
    %80 = vector.load %arg2[%c11, %c0_27] : memref<27x512xf32, #tpu.memory_space<vmem>>, vector<1x512xf32>
    %81 = vector.shape_cast %80 : vector<1x512xf32> to vector<512xf32>
    %82 = vector.shape_cast %81 : vector<512xf32> to vector<1x512xf32>
    %83 = vector.broadcast %82 : vector<1x512xf32> to vector<8x512xf32>
    %84 = arith.mulf %79, %83 : vector<8x512xf32>
    %c88 = arith.constant 88 : index
    %c0_28 = arith.constant 0 : index
    %85 = vector.load %arg20[%c88, %c0_28] : memref<216x512xf32, #tpu.memory_space<vmem>>, vector<8x512xf32>
    tpu.vector_store %arg20[%c88, %c0_28], %84 {strides = array<i32>} : memref<216x512xf32, #tpu.memory_space<vmem>>, vector<8x512xf32>,
    %c1_i32 = arith.constant 1 : i32
    %86 = tpu.dynamic_rotate %1 by %c1_i32 dim 1 : vector<8x512xf32>, i32 -> vector<8x512xf32>
    %c12 = arith.constant 12 : index
    %c0_29 = arith.constant 0 : index
    %87 = vector.load %arg2[%c12, %c0_29] : memref<27x512xf32, #tpu.memory_space<vmem>>, vector<1x512xf32>
    %88 = vector.shape_cast %87 : vector<1x512xf32> to vector<512xf32>
    %89 = vector.shape_cast %88 : vector<512xf32> to vector<1x512xf32>
    %90 = vector.broadcast %89 : vector<1x512xf32> to vector<8x512xf32>
    %91 = arith.mulf %86, %90 : vector<8x512xf32>
    %c96 = arith.constant 96 : index
    %c0_30 = arith.constant 0 : index
    %92 = vector.load %arg20[%c96, %c0_30] : memref<216x512xf32, #tpu.memory_space<vmem>>, vector<8x512xf32>
    tpu.vector_store %arg20[%c96, %c0_30], %91 {strides = array<i32>} : memref<216x512xf32, #tpu.memory_space<vmem>>, vector<8x512xf32>,
    %c104 = arith.constant 104 : index
    %c0_31 = arith.constant 0 : index
    %93 = vector.load %arg20[%c104, %c0_31] : memref<216x512xf32, #tpu.memory_space<vmem>>, vector<8x512xf32>
    tpu.vector_store %arg20[%c104, %c0_31], %1 {strides = array<i32>} : memref<216x512xf32, #tpu.memory_space<vmem>>, vector<8x512xf32>,
    %c511_i32 = arith.constant 511 : i32
    %94 = tpu.dynamic_rotate %1 by %c511_i32 dim 1 : vector<8x512xf32>, i32 -> vector<8x512xf32>
    %c14 = arith.constant 14 : index
    %c0_32 = arith.constant 0 : index
    %95 = vector.load %arg2[%c14, %c0_32] : memref<27x512xf32, #tpu.memory_space<vmem>>, vector<1x512xf32>
    %96 = vector.shape_cast %95 : vector<1x512xf32> to vector<512xf32>
    %97 = vector.shape_cast %96 : vector<512xf32> to vector<1x512xf32>
    %98 = vector.broadcast %97 : vector<1x512xf32> to vector<8x512xf32>
    %99 = arith.mulf %94, %98 : vector<8x512xf32>
    %c112 = arith.constant 112 : index
    %c0_33 = arith.constant 0 : index
    %100 = vector.load %arg20[%c112, %c0_33] : memref<216x512xf32, #tpu.memory_space<vmem>>, vector<8x512xf32>
    tpu.vector_store %arg20[%c112, %c0_33], %99 {strides = array<i32>} : memref<216x512xf32, #tpu.memory_space<vmem>>, vector<8x512xf32>,
    %c505_i32 = arith.constant 505 : i32
    %101 = tpu.dynamic_rotate %1 by %c505_i32 dim 1 : vector<8x512xf32>, i32 -> vector<8x512xf32>
    %c15 = arith.constant 15 : index
    %c0_34 = arith.constant 0 : index
    %102 = vector.load %arg2[%c15, %c0_34] : memref<27x512xf32, #tpu.memory_space<vmem>>, vector<1x512xf32>
    %103 = vector.shape_cast %102 : vector<1x512xf32> to vector<512xf32>
    %104 = vector.shape_cast %103 : vector<512xf32> to vector<1x512xf32>
    %105 = vector.broadcast %104 : vector<1x512xf32> to vector<8x512xf32>
    %106 = arith.mulf %101, %105 : vector<8x512xf32>
    %c120 = arith.constant 120 : index
    %c0_35 = arith.constant 0 : index
    %107 = vector.load %arg20[%c120, %c0_35] : memref<216x512xf32, #tpu.memory_space<vmem>>, vector<8x512xf32>
    tpu.vector_store %arg20[%c120, %c0_35], %106 {strides = array<i32>} : memref<216x512xf32, #tpu.memory_space<vmem>>, vector<8x512xf32>,
    %c504_i32 = arith.constant 504 : i32
    %108 = tpu.dynamic_rotate %1 by %c504_i32 dim 1 : vector<8x512xf32>, i32 -> vector<8x512xf32>
    %c16_36 = arith.constant 16 : index
    %c0_37 = arith.constant 0 : index
    %109 = vector.load %arg2[%c16_36, %c0_37] : memref<27x512xf32, #tpu.memory_space<vmem>>, vector<1x512xf32>
    %110 = vector.shape_cast %109 : vector<1x512xf32> to vector<512xf32>
    %111 = vector.shape_cast %110 : vector<512xf32> to vector<1x512xf32>
    %112 = vector.broadcast %111 : vector<1x512xf32> to vector<8x512xf32>
    %113 = arith.mulf %108, %112 : vector<8x512xf32>
    %c128 = arith.constant 128 : index
    %c0_38 = arith.constant 0 : index
    %114 = vector.load %arg20[%c128, %c0_38] : memref<216x512xf32, #tpu.memory_space<vmem>>, vector<8x512xf32>
    tpu.vector_store %arg20[%c128, %c0_38], %113 {strides = array<i32>} : memref<216x512xf32, #tpu.memory_space<vmem>>, vector<8x512xf32>,
    %c503_i32 = arith.constant 503 : i32
    %115 = tpu.dynamic_rotate %1 by %c503_i32 dim 1 : vector<8x512xf32>, i32 -> vector<8x512xf32>
    %c17 = arith.constant 17 : index
    %c0_39 = arith.constant 0 : index
    %116 = vector.load %arg2[%c17, %c0_39] : memref<27x512xf32, #tpu.memory_space<vmem>>, vector<1x512xf32>
    %117 = vector.shape_cast %116 : vector<1x512xf32> to vector<512xf32>
    %118 = vector.shape_cast %117 : vector<512xf32> to vector<1x512xf32>
    %119 = vector.broadcast %118 : vector<1x512xf32> to vector<8x512xf32>
    %120 = arith.mulf %115, %119 : vector<8x512xf32>
    %c136 = arith.constant 136 : index
    %c0_40 = arith.constant 0 : index
    %121 = vector.load %arg20[%c136, %c0_40] : memref<216x512xf32, #tpu.memory_space<vmem>>, vector<8x512xf32>
    tpu.vector_store %arg20[%c136, %c0_40], %120 {strides = array<i32>} : memref<216x512xf32, #tpu.memory_space<vmem>>, vector<8x512xf32>,
    %c457_i32 = arith.constant 457 : i32
    %122 = tpu.dynamic_rotate %1 by %c457_i32 dim 1 : vector<8x512xf32>, i32 -> vector<8x512xf32>
    %c18 = arith.constant 18 : index
    %c0_41 = arith.constant 0 : index
    %123 = vector.load %arg2[%c18, %c0_41] : memref<27x512xf32, #tpu.memory_space<vmem>>, vector<1x512xf32>
    %124 = vector.shape_cast %123 : vector<1x512xf32> to vector<512xf32>
    %125 = vector.shape_cast %124 : vector<512xf32> to vector<1x512xf32>
    %126 = vector.broadcast %125 : vector<1x512xf32> to vector<8x512xf32>
    %127 = arith.mulf %122, %126 : vector<8x512xf32>
    %c144 = arith.constant 144 : index
    %c0_42 = arith.constant 0 : index
    %128 = vector.load %arg20[%c144, %c0_42] : memref<216x512xf32, #tpu.memory_space<vmem>>, vector<8x512xf32>
    tpu.vector_store %arg20[%c144, %c0_42], %127 {strides = array<i32>} : memref<216x512xf32, #tpu.memory_space<vmem>>, vector<8x512xf32>,
    %c456_i32 = arith.constant 456 : i32
    %129 = tpu.dynamic_rotate %1 by %c456_i32 dim 1 : vector<8x512xf32>, i32 -> vector<8x512xf32>
    %c19 = arith.constant 19 : index
    %c0_43 = arith.constant 0 : index
    %130 = vector.load %arg2[%c19, %c0_43] : memref<27x512xf32, #tpu.memory_space<vmem>>, vector<1x512xf32>
    %131 = vector.shape_cast %130 : vector<1x512xf32> to vector<512xf32>
    %132 = vector.shape_cast %131 : vector<512xf32> to vector<1x512xf32>
    %133 = vector.broadcast %132 : vector<1x512xf32> to vector<8x512xf32>
    %134 = arith.mulf %129, %133 : vector<8x512xf32>
    %c152 = arith.constant 152 : index
    %c0_44 = arith.constant 0 : index
    %135 = vector.load %arg20[%c152, %c0_44] : memref<216x512xf32, #tpu.memory_space<vmem>>, vector<8x512xf32>
    tpu.vector_store %arg20[%c152, %c0_44], %134 {strides = array<i32>} : memref<216x512xf32, #tpu.memory_space<vmem>>, vector<8x512xf32>,
    %c455_i32 = arith.constant 455 : i32
    %136 = tpu.dynamic_rotate %1 by %c455_i32 dim 1 : vector<8x512xf32>, i32 -> vector<8x512xf32>
    %c20 = arith.constant 20 : index
    %c0_45 = arith.constant 0 : index
    %137 = vector.load %arg2[%c20, %c0_45] : memref<27x512xf32, #tpu.memory_space<vmem>>, vector<1x512xf32>
    %138 = vector.shape_cast %137 : vector<1x512xf32> to vector<512xf32>
    %139 = vector.shape_cast %138 : vector<512xf32> to vector<1x512xf32>
    %140 = vector.broadcast %139 : vector<1x512xf32> to vector<8x512xf32>
    %141 = arith.mulf %136, %140 : vector<8x512xf32>
    %c160 = arith.constant 160 : index
    %c0_46 = arith.constant 0 : index
    %142 = vector.load %arg20[%c160, %c0_46] : memref<216x512xf32, #tpu.memory_space<vmem>>, vector<8x512xf32>
    tpu.vector_store %arg20[%c160, %c0_46], %141 {strides = array<i32>} : memref<216x512xf32, #tpu.memory_space<vmem>>, vector<8x512xf32>,
    %c449_i32 = arith.constant 449 : i32
    %143 = tpu.dynamic_rotate %1 by %c449_i32 dim 1 : vector<8x512xf32>, i32 -> vector<8x512xf32>
    %c21 = arith.constant 21 : index
    %c0_47 = arith.constant 0 : index
    %144 = vector.load %arg2[%c21, %c0_47] : memref<27x512xf32, #tpu.memory_space<vmem>>, vector<1x512xf32>
    %145 = vector.shape_cast %144 : vector<1x512xf32> to vector<512xf32>
    %146 = vector.shape_cast %145 : vector<512xf32> to vector<1x512xf32>
    %147 = vector.broadcast %146 : vector<1x512xf32> to vector<8x512xf32>
    %148 = arith.mulf %143, %147 : vector<8x512xf32>
    %c168 = arith.constant 168 : index
    %c0_48 = arith.constant 0 : index
    %149 = vector.load %arg20[%c168, %c0_48] : memref<216x512xf32, #tpu.memory_space<vmem>>, vector<8x512xf32>
    tpu.vector_store %arg20[%c168, %c0_48], %148 {strides = array<i32>} : memref<216x512xf32, #tpu.memory_space<vmem>>, vector<8x512xf32>,
    %c448_i32 = arith.constant 448 : i32
    %150 = tpu.dynamic_rotate %1 by %c448_i32 dim 1 : vector<8x512xf32>, i32 -> vector<8x512xf32>
    %c22 = arith.constant 22 : index
    %c0_49 = arith.constant 0 : index
    %151 = vector.load %arg2[%c22, %c0_49] : memref<27x512xf32, #tpu.memory_space<vmem>>, vector<1x512xf32>
    %152 = vector.shape_cast %151 : vector<1x512xf32> to vector<512xf32>
    %153 = vector.shape_cast %152 : vector<512xf32> to vector<1x512xf32>
    %154 = vector.broadcast %153 : vector<1x512xf32> to vector<8x512xf32>
    %155 = arith.mulf %150, %154 : vector<8x512xf32>
    %c176 = arith.constant 176 : index
    %c0_50 = arith.constant 0 : index
    %156 = vector.load %arg20[%c176, %c0_50] : memref<216x512xf32, #tpu.memory_space<vmem>>, vector<8x512xf32>
    tpu.vector_store %arg20[%c176, %c0_50], %155 {strides = array<i32>} : memref<216x512xf32, #tpu.memory_space<vmem>>, vector<8x512xf32>,
    %c447_i32 = arith.constant 447 : i32
    %157 = tpu.dynamic_rotate %1 by %c447_i32 dim 1 : vector<8x512xf32>, i32 -> vector<8x512xf32>
    %c23 = arith.constant 23 : index
    %c0_51 = arith.constant 0 : index
    %158 = vector.load %arg2[%c23, %c0_51] : memref<27x512xf32, #tpu.memory_space<vmem>>, vector<1x512xf32>
    %159 = vector.shape_cast %158 : vector<1x512xf32> to vector<512xf32>
    %160 = vector.shape_cast %159 : vector<512xf32> to vector<1x512xf32>
    %161 = vector.broadcast %160 : vector<1x512xf32> to vector<8x512xf32>
    %162 = arith.mulf %157, %161 : vector<8x512xf32>
    %c184 = arith.constant 184 : index
    %c0_52 = arith.constant 0 : index
    %163 = vector.load %arg20[%c184, %c0_52] : memref<216x512xf32, #tpu.memory_space<vmem>>, vector<8x512xf32>
    tpu.vector_store %arg20[%c184, %c0_52], %162 {strides = array<i32>} : memref<216x512xf32, #tpu.memory_space<vmem>>, vector<8x512xf32>,
    %c441_i32 = arith.constant 441 : i32
    %164 = tpu.dynamic_rotate %1 by %c441_i32 dim 1 : vector<8x512xf32>, i32 -> vector<8x512xf32>
    %c24_53 = arith.constant 24 : index
    %c0_54 = arith.constant 0 : index
    %165 = vector.load %arg2[%c24_53, %c0_54] : memref<27x512xf32, #tpu.memory_space<vmem>>, vector<1x512xf32>
    %166 = vector.shape_cast %165 : vector<1x512xf32> to vector<512xf32>
    %167 = vector.shape_cast %166 : vector<512xf32> to vector<1x512xf32>
    %168 = vector.broadcast %167 : vector<1x512xf32> to vector<8x512xf32>
    %169 = arith.mulf %164, %168 : vector<8x512xf32>
    %c192 = arith.constant 192 : index
    %c0_55 = arith.constant 0 : index
    %170 = vector.load %arg20[%c192, %c0_55] : memref<216x512xf32, #tpu.memory_space<vmem>>, vector<8x512xf32>
    tpu.vector_store %arg20[%c192, %c0_55], %169 {strides = array<i32>} : memref<216x512xf32, #tpu.memory_space<vmem>>, vector<8x512xf32>,
    %c440_i32 = arith.constant 440 : i32
    %171 = tpu.dynamic_rotate %1 by %c440_i32 dim 1 : vector<8x512xf32>, i32 -> vector<8x512xf32>
    %c25 = arith.constant 25 : index
    %c0_56 = arith.constant 0 : index
    %172 = vector.load %arg2[%c25, %c0_56] : memref<27x512xf32, #tpu.memory_space<vmem>>, vector<1x512xf32>
    %173 = vector.shape_cast %172 : vector<1x512xf32> to vector<512xf32>
    %174 = vector.shape_cast %173 : vector<512xf32> to vector<1x512xf32>
    %175 = vector.broadcast %174 : vector<1x512xf32> to vector<8x512xf32>
    %176 = arith.mulf %171, %175 : vector<8x512xf32>
    %c200 = arith.constant 200 : index
    %c0_57 = arith.constant 0 : index
    %177 = vector.load %arg20[%c200, %c0_57] : memref<216x512xf32, #tpu.memory_space<vmem>>, vector<8x512xf32>
    tpu.vector_store %arg20[%c200, %c0_57], %176 {strides = array<i32>} : memref<216x512xf32, #tpu.memory_space<vmem>>, vector<8x512xf32>,
    %c439_i32 = arith.constant 439 : i32
    %178 = tpu.dynamic_rotate %1 by %c439_i32 dim 1 : vector<8x512xf32>, i32 -> vector<8x512xf32>
    %c26 = arith.constant 26 : index
    %c0_58 = arith.constant 0 : index
    %179 = vector.load %arg2[%c26, %c0_58] : memref<27x512xf32, #tpu.memory_space<vmem>>, vector<1x512xf32>
    %180 = vector.shape_cast %179 : vector<1x512xf32> to vector<512xf32>
    %181 = vector.shape_cast %180 : vector<512xf32> to vector<1x512xf32>
    %182 = vector.broadcast %181 : vector<1x512xf32> to vector<8x512xf32>
    %183 = arith.mulf %178, %182 : vector<8x512xf32>
    %c208 = arith.constant 208 : index
    %c0_59 = arith.constant 0 : index
    %184 = vector.load %arg20[%c208, %c0_59] : memref<216x512xf32, #tpu.memory_space<vmem>>, vector<8x512xf32>
    tpu.vector_store %arg20[%c208, %c0_59], %183 {strides = array<i32>} : memref<216x512xf32, #tpu.memory_space<vmem>>, vector<8x512xf32>,
    %c0_60 = arith.constant 0 : index
    %c0_61 = arith.constant 0 : index
    %185 = vector.load %arg5[%c0_60, %c0_61] : memref<8x216xf32, #tpu.memory_space<vmem>>, vector<8x216xf32>
    %c0_62 = arith.constant 0 : index
    %c0_63 = arith.constant 0 : index
    %186 = vector.load %arg20[%c0_62, %c0_63] : memref<216x512xf32, #tpu.memory_space<vmem>>, vector<216x512xf32>
    %cst = arith.constant dense<0.000000e+00> : vector<8x512xf32>
    %187 = tpu.matmul %185, %186, %cst {dimension_numbers = #tpu.dot_dimension_numbers<[1], [0], [0], [1], [0, 0, 1, 1], [], []>} : vector<8x216xf32>, vector<216x512xf32>, vector<8x512xf32> -> vector<8x512xf32>
    %c0_64 = arith.constant 0 : index
    %c0_65 = arith.constant 0 : index
    %188 = vector.load %arg6[%c0_64, %c0_65] : memref<8x1xf32, #tpu.memory_space<vmem>>, vector<8x1xf32>
    %189 = vector.broadcast %188 : vector<8x1xf32> to vector<8x512xf32>
    %190 = arith.addf %187, %189 : vector<8x512xf32>
    %cst_66 = arith.constant 0.000000e+00 : f32
    %191 = vector.broadcast %cst_66 : f32 to vector<8x512xf32>
    %192 = arith.maximumf %190, %191 : vector<8x512xf32>
    %c0_67 = arith.constant 0 : index
    %c0_68 = arith.constant 0 : index
    %193 = vector.load %arg7[%c0_67, %c0_68] : memref<8x8xf32, #tpu.memory_space<vmem>>, vector<8x8xf32>
    %cst_69 = arith.constant dense<0.000000e+00> : vector<8x512xf32>
    %194 = tpu.matmul %193, %192, %cst_69 {dimension_numbers = #tpu.dot_dimension_numbers<[1], [0], [0], [1], [0, 0, 1, 1], [], []>} : vector<8x8xf32>, vector<8x512xf32>, vector<8x512xf32> -> vector<8x512xf32>
    %c0_70 = arith.constant 0 : index
    %c0_71 = arith.constant 0 : index
    %195 = vector.load %arg8[%c0_70, %c0_71] : memref<8x1xf32, #tpu.memory_space<vmem>>, vector<8x1xf32>
    %196 = vector.broadcast %195 : vector<8x1xf32> to vector<8x512xf32>
    %197 = arith.addf %194, %196 : vector<8x512xf32>
    %c73_i32_72 = arith.constant 73 : i32
    %198 = tpu.dynamic_rotate %192 by %c73_i32_72 dim 1 : vector<8x512xf32>, i32 -> vector<8x512xf32>
    %c0_73 = arith.constant 0 : index
    %c0_74 = arith.constant 0 : index
    %199 = vector.load %arg2[%c0_73, %c0_74] : memref<27x512xf32, #tpu.memory_space<vmem>>, vector<1x512xf32>
    %200 = vector.shape_cast %199 : vector<1x512xf32> to vector<512xf32>
    %201 = vector.shape_cast %200 : vector<512xf32> to vector<1x512xf32>
    %202 = vector.broadcast %201 : vector<1x512xf32> to vector<8x512xf32>
    %203 = arith.mulf %198, %202 : vector<8x512xf32>
    %c0_75 = arith.constant 0 : index
    %c0_76 = arith.constant 0 : index
    %204 = vector.load %arg20[%c0_75, %c0_76] : memref<216x512xf32, #tpu.memory_space<vmem>>, vector<8x512xf32>
    tpu.vector_store %arg20[%c0_75, %c0_76], %203 {strides = array<i32>} : memref<216x512xf32, #tpu.memory_space<vmem>>, vector<8x512xf32>,
    %c72_i32_77 = arith.constant 72 : i32
    %205 = tpu.dynamic_rotate %192 by %c72_i32_77 dim 1 : vector<8x512xf32>, i32 -> vector<8x512xf32>
    %c1_78 = arith.constant 1 : index
    %c0_79 = arith.constant 0 : index
    %206 = vector.load %arg2[%c1_78, %c0_79] : memref<27x512xf32, #tpu.memory_space<vmem>>, vector<1x512xf32>
    %207 = vector.shape_cast %206 : vector<1x512xf32> to vector<512xf32>
    %208 = vector.shape_cast %207 : vector<512xf32> to vector<1x512xf32>
    %209 = vector.broadcast %208 : vector<1x512xf32> to vector<8x512xf32>
    %210 = arith.mulf %205, %209 : vector<8x512xf32>
    %c8_80 = arith.constant 8 : index
    %c0_81 = arith.constant 0 : index
    %211 = vector.load %arg20[%c8_80, %c0_81] : memref<216x512xf32, #tpu.memory_space<vmem>>, vector<8x512xf32>
    tpu.vector_store %arg20[%c8_80, %c0_81], %210 {strides = array<i32>} : memref<216x512xf32, #tpu.memory_space<vmem>>, vector<8x512xf32>,
    %c71_i32_82 = arith.constant 71 : i32
    %212 = tpu.dynamic_rotate %192 by %c71_i32_82 dim 1 : vector<8x512xf32>, i32 -> vector<8x512xf32>
    %c2_83 = arith.constant 2 : index
    %c0_84 = arith.constant 0 : index
    %213 = vector.load %arg2[%c2_83, %c0_84] : memref<27x512xf32, #tpu.memory_space<vmem>>, vector<1x512xf32>
    %214 = vector.shape_cast %213 : vector<1x512xf32> to vector<512xf32>
    %215 = vector.shape_cast %214 : vector<512xf32> to vector<1x512xf32>
    %216 = vector.broadcast %215 : vector<1x512xf32> to vector<8x512xf32>
    %217 = arith.mulf %212, %216 : vector<8x512xf32>
    %c16_85 = arith.constant 16 : index
    %c0_86 = arith.constant 0 : index
    %218 = vector.load %arg20[%c16_85, %c0_86] : memref<216x512xf32, #tpu.memory_space<vmem>>, vector<8x512xf32>
    tpu.vector_store %arg20[%c16_85, %c0_86], %217 {strides = array<i32>} : memref<216x512xf32, #tpu.memory_space<vmem>>, vector<8x512xf32>,
    %c65_i32_87 = arith.constant 65 : i32
    %219 = tpu.dynamic_rotate %192 by %c65_i32_87 dim 1 : vector<8x512xf32>, i32 -> vector<8x512xf32>
    %c3_88 = arith.constant 3 : index
    %c0_89 = arith.constant 0 : index
    %220 = vector.load %arg2[%c3_88, %c0_89] : memref<27x512xf32, #tpu.memory_space<vmem>>, vector<1x512xf32>
    %221 = vector.shape_cast %220 : vector<1x512xf32> to vector<512xf32>
    %222 = vector.shape_cast %221 : vector<512xf32> to vector<1x512xf32>
    %223 = vector.broadcast %222 : vector<1x512xf32> to vector<8x512xf32>
    %224 = arith.mulf %219, %223 : vector<8x512xf32>
    %c24_90 = arith.constant 24 : index
    %c0_91 = arith.constant 0 : index
    %225 = vector.load %arg20[%c24_90, %c0_91] : memref<216x512xf32, #tpu.memory_space<vmem>>, vector<8x512xf32>
    tpu.vector_store %arg20[%c24_90, %c0_91], %224 {strides = array<i32>} : memref<216x512xf32, #tpu.memory_space<vmem>>, vector<8x512xf32>,
    %c64_i32_92 = arith.constant 64 : i32
    %226 = tpu.dynamic_rotate %192 by %c64_i32_92 dim 1 : vector<8x512xf32>, i32 -> vector<8x512xf32>
    %c4_93 = arith.constant 4 : index
    %c0_94 = arith.constant 0 : index
    %227 = vector.load %arg2[%c4_93, %c0_94] : memref<27x512xf32, #tpu.memory_space<vmem>>, vector<1x512xf32>
    %228 = vector.shape_cast %227 : vector<1x512xf32> to vector<512xf32>
    %229 = vector.shape_cast %228 : vector<512xf32> to vector<1x512xf32>
    %230 = vector.broadcast %229 : vector<1x512xf32> to vector<8x512xf32>
    %231 = arith.mulf %226, %230 : vector<8x512xf32>
    %c32_95 = arith.constant 32 : index
    %c0_96 = arith.constant 0 : index
    %232 = vector.load %arg20[%c32_95, %c0_96] : memref<216x512xf32, #tpu.memory_space<vmem>>, vector<8x512xf32>
    tpu.vector_store %arg20[%c32_95, %c0_96], %231 {strides = array<i32>} : memref<216x512xf32, #tpu.memory_space<vmem>>, vector<8x512xf32>,
    %c63_i32_97 = arith.constant 63 : i32
    %233 = tpu.dynamic_rotate %192 by %c63_i32_97 dim 1 : vector<8x512xf32>, i32 -> vector<8x512xf32>
    %c5_98 = arith.constant 5 : index
    %c0_99 = arith.constant 0 : index
    %234 = vector.load %arg2[%c5_98, %c0_99] : memref<27x512xf32, #tpu.memory_space<vmem>>, vector<1x512xf32>
    %235 = vector.shape_cast %234 : vector<1x512xf32> to vector<512xf32>
    %236 = vector.shape_cast %235 : vector<512xf32> to vector<1x512xf32>
    %237 = vector.broadcast %236 : vector<1x512xf32> to vector<8x512xf32>
    %238 = arith.mulf %233, %237 : vector<8x512xf32>
    %c40_100 = arith.constant 40 : index
    %c0_101 = arith.constant 0 : index
    %239 = vector.load %arg20[%c40_100, %c0_101] : memref<216x512xf32, #tpu.memory_space<vmem>>, vector<8x512xf32>
    tpu.vector_store %arg20[%c40_100, %c0_101], %238 {strides = array<i32>} : memref<216x512xf32, #tpu.memory_space<vmem>>, vector<8x512xf32>,
    %c57_i32_102 = arith.constant 57 : i32
    %240 = tpu.dynamic_rotate %192 by %c57_i32_102 dim 1 : vector<8x512xf32>, i32 -> vector<8x512xf32>
    %c6_103 = arith.constant 6 : index
    %c0_104 = arith.constant 0 : index
    %241 = vector.load %arg2[%c6_103, %c0_104] : memref<27x512xf32, #tpu.memory_space<vmem>>, vector<1x512xf32>
    %242 = vector.shape_cast %241 : vector<1x512xf32> to vector<512xf32>
    %243 = vector.shape_cast %242 : vector<512xf32> to vector<1x512xf32>
    %244 = vector.broadcast %243 : vector<1x512xf32> to vector<8x512xf32>
    %245 = arith.mulf %240, %244 : vector<8x512xf32>
    %c48_105 = arith.constant 48 : index
    %c0_106 = arith.constant 0 : index
    %246 = vector.load %arg20[%c48_105, %c0_106] : memref<216x512xf32, #tpu.memory_space<vmem>>, vector<8x512xf32>
    tpu.vector_store %arg20[%c48_105, %c0_106], %245 {strides = array<i32>} : memref<216x512xf32, #tpu.memory_space<vmem>>, vector<8x512xf32>,
    %c56_i32_107 = arith.constant 56 : i32
    %247 = tpu.dynamic_rotate %192 by %c56_i32_107 dim 1 : vector<8x512xf32>, i32 -> vector<8x512xf32>
    %c7_108 = arith.constant 7 : index
    %c0_109 = arith.constant 0 : index
    %248 = vector.load %arg2[%c7_108, %c0_109] : memref<27x512xf32, #tpu.memory_space<vmem>>, vector<1x512xf32>
    %249 = vector.shape_cast %248 : vector<1x512xf32> to vector<512xf32>
    %250 = vector.shape_cast %249 : vector<512xf32> to vector<1x512xf32>
    %251 = vector.broadcast %250 : vector<1x512xf32> to vector<8x512xf32>
    %252 = arith.mulf %247, %251 : vector<8x512xf32>
    %c56_110 = arith.constant 56 : index
    %c0_111 = arith.constant 0 : index
    %253 = vector.load %arg20[%c56_110, %c0_111] : memref<216x512xf32, #tpu.memory_space<vmem>>, vector<8x512xf32>
    tpu.vector_store %arg20[%c56_110, %c0_111], %252 {strides = array<i32>} : memref<216x512xf32, #tpu.memory_space<vmem>>, vector<8x512xf32>,
    %c55_i32_112 = arith.constant 55 : i32
    %254 = tpu.dynamic_rotate %192 by %c55_i32_112 dim 1 : vector<8x512xf32>, i32 -> vector<8x512xf32>
    %c8_113 = arith.constant 8 : index
    %c0_114 = arith.constant 0 : index
    %255 = vector.load %arg2[%c8_113, %c0_114] : memref<27x512xf32, #tpu.memory_space<vmem>>, vector<1x512xf32>
    %256 = vector.shape_cast %255 : vector<1x512xf32> to vector<512xf32>
    %257 = vector.shape_cast %256 : vector<512xf32> to vector<1x512xf32>
    %258 = vector.broadcast %257 : vector<1x512xf32> to vector<8x512xf32>
    %259 = arith.mulf %254, %258 : vector<8x512xf32>
    %c64_115 = arith.constant 64 : index
    %c0_116 = arith.constant 0 : index
    %260 = vector.load %arg20[%c64_115, %c0_116] : memref<216x512xf32, #tpu.memory_space<vmem>>, vector<8x512xf32>
    tpu.vector_store %arg20[%c64_115, %c0_116], %259 {strides = array<i32>} : memref<216x512xf32, #tpu.memory_space<vmem>>, vector<8x512xf32>,
    %c9_i32_117 = arith.constant 9 : i32
    %261 = tpu.dynamic_rotate %192 by %c9_i32_117 dim 1 : vector<8x512xf32>, i32 -> vector<8x512xf32>
    %c9_118 = arith.constant 9 : index
    %c0_119 = arith.constant 0 : index
    %262 = vector.load %arg2[%c9_118, %c0_119] : memref<27x512xf32, #tpu.memory_space<vmem>>, vector<1x512xf32>
    %263 = vector.shape_cast %262 : vector<1x512xf32> to vector<512xf32>
    %264 = vector.shape_cast %263 : vector<512xf32> to vector<1x512xf32>
    %265 = vector.broadcast %264 : vector<1x512xf32> to vector<8x512xf32>
    %266 = arith.mulf %261, %265 : vector<8x512xf32>
    %c72_120 = arith.constant 72 : index
    %c0_121 = arith.constant 0 : index
    %267 = vector.load %arg20[%c72_120, %c0_121] : memref<216x512xf32, #tpu.memory_space<vmem>>, vector<8x512xf32>
    tpu.vector_store %arg20[%c72_120, %c0_121], %266 {strides = array<i32>} : memref<216x512xf32, #tpu.memory_space<vmem>>, vector<8x512xf32>,
    %c8_i32_122 = arith.constant 8 : i32
    %268 = tpu.dynamic_rotate %192 by %c8_i32_122 dim 1 : vector<8x512xf32>, i32 -> vector<8x512xf32>
    %c10_123 = arith.constant 10 : index
    %c0_124 = arith.constant 0 : index
    %269 = vector.load %arg2[%c10_123, %c0_124] : memref<27x512xf32, #tpu.memory_space<vmem>>, vector<1x512xf32>
    %270 = vector.shape_cast %269 : vector<1x512xf32> to vector<512xf32>
    %271 = vector.shape_cast %270 : vector<512xf32> to vector<1x512xf32>
    %272 = vector.broadcast %271 : vector<1x512xf32> to vector<8x512xf32>
    %273 = arith.mulf %268, %272 : vector<8x512xf32>
    %c80_125 = arith.constant 80 : index
    %c0_126 = arith.constant 0 : index
    %274 = vector.load %arg20[%c80_125, %c0_126] : memref<216x512xf32, #tpu.memory_space<vmem>>, vector<8x512xf32>
    tpu.vector_store %arg20[%c80_125, %c0_126], %273 {strides = array<i32>} : memref<216x512xf32, #tpu.memory_space<vmem>>, vector<8x512xf32>,
    %c7_i32_127 = arith.constant 7 : i32
    %275 = tpu.dynamic_rotate %192 by %c7_i32_127 dim 1 : vector<8x512xf32>, i32 -> vector<8x512xf32>
    %c11_128 = arith.constant 11 : index
    %c0_129 = arith.constant 0 : index
    %276 = vector.load %arg2[%c11_128, %c0_129] : memref<27x512xf32, #tpu.memory_space<vmem>>, vector<1x512xf32>
    %277 = vector.shape_cast %276 : vector<1x512xf32> to vector<512xf32>
    %278 = vector.shape_cast %277 : vector<512xf32> to vector<1x512xf32>
    %279 = vector.broadcast %278 : vector<1x512xf32> to vector<8x512xf32>
    %280 = arith.mulf %275, %279 : vector<8x512xf32>
    %c88_130 = arith.constant 88 : index
    %c0_131 = arith.constant 0 : index
    %281 = vector.load %arg20[%c88_130, %c0_131] : memref<216x512xf32, #tpu.memory_space<vmem>>, vector<8x512xf32>
    tpu.vector_store %arg20[%c88_130, %c0_131], %280 {strides = array<i32>} : memref<216x512xf32, #tpu.memory_space<vmem>>, vector<8x512xf32>,
    %c1_i32_132 = arith.constant 1 : i32
    %282 = tpu.dynamic_rotate %192 by %c1_i32_132 dim 1 : vector<8x512xf32>, i32 -> vector<8x512xf32>
    %c12_133 = arith.constant 12 : index
    %c0_134 = arith.constant 0 : index
    %283 = vector.load %arg2[%c12_133, %c0_134] : memref<27x512xf32, #tpu.memory_space<vmem>>, vector<1x512xf32>
    %284 = vector.shape_cast %283 : vector<1x512xf32> to vector<512xf32>
    %285 = vector.shape_cast %284 : vector<512xf32> to vector<1x512xf32>
    %286 = vector.broadcast %285 : vector<1x512xf32> to vector<8x512xf32>
    %287 = arith.mulf %282, %286 : vector<8x512xf32>
    %c96_135 = arith.constant 96 : index
    %c0_136 = arith.constant 0 : index
    %288 = vector.load %arg20[%c96_135, %c0_136] : memref<216x512xf32, #tpu.memory_space<vmem>>, vector<8x512xf32>
    tpu.vector_store %arg20[%c96_135, %c0_136], %287 {strides = array<i32>} : memref<216x512xf32, #tpu.memory_space<vmem>>, vector<8x512xf32>,
    %c104_137 = arith.constant 104 : index
    %c0_138 = arith.constant 0 : index
    %289 = vector.load %arg20[%c104_137, %c0_138] : memref<216x512xf32, #tpu.memory_space<vmem>>, vector<8x512xf32>
    tpu.vector_store %arg20[%c104_137, %c0_138], %192 {strides = array<i32>} : memref<216x512xf32, #tpu.memory_space<vmem>>, vector<8x512xf32>,
    %c511_i32_139 = arith.constant 511 : i32
    %290 = tpu.dynamic_rotate %192 by %c511_i32_139 dim 1 : vector<8x512xf32>, i32 -> vector<8x512xf32>
    %c14_140 = arith.constant 14 : index
    %c0_141 = arith.constant 0 : index
    %291 = vector.load %arg2[%c14_140, %c0_141] : memref<27x512xf32, #tpu.memory_space<vmem>>, vector<1x512xf32>
    %292 = vector.shape_cast %291 : vector<1x512xf32> to vector<512xf32>
    %293 = vector.shape_cast %292 : vector<512xf32> to vector<1x512xf32>
    %294 = vector.broadcast %293 : vector<1x512xf32> to vector<8x512xf32>
    %295 = arith.mulf %290, %294 : vector<8x512xf32>
    %c112_142 = arith.constant 112 : index
    %c0_143 = arith.constant 0 : index
    %296 = vector.load %arg20[%c112_142, %c0_143] : memref<216x512xf32, #tpu.memory_space<vmem>>, vector<8x512xf32>
    tpu.vector_store %arg20[%c112_142, %c0_143], %295 {strides = array<i32>} : memref<216x512xf32, #tpu.memory_space<vmem>>, vector<8x512xf32>,
    %c505_i32_144 = arith.constant 505 : i32
    %297 = tpu.dynamic_rotate %192 by %c505_i32_144 dim 1 : vector<8x512xf32>, i32 -> vector<8x512xf32>
    %c15_145 = arith.constant 15 : index
    %c0_146 = arith.constant 0 : index
    %298 = vector.load %arg2[%c15_145, %c0_146] : memref<27x512xf32, #tpu.memory_space<vmem>>, vector<1x512xf32>
    %299 = vector.shape_cast %298 : vector<1x512xf32> to vector<512xf32>
    %300 = vector.shape_cast %299 : vector<512xf32> to vector<1x512xf32>
    %301 = vector.broadcast %300 : vector<1x512xf32> to vector<8x512xf32>
    %302 = arith.mulf %297, %301 : vector<8x512xf32>
    %c120_147 = arith.constant 120 : index
    %c0_148 = arith.constant 0 : index
    %303 = vector.load %arg20[%c120_147, %c0_148] : memref<216x512xf32, #tpu.memory_space<vmem>>, vector<8x512xf32>
    tpu.vector_store %arg20[%c120_147, %c0_148], %302 {strides = array<i32>} : memref<216x512xf32, #tpu.memory_space<vmem>>, vector<8x512xf32>,
    %c504_i32_149 = arith.constant 504 : i32
    %304 = tpu.dynamic_rotate %192 by %c504_i32_149 dim 1 : vector<8x512xf32>, i32 -> vector<8x512xf32>
    %c16_150 = arith.constant 16 : index
    %c0_151 = arith.constant 0 : index
    %305 = vector.load %arg2[%c16_150, %c0_151] : memref<27x512xf32, #tpu.memory_space<vmem>>, vector<1x512xf32>
    %306 = vector.shape_cast %305 : vector<1x512xf32> to vector<512xf32>
    %307 = vector.shape_cast %306 : vector<512xf32> to vector<1x512xf32>
    %308 = vector.broadcast %307 : vector<1x512xf32> to vector<8x512xf32>
    %309 = arith.mulf %304, %308 : vector<8x512xf32>
    %c128_152 = arith.constant 128 : index
    %c0_153 = arith.constant 0 : index
    %310 = vector.load %arg20[%c128_152, %c0_153] : memref<216x512xf32, #tpu.memory_space<vmem>>, vector<8x512xf32>
    tpu.vector_store %arg20[%c128_152, %c0_153], %309 {strides = array<i32>} : memref<216x512xf32, #tpu.memory_space<vmem>>, vector<8x512xf32>,
    %c503_i32_154 = arith.constant 503 : i32
    %311 = tpu.dynamic_rotate %192 by %c503_i32_154 dim 1 : vector<8x512xf32>, i32 -> vector<8x512xf32>
    %c17_155 = arith.constant 17 : index
    %c0_156 = arith.constant 0 : index
    %312 = vector.load %arg2[%c17_155, %c0_156] : memref<27x512xf32, #tpu.memory_space<vmem>>, vector<1x512xf32>
    %313 = vector.shape_cast %312 : vector<1x512xf32> to vector<512xf32>
    %314 = vector.shape_cast %313 : vector<512xf32> to vector<1x512xf32>
    %315 = vector.broadcast %314 : vector<1x512xf32> to vector<8x512xf32>
    %316 = arith.mulf %311, %315 : vector<8x512xf32>
    %c136_157 = arith.constant 136 : index
    %c0_158 = arith.constant 0 : index
    %317 = vector.load %arg20[%c136_157, %c0_158] : memref<216x512xf32, #tpu.memory_space<vmem>>, vector<8x512xf32>
    tpu.vector_store %arg20[%c136_157, %c0_158], %316 {strides = array<i32>} : memref<216x512xf32, #tpu.memory_space<vmem>>, vector<8x512xf32>,
    %c457_i32_159 = arith.constant 457 : i32
    %318 = tpu.dynamic_rotate %192 by %c457_i32_159 dim 1 : vector<8x512xf32>, i32 -> vector<8x512xf32>
    %c18_160 = arith.constant 18 : index
    %c0_161 = arith.constant 0 : index
    %319 = vector.load %arg2[%c18_160, %c0_161] : memref<27x512xf32, #tpu.memory_space<vmem>>, vector<1x512xf32>
    %320 = vector.shape_cast %319 : vector<1x512xf32> to vector<512xf32>
    %321 = vector.shape_cast %320 : vector<512xf32> to vector<1x512xf32>
    %322 = vector.broadcast %321 : vector<1x512xf32> to vector<8x512xf32>
    %323 = arith.mulf %318, %322 : vector<8x512xf32>
    %c144_162 = arith.constant 144 : index
    %c0_163 = arith.constant 0 : index
    %324 = vector.load %arg20[%c144_162, %c0_163] : memref<216x512xf32, #tpu.memory_space<vmem>>, vector<8x512xf32>
    tpu.vector_store %arg20[%c144_162, %c0_163], %323 {strides = array<i32>} : memref<216x512xf32, #tpu.memory_space<vmem>>, vector<8x512xf32>,
    %c456_i32_164 = arith.constant 456 : i32
    %325 = tpu.dynamic_rotate %192 by %c456_i32_164 dim 1 : vector<8x512xf32>, i32 -> vector<8x512xf32>
    %c19_165 = arith.constant 19 : index
    %c0_166 = arith.constant 0 : index
    %326 = vector.load %arg2[%c19_165, %c0_166] : memref<27x512xf32, #tpu.memory_space<vmem>>, vector<1x512xf32>
    %327 = vector.shape_cast %326 : vector<1x512xf32> to vector<512xf32>
    %328 = vector.shape_cast %327 : vector<512xf32> to vector<1x512xf32>
    %329 = vector.broadcast %328 : vector<1x512xf32> to vector<8x512xf32>
    %330 = arith.mulf %325, %329 : vector<8x512xf32>
    %c152_167 = arith.constant 152 : index
    %c0_168 = arith.constant 0 : index
    %331 = vector.load %arg20[%c152_167, %c0_168] : memref<216x512xf32, #tpu.memory_space<vmem>>, vector<8x512xf32>
    tpu.vector_store %arg20[%c152_167, %c0_168], %330 {strides = array<i32>} : memref<216x512xf32, #tpu.memory_space<vmem>>, vector<8x512xf32>,
    %c455_i32_169 = arith.constant 455 : i32
    %332 = tpu.dynamic_rotate %192 by %c455_i32_169 dim 1 : vector<8x512xf32>, i32 -> vector<8x512xf32>
    %c20_170 = arith.constant 20 : index
    %c0_171 = arith.constant 0 : index
    %333 = vector.load %arg2[%c20_170, %c0_171] : memref<27x512xf32, #tpu.memory_space<vmem>>, vector<1x512xf32>
    %334 = vector.shape_cast %333 : vector<1x512xf32> to vector<512xf32>
    %335 = vector.shape_cast %334 : vector<512xf32> to vector<1x512xf32>
    %336 = vector.broadcast %335 : vector<1x512xf32> to vector<8x512xf32>
    %337 = arith.mulf %332, %336 : vector<8x512xf32>
    %c160_172 = arith.constant 160 : index
    %c0_173 = arith.constant 0 : index
    %338 = vector.load %arg20[%c160_172, %c0_173] : memref<216x512xf32, #tpu.memory_space<vmem>>, vector<8x512xf32>
    tpu.vector_store %arg20[%c160_172, %c0_173], %337 {strides = array<i32>} : memref<216x512xf32, #tpu.memory_space<vmem>>, vector<8x512xf32>,
    %c449_i32_174 = arith.constant 449 : i32
    %339 = tpu.dynamic_rotate %192 by %c449_i32_174 dim 1 : vector<8x512xf32>, i32 -> vector<8x512xf32>
    %c21_175 = arith.constant 21 : index
    %c0_176 = arith.constant 0 : index
    %340 = vector.load %arg2[%c21_175, %c0_176] : memref<27x512xf32, #tpu.memory_space<vmem>>, vector<1x512xf32>
    %341 = vector.shape_cast %340 : vector<1x512xf32> to vector<512xf32>
    %342 = vector.shape_cast %341 : vector<512xf32> to vector<1x512xf32>
    %343 = vector.broadcast %342 : vector<1x512xf32> to vector<8x512xf32>
    %344 = arith.mulf %339, %343 : vector<8x512xf32>
    %c168_177 = arith.constant 168 : index
    %c0_178 = arith.constant 0 : index
    %345 = vector.load %arg20[%c168_177, %c0_178] : memref<216x512xf32, #tpu.memory_space<vmem>>, vector<8x512xf32>
    tpu.vector_store %arg20[%c168_177, %c0_178], %344 {strides = array<i32>} : memref<216x512xf32, #tpu.memory_space<vmem>>, vector<8x512xf32>,
    %c448_i32_179 = arith.constant 448 : i32
    %346 = tpu.dynamic_rotate %192 by %c448_i32_179 dim 1 : vector<8x512xf32>, i32 -> vector<8x512xf32>
    %c22_180 = arith.constant 22 : index
    %c0_181 = arith.constant 0 : index
    %347 = vector.load %arg2[%c22_180, %c0_181] : memref<27x512xf32, #tpu.memory_space<vmem>>, vector<1x512xf32>
    %348 = vector.shape_cast %347 : vector<1x512xf32> to vector<512xf32>
    %349 = vector.shape_cast %348 : vector<512xf32> to vector<1x512xf32>
    %350 = vector.broadcast %349 : vector<1x512xf32> to vector<8x512xf32>
    %351 = arith.mulf %346, %350 : vector<8x512xf32>
    %c176_182 = arith.constant 176 : index
    %c0_183 = arith.constant 0 : index
    %352 = vector.load %arg20[%c176_182, %c0_183] : memref<216x512xf32, #tpu.memory_space<vmem>>, vector<8x512xf32>
    tpu.vector_store %arg20[%c176_182, %c0_183], %351 {strides = array<i32>} : memref<216x512xf32, #tpu.memory_space<vmem>>, vector<8x512xf32>,
    %c447_i32_184 = arith.constant 447 : i32
    %353 = tpu.dynamic_rotate %192 by %c447_i32_184 dim 1 : vector<8x512xf32>, i32 -> vector<8x512xf32>
    %c23_185 = arith.constant 23 : index
    %c0_186 = arith.constant 0 : index
    %354 = vector.load %arg2[%c23_185, %c0_186] : memref<27x512xf32, #tpu.memory_space<vmem>>, vector<1x512xf32>
    %355 = vector.shape_cast %354 : vector<1x512xf32> to vector<512xf32>
    %356 = vector.shape_cast %355 : vector<512xf32> to vector<1x512xf32>
    %357 = vector.broadcast %356 : vector<1x512xf32> to vector<8x512xf32>
    %358 = arith.mulf %353, %357 : vector<8x512xf32>
    %c184_187 = arith.constant 184 : index
    %c0_188 = arith.constant 0 : index
    %359 = vector.load %arg20[%c184_187, %c0_188] : memref<216x512xf32, #tpu.memory_space<vmem>>, vector<8x512xf32>
    tpu.vector_store %arg20[%c184_187, %c0_188], %358 {strides = array<i32>} : memref<216x512xf32, #tpu.memory_space<vmem>>, vector<8x512xf32>,
    %c441_i32_189 = arith.constant 441 : i32
    %360 = tpu.dynamic_rotate %192 by %c441_i32_189 dim 1 : vector<8x512xf32>, i32 -> vector<8x512xf32>
    %c24_190 = arith.constant 24 : index
    %c0_191 = arith.constant 0 : index
    %361 = vector.load %arg2[%c24_190, %c0_191] : memref<27x512xf32, #tpu.memory_space<vmem>>, vector<1x512xf32>
    %362 = vector.shape_cast %361 : vector<1x512xf32> to vector<512xf32>
    %363 = vector.shape_cast %362 : vector<512xf32> to vector<1x512xf32>
    %364 = vector.broadcast %363 : vector<1x512xf32> to vector<8x512xf32>
    %365 = arith.mulf %360, %364 : vector<8x512xf32>
    %c192_192 = arith.constant 192 : index
    %c0_193 = arith.constant 0 : index
    %366 = vector.load %arg20[%c192_192, %c0_193] : memref<216x512xf32, #tpu.memory_space<vmem>>, vector<8x512xf32>
    tpu.vector_store %arg20[%c192_192, %c0_193], %365 {strides = array<i32>} : memref<216x512xf32, #tpu.memory_space<vmem>>, vector<8x512xf32>,
    %c440_i32_194 = arith.constant 440 : i32
    %367 = tpu.dynamic_rotate %192 by %c440_i32_194 dim 1 : vector<8x512xf32>, i32 -> vector<8x512xf32>
    %c25_195 = arith.constant 25 : index
    %c0_196 = arith.constant 0 : index
    %368 = vector.load %arg2[%c25_195, %c0_196] : memref<27x512xf32, #tpu.memory_space<vmem>>, vector<1x512xf32>
    %369 = vector.shape_cast %368 : vector<1x512xf32> to vector<512xf32>
    %370 = vector.shape_cast %369 : vector<512xf32> to vector<1x512xf32>
    %371 = vector.broadcast %370 : vector<1x512xf32> to vector<8x512xf32>
    %372 = arith.mulf %367, %371 : vector<8x512xf32>
    %c200_197 = arith.constant 200 : index
    %c0_198 = arith.constant 0 : index
    %373 = vector.load %arg20[%c200_197, %c0_198] : memref<216x512xf32, #tpu.memory_space<vmem>>, vector<8x512xf32>
    tpu.vector_store %arg20[%c200_197, %c0_198], %372 {strides = array<i32>} : memref<216x512xf32, #tpu.memory_space<vmem>>, vector<8x512xf32>,
    %c439_i32_199 = arith.constant 439 : i32
    %374 = tpu.dynamic_rotate %192 by %c439_i32_199 dim 1 : vector<8x512xf32>, i32 -> vector<8x512xf32>
    %c26_200 = arith.constant 26 : index
    %c0_201 = arith.constant 0 : index
    %375 = vector.load %arg2[%c26_200, %c0_201] : memref<27x512xf32, #tpu.memory_space<vmem>>, vector<1x512xf32>
    %376 = vector.shape_cast %375 : vector<1x512xf32> to vector<512xf32>
    %377 = vector.shape_cast %376 : vector<512xf32> to vector<1x512xf32>
    %378 = vector.broadcast %377 : vector<1x512xf32> to vector<8x512xf32>
    %379 = arith.mulf %374, %378 : vector<8x512xf32>
    %c208_202 = arith.constant 208 : index
    %c0_203 = arith.constant 0 : index
    %380 = vector.load %arg20[%c208_202, %c0_203] : memref<216x512xf32, #tpu.memory_space<vmem>>, vector<8x512xf32>
    tpu.vector_store %arg20[%c208_202, %c0_203], %379 {strides = array<i32>} : memref<216x512xf32, #tpu.memory_space<vmem>>, vector<8x512xf32>,
    %c0_204 = arith.constant 0 : index
    %c0_205 = arith.constant 0 : index
    %381 = vector.load %arg9[%c0_204, %c0_205] : memref<8x216xf32, #tpu.memory_space<vmem>>, vector<8x216xf32>
    %c0_206 = arith.constant 0 : index
    %c0_207 = arith.constant 0 : index
    %382 = vector.load %arg20[%c0_206, %c0_207] : memref<216x512xf32, #tpu.memory_space<vmem>>, vector<216x512xf32>
    %cst_208 = arith.constant dense<0.000000e+00> : vector<8x512xf32>
    %383 = tpu.matmul %381, %382, %cst_208 {dimension_numbers = #tpu.dot_dimension_numbers<[1], [0], [0], [1], [0, 0, 1, 1], [], []>} : vector<8x216xf32>, vector<216x512xf32>, vector<8x512xf32> -> vector<8x512xf32>
    %c0_209 = arith.constant 0 : index
    %c0_210 = arith.constant 0 : index
    %384 = vector.load %arg10[%c0_209, %c0_210] : memref<8x1xf32, #tpu.memory_space<vmem>>, vector<8x1xf32>
    %385 = vector.broadcast %384 : vector<8x1xf32> to vector<8x512xf32>
    %386 = arith.addf %383, %385 : vector<8x512xf32>
    %cst_211 = arith.constant 0.000000e+00 : f32
    %387 = vector.broadcast %cst_211 : f32 to vector<8x512xf32>
    %388 = arith.maximumf %386, %387 : vector<8x512xf32>
    %c73_i32_212 = arith.constant 73 : i32
    %389 = tpu.dynamic_rotate %388 by %c73_i32_212 dim 1 : vector<8x512xf32>, i32 -> vector<8x512xf32>
    %c0_213 = arith.constant 0 : index
    %c0_214 = arith.constant 0 : index
    %390 = vector.load %arg2[%c0_213, %c0_214] : memref<27x512xf32, #tpu.memory_space<vmem>>, vector<1x512xf32>
    %391 = vector.shape_cast %390 : vector<1x512xf32> to vector<512xf32>
    %392 = vector.shape_cast %391 : vector<512xf32> to vector<1x512xf32>
    %393 = vector.broadcast %392 : vector<1x512xf32> to vector<8x512xf32>
    %394 = arith.mulf %389, %393 : vector<8x512xf32>
    %c0_215 = arith.constant 0 : index
    %c0_216 = arith.constant 0 : index
    %395 = vector.load %arg20[%c0_215, %c0_216] : memref<216x512xf32, #tpu.memory_space<vmem>>, vector<8x512xf32>
    tpu.vector_store %arg20[%c0_215, %c0_216], %394 {strides = array<i32>} : memref<216x512xf32, #tpu.memory_space<vmem>>, vector<8x512xf32>,
    %c72_i32_217 = arith.constant 72 : i32
    %396 = tpu.dynamic_rotate %388 by %c72_i32_217 dim 1 : vector<8x512xf32>, i32 -> vector<8x512xf32>
    %c1_218 = arith.constant 1 : index
    %c0_219 = arith.constant 0 : index
    %397 = vector.load %arg2[%c1_218, %c0_219] : memref<27x512xf32, #tpu.memory_space<vmem>>, vector<1x512xf32>
    %398 = vector.shape_cast %397 : vector<1x512xf32> to vector<512xf32>
    %399 = vector.shape_cast %398 : vector<512xf32> to vector<1x512xf32>
    %400 = vector.broadcast %399 : vector<1x512xf32> to vector<8x512xf32>
    %401 = arith.mulf %396, %400 : vector<8x512xf32>
    %c8_220 = arith.constant 8 : index
    %c0_221 = arith.constant 0 : index
    %402 = vector.load %arg20[%c8_220, %c0_221] : memref<216x512xf32, #tpu.memory_space<vmem>>, vector<8x512xf32>
    tpu.vector_store %arg20[%c8_220, %c0_221], %401 {strides = array<i32>} : memref<216x512xf32, #tpu.memory_space<vmem>>, vector<8x512xf32>,
    %c71_i32_222 = arith.constant 71 : i32
    %403 = tpu.dynamic_rotate %388 by %c71_i32_222 dim 1 : vector<8x512xf32>, i32 -> vector<8x512xf32>
    %c2_223 = arith.constant 2 : index
    %c0_224 = arith.constant 0 : index
    %404 = vector.load %arg2[%c2_223, %c0_224] : memref<27x512xf32, #tpu.memory_space<vmem>>, vector<1x512xf32>
    %405 = vector.shape_cast %404 : vector<1x512xf32> to vector<512xf32>
    %406 = vector.shape_cast %405 : vector<512xf32> to vector<1x512xf32>
    %407 = vector.broadcast %406 : vector<1x512xf32> to vector<8x512xf32>
    %408 = arith.mulf %403, %407 : vector<8x512xf32>
    %c16_225 = arith.constant 16 : index
    %c0_226 = arith.constant 0 : index
    %409 = vector.load %arg20[%c16_225, %c0_226] : memref<216x512xf32, #tpu.memory_space<vmem>>, vector<8x512xf32>
    tpu.vector_store %arg20[%c16_225, %c0_226], %408 {strides = array<i32>} : memref<216x512xf32, #tpu.memory_space<vmem>>, vector<8x512xf32>,
    %c65_i32_227 = arith.constant 65 : i32
    %410 = tpu.dynamic_rotate %388 by %c65_i32_227 dim 1 : vector<8x512xf32>, i32 -> vector<8x512xf32>
    %c3_228 = arith.constant 3 : index
    %c0_229 = arith.constant 0 : index
    %411 = vector.load %arg2[%c3_228, %c0_229] : memref<27x512xf32, #tpu.memory_space<vmem>>, vector<1x512xf32>
    %412 = vector.shape_cast %411 : vector<1x512xf32> to vector<512xf32>
    %413 = vector.shape_cast %412 : vector<512xf32> to vector<1x512xf32>
    %414 = vector.broadcast %413 : vector<1x512xf32> to vector<8x512xf32>
    %415 = arith.mulf %410, %414 : vector<8x512xf32>
    %c24_230 = arith.constant 24 : index
    %c0_231 = arith.constant 0 : index
    %416 = vector.load %arg20[%c24_230, %c0_231] : memref<216x512xf32, #tpu.memory_space<vmem>>, vector<8x512xf32>
    tpu.vector_store %arg20[%c24_230, %c0_231], %415 {strides = array<i32>} : memref<216x512xf32, #tpu.memory_space<vmem>>, vector<8x512xf32>,
    %c64_i32_232 = arith.constant 64 : i32
    %417 = tpu.dynamic_rotate %388 by %c64_i32_232 dim 1 : vector<8x512xf32>, i32 -> vector<8x512xf32>
    %c4_233 = arith.constant 4 : index
    %c0_234 = arith.constant 0 : index
    %418 = vector.load %arg2[%c4_233, %c0_234] : memref<27x512xf32, #tpu.memory_space<vmem>>, vector<1x512xf32>
    %419 = vector.shape_cast %418 : vector<1x512xf32> to vector<512xf32>
    %420 = vector.shape_cast %419 : vector<512xf32> to vector<1x512xf32>
    %421 = vector.broadcast %420 : vector<1x512xf32> to vector<8x512xf32>
    %422 = arith.mulf %417, %421 : vector<8x512xf32>
    %c32_235 = arith.constant 32 : index
    %c0_236 = arith.constant 0 : index
    %423 = vector.load %arg20[%c32_235, %c0_236] : memref<216x512xf32, #tpu.memory_space<vmem>>, vector<8x512xf32>
    tpu.vector_store %arg20[%c32_235, %c0_236], %422 {strides = array<i32>} : memref<216x512xf32, #tpu.memory_space<vmem>>, vector<8x512xf32>,
    %c63_i32_237 = arith.constant 63 : i32
    %424 = tpu.dynamic_rotate %388 by %c63_i32_237 dim 1 : vector<8x512xf32>, i32 -> vector<8x512xf32>
    %c5_238 = arith.constant 5 : index
    %c0_239 = arith.constant 0 : index
    %425 = vector.load %arg2[%c5_238, %c0_239] : memref<27x512xf32, #tpu.memory_space<vmem>>, vector<1x512xf32>
    %426 = vector.shape_cast %425 : vector<1x512xf32> to vector<512xf32>
    %427 = vector.shape_cast %426 : vector<512xf32> to vector<1x512xf32>
    %428 = vector.broadcast %427 : vector<1x512xf32> to vector<8x512xf32>
    %429 = arith.mulf %424, %428 : vector<8x512xf32>
    %c40_240 = arith.constant 40 : index
    %c0_241 = arith.constant 0 : index
    %430 = vector.load %arg20[%c40_240, %c0_241] : memref<216x512xf32, #tpu.memory_space<vmem>>, vector<8x512xf32>
    tpu.vector_store %arg20[%c40_240, %c0_241], %429 {strides = array<i32>} : memref<216x512xf32, #tpu.memory_space<vmem>>, vector<8x512xf32>,
    %c57_i32_242 = arith.constant 57 : i32
    %431 = tpu.dynamic_rotate %388 by %c57_i32_242 dim 1 : vector<8x512xf32>, i32 -> vector<8x512xf32>
    %c6_243 = arith.constant 6 : index
    %c0_244 = arith.constant 0 : index
    %432 = vector.load %arg2[%c6_243, %c0_244] : memref<27x512xf32, #tpu.memory_space<vmem>>, vector<1x512xf32>
    %433 = vector.shape_cast %432 : vector<1x512xf32> to vector<512xf32>
    %434 = vector.shape_cast %433 : vector<512xf32> to vector<1x512xf32>
    %435 = vector.broadcast %434 : vector<1x512xf32> to vector<8x512xf32>
    %436 = arith.mulf %431, %435 : vector<8x512xf32>
    %c48_245 = arith.constant 48 : index
    %c0_246 = arith.constant 0 : index
    %437 = vector.load %arg20[%c48_245, %c0_246] : memref<216x512xf32, #tpu.memory_space<vmem>>, vector<8x512xf32>
    tpu.vector_store %arg20[%c48_245, %c0_246], %436 {strides = array<i32>} : memref<216x512xf32, #tpu.memory_space<vmem>>, vector<8x512xf32>,
    %c56_i32_247 = arith.constant 56 : i32
    %438 = tpu.dynamic_rotate %388 by %c56_i32_247 dim 1 : vector<8x512xf32>, i32 -> vector<8x512xf32>
    %c7_248 = arith.constant 7 : index
    %c0_249 = arith.constant 0 : index
    %439 = vector.load %arg2[%c7_248, %c0_249] : memref<27x512xf32, #tpu.memory_space<vmem>>, vector<1x512xf32>
    %440 = vector.shape_cast %439 : vector<1x512xf32> to vector<512xf32>
    %441 = vector.shape_cast %440 : vector<512xf32> to vector<1x512xf32>
    %442 = vector.broadcast %441 : vector<1x512xf32> to vector<8x512xf32>
    %443 = arith.mulf %438, %442 : vector<8x512xf32>
    %c56_250 = arith.constant 56 : index
    %c0_251 = arith.constant 0 : index
    %444 = vector.load %arg20[%c56_250, %c0_251] : memref<216x512xf32, #tpu.memory_space<vmem>>, vector<8x512xf32>
    tpu.vector_store %arg20[%c56_250, %c0_251], %443 {strides = array<i32>} : memref<216x512xf32, #tpu.memory_space<vmem>>, vector<8x512xf32>,
    %c55_i32_252 = arith.constant 55 : i32
    %445 = tpu.dynamic_rotate %388 by %c55_i32_252 dim 1 : vector<8x512xf32>, i32 -> vector<8x512xf32>
    %c8_253 = arith.constant 8 : index
    %c0_254 = arith.constant 0 : index
    %446 = vector.load %arg2[%c8_253, %c0_254] : memref<27x512xf32, #tpu.memory_space<vmem>>, vector<1x512xf32>
    %447 = vector.shape_cast %446 : vector<1x512xf32> to vector<512xf32>
    %448 = vector.shape_cast %447 : vector<512xf32> to vector<1x512xf32>
    %449 = vector.broadcast %448 : vector<1x512xf32> to vector<8x512xf32>
    %450 = arith.mulf %445, %449 : vector<8x512xf32>
    %c64_255 = arith.constant 64 : index
    %c0_256 = arith.constant 0 : index
    %451 = vector.load %arg20[%c64_255, %c0_256] : memref<216x512xf32, #tpu.memory_space<vmem>>, vector<8x512xf32>
    tpu.vector_store %arg20[%c64_255, %c0_256], %450 {strides = array<i32>} : memref<216x512xf32, #tpu.memory_space<vmem>>, vector<8x512xf32>,
    %c9_i32_257 = arith.constant 9 : i32
    %452 = tpu.dynamic_rotate %388 by %c9_i32_257 dim 1 : vector<8x512xf32>, i32 -> vector<8x512xf32>
    %c9_258 = arith.constant 9 : index
    %c0_259 = arith.constant 0 : index
    %453 = vector.load %arg2[%c9_258, %c0_259] : memref<27x512xf32, #tpu.memory_space<vmem>>, vector<1x512xf32>
    %454 = vector.shape_cast %453 : vector<1x512xf32> to vector<512xf32>
    %455 = vector.shape_cast %454 : vector<512xf32> to vector<1x512xf32>
    %456 = vector.broadcast %455 : vector<1x512xf32> to vector<8x512xf32>
    %457 = arith.mulf %452, %456 : vector<8x512xf32>
    %c72_260 = arith.constant 72 : index
    %c0_261 = arith.constant 0 : index
    %458 = vector.load %arg20[%c72_260, %c0_261] : memref<216x512xf32, #tpu.memory_space<vmem>>, vector<8x512xf32>
    tpu.vector_store %arg20[%c72_260, %c0_261], %457 {strides = array<i32>} : memref<216x512xf32, #tpu.memory_space<vmem>>, vector<8x512xf32>,
    %c8_i32_262 = arith.constant 8 : i32
    %459 = tpu.dynamic_rotate %388 by %c8_i32_262 dim 1 : vector<8x512xf32>, i32 -> vector<8x512xf32>
    %c10_263 = arith.constant 10 : index
    %c0_264 = arith.constant 0 : index
    %460 = vector.load %arg2[%c10_263, %c0_264] : memref<27x512xf32, #tpu.memory_space<vmem>>, vector<1x512xf32>
    %461 = vector.shape_cast %460 : vector<1x512xf32> to vector<512xf32>
    %462 = vector.shape_cast %461 : vector<512xf32> to vector<1x512xf32>
    %463 = vector.broadcast %462 : vector<1x512xf32> to vector<8x512xf32>
    %464 = arith.mulf %459, %463 : vector<8x512xf32>
    %c80_265 = arith.constant 80 : index
    %c0_266 = arith.constant 0 : index
    %465 = vector.load %arg20[%c80_265, %c0_266] : memref<216x512xf32, #tpu.memory_space<vmem>>, vector<8x512xf32>
    tpu.vector_store %arg20[%c80_265, %c0_266], %464 {strides = array<i32>} : memref<216x512xf32, #tpu.memory_space<vmem>>, vector<8x512xf32>,
    %c7_i32_267 = arith.constant 7 : i32
    %466 = tpu.dynamic_rotate %388 by %c7_i32_267 dim 1 : vector<8x512xf32>, i32 -> vector<8x512xf32>
    %c11_268 = arith.constant 11 : index
    %c0_269 = arith.constant 0 : index
    %467 = vector.load %arg2[%c11_268, %c0_269] : memref<27x512xf32, #tpu.memory_space<vmem>>, vector<1x512xf32>
    %468 = vector.shape_cast %467 : vector<1x512xf32> to vector<512xf32>
    %469 = vector.shape_cast %468 : vector<512xf32> to vector<1x512xf32>
    %470 = vector.broadcast %469 : vector<1x512xf32> to vector<8x512xf32>
    %471 = arith.mulf %466, %470 : vector<8x512xf32>
    %c88_270 = arith.constant 88 : index
    %c0_271 = arith.constant 0 : index
    %472 = vector.load %arg20[%c88_270, %c0_271] : memref<216x512xf32, #tpu.memory_space<vmem>>, vector<8x512xf32>
    tpu.vector_store %arg20[%c88_270, %c0_271], %471 {strides = array<i32>} : memref<216x512xf32, #tpu.memory_space<vmem>>, vector<8x512xf32>,
    %c1_i32_272 = arith.constant 1 : i32
    %473 = tpu.dynamic_rotate %388 by %c1_i32_272 dim 1 : vector<8x512xf32>, i32 -> vector<8x512xf32>
    %c12_273 = arith.constant 12 : index
    %c0_274 = arith.constant 0 : index
    %474 = vector.load %arg2[%c12_273, %c0_274] : memref<27x512xf32, #tpu.memory_space<vmem>>, vector<1x512xf32>
    %475 = vector.shape_cast %474 : vector<1x512xf32> to vector<512xf32>
    %476 = vector.shape_cast %475 : vector<512xf32> to vector<1x512xf32>
    %477 = vector.broadcast %476 : vector<1x512xf32> to vector<8x512xf32>
    %478 = arith.mulf %473, %477 : vector<8x512xf32>
    %c96_275 = arith.constant 96 : index
    %c0_276 = arith.constant 0 : index
    %479 = vector.load %arg20[%c96_275, %c0_276] : memref<216x512xf32, #tpu.memory_space<vmem>>, vector<8x512xf32>
    tpu.vector_store %arg20[%c96_275, %c0_276], %478 {strides = array<i32>} : memref<216x512xf32, #tpu.memory_space<vmem>>, vector<8x512xf32>,
    %c104_277 = arith.constant 104 : index
    %c0_278 = arith.constant 0 : index
    %480 = vector.load %arg20[%c104_277, %c0_278] : memref<216x512xf32, #tpu.memory_space<vmem>>, vector<8x512xf32>
    tpu.vector_store %arg20[%c104_277, %c0_278], %388 {strides = array<i32>} : memref<216x512xf32, #tpu.memory_space<vmem>>, vector<8x512xf32>,
    %c511_i32_279 = arith.constant 511 : i32
    %481 = tpu.dynamic_rotate %388 by %c511_i32_279 dim 1 : vector<8x512xf32>, i32 -> vector<8x512xf32>
    %c14_280 = arith.constant 14 : index
    %c0_281 = arith.constant 0 : index
    %482 = vector.load %arg2[%c14_280, %c0_281] : memref<27x512xf32, #tpu.memory_space<vmem>>, vector<1x512xf32>
    %483 = vector.shape_cast %482 : vector<1x512xf32> to vector<512xf32>
    %484 = vector.shape_cast %483 : vector<512xf32> to vector<1x512xf32>
    %485 = vector.broadcast %484 : vector<1x512xf32> to vector<8x512xf32>
    %486 = arith.mulf %481, %485 : vector<8x512xf32>
    %c112_282 = arith.constant 112 : index
    %c0_283 = arith.constant 0 : index
    %487 = vector.load %arg20[%c112_282, %c0_283] : memref<216x512xf32, #tpu.memory_space<vmem>>, vector<8x512xf32>
    tpu.vector_store %arg20[%c112_282, %c0_283], %486 {strides = array<i32>} : memref<216x512xf32, #tpu.memory_space<vmem>>, vector<8x512xf32>,
    %c505_i32_284 = arith.constant 505 : i32
    %488 = tpu.dynamic_rotate %388 by %c505_i32_284 dim 1 : vector<8x512xf32>, i32 -> vector<8x512xf32>
    %c15_285 = arith.constant 15 : index
    %c0_286 = arith.constant 0 : index
    %489 = vector.load %arg2[%c15_285, %c0_286] : memref<27x512xf32, #tpu.memory_space<vmem>>, vector<1x512xf32>
    %490 = vector.shape_cast %489 : vector<1x512xf32> to vector<512xf32>
    %491 = vector.shape_cast %490 : vector<512xf32> to vector<1x512xf32>
    %492 = vector.broadcast %491 : vector<1x512xf32> to vector<8x512xf32>
    %493 = arith.mulf %488, %492 : vector<8x512xf32>
    %c120_287 = arith.constant 120 : index
    %c0_288 = arith.constant 0 : index
    %494 = vector.load %arg20[%c120_287, %c0_288] : memref<216x512xf32, #tpu.memory_space<vmem>>, vector<8x512xf32>
    tpu.vector_store %arg20[%c120_287, %c0_288], %493 {strides = array<i32>} : memref<216x512xf32, #tpu.memory_space<vmem>>, vector<8x512xf32>,
    %c504_i32_289 = arith.constant 504 : i32
    %495 = tpu.dynamic_rotate %388 by %c504_i32_289 dim 1 : vector<8x512xf32>, i32 -> vector<8x512xf32>
    %c16_290 = arith.constant 16 : index
    %c0_291 = arith.constant 0 : index
    %496 = vector.load %arg2[%c16_290, %c0_291] : memref<27x512xf32, #tpu.memory_space<vmem>>, vector<1x512xf32>
    %497 = vector.shape_cast %496 : vector<1x512xf32> to vector<512xf32>
    %498 = vector.shape_cast %497 : vector<512xf32> to vector<1x512xf32>
    %499 = vector.broadcast %498 : vector<1x512xf32> to vector<8x512xf32>
    %500 = arith.mulf %495, %499 : vector<8x512xf32>
    %c128_292 = arith.constant 128 : index
    %c0_293 = arith.constant 0 : index
    %501 = vector.load %arg20[%c128_292, %c0_293] : memref<216x512xf32, #tpu.memory_space<vmem>>, vector<8x512xf32>
    tpu.vector_store %arg20[%c128_292, %c0_293], %500 {strides = array<i32>} : memref<216x512xf32, #tpu.memory_space<vmem>>, vector<8x512xf32>,
    %c503_i32_294 = arith.constant 503 : i32
    %502 = tpu.dynamic_rotate %388 by %c503_i32_294 dim 1 : vector<8x512xf32>, i32 -> vector<8x512xf32>
    %c17_295 = arith.constant 17 : index
    %c0_296 = arith.constant 0 : index
    %503 = vector.load %arg2[%c17_295, %c0_296] : memref<27x512xf32, #tpu.memory_space<vmem>>, vector<1x512xf32>
    %504 = vector.shape_cast %503 : vector<1x512xf32> to vector<512xf32>
    %505 = vector.shape_cast %504 : vector<512xf32> to vector<1x512xf32>
    %506 = vector.broadcast %505 : vector<1x512xf32> to vector<8x512xf32>
    %507 = arith.mulf %502, %506 : vector<8x512xf32>
    %c136_297 = arith.constant 136 : index
    %c0_298 = arith.constant 0 : index
    %508 = vector.load %arg20[%c136_297, %c0_298] : memref<216x512xf32, #tpu.memory_space<vmem>>, vector<8x512xf32>
    tpu.vector_store %arg20[%c136_297, %c0_298], %507 {strides = array<i32>} : memref<216x512xf32, #tpu.memory_space<vmem>>, vector<8x512xf32>,
    %c457_i32_299 = arith.constant 457 : i32
    %509 = tpu.dynamic_rotate %388 by %c457_i32_299 dim 1 : vector<8x512xf32>, i32 -> vector<8x512xf32>
    %c18_300 = arith.constant 18 : index
    %c0_301 = arith.constant 0 : index
    %510 = vector.load %arg2[%c18_300, %c0_301] : memref<27x512xf32, #tpu.memory_space<vmem>>, vector<1x512xf32>
    %511 = vector.shape_cast %510 : vector<1x512xf32> to vector<512xf32>
    %512 = vector.shape_cast %511 : vector<512xf32> to vector<1x512xf32>
    %513 = vector.broadcast %512 : vector<1x512xf32> to vector<8x512xf32>
    %514 = arith.mulf %509, %513 : vector<8x512xf32>
    %c144_302 = arith.constant 144 : index
    %c0_303 = arith.constant 0 : index
    %515 = vector.load %arg20[%c144_302, %c0_303] : memref<216x512xf32, #tpu.memory_space<vmem>>, vector<8x512xf32>
    tpu.vector_store %arg20[%c144_302, %c0_303], %514 {strides = array<i32>} : memref<216x512xf32, #tpu.memory_space<vmem>>, vector<8x512xf32>,
    %c456_i32_304 = arith.constant 456 : i32
    %516 = tpu.dynamic_rotate %388 by %c456_i32_304 dim 1 : vector<8x512xf32>, i32 -> vector<8x512xf32>
    %c19_305 = arith.constant 19 : index
    %c0_306 = arith.constant 0 : index
    %517 = vector.load %arg2[%c19_305, %c0_306] : memref<27x512xf32, #tpu.memory_space<vmem>>, vector<1x512xf32>
    %518 = vector.shape_cast %517 : vector<1x512xf32> to vector<512xf32>
    %519 = vector.shape_cast %518 : vector<512xf32> to vector<1x512xf32>
    %520 = vector.broadcast %519 : vector<1x512xf32> to vector<8x512xf32>
    %521 = arith.mulf %516, %520 : vector<8x512xf32>
    %c152_307 = arith.constant 152 : index
    %c0_308 = arith.constant 0 : index
    %522 = vector.load %arg20[%c152_307, %c0_308] : memref<216x512xf32, #tpu.memory_space<vmem>>, vector<8x512xf32>
    tpu.vector_store %arg20[%c152_307, %c0_308], %521 {strides = array<i32>} : memref<216x512xf32, #tpu.memory_space<vmem>>, vector<8x512xf32>,
    %c455_i32_309 = arith.constant 455 : i32
    %523 = tpu.dynamic_rotate %388 by %c455_i32_309 dim 1 : vector<8x512xf32>, i32 -> vector<8x512xf32>
    %c20_310 = arith.constant 20 : index
    %c0_311 = arith.constant 0 : index
    %524 = vector.load %arg2[%c20_310, %c0_311] : memref<27x512xf32, #tpu.memory_space<vmem>>, vector<1x512xf32>
    %525 = vector.shape_cast %524 : vector<1x512xf32> to vector<512xf32>
    %526 = vector.shape_cast %525 : vector<512xf32> to vector<1x512xf32>
    %527 = vector.broadcast %526 : vector<1x512xf32> to vector<8x512xf32>
    %528 = arith.mulf %523, %527 : vector<8x512xf32>
    %c160_312 = arith.constant 160 : index
    %c0_313 = arith.constant 0 : index
    %529 = vector.load %arg20[%c160_312, %c0_313] : memref<216x512xf32, #tpu.memory_space<vmem>>, vector<8x512xf32>
    tpu.vector_store %arg20[%c160_312, %c0_313], %528 {strides = array<i32>} : memref<216x512xf32, #tpu.memory_space<vmem>>, vector<8x512xf32>,
    %c449_i32_314 = arith.constant 449 : i32
    %530 = tpu.dynamic_rotate %388 by %c449_i32_314 dim 1 : vector<8x512xf32>, i32 -> vector<8x512xf32>
    %c21_315 = arith.constant 21 : index
    %c0_316 = arith.constant 0 : index
    %531 = vector.load %arg2[%c21_315, %c0_316] : memref<27x512xf32, #tpu.memory_space<vmem>>, vector<1x512xf32>
    %532 = vector.shape_cast %531 : vector<1x512xf32> to vector<512xf32>
    %533 = vector.shape_cast %532 : vector<512xf32> to vector<1x512xf32>
    %534 = vector.broadcast %533 : vector<1x512xf32> to vector<8x512xf32>
    %535 = arith.mulf %530, %534 : vector<8x512xf32>
    %c168_317 = arith.constant 168 : index
    %c0_318 = arith.constant 0 : index
    %536 = vector.load %arg20[%c168_317, %c0_318] : memref<216x512xf32, #tpu.memory_space<vmem>>, vector<8x512xf32>
    tpu.vector_store %arg20[%c168_317, %c0_318], %535 {strides = array<i32>} : memref<216x512xf32, #tpu.memory_space<vmem>>, vector<8x512xf32>,
    %c448_i32_319 = arith.constant 448 : i32
    %537 = tpu.dynamic_rotate %388 by %c448_i32_319 dim 1 : vector<8x512xf32>, i32 -> vector<8x512xf32>
    %c22_320 = arith.constant 22 : index
    %c0_321 = arith.constant 0 : index
    %538 = vector.load %arg2[%c22_320, %c0_321] : memref<27x512xf32, #tpu.memory_space<vmem>>, vector<1x512xf32>
    %539 = vector.shape_cast %538 : vector<1x512xf32> to vector<512xf32>
    %540 = vector.shape_cast %539 : vector<512xf32> to vector<1x512xf32>
    %541 = vector.broadcast %540 : vector<1x512xf32> to vector<8x512xf32>
    %542 = arith.mulf %537, %541 : vector<8x512xf32>
    %c176_322 = arith.constant 176 : index
    %c0_323 = arith.constant 0 : index
    %543 = vector.load %arg20[%c176_322, %c0_323] : memref<216x512xf32, #tpu.memory_space<vmem>>, vector<8x512xf32>
    tpu.vector_store %arg20[%c176_322, %c0_323], %542 {strides = array<i32>} : memref<216x512xf32, #tpu.memory_space<vmem>>, vector<8x512xf32>,
    %c447_i32_324 = arith.constant 447 : i32
    %544 = tpu.dynamic_rotate %388 by %c447_i32_324 dim 1 : vector<8x512xf32>, i32 -> vector<8x512xf32>
    %c23_325 = arith.constant 23 : index
    %c0_326 = arith.constant 0 : index
    %545 = vector.load %arg2[%c23_325, %c0_326] : memref<27x512xf32, #tpu.memory_space<vmem>>, vector<1x512xf32>
    %546 = vector.shape_cast %545 : vector<1x512xf32> to vector<512xf32>
    %547 = vector.shape_cast %546 : vector<512xf32> to vector<1x512xf32>
    %548 = vector.broadcast %547 : vector<1x512xf32> to vector<8x512xf32>
    %549 = arith.mulf %544, %548 : vector<8x512xf32>
    %c184_327 = arith.constant 184 : index
    %c0_328 = arith.constant 0 : index
    %550 = vector.load %arg20[%c184_327, %c0_328] : memref<216x512xf32, #tpu.memory_space<vmem>>, vector<8x512xf32>
    tpu.vector_store %arg20[%c184_327, %c0_328], %549 {strides = array<i32>} : memref<216x512xf32, #tpu.memory_space<vmem>>, vector<8x512xf32>,
    %c441_i32_329 = arith.constant 441 : i32
    %551 = tpu.dynamic_rotate %388 by %c441_i32_329 dim 1 : vector<8x512xf32>, i32 -> vector<8x512xf32>
    %c24_330 = arith.constant 24 : index
    %c0_331 = arith.constant 0 : index
    %552 = vector.load %arg2[%c24_330, %c0_331] : memref<27x512xf32, #tpu.memory_space<vmem>>, vector<1x512xf32>
    %553 = vector.shape_cast %552 : vector<1x512xf32> to vector<512xf32>
    %554 = vector.shape_cast %553 : vector<512xf32> to vector<1x512xf32>
    %555 = vector.broadcast %554 : vector<1x512xf32> to vector<8x512xf32>
    %556 = arith.mulf %551, %555 : vector<8x512xf32>
    %c192_332 = arith.constant 192 : index
    %c0_333 = arith.constant 0 : index
    %557 = vector.load %arg20[%c192_332, %c0_333] : memref<216x512xf32, #tpu.memory_space<vmem>>, vector<8x512xf32>
    tpu.vector_store %arg20[%c192_332, %c0_333], %556 {strides = array<i32>} : memref<216x512xf32, #tpu.memory_space<vmem>>, vector<8x512xf32>,
    %c440_i32_334 = arith.constant 440 : i32
    %558 = tpu.dynamic_rotate %388 by %c440_i32_334 dim 1 : vector<8x512xf32>, i32 -> vector<8x512xf32>
    %c25_335 = arith.constant 25 : index
    %c0_336 = arith.constant 0 : index
    %559 = vector.load %arg2[%c25_335, %c0_336] : memref<27x512xf32, #tpu.memory_space<vmem>>, vector<1x512xf32>
    %560 = vector.shape_cast %559 : vector<1x512xf32> to vector<512xf32>
    %561 = vector.shape_cast %560 : vector<512xf32> to vector<1x512xf32>
    %562 = vector.broadcast %561 : vector<1x512xf32> to vector<8x512xf32>
    %563 = arith.mulf %558, %562 : vector<8x512xf32>
    %c200_337 = arith.constant 200 : index
    %c0_338 = arith.constant 0 : index
    %564 = vector.load %arg20[%c200_337, %c0_338] : memref<216x512xf32, #tpu.memory_space<vmem>>, vector<8x512xf32>
    tpu.vector_store %arg20[%c200_337, %c0_338], %563 {strides = array<i32>} : memref<216x512xf32, #tpu.memory_space<vmem>>, vector<8x512xf32>,
    %c439_i32_339 = arith.constant 439 : i32
    %565 = tpu.dynamic_rotate %388 by %c439_i32_339 dim 1 : vector<8x512xf32>, i32 -> vector<8x512xf32>
    %c26_340 = arith.constant 26 : index
    %c0_341 = arith.constant 0 : index
    %566 = vector.load %arg2[%c26_340, %c0_341] : memref<27x512xf32, #tpu.memory_space<vmem>>, vector<1x512xf32>
    %567 = vector.shape_cast %566 : vector<1x512xf32> to vector<512xf32>
    %568 = vector.shape_cast %567 : vector<512xf32> to vector<1x512xf32>
    %569 = vector.broadcast %568 : vector<1x512xf32> to vector<8x512xf32>
    %570 = arith.mulf %565, %569 : vector<8x512xf32>
    %c208_342 = arith.constant 208 : index
    %c0_343 = arith.constant 0 : index
    %571 = vector.load %arg20[%c208_342, %c0_343] : memref<216x512xf32, #tpu.memory_space<vmem>>, vector<8x512xf32>
    tpu.vector_store %arg20[%c208_342, %c0_343], %570 {strides = array<i32>} : memref<216x512xf32, #tpu.memory_space<vmem>>, vector<8x512xf32>,
    %c0_344 = arith.constant 0 : index
    %c0_345 = arith.constant 0 : index
    %572 = vector.load %arg11[%c0_344, %c0_345] : memref<8x216xf32, #tpu.memory_space<vmem>>, vector<8x216xf32>
    %c0_346 = arith.constant 0 : index
    %c0_347 = arith.constant 0 : index
    %573 = vector.load %arg20[%c0_346, %c0_347] : memref<216x512xf32, #tpu.memory_space<vmem>>, vector<216x512xf32>
    %cst_348 = arith.constant dense<0.000000e+00> : vector<8x512xf32>
    %574 = tpu.matmul %572, %573, %cst_348 {dimension_numbers = #tpu.dot_dimension_numbers<[1], [0], [0], [1], [0, 0, 1, 1], [], []>} : vector<8x216xf32>, vector<216x512xf32>, vector<8x512xf32> -> vector<8x512xf32>
    %c0_349 = arith.constant 0 : index
    %c0_350 = arith.constant 0 : index
    %575 = vector.load %arg12[%c0_349, %c0_350] : memref<8x1xf32, #tpu.memory_space<vmem>>, vector<8x1xf32>
    %576 = vector.broadcast %575 : vector<8x1xf32> to vector<8x512xf32>
    %577 = arith.addf %574, %576 : vector<8x512xf32>
    %578 = arith.addf %577, %197 : vector<8x512xf32>
    %cst_351 = arith.constant 0.000000e+00 : f32
    %579 = vector.broadcast %cst_351 : f32 to vector<8x512xf32>
    %580 = arith.maximumf %578, %579 : vector<8x512xf32>
    %c73_i32_352 = arith.constant 73 : i32
    %581 = tpu.dynamic_rotate %580 by %c73_i32_352 dim 1 : vector<8x512xf32>, i32 -> vector<8x512xf32>
    %c0_353 = arith.constant 0 : index
    %c0_354 = arith.constant 0 : index
    %582 = vector.load %arg2[%c0_353, %c0_354] : memref<27x512xf32, #tpu.memory_space<vmem>>, vector<1x512xf32>
    %583 = vector.shape_cast %582 : vector<1x512xf32> to vector<512xf32>
    %584 = vector.shape_cast %583 : vector<512xf32> to vector<1x512xf32>
    %585 = vector.broadcast %584 : vector<1x512xf32> to vector<8x512xf32>
    %586 = arith.mulf %581, %585 : vector<8x512xf32>
    %c0_355 = arith.constant 0 : index
    %c0_356 = arith.constant 0 : index
    %587 = vector.load %arg20[%c0_355, %c0_356] : memref<216x512xf32, #tpu.memory_space<vmem>>, vector<8x512xf32>
    tpu.vector_store %arg20[%c0_355, %c0_356], %586 {strides = array<i32>} : memref<216x512xf32, #tpu.memory_space<vmem>>, vector<8x512xf32>,
    %c72_i32_357 = arith.constant 72 : i32
    %588 = tpu.dynamic_rotate %580 by %c72_i32_357 dim 1 : vector<8x512xf32>, i32 -> vector<8x512xf32>
    %c1_358 = arith.constant 1 : index
    %c0_359 = arith.constant 0 : index
    %589 = vector.load %arg2[%c1_358, %c0_359] : memref<27x512xf32, #tpu.memory_space<vmem>>, vector<1x512xf32>
    %590 = vector.shape_cast %589 : vector<1x512xf32> to vector<512xf32>
    %591 = vector.shape_cast %590 : vector<512xf32> to vector<1x512xf32>
    %592 = vector.broadcast %591 : vector<1x512xf32> to vector<8x512xf32>
    %593 = arith.mulf %588, %592 : vector<8x512xf32>
    %c8_360 = arith.constant 8 : index
    %c0_361 = arith.constant 0 : index
    %594 = vector.load %arg20[%c8_360, %c0_361] : memref<216x512xf32, #tpu.memory_space<vmem>>, vector<8x512xf32>
    tpu.vector_store %arg20[%c8_360, %c0_361], %593 {strides = array<i32>} : memref<216x512xf32, #tpu.memory_space<vmem>>, vector<8x512xf32>,
    %c71_i32_362 = arith.constant 71 : i32
    %595 = tpu.dynamic_rotate %580 by %c71_i32_362 dim 1 : vector<8x512xf32>, i32 -> vector<8x512xf32>
    %c2_363 = arith.constant 2 : index
    %c0_364 = arith.constant 0 : index
    %596 = vector.load %arg2[%c2_363, %c0_364] : memref<27x512xf32, #tpu.memory_space<vmem>>, vector<1x512xf32>
    %597 = vector.shape_cast %596 : vector<1x512xf32> to vector<512xf32>
    %598 = vector.shape_cast %597 : vector<512xf32> to vector<1x512xf32>
    %599 = vector.broadcast %598 : vector<1x512xf32> to vector<8x512xf32>
    %600 = arith.mulf %595, %599 : vector<8x512xf32>
    %c16_365 = arith.constant 16 : index
    %c0_366 = arith.constant 0 : index
    %601 = vector.load %arg20[%c16_365, %c0_366] : memref<216x512xf32, #tpu.memory_space<vmem>>, vector<8x512xf32>
    tpu.vector_store %arg20[%c16_365, %c0_366], %600 {strides = array<i32>} : memref<216x512xf32, #tpu.memory_space<vmem>>, vector<8x512xf32>,
    %c65_i32_367 = arith.constant 65 : i32
    %602 = tpu.dynamic_rotate %580 by %c65_i32_367 dim 1 : vector<8x512xf32>, i32 -> vector<8x512xf32>
    %c3_368 = arith.constant 3 : index
    %c0_369 = arith.constant 0 : index
    %603 = vector.load %arg2[%c3_368, %c0_369] : memref<27x512xf32, #tpu.memory_space<vmem>>, vector<1x512xf32>
    %604 = vector.shape_cast %603 : vector<1x512xf32> to vector<512xf32>
    %605 = vector.shape_cast %604 : vector<512xf32> to vector<1x512xf32>
    %606 = vector.broadcast %605 : vector<1x512xf32> to vector<8x512xf32>
    %607 = arith.mulf %602, %606 : vector<8x512xf32>
    %c24_370 = arith.constant 24 : index
    %c0_371 = arith.constant 0 : index
    %608 = vector.load %arg20[%c24_370, %c0_371] : memref<216x512xf32, #tpu.memory_space<vmem>>, vector<8x512xf32>
    tpu.vector_store %arg20[%c24_370, %c0_371], %607 {strides = array<i32>} : memref<216x512xf32, #tpu.memory_space<vmem>>, vector<8x512xf32>,
    %c64_i32_372 = arith.constant 64 : i32
    %609 = tpu.dynamic_rotate %580 by %c64_i32_372 dim 1 : vector<8x512xf32>, i32 -> vector<8x512xf32>
    %c4_373 = arith.constant 4 : index
    %c0_374 = arith.constant 0 : index
    %610 = vector.load %arg2[%c4_373, %c0_374] : memref<27x512xf32, #tpu.memory_space<vmem>>, vector<1x512xf32>
    %611 = vector.shape_cast %610 : vector<1x512xf32> to vector<512xf32>
    %612 = vector.shape_cast %611 : vector<512xf32> to vector<1x512xf32>
    %613 = vector.broadcast %612 : vector<1x512xf32> to vector<8x512xf32>
    %614 = arith.mulf %609, %613 : vector<8x512xf32>
    %c32_375 = arith.constant 32 : index
    %c0_376 = arith.constant 0 : index
    %615 = vector.load %arg20[%c32_375, %c0_376] : memref<216x512xf32, #tpu.memory_space<vmem>>, vector<8x512xf32>
    tpu.vector_store %arg20[%c32_375, %c0_376], %614 {strides = array<i32>} : memref<216x512xf32, #tpu.memory_space<vmem>>, vector<8x512xf32>,
    %c63_i32_377 = arith.constant 63 : i32
    %616 = tpu.dynamic_rotate %580 by %c63_i32_377 dim 1 : vector<8x512xf32>, i32 -> vector<8x512xf32>
    %c5_378 = arith.constant 5 : index
    %c0_379 = arith.constant 0 : index
    %617 = vector.load %arg2[%c5_378, %c0_379] : memref<27x512xf32, #tpu.memory_space<vmem>>, vector<1x512xf32>
    %618 = vector.shape_cast %617 : vector<1x512xf32> to vector<512xf32>
    %619 = vector.shape_cast %618 : vector<512xf32> to vector<1x512xf32>
    %620 = vector.broadcast %619 : vector<1x512xf32> to vector<8x512xf32>
    %621 = arith.mulf %616, %620 : vector<8x512xf32>
    %c40_380 = arith.constant 40 : index
    %c0_381 = arith.constant 0 : index
    %622 = vector.load %arg20[%c40_380, %c0_381] : memref<216x512xf32, #tpu.memory_space<vmem>>, vector<8x512xf32>
    tpu.vector_store %arg20[%c40_380, %c0_381], %621 {strides = array<i32>} : memref<216x512xf32, #tpu.memory_space<vmem>>, vector<8x512xf32>,
    %c57_i32_382 = arith.constant 57 : i32
    %623 = tpu.dynamic_rotate %580 by %c57_i32_382 dim 1 : vector<8x512xf32>, i32 -> vector<8x512xf32>
    %c6_383 = arith.constant 6 : index
    %c0_384 = arith.constant 0 : index
    %624 = vector.load %arg2[%c6_383, %c0_384] : memref<27x512xf32, #tpu.memory_space<vmem>>, vector<1x512xf32>
    %625 = vector.shape_cast %624 : vector<1x512xf32> to vector<512xf32>
    %626 = vector.shape_cast %625 : vector<512xf32> to vector<1x512xf32>
    %627 = vector.broadcast %626 : vector<1x512xf32> to vector<8x512xf32>
    %628 = arith.mulf %623, %627 : vector<8x512xf32>
    %c48_385 = arith.constant 48 : index
    %c0_386 = arith.constant 0 : index
    %629 = vector.load %arg20[%c48_385, %c0_386] : memref<216x512xf32, #tpu.memory_space<vmem>>, vector<8x512xf32>
    tpu.vector_store %arg20[%c48_385, %c0_386], %628 {strides = array<i32>} : memref<216x512xf32, #tpu.memory_space<vmem>>, vector<8x512xf32>,
    %c56_i32_387 = arith.constant 56 : i32
    %630 = tpu.dynamic_rotate %580 by %c56_i32_387 dim 1 : vector<8x512xf32>, i32 -> vector<8x512xf32>
    %c7_388 = arith.constant 7 : index
    %c0_389 = arith.constant 0 : index
    %631 = vector.load %arg2[%c7_388, %c0_389] : memref<27x512xf32, #tpu.memory_space<vmem>>, vector<1x512xf32>
    %632 = vector.shape_cast %631 : vector<1x512xf32> to vector<512xf32>
    %633 = vector.shape_cast %632 : vector<512xf32> to vector<1x512xf32>
    %634 = vector.broadcast %633 : vector<1x512xf32> to vector<8x512xf32>
    %635 = arith.mulf %630, %634 : vector<8x512xf32>
    %c56_390 = arith.constant 56 : index
    %c0_391 = arith.constant 0 : index
    %636 = vector.load %arg20[%c56_390, %c0_391] : memref<216x512xf32, #tpu.memory_space<vmem>>, vector<8x512xf32>
    tpu.vector_store %arg20[%c56_390, %c0_391], %635 {strides = array<i32>} : memref<216x512xf32, #tpu.memory_space<vmem>>, vector<8x512xf32>,
    %c55_i32_392 = arith.constant 55 : i32
    %637 = tpu.dynamic_rotate %580 by %c55_i32_392 dim 1 : vector<8x512xf32>, i32 -> vector<8x512xf32>
    %c8_393 = arith.constant 8 : index
    %c0_394 = arith.constant 0 : index
    %638 = vector.load %arg2[%c8_393, %c0_394] : memref<27x512xf32, #tpu.memory_space<vmem>>, vector<1x512xf32>
    %639 = vector.shape_cast %638 : vector<1x512xf32> to vector<512xf32>
    %640 = vector.shape_cast %639 : vector<512xf32> to vector<1x512xf32>
    %641 = vector.broadcast %640 : vector<1x512xf32> to vector<8x512xf32>
    %642 = arith.mulf %637, %641 : vector<8x512xf32>
    %c64_395 = arith.constant 64 : index
    %c0_396 = arith.constant 0 : index
    %643 = vector.load %arg20[%c64_395, %c0_396] : memref<216x512xf32, #tpu.memory_space<vmem>>, vector<8x512xf32>
    tpu.vector_store %arg20[%c64_395, %c0_396], %642 {strides = array<i32>} : memref<216x512xf32, #tpu.memory_space<vmem>>, vector<8x512xf32>,
    %c9_i32_397 = arith.constant 9 : i32
    %644 = tpu.dynamic_rotate %580 by %c9_i32_397 dim 1 : vector<8x512xf32>, i32 -> vector<8x512xf32>
    %c9_398 = arith.constant 9 : index
    %c0_399 = arith.constant 0 : index
    %645 = vector.load %arg2[%c9_398, %c0_399] : memref<27x512xf32, #tpu.memory_space<vmem>>, vector<1x512xf32>
    %646 = vector.shape_cast %645 : vector<1x512xf32> to vector<512xf32>
    %647 = vector.shape_cast %646 : vector<512xf32> to vector<1x512xf32>
    %648 = vector.broadcast %647 : vector<1x512xf32> to vector<8x512xf32>
    %649 = arith.mulf %644, %648 : vector<8x512xf32>
    %c72_400 = arith.constant 72 : index
    %c0_401 = arith.constant 0 : index
    %650 = vector.load %arg20[%c72_400, %c0_401] : memref<216x512xf32, #tpu.memory_space<vmem>>, vector<8x512xf32>
    tpu.vector_store %arg20[%c72_400, %c0_401], %649 {strides = array<i32>} : memref<216x512xf32, #tpu.memory_space<vmem>>, vector<8x512xf32>,
    %c8_i32_402 = arith.constant 8 : i32
    %651 = tpu.dynamic_rotate %580 by %c8_i32_402 dim 1 : vector<8x512xf32>, i32 -> vector<8x512xf32>
    %c10_403 = arith.constant 10 : index
    %c0_404 = arith.constant 0 : index
    %652 = vector.load %arg2[%c10_403, %c0_404] : memref<27x512xf32, #tpu.memory_space<vmem>>, vector<1x512xf32>
    %653 = vector.shape_cast %652 : vector<1x512xf32> to vector<512xf32>
    %654 = vector.shape_cast %653 : vector<512xf32> to vector<1x512xf32>
    %655 = vector.broadcast %654 : vector<1x512xf32> to vector<8x512xf32>
    %656 = arith.mulf %651, %655 : vector<8x512xf32>
    %c80_405 = arith.constant 80 : index
    %c0_406 = arith.constant 0 : index
    %657 = vector.load %arg20[%c80_405, %c0_406] : memref<216x512xf32, #tpu.memory_space<vmem>>, vector<8x512xf32>
    tpu.vector_store %arg20[%c80_405, %c0_406], %656 {strides = array<i32>} : memref<216x512xf32, #tpu.memory_space<vmem>>, vector<8x512xf32>,
    %c7_i32_407 = arith.constant 7 : i32
    %658 = tpu.dynamic_rotate %580 by %c7_i32_407 dim 1 : vector<8x512xf32>, i32 -> vector<8x512xf32>
    %c11_408 = arith.constant 11 : index
    %c0_409 = arith.constant 0 : index
    %659 = vector.load %arg2[%c11_408, %c0_409] : memref<27x512xf32, #tpu.memory_space<vmem>>, vector<1x512xf32>
    %660 = vector.shape_cast %659 : vector<1x512xf32> to vector<512xf32>
    %661 = vector.shape_cast %660 : vector<512xf32> to vector<1x512xf32>
    %662 = vector.broadcast %661 : vector<1x512xf32> to vector<8x512xf32>
    %663 = arith.mulf %658, %662 : vector<8x512xf32>
    %c88_410 = arith.constant 88 : index
    %c0_411 = arith.constant 0 : index
    %664 = vector.load %arg20[%c88_410, %c0_411] : memref<216x512xf32, #tpu.memory_space<vmem>>, vector<8x512xf32>
    tpu.vector_store %arg20[%c88_410, %c0_411], %663 {strides = array<i32>} : memref<216x512xf32, #tpu.memory_space<vmem>>, vector<8x512xf32>,
    %c1_i32_412 = arith.constant 1 : i32
    %665 = tpu.dynamic_rotate %580 by %c1_i32_412 dim 1 : vector<8x512xf32>, i32 -> vector<8x512xf32>
    %c12_413 = arith.constant 12 : index
    %c0_414 = arith.constant 0 : index
    %666 = vector.load %arg2[%c12_413, %c0_414] : memref<27x512xf32, #tpu.memory_space<vmem>>, vector<1x512xf32>
    %667 = vector.shape_cast %666 : vector<1x512xf32> to vector<512xf32>
    %668 = vector.shape_cast %667 : vector<512xf32> to vector<1x512xf32>
    %669 = vector.broadcast %668 : vector<1x512xf32> to vector<8x512xf32>
    %670 = arith.mulf %665, %669 : vector<8x512xf32>
    %c96_415 = arith.constant 96 : index
    %c0_416 = arith.constant 0 : index
    %671 = vector.load %arg20[%c96_415, %c0_416] : memref<216x512xf32, #tpu.memory_space<vmem>>, vector<8x512xf32>
    tpu.vector_store %arg20[%c96_415, %c0_416], %670 {strides = array<i32>} : memref<216x512xf32, #tpu.memory_space<vmem>>, vector<8x512xf32>,
    %c104_417 = arith.constant 104 : index
    %c0_418 = arith.constant 0 : index
    %672 = vector.load %arg20[%c104_417, %c0_418] : memref<216x512xf32, #tpu.memory_space<vmem>>, vector<8x512xf32>
    tpu.vector_store %arg20[%c104_417, %c0_418], %580 {strides = array<i32>} : memref<216x512xf32, #tpu.memory_space<vmem>>, vector<8x512xf32>,
    %c511_i32_419 = arith.constant 511 : i32
    %673 = tpu.dynamic_rotate %580 by %c511_i32_419 dim 1 : vector<8x512xf32>, i32 -> vector<8x512xf32>
    %c14_420 = arith.constant 14 : index
    %c0_421 = arith.constant 0 : index
    %674 = vector.load %arg2[%c14_420, %c0_421] : memref<27x512xf32, #tpu.memory_space<vmem>>, vector<1x512xf32>
    %675 = vector.shape_cast %674 : vector<1x512xf32> to vector<512xf32>
    %676 = vector.shape_cast %675 : vector<512xf32> to vector<1x512xf32>
    %677 = vector.broadcast %676 : vector<1x512xf32> to vector<8x512xf32>
    %678 = arith.mulf %673, %677 : vector<8x512xf32>
    %c112_422 = arith.constant 112 : index
    %c0_423 = arith.constant 0 : index
    %679 = vector.load %arg20[%c112_422, %c0_423] : memref<216x512xf32, #tpu.memory_space<vmem>>, vector<8x512xf32>
    tpu.vector_store %arg20[%c112_422, %c0_423], %678 {strides = array<i32>} : memref<216x512xf32, #tpu.memory_space<vmem>>, vector<8x512xf32>,
    %c505_i32_424 = arith.constant 505 : i32
    %680 = tpu.dynamic_rotate %580 by %c505_i32_424 dim 1 : vector<8x512xf32>, i32 -> vector<8x512xf32>
    %c15_425 = arith.constant 15 : index
    %c0_426 = arith.constant 0 : index
    %681 = vector.load %arg2[%c15_425, %c0_426] : memref<27x512xf32, #tpu.memory_space<vmem>>, vector<1x512xf32>
    %682 = vector.shape_cast %681 : vector<1x512xf32> to vector<512xf32>
    %683 = vector.shape_cast %682 : vector<512xf32> to vector<1x512xf32>
    %684 = vector.broadcast %683 : vector<1x512xf32> to vector<8x512xf32>
    %685 = arith.mulf %680, %684 : vector<8x512xf32>
    %c120_427 = arith.constant 120 : index
    %c0_428 = arith.constant 0 : index
    %686 = vector.load %arg20[%c120_427, %c0_428] : memref<216x512xf32, #tpu.memory_space<vmem>>, vector<8x512xf32>
    tpu.vector_store %arg20[%c120_427, %c0_428], %685 {strides = array<i32>} : memref<216x512xf32, #tpu.memory_space<vmem>>, vector<8x512xf32>,
    %c504_i32_429 = arith.constant 504 : i32
    %687 = tpu.dynamic_rotate %580 by %c504_i32_429 dim 1 : vector<8x512xf32>, i32 -> vector<8x512xf32>
    %c16_430 = arith.constant 16 : index
    %c0_431 = arith.constant 0 : index
    %688 = vector.load %arg2[%c16_430, %c0_431] : memref<27x512xf32, #tpu.memory_space<vmem>>, vector<1x512xf32>
    %689 = vector.shape_cast %688 : vector<1x512xf32> to vector<512xf32>
    %690 = vector.shape_cast %689 : vector<512xf32> to vector<1x512xf32>
    %691 = vector.broadcast %690 : vector<1x512xf32> to vector<8x512xf32>
    %692 = arith.mulf %687, %691 : vector<8x512xf32>
    %c128_432 = arith.constant 128 : index
    %c0_433 = arith.constant 0 : index
    %693 = vector.load %arg20[%c128_432, %c0_433] : memref<216x512xf32, #tpu.memory_space<vmem>>, vector<8x512xf32>
    tpu.vector_store %arg20[%c128_432, %c0_433], %692 {strides = array<i32>} : memref<216x512xf32, #tpu.memory_space<vmem>>, vector<8x512xf32>,
    %c503_i32_434 = arith.constant 503 : i32
    %694 = tpu.dynamic_rotate %580 by %c503_i32_434 dim 1 : vector<8x512xf32>, i32 -> vector<8x512xf32>
    %c17_435 = arith.constant 17 : index
    %c0_436 = arith.constant 0 : index
    %695 = vector.load %arg2[%c17_435, %c0_436] : memref<27x512xf32, #tpu.memory_space<vmem>>, vector<1x512xf32>
    %696 = vector.shape_cast %695 : vector<1x512xf32> to vector<512xf32>
    %697 = vector.shape_cast %696 : vector<512xf32> to vector<1x512xf32>
    %698 = vector.broadcast %697 : vector<1x512xf32> to vector<8x512xf32>
    %699 = arith.mulf %694, %698 : vector<8x512xf32>
    %c136_437 = arith.constant 136 : index
    %c0_438 = arith.constant 0 : index
    %700 = vector.load %arg20[%c136_437, %c0_438] : memref<216x512xf32, #tpu.memory_space<vmem>>, vector<8x512xf32>
    tpu.vector_store %arg20[%c136_437, %c0_438], %699 {strides = array<i32>} : memref<216x512xf32, #tpu.memory_space<vmem>>, vector<8x512xf32>,
    %c457_i32_439 = arith.constant 457 : i32
    %701 = tpu.dynamic_rotate %580 by %c457_i32_439 dim 1 : vector<8x512xf32>, i32 -> vector<8x512xf32>
    %c18_440 = arith.constant 18 : index
    %c0_441 = arith.constant 0 : index
    %702 = vector.load %arg2[%c18_440, %c0_441] : memref<27x512xf32, #tpu.memory_space<vmem>>, vector<1x512xf32>
    %703 = vector.shape_cast %702 : vector<1x512xf32> to vector<512xf32>
    %704 = vector.shape_cast %703 : vector<512xf32> to vector<1x512xf32>
    %705 = vector.broadcast %704 : vector<1x512xf32> to vector<8x512xf32>
    %706 = arith.mulf %701, %705 : vector<8x512xf32>
    %c144_442 = arith.constant 144 : index
    %c0_443 = arith.constant 0 : index
    %707 = vector.load %arg20[%c144_442, %c0_443] : memref<216x512xf32, #tpu.memory_space<vmem>>, vector<8x512xf32>
    tpu.vector_store %arg20[%c144_442, %c0_443], %706 {strides = array<i32>} : memref<216x512xf32, #tpu.memory_space<vmem>>, vector<8x512xf32>,
    %c456_i32_444 = arith.constant 456 : i32
    %708 = tpu.dynamic_rotate %580 by %c456_i32_444 dim 1 : vector<8x512xf32>, i32 -> vector<8x512xf32>
    %c19_445 = arith.constant 19 : index
    %c0_446 = arith.constant 0 : index
    %709 = vector.load %arg2[%c19_445, %c0_446] : memref<27x512xf32, #tpu.memory_space<vmem>>, vector<1x512xf32>
    %710 = vector.shape_cast %709 : vector<1x512xf32> to vector<512xf32>
    %711 = vector.shape_cast %710 : vector<512xf32> to vector<1x512xf32>
    %712 = vector.broadcast %711 : vector<1x512xf32> to vector<8x512xf32>
    %713 = arith.mulf %708, %712 : vector<8x512xf32>
    %c152_447 = arith.constant 152 : index
    %c0_448 = arith.constant 0 : index
    %714 = vector.load %arg20[%c152_447, %c0_448] : memref<216x512xf32, #tpu.memory_space<vmem>>, vector<8x512xf32>
    tpu.vector_store %arg20[%c152_447, %c0_448], %713 {strides = array<i32>} : memref<216x512xf32, #tpu.memory_space<vmem>>, vector<8x512xf32>,
    %c455_i32_449 = arith.constant 455 : i32
    %715 = tpu.dynamic_rotate %580 by %c455_i32_449 dim 1 : vector<8x512xf32>, i32 -> vector<8x512xf32>
    %c20_450 = arith.constant 20 : index
    %c0_451 = arith.constant 0 : index
    %716 = vector.load %arg2[%c20_450, %c0_451] : memref<27x512xf32, #tpu.memory_space<vmem>>, vector<1x512xf32>
    %717 = vector.shape_cast %716 : vector<1x512xf32> to vector<512xf32>
    %718 = vector.shape_cast %717 : vector<512xf32> to vector<1x512xf32>
    %719 = vector.broadcast %718 : vector<1x512xf32> to vector<8x512xf32>
    %720 = arith.mulf %715, %719 : vector<8x512xf32>
    %c160_452 = arith.constant 160 : index
    %c0_453 = arith.constant 0 : index
    %721 = vector.load %arg20[%c160_452, %c0_453] : memref<216x512xf32, #tpu.memory_space<vmem>>, vector<8x512xf32>
    tpu.vector_store %arg20[%c160_452, %c0_453], %720 {strides = array<i32>} : memref<216x512xf32, #tpu.memory_space<vmem>>, vector<8x512xf32>,
    %c449_i32_454 = arith.constant 449 : i32
    %722 = tpu.dynamic_rotate %580 by %c449_i32_454 dim 1 : vector<8x512xf32>, i32 -> vector<8x512xf32>
    %c21_455 = arith.constant 21 : index
    %c0_456 = arith.constant 0 : index
    %723 = vector.load %arg2[%c21_455, %c0_456] : memref<27x512xf32, #tpu.memory_space<vmem>>, vector<1x512xf32>
    %724 = vector.shape_cast %723 : vector<1x512xf32> to vector<512xf32>
    %725 = vector.shape_cast %724 : vector<512xf32> to vector<1x512xf32>
    %726 = vector.broadcast %725 : vector<1x512xf32> to vector<8x512xf32>
    %727 = arith.mulf %722, %726 : vector<8x512xf32>
    %c168_457 = arith.constant 168 : index
    %c0_458 = arith.constant 0 : index
    %728 = vector.load %arg20[%c168_457, %c0_458] : memref<216x512xf32, #tpu.memory_space<vmem>>, vector<8x512xf32>
    tpu.vector_store %arg20[%c168_457, %c0_458], %727 {strides = array<i32>} : memref<216x512xf32, #tpu.memory_space<vmem>>, vector<8x512xf32>,
    %c448_i32_459 = arith.constant 448 : i32
    %729 = tpu.dynamic_rotate %580 by %c448_i32_459 dim 1 : vector<8x512xf32>, i32 -> vector<8x512xf32>
    %c22_460 = arith.constant 22 : index
    %c0_461 = arith.constant 0 : index
    %730 = vector.load %arg2[%c22_460, %c0_461] : memref<27x512xf32, #tpu.memory_space<vmem>>, vector<1x512xf32>
    %731 = vector.shape_cast %730 : vector<1x512xf32> to vector<512xf32>
    %732 = vector.shape_cast %731 : vector<512xf32> to vector<1x512xf32>
    %733 = vector.broadcast %732 : vector<1x512xf32> to vector<8x512xf32>
    %734 = arith.mulf %729, %733 : vector<8x512xf32>
    %c176_462 = arith.constant 176 : index
    %c0_463 = arith.constant 0 : index
    %735 = vector.load %arg20[%c176_462, %c0_463] : memref<216x512xf32, #tpu.memory_space<vmem>>, vector<8x512xf32>
    tpu.vector_store %arg20[%c176_462, %c0_463], %734 {strides = array<i32>} : memref<216x512xf32, #tpu.memory_space<vmem>>, vector<8x512xf32>,
    %c447_i32_464 = arith.constant 447 : i32
    %736 = tpu.dynamic_rotate %580 by %c447_i32_464 dim 1 : vector<8x512xf32>, i32 -> vector<8x512xf32>
    %c23_465 = arith.constant 23 : index
    %c0_466 = arith.constant 0 : index
    %737 = vector.load %arg2[%c23_465, %c0_466] : memref<27x512xf32, #tpu.memory_space<vmem>>, vector<1x512xf32>
    %738 = vector.shape_cast %737 : vector<1x512xf32> to vector<512xf32>
    %739 = vector.shape_cast %738 : vector<512xf32> to vector<1x512xf32>
    %740 = vector.broadcast %739 : vector<1x512xf32> to vector<8x512xf32>
    %741 = arith.mulf %736, %740 : vector<8x512xf32>
    %c184_467 = arith.constant 184 : index
    %c0_468 = arith.constant 0 : index
    %742 = vector.load %arg20[%c184_467, %c0_468] : memref<216x512xf32, #tpu.memory_space<vmem>>, vector<8x512xf32>
    tpu.vector_store %arg20[%c184_467, %c0_468], %741 {strides = array<i32>} : memref<216x512xf32, #tpu.memory_space<vmem>>, vector<8x512xf32>,
    %c441_i32_469 = arith.constant 441 : i32
    %743 = tpu.dynamic_rotate %580 by %c441_i32_469 dim 1 : vector<8x512xf32>, i32 -> vector<8x512xf32>
    %c24_470 = arith.constant 24 : index
    %c0_471 = arith.constant 0 : index
    %744 = vector.load %arg2[%c24_470, %c0_471] : memref<27x512xf32, #tpu.memory_space<vmem>>, vector<1x512xf32>
    %745 = vector.shape_cast %744 : vector<1x512xf32> to vector<512xf32>
    %746 = vector.shape_cast %745 : vector<512xf32> to vector<1x512xf32>
    %747 = vector.broadcast %746 : vector<1x512xf32> to vector<8x512xf32>
    %748 = arith.mulf %743, %747 : vector<8x512xf32>
    %c192_472 = arith.constant 192 : index
    %c0_473 = arith.constant 0 : index
    %749 = vector.load %arg20[%c192_472, %c0_473] : memref<216x512xf32, #tpu.memory_space<vmem>>, vector<8x512xf32>
    tpu.vector_store %arg20[%c192_472, %c0_473], %748 {strides = array<i32>} : memref<216x512xf32, #tpu.memory_space<vmem>>, vector<8x512xf32>,
    %c440_i32_474 = arith.constant 440 : i32
    %750 = tpu.dynamic_rotate %580 by %c440_i32_474 dim 1 : vector<8x512xf32>, i32 -> vector<8x512xf32>
    %c25_475 = arith.constant 25 : index
    %c0_476 = arith.constant 0 : index
    %751 = vector.load %arg2[%c25_475, %c0_476] : memref<27x512xf32, #tpu.memory_space<vmem>>, vector<1x512xf32>
    %752 = vector.shape_cast %751 : vector<1x512xf32> to vector<512xf32>
    %753 = vector.shape_cast %752 : vector<512xf32> to vector<1x512xf32>
    %754 = vector.broadcast %753 : vector<1x512xf32> to vector<8x512xf32>
    %755 = arith.mulf %750, %754 : vector<8x512xf32>
    %c200_477 = arith.constant 200 : index
    %c0_478 = arith.constant 0 : index
    %756 = vector.load %arg20[%c200_477, %c0_478] : memref<216x512xf32, #tpu.memory_space<vmem>>, vector<8x512xf32>
    tpu.vector_store %arg20[%c200_477, %c0_478], %755 {strides = array<i32>} : memref<216x512xf32, #tpu.memory_space<vmem>>, vector<8x512xf32>,
    %c439_i32_479 = arith.constant 439 : i32
    %757 = tpu.dynamic_rotate %580 by %c439_i32_479 dim 1 : vector<8x512xf32>, i32 -> vector<8x512xf32>
    %c26_480 = arith.constant 26 : index
    %c0_481 = arith.constant 0 : index
    %758 = vector.load %arg2[%c26_480, %c0_481] : memref<27x512xf32, #tpu.memory_space<vmem>>, vector<1x512xf32>
    %759 = vector.shape_cast %758 : vector<1x512xf32> to vector<512xf32>
    %760 = vector.shape_cast %759 : vector<512xf32> to vector<1x512xf32>
    %761 = vector.broadcast %760 : vector<1x512xf32> to vector<8x512xf32>
    %762 = arith.mulf %757, %761 : vector<8x512xf32>
    %c208_482 = arith.constant 208 : index
    %c0_483 = arith.constant 0 : index
    %763 = vector.load %arg20[%c208_482, %c0_483] : memref<216x512xf32, #tpu.memory_space<vmem>>, vector<8x512xf32>
    tpu.vector_store %arg20[%c208_482, %c0_483], %762 {strides = array<i32>} : memref<216x512xf32, #tpu.memory_space<vmem>>, vector<8x512xf32>,
    %c0_484 = arith.constant 0 : index
    %c0_485 = arith.constant 0 : index
    %764 = vector.load %arg13[%c0_484, %c0_485] : memref<16x216xf32, #tpu.memory_space<vmem>>, vector<16x216xf32>
    %c0_486 = arith.constant 0 : index
    %c0_487 = arith.constant 0 : index
    %765 = vector.load %arg20[%c0_486, %c0_487] : memref<216x512xf32, #tpu.memory_space<vmem>>, vector<216x512xf32>
    %cst_488 = arith.constant dense<0.000000e+00> : vector<16x512xf32>
    %766 = tpu.matmul %764, %765, %cst_488 {dimension_numbers = #tpu.dot_dimension_numbers<[1], [0], [0], [1], [0, 0, 1, 1], [], []>} : vector<16x216xf32>, vector<216x512xf32>, vector<16x512xf32> -> vector<16x512xf32>
    %c0_489 = arith.constant 0 : index
    %c0_490 = arith.constant 0 : index
    %767 = vector.load %arg14[%c0_489, %c0_490] : memref<16x1xf32, #tpu.memory_space<vmem>>, vector<16x1xf32>
    %768 = vector.broadcast %767 : vector<16x1xf32> to vector<16x512xf32>
    %769 = arith.addf %766, %768 : vector<16x512xf32>
    %cst_491 = arith.constant 0.000000e+00 : f32
    %770 = vector.broadcast %cst_491 : f32 to vector<16x512xf32>
    %771 = arith.maximumf %769, %770 : vector<16x512xf32>
    %c0_492 = arith.constant 0 : index
    %c0_493 = arith.constant 0 : index
    %772 = vector.load %arg4[%c0_492, %c0_493] : memref<512x128xf32, #tpu.memory_space<vmem>>, vector<512x128xf32>
    %cst_494 = arith.constant dense<0.000000e+00> : vector<16x128xf32>
    %773 = tpu.matmul %771, %772, %cst_494 {dimension_numbers = #tpu.dot_dimension_numbers<[1], [0], [0], [1], [0, 0, 1, 1], [], []>} : vector<16x512xf32>, vector<512x128xf32>, vector<16x128xf32> -> vector<16x128xf32>
    %c41_i32 = arith.constant 41 : i32
    %774 = tpu.dynamic_rotate %773 by %c41_i32 dim 1 : vector<16x128xf32>, i32 -> vector<16x128xf32>
    %c0_495 = arith.constant 0 : index
    %c0_496 = arith.constant 0 : index
    %775 = vector.load %arg3[%c0_495, %c0_496] : memref<27x128xf32, #tpu.memory_space<vmem>>, vector<1x128xf32>
    %776 = vector.shape_cast %775 : vector<1x128xf32> to vector<128xf32>
    %777 = vector.shape_cast %776 : vector<128xf32> to vector<1x128xf32>
    %778 = vector.broadcast %777 : vector<1x128xf32> to vector<16x128xf32>
    %779 = arith.mulf %774, %778 : vector<16x128xf32>
    %c0_497 = arith.constant 0 : index
    %c0_498 = arith.constant 0 : index
    %780 = vector.load %arg21[%c0_497, %c0_498] : memref<432x128xf32, #tpu.memory_space<vmem>>, vector<16x128xf32>
    tpu.vector_store %arg21[%c0_497, %c0_498], %779 {strides = array<i32>} : memref<432x128xf32, #tpu.memory_space<vmem>>, vector<16x128xf32>,
    %c40_i32 = arith.constant 40 : i32
    %781 = tpu.dynamic_rotate %773 by %c40_i32 dim 1 : vector<16x128xf32>, i32 -> vector<16x128xf32>
    %c1_499 = arith.constant 1 : index
    %c0_500 = arith.constant 0 : index
    %782 = vector.load %arg3[%c1_499, %c0_500] : memref<27x128xf32, #tpu.memory_space<vmem>>, vector<1x128xf32>
    %783 = vector.shape_cast %782 : vector<1x128xf32> to vector<128xf32>
    %784 = vector.shape_cast %783 : vector<128xf32> to vector<1x128xf32>
    %785 = vector.broadcast %784 : vector<1x128xf32> to vector<16x128xf32>
    %786 = arith.mulf %781, %785 : vector<16x128xf32>
    %c16_501 = arith.constant 16 : index
    %c0_502 = arith.constant 0 : index
    %787 = vector.load %arg21[%c16_501, %c0_502] : memref<432x128xf32, #tpu.memory_space<vmem>>, vector<16x128xf32>
    tpu.vector_store %arg21[%c16_501, %c0_502], %786 {strides = array<i32>} : memref<432x128xf32, #tpu.memory_space<vmem>>, vector<16x128xf32>,
    %c39_i32 = arith.constant 39 : i32
    %788 = tpu.dynamic_rotate %773 by %c39_i32 dim 1 : vector<16x128xf32>, i32 -> vector<16x128xf32>
    %c2_503 = arith.constant 2 : index
    %c0_504 = arith.constant 0 : index
    %789 = vector.load %arg3[%c2_503, %c0_504] : memref<27x128xf32, #tpu.memory_space<vmem>>, vector<1x128xf32>
    %790 = vector.shape_cast %789 : vector<1x128xf32> to vector<128xf32>
    %791 = vector.shape_cast %790 : vector<128xf32> to vector<1x128xf32>
    %792 = vector.broadcast %791 : vector<1x128xf32> to vector<16x128xf32>
    %793 = arith.mulf %788, %792 : vector<16x128xf32>
    %c32_505 = arith.constant 32 : index
    %c0_506 = arith.constant 0 : index
    %794 = vector.load %arg21[%c32_505, %c0_506] : memref<432x128xf32, #tpu.memory_space<vmem>>, vector<16x128xf32>
    tpu.vector_store %arg21[%c32_505, %c0_506], %793 {strides = array<i32>} : memref<432x128xf32, #tpu.memory_space<vmem>>, vector<16x128xf32>,
    %c33_i32 = arith.constant 33 : i32
    %795 = tpu.dynamic_rotate %773 by %c33_i32 dim 1 : vector<16x128xf32>, i32 -> vector<16x128xf32>
    %c3_507 = arith.constant 3 : index
    %c0_508 = arith.constant 0 : index
    %796 = vector.load %arg3[%c3_507, %c0_508] : memref<27x128xf32, #tpu.memory_space<vmem>>, vector<1x128xf32>
    %797 = vector.shape_cast %796 : vector<1x128xf32> to vector<128xf32>
    %798 = vector.shape_cast %797 : vector<128xf32> to vector<1x128xf32>
    %799 = vector.broadcast %798 : vector<1x128xf32> to vector<16x128xf32>
    %800 = arith.mulf %795, %799 : vector<16x128xf32>
    %c48_509 = arith.constant 48 : index
    %c0_510 = arith.constant 0 : index
    %801 = vector.load %arg21[%c48_509, %c0_510] : memref<432x128xf32, #tpu.memory_space<vmem>>, vector<16x128xf32>
    tpu.vector_store %arg21[%c48_509, %c0_510], %800 {strides = array<i32>} : memref<432x128xf32, #tpu.memory_space<vmem>>, vector<16x128xf32>,
    %c32_i32 = arith.constant 32 : i32
    %802 = tpu.dynamic_rotate %773 by %c32_i32 dim 1 : vector<16x128xf32>, i32 -> vector<16x128xf32>
    %c4_511 = arith.constant 4 : index
    %c0_512 = arith.constant 0 : index
    %803 = vector.load %arg3[%c4_511, %c0_512] : memref<27x128xf32, #tpu.memory_space<vmem>>, vector<1x128xf32>
    %804 = vector.shape_cast %803 : vector<1x128xf32> to vector<128xf32>
    %805 = vector.shape_cast %804 : vector<128xf32> to vector<1x128xf32>
    %806 = vector.broadcast %805 : vector<1x128xf32> to vector<16x128xf32>
    %807 = arith.mulf %802, %806 : vector<16x128xf32>
    %c64_513 = arith.constant 64 : index
    %c0_514 = arith.constant 0 : index
    %808 = vector.load %arg21[%c64_513, %c0_514] : memref<432x128xf32, #tpu.memory_space<vmem>>, vector<16x128xf32>
    tpu.vector_store %arg21[%c64_513, %c0_514], %807 {strides = array<i32>} : memref<432x128xf32, #tpu.memory_space<vmem>>, vector<16x128xf32>,
    %c31_i32 = arith.constant 31 : i32
    %809 = tpu.dynamic_rotate %773 by %c31_i32 dim 1 : vector<16x128xf32>, i32 -> vector<16x128xf32>
    %c5_515 = arith.constant 5 : index
    %c0_516 = arith.constant 0 : index
    %810 = vector.load %arg3[%c5_515, %c0_516] : memref<27x128xf32, #tpu.memory_space<vmem>>, vector<1x128xf32>
    %811 = vector.shape_cast %810 : vector<1x128xf32> to vector<128xf32>
    %812 = vector.shape_cast %811 : vector<128xf32> to vector<1x128xf32>
    %813 = vector.broadcast %812 : vector<1x128xf32> to vector<16x128xf32>
    %814 = arith.mulf %809, %813 : vector<16x128xf32>
    %c80_517 = arith.constant 80 : index
    %c0_518 = arith.constant 0 : index
    %815 = vector.load %arg21[%c80_517, %c0_518] : memref<432x128xf32, #tpu.memory_space<vmem>>, vector<16x128xf32>
    tpu.vector_store %arg21[%c80_517, %c0_518], %814 {strides = array<i32>} : memref<432x128xf32, #tpu.memory_space<vmem>>, vector<16x128xf32>,
    %c25_i32 = arith.constant 25 : i32
    %816 = tpu.dynamic_rotate %773 by %c25_i32 dim 1 : vector<16x128xf32>, i32 -> vector<16x128xf32>
    %c6_519 = arith.constant 6 : index
    %c0_520 = arith.constant 0 : index
    %817 = vector.load %arg3[%c6_519, %c0_520] : memref<27x128xf32, #tpu.memory_space<vmem>>, vector<1x128xf32>
    %818 = vector.shape_cast %817 : vector<1x128xf32> to vector<128xf32>
    %819 = vector.shape_cast %818 : vector<128xf32> to vector<1x128xf32>
    %820 = vector.broadcast %819 : vector<1x128xf32> to vector<16x128xf32>
    %821 = arith.mulf %816, %820 : vector<16x128xf32>
    %c96_521 = arith.constant 96 : index
    %c0_522 = arith.constant 0 : index
    %822 = vector.load %arg21[%c96_521, %c0_522] : memref<432x128xf32, #tpu.memory_space<vmem>>, vector<16x128xf32>
    tpu.vector_store %arg21[%c96_521, %c0_522], %821 {strides = array<i32>} : memref<432x128xf32, #tpu.memory_space<vmem>>, vector<16x128xf32>,
    %c24_i32 = arith.constant 24 : i32
    %823 = tpu.dynamic_rotate %773 by %c24_i32 dim 1 : vector<16x128xf32>, i32 -> vector<16x128xf32>
    %c7_523 = arith.constant 7 : index
    %c0_524 = arith.constant 0 : index
    %824 = vector.load %arg3[%c7_523, %c0_524] : memref<27x128xf32, #tpu.memory_space<vmem>>, vector<1x128xf32>
    %825 = vector.shape_cast %824 : vector<1x128xf32> to vector<128xf32>
    %826 = vector.shape_cast %825 : vector<128xf32> to vector<1x128xf32>
    %827 = vector.broadcast %826 : vector<1x128xf32> to vector<16x128xf32>
    %828 = arith.mulf %823, %827 : vector<16x128xf32>
    %c112_525 = arith.constant 112 : index
    %c0_526 = arith.constant 0 : index
    %829 = vector.load %arg21[%c112_525, %c0_526] : memref<432x128xf32, #tpu.memory_space<vmem>>, vector<16x128xf32>
    tpu.vector_store %arg21[%c112_525, %c0_526], %828 {strides = array<i32>} : memref<432x128xf32, #tpu.memory_space<vmem>>, vector<16x128xf32>,
    %c23_i32 = arith.constant 23 : i32
    %830 = tpu.dynamic_rotate %773 by %c23_i32 dim 1 : vector<16x128xf32>, i32 -> vector<16x128xf32>
    %c8_527 = arith.constant 8 : index
    %c0_528 = arith.constant 0 : index
    %831 = vector.load %arg3[%c8_527, %c0_528] : memref<27x128xf32, #tpu.memory_space<vmem>>, vector<1x128xf32>
    %832 = vector.shape_cast %831 : vector<1x128xf32> to vector<128xf32>
    %833 = vector.shape_cast %832 : vector<128xf32> to vector<1x128xf32>
    %834 = vector.broadcast %833 : vector<1x128xf32> to vector<16x128xf32>
    %835 = arith.mulf %830, %834 : vector<16x128xf32>
    %c128_529 = arith.constant 128 : index
    %c0_530 = arith.constant 0 : index
    %836 = vector.load %arg21[%c128_529, %c0_530] : memref<432x128xf32, #tpu.memory_space<vmem>>, vector<16x128xf32>
    tpu.vector_store %arg21[%c128_529, %c0_530], %835 {strides = array<i32>} : memref<432x128xf32, #tpu.memory_space<vmem>>, vector<16x128xf32>,
    %c9_i32_531 = arith.constant 9 : i32
    %837 = tpu.dynamic_rotate %773 by %c9_i32_531 dim 1 : vector<16x128xf32>, i32 -> vector<16x128xf32>
    %c9_532 = arith.constant 9 : index
    %c0_533 = arith.constant 0 : index
    %838 = vector.load %arg3[%c9_532, %c0_533] : memref<27x128xf32, #tpu.memory_space<vmem>>, vector<1x128xf32>
    %839 = vector.shape_cast %838 : vector<1x128xf32> to vector<128xf32>
    %840 = vector.shape_cast %839 : vector<128xf32> to vector<1x128xf32>
    %841 = vector.broadcast %840 : vector<1x128xf32> to vector<16x128xf32>
    %842 = arith.mulf %837, %841 : vector<16x128xf32>
    %c144_534 = arith.constant 144 : index
    %c0_535 = arith.constant 0 : index
    %843 = vector.load %arg21[%c144_534, %c0_535] : memref<432x128xf32, #tpu.memory_space<vmem>>, vector<16x128xf32>
    tpu.vector_store %arg21[%c144_534, %c0_535], %842 {strides = array<i32>} : memref<432x128xf32, #tpu.memory_space<vmem>>, vector<16x128xf32>,
    %c8_i32_536 = arith.constant 8 : i32
    %844 = tpu.dynamic_rotate %773 by %c8_i32_536 dim 1 : vector<16x128xf32>, i32 -> vector<16x128xf32>
    %c10_537 = arith.constant 10 : index
    %c0_538 = arith.constant 0 : index
    %845 = vector.load %arg3[%c10_537, %c0_538] : memref<27x128xf32, #tpu.memory_space<vmem>>, vector<1x128xf32>
    %846 = vector.shape_cast %845 : vector<1x128xf32> to vector<128xf32>
    %847 = vector.shape_cast %846 : vector<128xf32> to vector<1x128xf32>
    %848 = vector.broadcast %847 : vector<1x128xf32> to vector<16x128xf32>
    %849 = arith.mulf %844, %848 : vector<16x128xf32>
    %c160_539 = arith.constant 160 : index
    %c0_540 = arith.constant 0 : index
    %850 = vector.load %arg21[%c160_539, %c0_540] : memref<432x128xf32, #tpu.memory_space<vmem>>, vector<16x128xf32>
    tpu.vector_store %arg21[%c160_539, %c0_540], %849 {strides = array<i32>} : memref<432x128xf32, #tpu.memory_space<vmem>>, vector<16x128xf32>,
    %c7_i32_541 = arith.constant 7 : i32
    %851 = tpu.dynamic_rotate %773 by %c7_i32_541 dim 1 : vector<16x128xf32>, i32 -> vector<16x128xf32>
    %c11_542 = arith.constant 11 : index
    %c0_543 = arith.constant 0 : index
    %852 = vector.load %arg3[%c11_542, %c0_543] : memref<27x128xf32, #tpu.memory_space<vmem>>, vector<1x128xf32>
    %853 = vector.shape_cast %852 : vector<1x128xf32> to vector<128xf32>
    %854 = vector.shape_cast %853 : vector<128xf32> to vector<1x128xf32>
    %855 = vector.broadcast %854 : vector<1x128xf32> to vector<16x128xf32>
    %856 = arith.mulf %851, %855 : vector<16x128xf32>
    %c176_544 = arith.constant 176 : index
    %c0_545 = arith.constant 0 : index
    %857 = vector.load %arg21[%c176_544, %c0_545] : memref<432x128xf32, #tpu.memory_space<vmem>>, vector<16x128xf32>
    tpu.vector_store %arg21[%c176_544, %c0_545], %856 {strides = array<i32>} : memref<432x128xf32, #tpu.memory_space<vmem>>, vector<16x128xf32>,
    %c1_i32_546 = arith.constant 1 : i32
    %858 = tpu.dynamic_rotate %773 by %c1_i32_546 dim 1 : vector<16x128xf32>, i32 -> vector<16x128xf32>
    %c12_547 = arith.constant 12 : index
    %c0_548 = arith.constant 0 : index
    %859 = vector.load %arg3[%c12_547, %c0_548] : memref<27x128xf32, #tpu.memory_space<vmem>>, vector<1x128xf32>
    %860 = vector.shape_cast %859 : vector<1x128xf32> to vector<128xf32>
    %861 = vector.shape_cast %860 : vector<128xf32> to vector<1x128xf32>
    %862 = vector.broadcast %861 : vector<1x128xf32> to vector<16x128xf32>
    %863 = arith.mulf %858, %862 : vector<16x128xf32>
    %c192_549 = arith.constant 192 : index
    %c0_550 = arith.constant 0 : index
    %864 = vector.load %arg21[%c192_549, %c0_550] : memref<432x128xf32, #tpu.memory_space<vmem>>, vector<16x128xf32>
    tpu.vector_store %arg21[%c192_549, %c0_550], %863 {strides = array<i32>} : memref<432x128xf32, #tpu.memory_space<vmem>>, vector<16x128xf32>,
    %c208_551 = arith.constant 208 : index
    %c0_552 = arith.constant 0 : index
    %865 = vector.load %arg21[%c208_551, %c0_552] : memref<432x128xf32, #tpu.memory_space<vmem>>, vector<16x128xf32>
    tpu.vector_store %arg21[%c208_551, %c0_552], %773 {strides = array<i32>} : memref<432x128xf32, #tpu.memory_space<vmem>>, vector<16x128xf32>,
    %c127_i32 = arith.constant 127 : i32
    %866 = tpu.dynamic_rotate %773 by %c127_i32 dim 1 : vector<16x128xf32>, i32 -> vector<16x128xf32>
    %c14_553 = arith.constant 14 : index
    %c0_554 = arith.constant 0 : index
    %867 = vector.load %arg3[%c14_553, %c0_554] : memref<27x128xf32, #tpu.memory_space<vmem>>, vector<1x128xf32>
    %868 = vector.shape_cast %867 : vector<1x128xf32> to vector<128xf32>
    %869 = vector.shape_cast %868 : vector<128xf32> to vector<1x128xf32>
    %870 = vector.broadcast %869 : vector<1x128xf32> to vector<16x128xf32>
    %871 = arith.mulf %866, %870 : vector<16x128xf32>
    %c224 = arith.constant 224 : index
    %c0_555 = arith.constant 0 : index
    %872 = vector.load %arg21[%c224, %c0_555] : memref<432x128xf32, #tpu.memory_space<vmem>>, vector<16x128xf32>
    tpu.vector_store %arg21[%c224, %c0_555], %871 {strides = array<i32>} : memref<432x128xf32, #tpu.memory_space<vmem>>, vector<16x128xf32>,
    %c121_i32 = arith.constant 121 : i32
    %873 = tpu.dynamic_rotate %773 by %c121_i32 dim 1 : vector<16x128xf32>, i32 -> vector<16x128xf32>
    %c15_556 = arith.constant 15 : index
    %c0_557 = arith.constant 0 : index
    %874 = vector.load %arg3[%c15_556, %c0_557] : memref<27x128xf32, #tpu.memory_space<vmem>>, vector<1x128xf32>
    %875 = vector.shape_cast %874 : vector<1x128xf32> to vector<128xf32>
    %876 = vector.shape_cast %875 : vector<128xf32> to vector<1x128xf32>
    %877 = vector.broadcast %876 : vector<1x128xf32> to vector<16x128xf32>
    %878 = arith.mulf %873, %877 : vector<16x128xf32>
    %c240 = arith.constant 240 : index
    %c0_558 = arith.constant 0 : index
    %879 = vector.load %arg21[%c240, %c0_558] : memref<432x128xf32, #tpu.memory_space<vmem>>, vector<16x128xf32>
    tpu.vector_store %arg21[%c240, %c0_558], %878 {strides = array<i32>} : memref<432x128xf32, #tpu.memory_space<vmem>>, vector<16x128xf32>,
    %c120_i32 = arith.constant 120 : i32
    %880 = tpu.dynamic_rotate %773 by %c120_i32 dim 1 : vector<16x128xf32>, i32 -> vector<16x128xf32>
    %c16_559 = arith.constant 16 : index
    %c0_560 = arith.constant 0 : index
    %881 = vector.load %arg3[%c16_559, %c0_560] : memref<27x128xf32, #tpu.memory_space<vmem>>, vector<1x128xf32>
    %882 = vector.shape_cast %881 : vector<1x128xf32> to vector<128xf32>
    %883 = vector.shape_cast %882 : vector<128xf32> to vector<1x128xf32>
    %884 = vector.broadcast %883 : vector<1x128xf32> to vector<16x128xf32>
    %885 = arith.mulf %880, %884 : vector<16x128xf32>
    %c256 = arith.constant 256 : index
    %c0_561 = arith.constant 0 : index
    %886 = vector.load %arg21[%c256, %c0_561] : memref<432x128xf32, #tpu.memory_space<vmem>>, vector<16x128xf32>
    tpu.vector_store %arg21[%c256, %c0_561], %885 {strides = array<i32>} : memref<432x128xf32, #tpu.memory_space<vmem>>, vector<16x128xf32>,
    %c119_i32 = arith.constant 119 : i32
    %887 = tpu.dynamic_rotate %773 by %c119_i32 dim 1 : vector<16x128xf32>, i32 -> vector<16x128xf32>
    %c17_562 = arith.constant 17 : index
    %c0_563 = arith.constant 0 : index
    %888 = vector.load %arg3[%c17_562, %c0_563] : memref<27x128xf32, #tpu.memory_space<vmem>>, vector<1x128xf32>
    %889 = vector.shape_cast %888 : vector<1x128xf32> to vector<128xf32>
    %890 = vector.shape_cast %889 : vector<128xf32> to vector<1x128xf32>
    %891 = vector.broadcast %890 : vector<1x128xf32> to vector<16x128xf32>
    %892 = arith.mulf %887, %891 : vector<16x128xf32>
    %c272 = arith.constant 272 : index
    %c0_564 = arith.constant 0 : index
    %893 = vector.load %arg21[%c272, %c0_564] : memref<432x128xf32, #tpu.memory_space<vmem>>, vector<16x128xf32>
    tpu.vector_store %arg21[%c272, %c0_564], %892 {strides = array<i32>} : memref<432x128xf32, #tpu.memory_space<vmem>>, vector<16x128xf32>,
    %c105_i32 = arith.constant 105 : i32
    %894 = tpu.dynamic_rotate %773 by %c105_i32 dim 1 : vector<16x128xf32>, i32 -> vector<16x128xf32>
    %c18_565 = arith.constant 18 : index
    %c0_566 = arith.constant 0 : index
    %895 = vector.load %arg3[%c18_565, %c0_566] : memref<27x128xf32, #tpu.memory_space<vmem>>, vector<1x128xf32>
    %896 = vector.shape_cast %895 : vector<1x128xf32> to vector<128xf32>
    %897 = vector.shape_cast %896 : vector<128xf32> to vector<1x128xf32>
    %898 = vector.broadcast %897 : vector<1x128xf32> to vector<16x128xf32>
    %899 = arith.mulf %894, %898 : vector<16x128xf32>
    %c288 = arith.constant 288 : index
    %c0_567 = arith.constant 0 : index
    %900 = vector.load %arg21[%c288, %c0_567] : memref<432x128xf32, #tpu.memory_space<vmem>>, vector<16x128xf32>
    tpu.vector_store %arg21[%c288, %c0_567], %899 {strides = array<i32>} : memref<432x128xf32, #tpu.memory_space<vmem>>, vector<16x128xf32>,
    %c104_i32 = arith.constant 104 : i32
    %901 = tpu.dynamic_rotate %773 by %c104_i32 dim 1 : vector<16x128xf32>, i32 -> vector<16x128xf32>
    %c19_568 = arith.constant 19 : index
    %c0_569 = arith.constant 0 : index
    %902 = vector.load %arg3[%c19_568, %c0_569] : memref<27x128xf32, #tpu.memory_space<vmem>>, vector<1x128xf32>
    %903 = vector.shape_cast %902 : vector<1x128xf32> to vector<128xf32>
    %904 = vector.shape_cast %903 : vector<128xf32> to vector<1x128xf32>
    %905 = vector.broadcast %904 : vector<1x128xf32> to vector<16x128xf32>
    %906 = arith.mulf %901, %905 : vector<16x128xf32>
    %c304 = arith.constant 304 : index
    %c0_570 = arith.constant 0 : index
    %907 = vector.load %arg21[%c304, %c0_570] : memref<432x128xf32, #tpu.memory_space<vmem>>, vector<16x128xf32>
    tpu.vector_store %arg21[%c304, %c0_570], %906 {strides = array<i32>} : memref<432x128xf32, #tpu.memory_space<vmem>>, vector<16x128xf32>,
    %c103_i32 = arith.constant 103 : i32
    %908 = tpu.dynamic_rotate %773 by %c103_i32 dim 1 : vector<16x128xf32>, i32 -> vector<16x128xf32>
    %c20_571 = arith.constant 20 : index
    %c0_572 = arith.constant 0 : index
    %909 = vector.load %arg3[%c20_571, %c0_572] : memref<27x128xf32, #tpu.memory_space<vmem>>, vector<1x128xf32>
    %910 = vector.shape_cast %909 : vector<1x128xf32> to vector<128xf32>
    %911 = vector.shape_cast %910 : vector<128xf32> to vector<1x128xf32>
    %912 = vector.broadcast %911 : vector<1x128xf32> to vector<16x128xf32>
    %913 = arith.mulf %908, %912 : vector<16x128xf32>
    %c320 = arith.constant 320 : index
    %c0_573 = arith.constant 0 : index
    %914 = vector.load %arg21[%c320, %c0_573] : memref<432x128xf32, #tpu.memory_space<vmem>>, vector<16x128xf32>
    tpu.vector_store %arg21[%c320, %c0_573], %913 {strides = array<i32>} : memref<432x128xf32, #tpu.memory_space<vmem>>, vector<16x128xf32>,
    %c97_i32 = arith.constant 97 : i32
    %915 = tpu.dynamic_rotate %773 by %c97_i32 dim 1 : vector<16x128xf32>, i32 -> vector<16x128xf32>
    %c21_574 = arith.constant 21 : index
    %c0_575 = arith.constant 0 : index
    %916 = vector.load %arg3[%c21_574, %c0_575] : memref<27x128xf32, #tpu.memory_space<vmem>>, vector<1x128xf32>
    %917 = vector.shape_cast %916 : vector<1x128xf32> to vector<128xf32>
    %918 = vector.shape_cast %917 : vector<128xf32> to vector<1x128xf32>
    %919 = vector.broadcast %918 : vector<1x128xf32> to vector<16x128xf32>
    %920 = arith.mulf %915, %919 : vector<16x128xf32>
    %c336 = arith.constant 336 : index
    %c0_576 = arith.constant 0 : index
    %921 = vector.load %arg21[%c336, %c0_576] : memref<432x128xf32, #tpu.memory_space<vmem>>, vector<16x128xf32>
    tpu.vector_store %arg21[%c336, %c0_576], %920 {strides = array<i32>} : memref<432x128xf32, #tpu.memory_space<vmem>>, vector<16x128xf32>,
    %c96_i32 = arith.constant 96 : i32
    %922 = tpu.dynamic_rotate %773 by %c96_i32 dim 1 : vector<16x128xf32>, i32 -> vector<16x128xf32>
    %c22_577 = arith.constant 22 : index
    %c0_578 = arith.constant 0 : index
    %923 = vector.load %arg3[%c22_577, %c0_578] : memref<27x128xf32, #tpu.memory_space<vmem>>, vector<1x128xf32>
    %924 = vector.shape_cast %923 : vector<1x128xf32> to vector<128xf32>
    %925 = vector.shape_cast %924 : vector<128xf32> to vector<1x128xf32>
    %926 = vector.broadcast %925 : vector<1x128xf32> to vector<16x128xf32>
    %927 = arith.mulf %922, %926 : vector<16x128xf32>
    %c352 = arith.constant 352 : index
    %c0_579 = arith.constant 0 : index
    %928 = vector.load %arg21[%c352, %c0_579] : memref<432x128xf32, #tpu.memory_space<vmem>>, vector<16x128xf32>
    tpu.vector_store %arg21[%c352, %c0_579], %927 {strides = array<i32>} : memref<432x128xf32, #tpu.memory_space<vmem>>, vector<16x128xf32>,
    %c95_i32 = arith.constant 95 : i32
    %929 = tpu.dynamic_rotate %773 by %c95_i32 dim 1 : vector<16x128xf32>, i32 -> vector<16x128xf32>
    %c23_580 = arith.constant 23 : index
    %c0_581 = arith.constant 0 : index
    %930 = vector.load %arg3[%c23_580, %c0_581] : memref<27x128xf32, #tpu.memory_space<vmem>>, vector<1x128xf32>
    %931 = vector.shape_cast %930 : vector<1x128xf32> to vector<128xf32>
    %932 = vector.shape_cast %931 : vector<128xf32> to vector<1x128xf32>
    %933 = vector.broadcast %932 : vector<1x128xf32> to vector<16x128xf32>
    %934 = arith.mulf %929, %933 : vector<16x128xf32>
    %c368 = arith.constant 368 : index
    %c0_582 = arith.constant 0 : index
    %935 = vector.load %arg21[%c368, %c0_582] : memref<432x128xf32, #tpu.memory_space<vmem>>, vector<16x128xf32>
    tpu.vector_store %arg21[%c368, %c0_582], %934 {strides = array<i32>} : memref<432x128xf32, #tpu.memory_space<vmem>>, vector<16x128xf32>,
    %c89_i32 = arith.constant 89 : i32
    %936 = tpu.dynamic_rotate %773 by %c89_i32 dim 1 : vector<16x128xf32>, i32 -> vector<16x128xf32>
    %c24_583 = arith.constant 24 : index
    %c0_584 = arith.constant 0 : index
    %937 = vector.load %arg3[%c24_583, %c0_584] : memref<27x128xf32, #tpu.memory_space<vmem>>, vector<1x128xf32>
    %938 = vector.shape_cast %937 : vector<1x128xf32> to vector<128xf32>
    %939 = vector.shape_cast %938 : vector<128xf32> to vector<1x128xf32>
    %940 = vector.broadcast %939 : vector<1x128xf32> to vector<16x128xf32>
    %941 = arith.mulf %936, %940 : vector<16x128xf32>
    %c384 = arith.constant 384 : index
    %c0_585 = arith.constant 0 : index
    %942 = vector.load %arg21[%c384, %c0_585] : memref<432x128xf32, #tpu.memory_space<vmem>>, vector<16x128xf32>
    tpu.vector_store %arg21[%c384, %c0_585], %941 {strides = array<i32>} : memref<432x128xf32, #tpu.memory_space<vmem>>, vector<16x128xf32>,
    %c88_i32 = arith.constant 88 : i32
    %943 = tpu.dynamic_rotate %773 by %c88_i32 dim 1 : vector<16x128xf32>, i32 -> vector<16x128xf32>
    %c25_586 = arith.constant 25 : index
    %c0_587 = arith.constant 0 : index
    %944 = vector.load %arg3[%c25_586, %c0_587] : memref<27x128xf32, #tpu.memory_space<vmem>>, vector<1x128xf32>
    %945 = vector.shape_cast %944 : vector<1x128xf32> to vector<128xf32>
    %946 = vector.shape_cast %945 : vector<128xf32> to vector<1x128xf32>
    %947 = vector.broadcast %946 : vector<1x128xf32> to vector<16x128xf32>
    %948 = arith.mulf %943, %947 : vector<16x128xf32>
    %c400 = arith.constant 400 : index
    %c0_588 = arith.constant 0 : index
    %949 = vector.load %arg21[%c400, %c0_588] : memref<432x128xf32, #tpu.memory_space<vmem>>, vector<16x128xf32>
    tpu.vector_store %arg21[%c400, %c0_588], %948 {strides = array<i32>} : memref<432x128xf32, #tpu.memory_space<vmem>>, vector<16x128xf32>,
    %c87_i32 = arith.constant 87 : i32
    %950 = tpu.dynamic_rotate %773 by %c87_i32 dim 1 : vector<16x128xf32>, i32 -> vector<16x128xf32>
    %c26_589 = arith.constant 26 : index
    %c0_590 = arith.constant 0 : index
    %951 = vector.load %arg3[%c26_589, %c0_590] : memref<27x128xf32, #tpu.memory_space<vmem>>, vector<1x128xf32>
    %952 = vector.shape_cast %951 : vector<1x128xf32> to vector<128xf32>
    %953 = vector.shape_cast %952 : vector<128xf32> to vector<1x128xf32>
    %954 = vector.broadcast %953 : vector<1x128xf32> to vector<16x128xf32>
    %955 = arith.mulf %950, %954 : vector<16x128xf32>
    %c416 = arith.constant 416 : index
    %c0_591 = arith.constant 0 : index
    %956 = vector.load %arg21[%c416, %c0_591] : memref<432x128xf32, #tpu.memory_space<vmem>>, vector<16x128xf32>
    tpu.vector_store %arg21[%c416, %c0_591], %955 {strides = array<i32>} : memref<432x128xf32, #tpu.memory_space<vmem>>, vector<16x128xf32>,
    %c0_592 = arith.constant 0 : index
    %c0_593 = arith.constant 0 : index
    %957 = vector.load %arg15[%c0_592, %c0_593] : memref<16x432xf32, #tpu.memory_space<vmem>>, vector<16x432xf32>
    %c0_594 = arith.constant 0 : index
    %c0_595 = arith.constant 0 : index
    %958 = vector.load %arg21[%c0_594, %c0_595] : memref<432x128xf32, #tpu.memory_space<vmem>>, vector<432x128xf32>
    %cst_596 = arith.constant dense<0.000000e+00> : vector<16x128xf32>
    %959 = tpu.matmul %957, %958, %cst_596 {dimension_numbers = #tpu.dot_dimension_numbers<[1], [0], [0], [1], [0, 0, 1, 1], [], []>} : vector<16x432xf32>, vector<432x128xf32>, vector<16x128xf32> -> vector<16x128xf32>
    %c0_597 = arith.constant 0 : index
    %c0_598 = arith.constant 0 : index
    %960 = vector.load %arg16[%c0_597, %c0_598] : memref<16x1xf32, #tpu.memory_space<vmem>>, vector<16x1xf32>
    %961 = vector.broadcast %960 : vector<16x1xf32> to vector<16x128xf32>
    %962 = arith.addf %959, %961 : vector<16x128xf32>
    %cst_599 = arith.constant 0.000000e+00 : f32
    %963 = vector.broadcast %cst_599 : f32 to vector<16x128xf32>
    %964 = arith.maximumf %962, %963 : vector<16x128xf32>
    %c0_600 = arith.constant 0 : index
    %c0_601 = arith.constant 0 : index
    %965 = vector.load %arg17[%c0_600, %c0_601] : memref<16x1xf32, #tpu.memory_space<vmem>>, vector<16x1xf32>
    %966 = vector.broadcast %965 : vector<16x1xf32> to vector<16x128xf32>
    %967 = arith.mulf %964, %966 : vector<16x128xf32>
    %cst_602 = arith.constant dense<0.000000e+00> : vector<128xf32>
    %968 = vector.multi_reduction <add>, %967, %cst_602 [0] : vector<16x128xf32> to vector<128xf32>
    %969 = vector.shape_cast %968 : vector<128xf32> to vector<1x128xf32>
    %c0_603 = arith.constant 0 : index
    %c0_604 = arith.constant 0 : index
    %970 = vector.load %arg18[%c0_603, %c0_604] : memref<1x1xf32, #tpu.memory_space<vmem>>, vector<1x1xf32>
    %971 = vector.broadcast %970 : vector<1x1xf32> to vector<1x128xf32>
    %972 = arith.addf %969, %971 : vector<1x128xf32>
    %973 = vector.shape_cast %972 : vector<1x128xf32> to vector<1x1x128xf32>
    %c0_605 = arith.constant 0 : index
    %c0_606 = arith.constant 0 : index
    %c0_607 = arith.constant 0 : index
    %974 = vector.load %arg19[%c0_605, %c0_606, %c0_607] : memref<1x1x128xf32, #tpu.memory_space<vmem>>, vector<1x1x128xf32>
    tpu.vector_store %arg19[%c0_605, %c0_606, %c0_607], %973 {strides = array<i32>} : memref<1x1x128xf32, #tpu.memory_space<vmem>>, vector<1x1x128xf32>,
    return
  }
  func.func @transform_0(%arg0: i32) -> (i32, i32, i32) {
    %c0_i32 = arith.constant 0 : i32
    %c0_i32_0 = arith.constant 0 : i32
    %c0_i32_1 = arith.constant 0 : i32
    return %arg0, %c0_i32, %c0_i32_0 : i32, i32, i32
  }
  func.func @transform_1(%arg0: i32) -> (i32, i32) {
    %c0_i32 = arith.constant 0 : i32
    %c0_i32_0 = arith.constant 0 : i32
    %c0_i32_1 = arith.constant 0 : i32
    return %c0_i32, %c0_i32_0 : i32, i32
  }
  func.func @transform_2(%arg0: i32) -> (i32, i32) {
    %c0_i32 = arith.constant 0 : i32
    %c0_i32_0 = arith.constant 0 : i32
    %c0_i32_1 = arith.constant 0 : i32
    return %c0_i32, %c0_i32_0 : i32, i32
  }
  func.func @transform_3(%arg0: i32) -> (i32, i32) {
    %c0_i32 = arith.constant 0 : i32
    %c0_i32_0 = arith.constant 0 : i32
    %c0_i32_1 = arith.constant 0 : i32
    return %c0_i32, %c0_i32_0 : i32, i32
  }
  func.func @transform_4(%arg0: i32) -> (i32, i32) {
    %c0_i32 = arith.constant 0 : i32
    %c0_i32_0 = arith.constant 0 : i32
    %c0_i32_1 = arith.constant 0 : i32
    return %c0_i32, %c0_i32_0 : i32, i32
  }
  func.func @transform_5(%arg0: i32) -> (i32, i32) {
    %c0_i32 = arith.constant 0 : i32
    %c0_i32_0 = arith.constant 0 : i32
    %c0_i32_1 = arith.constant 0 : i32
    return %c0_i32, %c0_i32_0 : i32, i32
  }
  func.func @transform_6(%arg0: i32) -> (i32, i32) {
    %c0_i32 = arith.constant 0 : i32
    %c0_i32_0 = arith.constant 0 : i32
    %c0_i32_1 = arith.constant 0 : i32
    return %c0_i32, %c0_i32_0 : i32, i32
  }
  func.func @transform_7(%arg0: i32) -> (i32, i32) {
    %c0_i32 = arith.constant 0 : i32
    %c0_i32_0 = arith.constant 0 : i32
    %c0_i32_1 = arith.constant 0 : i32
    return %c0_i32, %c0_i32_0 : i32, i32
  }
  func.func @transform_8(%arg0: i32) -> (i32, i32) {
    %c0_i32 = arith.constant 0 : i32
    %c0_i32_0 = arith.constant 0 : i32
    %c0_i32_1 = arith.constant 0 : i32
    return %c0_i32, %c0_i32_0 : i32, i32
  }
  func.func @transform_9(%arg0: i32) -> (i32, i32) {
    %c0_i32 = arith.constant 0 : i32
    %c0_i32_0 = arith.constant 0 : i32
    %c0_i32_1 = arith.constant 0 : i32
    return %c0_i32, %c0_i32_0 : i32, i32
  }
  func.func @transform_10(%arg0: i32) -> (i32, i32) {
    %c0_i32 = arith.constant 0 : i32
    %c0_i32_0 = arith.constant 0 : i32
    %c0_i32_1 = arith.constant 0 : i32
    return %c0_i32, %c0_i32_0 : i32, i32
  }
  func.func @transform_11(%arg0: i32) -> (i32, i32) {
    %c0_i32 = arith.constant 0 : i32
    %c0_i32_0 = arith.constant 0 : i32
    %c0_i32_1 = arith.constant 0 : i32
    return %c0_i32, %c0_i32_0 : i32, i32
  }
  func.func @transform_12(%arg0: i32) -> (i32, i32) {
    %c0_i32 = arith.constant 0 : i32
    %c0_i32_0 = arith.constant 0 : i32
    %c0_i32_1 = arith.constant 0 : i32
    return %c0_i32, %c0_i32_0 : i32, i32
  }
  func.func @transform_13(%arg0: i32) -> (i32, i32) {
    %c0_i32 = arith.constant 0 : i32
    %c0_i32_0 = arith.constant 0 : i32
    %c0_i32_1 = arith.constant 0 : i32
    return %c0_i32, %c0_i32_0 : i32, i32
  }
  func.func @transform_14(%arg0: i32) -> (i32, i32) {
    %c0_i32 = arith.constant 0 : i32
    %c0_i32_0 = arith.constant 0 : i32
    %c0_i32_1 = arith.constant 0 : i32
    return %c0_i32, %c0_i32_0 : i32, i32
  }
  func.func @transform_15(%arg0: i32) -> (i32, i32) {
    %c0_i32 = arith.constant 0 : i32
    %c0_i32_0 = arith.constant 0 : i32
    %c0_i32_1 = arith.constant 0 : i32
    return %c0_i32, %c0_i32_0 : i32, i32
  }
  func.func @transform_16(%arg0: i32) -> (i32, i32) {
    %c0_i32 = arith.constant 0 : i32
    %c0_i32_0 = arith.constant 0 : i32
    %c0_i32_1 = arith.constant 0 : i32
    return %c0_i32, %c0_i32_0 : i32, i32
  }
  func.func @transform_17(%arg0: i32) -> (i32, i32) {
    %c0_i32 = arith.constant 0 : i32
    %c0_i32_0 = arith.constant 0 : i32
    %c0_i32_1 = arith.constant 0 : i32
    return %c0_i32, %c0_i32_0 : i32, i32
  }
  func.func @transform_18(%arg0: i32) -> (i32, i32, i32) {
    %c0_i32 = arith.constant 0 : i32
    %c0_i32_0 = arith.constant 0 : i32
    %c0_i32_1 = arith.constant 0 : i32
    return %arg0, %c0_i32, %c0_i32_0 : i32, i32, i32
  }
}

</mosaic_0001>

<llo_original>
// kernel: encoder_forward.1
$region0: #{encoder_forward.1}
  #allocation0 [shape = 'u32[]', space=smem, size = 0x4, offset = 0x4, fixed_abs, tag = 'smem constant byte address 0x4 - core index']
  #allocation1 [shape = 'u32[144,128]{1,0:T(1,128)}', space=vmem, size = 0x12000, scoped, tag = 'internal scratch']
  #allocation2 [shape = 'f32[216,512]{1,0:T(8,128)}', space=vmem, size = 0x6c000, scoped, tag = 'scratch operand']
  #allocation3 [shape = 'f32[432,128]{1,0:T(8,128)}', space=vmem, size = 0x36000, scoped, tag = 'scratch operand']
  #allocation4 [shape = 'f32[1,1]{1,0:T(1,128)S(1)}', space=vmem, size = 0x200, scoped, tag = 'scoped memory for encoder_forward.1']
  %s0 = inlined_call_operand.vmem [shape: f32[2,8,512], index: 0, kind: input, shape index: {}]
  %s1 = inlined_call_operand.vmem [shape: f32[27,512], index: 1, kind: input, shape index: {}]
  %s2 = inlined_call_operand.vmem [shape: f32[27,128], index: 2, kind: input, shape index: {}]
  %s3 = inlined_call_operand.vmem [shape: f32[512,128], index: 3, kind: input, shape index: {}]
  %s4 = inlined_call_operand.vmem [shape: f32[8,216], index: 4, kind: input, shape index: {}]
  %s5 = inlined_call_operand.vmem [shape: f32[8,1], index: 5, kind: input, shape index: {}]
  %s6 = inlined_call_operand.vmem [shape: f32[8,8], index: 6, kind: input, shape index: {}]
  %s7 = inlined_call_operand.vmem [shape: f32[8,1], index: 7, kind: input, shape index: {}]
  %s8 = inlined_call_operand.vmem [shape: f32[8,216], index: 8, kind: input, shape index: {}]
  %s9 = inlined_call_operand.vmem [shape: f32[8,1], index: 9, kind: input, shape index: {}]
  %s10 = inlined_call_operand.vmem [shape: f32[8,216], index: 10, kind: input, shape index: {}]
  %s11 = inlined_call_operand.vmem [shape: f32[8,1], index: 11, kind: input, shape index: {}]
  %s12 = inlined_call_operand.vmem [shape: f32[16,216], index: 12, kind: input, shape index: {}]
  %s13 = inlined_call_operand.vmem [shape: f32[16,1], index: 13, kind: input, shape index: {}]
  %s14 = inlined_call_operand.vmem [shape: f32[16,432], index: 14, kind: input, shape index: {}]
  %s15 = inlined_call_operand.vmem [shape: f32[16,1], index: 15, kind: input, shape index: {}]
  %s16 = inlined_call_operand.vmem [shape: f32[16,1], index: 16, kind: input, shape index: {}]
  %s17 = inlined_call_operand.<no memory space> [shape: f32[1,1], index: 17, kind: input, shape index: {}]
  %s18 = inlined_call_operand.vmem [shape: f32[2,1,128], index: 18, kind: output, shape index: {}]
  %s19 = sld [smem:[#allocation0]]
  $region105: #{encoder_forward.1} parent=0
    _
  %s21 = ssub.s32 1, %s19
  %s22 = scalar_select 0, %s21, %s19
  %v23 = vstv %s17
  %24 = vst [vmem:[#allocation4] sm:$0x1] %v23
  loop: start=0, step=1, limit=4
  $region2: #{encoder_forward.1} parent=0 // loop_pre_header
    _
  $region3: #{encoder_forward.1} parent=0 // loop_header
    %s26 = sphi 0, %s30
    %p27 = scmp.ge.s32.totalorder %s26, 4
    %s36 = sphi 0, %s38
    %s39 = sphi 0, %s36
    %s40 = sphi 0, %s39
    %s56 = sphi 0, %s40
    %s60 = sphi 0, %s60
    %s62 = sphi 0, %s60
    %s63 = sphi 0, %s62
    %s77 = sphi 0, %s63
    %s81 = sphi 0, %s81
    %s83 = sphi 0, %s81
    %s84 = sphi 0, %s83
    %s98 = sphi 0, %s84
    %s102 = sphi 0, %s102
    %s104 = sphi 0, %s102
    %s105 = sphi 0, %s104
    %s119 = sphi 0, %s105
    %s123 = sphi 0, %s123
    %s125 = sphi 0, %s123
    %s126 = sphi 0, %s125
    %s140 = sphi 0, %s126
    %s144 = sphi 0, %s144
    %s146 = sphi 0, %s144
    %s147 = sphi 0, %s146
    %s161 = sphi 0, %s147
    %s165 = sphi 0, %s165
    %s167 = sphi 0, %s165
    %s168 = sphi 0, %s167
    %s182 = sphi 0, %s168
    %s186 = sphi 0, %s186
    %s188 = sphi 0, %s186
    %s189 = sphi 0, %s188
    %s203 = sphi 0, %s189
    %s207 = sphi 0, %s207
    %s209 = sphi 0, %s207
    %s210 = sphi 0, %s209
    %s224 = sphi 0, %s210
    %s228 = sphi 0, %s228
    %s230 = sphi 0, %s228
    %s231 = sphi 0, %s230
    %s245 = sphi 0, %s231
    %s249 = sphi 0, %s249
    %s251 = sphi 0, %s249
    %s252 = sphi 0, %s251
    %s266 = sphi 0, %s252
    %s270 = sphi 0, %s270
    %s272 = sphi 0, %s270
    %s273 = sphi 0, %s272
    %s287 = sphi 0, %s273
    %s291 = sphi 0, %s291
    %s293 = sphi 0, %s291
    %s294 = sphi 0, %s293
    %s308 = sphi 0, %s294
    %s312 = sphi 0, %s312
    %s314 = sphi 0, %s312
    %s315 = sphi 0, %s314
    %s329 = sphi 0, %s315
    %s333 = sphi 0, %s333
    %s335 = sphi 0, %s333
    %s336 = sphi 0, %s335
    %s350 = sphi 0, %s336
    %s354 = sphi 0, %s354
    %s356 = sphi 0, %s354
    %s357 = sphi 0, %s356
    %s371 = sphi 0, %s357
    %s375 = sphi 0, %s375
    %s377 = sphi 0, %s375
    %s378 = sphi 0, %s377
    %s392 = sphi 0, %s378
    %s396 = sphi 0, %s396
    %s398 = sphi 0, %s396
    %s399 = sphi 0, %s398
    %s413 = sphi 0, %s399
    %s419 = sphi 0, %s421
    %s422 = sphi 0, %s419
    %s423 = sphi 0, %s422
    %s439 = sphi 0, %s423
  $region4: #{encoder_forward.1} parent=0 // loop_header_branch
    %29 = sbr.rel (%p27) target = $region8
  $region5: #{encoder_forward.1} parent=0 // loop_body
    %s31 = ssub.s32 %s26, 1
    %s32 = ssub.s32 %s26, 2
    %s33 = sadd.s32 %s26, 1
    %s34 = ssub.s32 %s26, %s33
    %p35 = scmp.eq.s32.totalorder %s34, 0
    %s37 = sadd.s32 %s36, 1
    %s38 = scalar_select %p35, %s36, %s37
    %p41 = pneg %p35
    %p42 = scmp.eq.s32.totalorder %s26, 1
    %p43 = por %p41, %p42
    %p44 = scmp.ne.s32.totalorder %s36, %s39
    %p45 = scmp.eq.s32.totalorder %s26, 0
    %p46 = por %p44, %p45
    %p47 = scmp.ne.s32.totalorder %s36, %s39
    %p48 = scmp.eq.s32.totalorder %s31, 1
    %p49 = por %p47, %p48
    %p50 = scmp.ne.s32.totalorder %s39, %s40
    %p51 = scmp.eq.s32.totalorder %s31, 0
    %p52 = por %p50, %p51
    %p53 = scmp.ne.s32.totalorder %s39, %s40
    %p54 = scmp.eq.s32.totalorder %s32, 1
    %p55 = por %p53, %p54
    %p57 = scmp.ne.s32.totalorder %s40, %s56
    %p58 = scmp.eq.s32.totalorder %s32, 0
    %p59 = por %p57, %p58
    %s61 = sadd.s32 %s60, 1
    %p64 = scmp.eq.s32.totalorder %s26, 1
    %p65 = scmp.ne.s32.totalorder %s60, %s62
    %p66 = scmp.eq.s32.totalorder %s26, 0
    %p67 = por %p65, %p66
    %p68 = scmp.ne.s32.totalorder %s60, %s62
    %p69 = scmp.eq.s32.totalorder %s31, 1
    %p70 = por %p68, %p69
    %p71 = scmp.ne.s32.totalorder %s62, %s63
    %p72 = scmp.eq.s32.totalorder %s31, 0
    %p73 = por %p71, %p72
    %p74 = scmp.ne.s32.totalorder %s62, %s63
    %p75 = scmp.eq.s32.totalorder %s32, 1
    %p76 = por %p74, %p75
    %p78 = scmp.ne.s32.totalorder %s63, %s77
    %p79 = scmp.eq.s32.totalorder %s32, 0
    %p80 = por %p78, %p79
    %s82 = sadd.s32 %s81, 1
    %p85 = scmp.eq.s32.totalorder %s26, 1
    %p86 = scmp.ne.s32.totalorder %s81, %s83
    %p87 = scmp.eq.s32.totalorder %s26, 0
    %p88 = por %p86, %p87
    %p89 = scmp.ne.s32.totalorder %s81, %s83
    %p90 = scmp.eq.s32.totalorder %s31, 1
    %p91 = por %p89, %p90
    %p92 = scmp.ne.s32.totalorder %s83, %s84
    %p93 = scmp.eq.s32.totalorder %s31, 0
    %p94 = por %p92, %p93
    %p95 = scmp.ne.s32.totalorder %s83, %s84
    %p96 = scmp.eq.s32.totalorder %s32, 1
    %p97 = por %p95, %p96
    %p99 = scmp.ne.s32.totalorder %s84, %s98
    %p100 = scmp.eq.s32.totalorder %s32, 0
    %p101 = por %p99, %p100
    %s103 = sadd.s32 %s102, 1
    %p106 = scmp.eq.s32.totalorder %s26, 1
    %p107 = scmp.ne.s32.totalorder %s102, %s104
    %p108 = scmp.eq.s32.totalorder %s26, 0
    %p109 = por %p107, %p108
    %p110 = scmp.ne.s32.totalorder %s102, %s104
    %p111 = scmp.eq.s32.totalorder %s31, 1
    %p112 = por %p110, %p111
    %p113 = scmp.ne.s32.totalorder %s104, %s105
    %p114 = scmp.eq.s32.totalorder %s31, 0
    %p115 = por %p113, %p114
    %p116 = scmp.ne.s32.totalorder %s104, %s105
    %p117 = scmp.eq.s32.totalorder %s32, 1
    %p118 = por %p116, %p117
    %p120 = scmp.ne.s32.totalorder %s105, %s119
    %p121 = scmp.eq.s32.totalorder %s32, 0
    %p122 = por %p120, %p121
    %s124 = sadd.s32 %s123, 1
    %p127 = scmp.eq.s32.totalorder %s26, 1
    %p128 = scmp.ne.s32.totalorder %s123, %s125
    %p129 = scmp.eq.s32.totalorder %s26, 0
    %p130 = por %p128, %p129
    %p131 = scmp.ne.s32.totalorder %s123, %s125
    %p132 = scmp.eq.s32.totalorder %s31, 1
    %p133 = por %p131, %p132
    %p134 = scmp.ne.s32.totalorder %s125, %s126
    %p135 = scmp.eq.s32.totalorder %s31, 0
    %p136 = por %p134, %p135
    %p137 = scmp.ne.s32.totalorder %s125, %s126
    %p138 = scmp.eq.s32.totalorder %s32, 1
    %p139 = por %p137, %p138
    %p141 = scmp.ne.s32.totalorder %s126, %s140
    %p142 = scmp.eq.s32.totalorder %s32, 0
    %p143 = por %p141, %p142
    %s145 = sadd.s32 %s144, 1
    %p148 = scmp.eq.s32.totalorder %s26, 1
    %p149 = scmp.ne.s32.totalorder %s144, %s146
    %p150 = scmp.eq.s32.totalorder %s26, 0
    %p151 = por %p149, %p150
    %p152 = scmp.ne.s32.totalorder %s144, %s146
    %p153 = scmp.eq.s32.totalorder %s31, 1
    %p154 = por %p152, %p153
    %p155 = scmp.ne.s32.totalorder %s146, %s147
    %p156 = scmp.eq.s32.totalorder %s31, 0
    %p157 = por %p155, %p156
    %p158 = scmp.ne.s32.totalorder %s146, %s147
    %p159 = scmp.eq.s32.totalorder %s32, 1
    %p160 = por %p158, %p159
    %p162 = scmp.ne.s32.totalorder %s147, %s161
    %p163 = scmp.eq.s32.totalorder %s32, 0
    %p164 = por %p162, %p163
    %s166 = sadd.s32 %s165, 1
    %p169 = scmp.eq.s32.totalorder %s26, 1
    %p170 = scmp.ne.s32.totalorder %s165, %s167
    %p171 = scmp.eq.s32.totalorder %s26, 0
    %p172 = por %p170, %p171
    %p173 = scmp.ne.s32.totalorder %s165, %s167
    %p174 = scmp.eq.s32.totalorder %s31, 1
    %p175 = por %p173, %p174
    %p176 = scmp.ne.s32.totalorder %s167, %s168
    %p177 = scmp.eq.s32.totalorder %s31, 0
    %p178 = por %p176, %p177
    %p179 = scmp.ne.s32.totalorder %s167, %s168
    %p180 = scmp.eq.s32.totalorder %s32, 1
    %p181 = por %p179, %p180
    %p183 = scmp.ne.s32.totalorder %s168, %s182
    %p184 = scmp.eq.s32.totalorder %s32, 0
    %p185 = por %p183, %p184
    %s187 = sadd.s32 %s186, 1
    %p190 = scmp.eq.s32.totalorder %s26, 1
    %p191 = scmp.ne.s32.totalorder %s186, %s188
    %p192 = scmp.eq.s32.totalorder %s26, 0
    %p193 = por %p191, %p192
    %p194 = scmp.ne.s32.totalorder %s186, %s188
    %p195 = scmp.eq.s32.totalorder %s31, 1
    %p196 = por %p194, %p195
    %p197 = scmp.ne.s32.totalorder %s188, %s189
    %p198 = scmp.eq.s32.totalorder %s31, 0
    %p199 = por %p197, %p198
    %p200 = scmp.ne.s32.totalorder %s188, %s189
    %p201 = scmp.eq.s32.totalorder %s32, 1
    %p202 = por %p200, %p201
    %p204 = scmp.ne.s32.totalorder %s189, %s203
    %p205 = scmp.eq.s32.totalorder %s32, 0
    %p206 = por %p204, %p205
    %s208 = sadd.s32 %s207, 1
    %p211 = scmp.eq.s32.totalorder %s26, 1
    %p212 = scmp.ne.s32.totalorder %s207, %s209
    %p213 = scmp.eq.s32.totalorder %s26, 0
    %p214 = por %p212, %p213
    %p215 = scmp.ne.s32.totalorder %s207, %s209
    %p216 = scmp.eq.s32.totalorder %s31, 1
    %p217 = por %p215, %p216
    %p218 = scmp.ne.s32.totalorder %s209, %s210
    %p219 = scmp.eq.s32.totalorder %s31, 0
    %p220 = por %p218, %p219
    %p221 = scmp.ne.s32.totalorder %s209, %s210
    %p222 = scmp.eq.s32.totalorder %s32, 1
    %p223 = por %p221, %p222
    %p225 = scmp.ne.s32.totalorder %s210, %s224
    %p226 = scmp.eq.s32.totalorder %s32, 0
    %p227 = por %p225, %p226
    %s229 = sadd.s32 %s228, 1
    %p232 = scmp.eq.s32.totalorder %s26, 1
    %p233 = scmp.ne.s32.totalorder %s228, %s230
    %p234 = scmp.eq.s32.totalorder %s26, 0
    %p235 = por %p233, %p234
    %p236 = scmp.ne.s32.totalorder %s228, %s230
    %p237 = scmp.eq.s32.totalorder %s31, 1
    %p238 = por %p236, %p237
    %p239 = scmp.ne.s32.totalorder %s230, %s231
    %p240 = scmp.eq.s32.totalorder %s31, 0
    %p241 = por %p239, %p240
    %p242 = scmp.ne.s32.totalorder %s230, %s231
    %p243 = scmp.eq.s32.totalorder %s32, 1
    %p244 = por %p242, %p243
    %p246 = scmp.ne.s32.totalorder %s231, %s245
    %p247 = scmp.eq.s32.totalorder %s32, 0
    %p248 = por %p246, %p247
    %s250 = sadd.s32 %s249, 1
    %p253 = scmp.eq.s32.totalorder %s26, 1
    %p254 = scmp.ne.s32.totalorder %s249, %s251
    %p255 = scmp.eq.s32.totalorder %s26, 0
    %p256 = por %p254, %p255
    %p257 = scmp.ne.s32.totalorder %s249, %s251
    %p258 = scmp.eq.s32.totalorder %s31, 1
    %p259 = por %p257, %p258
    %p260 = scmp.ne.s32.totalorder %s251, %s252
    %p261 = scmp.eq.s32.totalorder %s31, 0
    %p262 = por %p260, %p261
    %p263 = scmp.ne.s32.totalorder %s251, %s252
    %p264 = scmp.eq.s32.totalorder %s32, 1
    %p265 = por %p263, %p264
    %p267 = scmp.ne.s32.totalorder %s252, %s266
    %p268 = scmp.eq.s32.totalorder %s32, 0
    %p269 = por %p267, %p268
    %s271 = sadd.s32 %s270, 1
    %p274 = scmp.eq.s32.totalorder %s26, 1
    %p275 = scmp.ne.s32.totalorder %s270, %s272
    %p276 = scmp.eq.s32.totalorder %s26, 0
    %p277 = por %p275, %p276
    %p278 = scmp.ne.s32.totalorder %s270, %s272
    %p279 = scmp.eq.s32.totalorder %s31, 1
    %p280 = por %p278, %p279
    %p281 = scmp.ne.s32.totalorder %s272, %s273
    %p282 = scmp.eq.s32.totalorder %s31, 0
    %p283 = por %p281, %p282
    %p284 = scmp.ne.s32.totalorder %s272, %s273
    %p285 = scmp.eq.s32.totalorder %s32, 1
    %p286 = por %p284, %p285
    %p288 = scmp.ne.s32.totalorder %s273, %s287
    %p289 = scmp.eq.s32.totalorder %s32, 0
    %p290 = por %p288, %p289
    %s292 = sadd.s32 %s291, 1
    %p295 = scmp.eq.s32.totalorder %s26, 1
    %p296 = scmp.ne.s32.totalorder %s291, %s293
    %p297 = scmp.eq.s32.totalorder %s26, 0
    %p298 = por %p296, %p297
    %p299 = scmp.ne.s32.totalorder %s291, %s293
    %p300 = scmp.eq.s32.totalorder %s31, 1
    %p301 = por %p299, %p300
    %p302 = scmp.ne.s32.totalorder %s293, %s294
    %p303 = scmp.eq.s32.totalorder %s31, 0
    %p304 = por %p302, %p303
    %p305 = scmp.ne.s32.totalorder %s293, %s294
    %p306 = scmp.eq.s32.totalorder %s32, 1
    %p307 = por %p305, %p306
    %p309 = scmp.ne.s32.totalorder %s294, %s308
    %p310 = scmp.eq.s32.totalorder %s32, 0
    %p311 = por %p309, %p310
    %s313 = sadd.s32 %s312, 1
    %p316 = scmp.eq.s32.totalorder %s26, 1
    %p317 = scmp.ne.s32.totalorder %s312, %s314
    %p318 = scmp.eq.s32.totalorder %s26, 0
    %p319 = por %p317, %p318
    %p320 = scmp.ne.s32.totalorder %s312, %s314
    %p321 = scmp.eq.s32.totalorder %s31, 1
    %p322 = por %p320, %p321
    %p323 = scmp.ne.s32.totalorder %s314, %s315
    %p324 = scmp.eq.s32.totalorder %s31, 0
    %p325 = por %p323, %p324
    %p326 = scmp.ne.s32.totalorder %s314, %s315
    %p327 = scmp.eq.s32.totalorder %s32, 1
    %p328 = por %p326, %p327
    %p330 = scmp.ne.s32.totalorder %s315, %s329
    %p331 = scmp.eq.s32.totalorder %s32, 0
    %p332 = por %p330, %p331
    %s334 = sadd.s32 %s333, 1
    %p337 = scmp.eq.s32.totalorder %s26, 1
    %p338 = scmp.ne.s32.totalorder %s333, %s335
    %p339 = scmp.eq.s32.totalorder %s26, 0
    %p340 = por %p338, %p339
    %p341 = scmp.ne.s32.totalorder %s333, %s335
    %p342 = scmp.eq.s32.totalorder %s31, 1
    %p343 = por %p341, %p342
    %p344 = scmp.ne.s32.totalorder %s335, %s336
    %p345 = scmp.eq.s32.totalorder %s31, 0
    %p346 = por %p344, %p345
    %p347 = scmp.ne.s32.totalorder %s335, %s336
    %p348 = scmp.eq.s32.totalorder %s32, 1
    %p349 = por %p347, %p348
    %p351 = scmp.ne.s32.totalorder %s336, %s350
    %p352 = scmp.eq.s32.totalorder %s32, 0
    %p353 = por %p351, %p352
    %s355 = sadd.s32 %s354, 1
    %p358 = scmp.eq.s32.totalorder %s26, 1
    %p359 = scmp.ne.s32.totalorder %s354, %s356
    %p360 = scmp.eq.s32.totalorder %s26, 0
    %p361 = por %p359, %p360
    %p362 = scmp.ne.s32.totalorder %s354, %s356
    %p363 = scmp.eq.s32.totalorder %s31, 1
    %p364 = por %p362, %p363
    %p365 = scmp.ne.s32.totalorder %s356, %s357
    %p366 = scmp.eq.s32.totalorder %s31, 0
    %p367 = por %p365, %p366
    %p368 = scmp.ne.s32.totalorder %s356, %s357
    %p369 = scmp.eq.s32.totalorder %s32, 1
    %p370 = por %p368, %p369
    %p372 = scmp.ne.s32.totalorder %s357, %s371
    %p373 = scmp.eq.s32.totalorder %s32, 0
    %p374 = por %p372, %p373
    %s376 = sadd.s32 %s375, 1
    %p379 = scmp.eq.s32.totalorder %s26, 1
    %p380 = scmp.ne.s32.totalorder %s375, %s377
    %p381 = scmp.eq.s32.totalorder %s26, 0
    %p382 = por %p380, %p381
    %p383 = scmp.ne.s32.totalorder %s375, %s377
    %p384 = scmp.eq.s32.totalorder %s31, 1
    %p385 = por %p383, %p384
    %p386 = scmp.ne.s32.totalorder %s377, %s378
    %p387 = scmp.eq.s32.totalorder %s31, 0
    %p388 = por %p386, %p387
    %p389 = scmp.ne.s32.totalorder %s377, %s378
    %p390 = scmp.eq.s32.totalorder %s32, 1
    %p391 = por %p389, %p390
    %p393 = scmp.ne.s32.totalorder %s378, %s392
    %p394 = scmp.eq.s32.totalorder %s32, 0
    %p395 = por %p393, %p394
    %s397 = sadd.s32 %s396, 1
    %p400 = scmp.eq.s32.totalorder %s26, 1
    %p401 = scmp.ne.s32.totalorder %s396, %s398
    %p402 = scmp.eq.s32.totalorder %s26, 0
    %p403 = por %p401, %p402
    %p404 = scmp.ne.s32.totalorder %s396, %s398
    %p405 = scmp.eq.s32.totalorder %s31, 1
    %p406 = por %p404, %p405
    %p407 = scmp.ne.s32.totalorder %s398, %s399
    %p408 = scmp.eq.s32.totalorder %s31, 0
    %p409 = por %p407, %p408
    %p410 = scmp.ne.s32.totalorder %s398, %s399
    %p411 = scmp.eq.s32.totalorder %s32, 1
    %p412 = por %p410, %p411
    %p414 = scmp.ne.s32.totalorder %s399, %s413
    %p415 = scmp.eq.s32.totalorder %s32, 0
    %p416 = por %p414, %p415
    %s417 = ssub.s32 %s26, %s33
    %p418 = scmp.eq.s32.totalorder %s417, 0
    %s420 = sadd.s32 %s419, 1
    %s421 = scalar_select %p418, %s419, %s420
    %p424 = pneg %p418
    %p425 = scmp.eq.s32.totalorder %s26, 1
    %p426 = por %p424, %p425
    %p427 = scmp.ne.s32.totalorder %s419, %s422
    %p428 = scmp.eq.s32.totalorder %s26, 0
    %p429 = por %p427, %p428
    %p430 = scmp.ne.s32.totalorder %s419, %s422
    %p431 = scmp.eq.s32.totalorder %s31, 1
    %p432 = por %p430, %p431
    %p433 = scmp.ne.s32.totalorder %s422, %s423
    %p434 = scmp.eq.s32.totalorder %s31, 0
    %p435 = por %p433, %p434
    %p436 = scmp.ne.s32.totalorder %s422, %s423
    %p437 = scmp.eq.s32.totalorder %s32, 1
    %p438 = por %p436, %p437
    %p440 = scmp.ne.s32.totalorder %s423, %s439
    %p441 = scmp.eq.s32.totalorder %s32, 0
    %p442 = por %p440, %p441
    %p443 = scmp.le.s32.totalorder 1, %s26
    %p444 = scmp.lt.s32.totalorder %s26, 3
    %p445 = pnand %p443, %p444
    %p446 = pneg %p445
    // Predicated region
    $region9: #{encoder_forward.1} parent=5 // pred_check
      _
    $region10: #{encoder_forward.1} parent=5 // pred_check_branch
      %448 = sbr.rel (%p445) target = $region12
    $region11: #{encoder_forward.1} parent=5 // pred_region
      %s449 = ssub.s32 %s26, 1
      // Predicated region
      $region13: #{encoder_forward.1} parent=11 // pred_check
        %p450 = pneg %p73
      $region14: #{encoder_forward.1} parent=11 // pred_check_branch
        %452 = sbr.rel (%p450) target = $region16
      $region15: #{encoder_forward.1} parent=11 // pred_region
        _
      $region16: #{encoder_forward.1} parent=11 // pred_fallthru
        _
      // Predicated region
      $region17: #{encoder_forward.1} parent=11 // pred_check
        %p453 = pneg %p94
      $region18: #{encoder_forward.1} parent=11 // pred_check_branch
        %455 = sbr.rel (%p453) target = $region20
      $region19: #{encoder_forward.1} parent=11 // pred_region
        _
      $region20: #{encoder_forward.1} parent=11 // pred_fallthru
        _
      // Predicated region
      $region21: #{encoder_forward.1} parent=11 // pred_check
        %p456 = pneg %p115
      $region22: #{encoder_forward.1} parent=11 // pred_check_branch
        %458 = sbr.rel (%p456) target = $region24
      $region23: #{encoder_forward.1} parent=11 // pred_region
        _
      $region24: #{encoder_forward.1} parent=11 // pred_fallthru
        _
      // Predicated region
      $region25: #{encoder_forward.1} parent=11 // pred_check
        %p459 = pneg %p136
      $region26: #{encoder_forward.1} parent=11 // pred_check_branch
        %461 = sbr.rel (%p459) target = $region28
      $region27: #{encoder_forward.1} parent=11 // pred_region
        _
      $region28: #{encoder_forward.1} parent=11 // pred_fallthru
        _
      // Predicated region
      $region29: #{encoder_forward.1} parent=11 // pred_check
        %p462 = pneg %p157
      $region30: #{encoder_forward.1} parent=11 // pred_check_branch
        %464 = sbr.rel (%p462) target = $region32
      $region31: #{encoder_forward.1} parent=11 // pred_region
        _
      $region32: #{encoder_forward.1} parent=11 // pred_fallthru
        _
      // Predicated region
      $region33: #{encoder_forward.1} parent=11 // pred_check
        %p465 = pneg %p178
      $region34: #{encoder_forward.1} parent=11 // pred_check_branch
        %467 = sbr.rel (%p465) target = $region36
      $region35: #{encoder_forward.1} parent=11 // pred_region
        _
      $region36: #{encoder_forward.1} parent=11 // pred_fallthru
        _
      // Predicated region
      $region37: #{encoder_forward.1} parent=11 // pred_check
        %p468 = pneg %p199
      $region38: #{encoder_forward.1} parent=11 // pred_check_branch
        %470 = sbr.rel (%p468) target = $region40
      $region39: #{encoder_forward.1} parent=11 // pred_region
        _
      $region40: #{encoder_forward.1} parent=11 // pred_fallthru
        _
      // Predicated region
      $region41: #{encoder_forward.1} parent=11 // pred_check
        %p471 = pneg %p220
      $region42: #{encoder_forward.1} parent=11 // pred_check_branch
        %473 = sbr.rel (%p471) target = $region44
      $region43: #{encoder_forward.1} parent=11 // pred_region
        _
      $region44: #{encoder_forward.1} parent=11 // pred_fallthru
        _
      // Predicated region
      $region45: #{encoder_forward.1} parent=11 // pred_check
        %p474 = pneg %p241
      $region46: #{encoder_forward.1} parent=11 // pred_check_branch
        %476 = sbr.rel (%p474) target = $region48
      $region47: #{encoder_forward.1} parent=11 // pred_region
        _
      $region48: #{encoder_forward.1} parent=11 // pred_fallthru
        _
      // Predicated region
      $region49: #{encoder_forward.1} parent=11 // pred_check
        %p477 = pneg %p262
      $region50: #{encoder_forward.1} parent=11 // pred_check_branch
        %479 = sbr.rel (%p477) target = $region52
      $region51: #{encoder_forward.1} parent=11 // pred_region
        _
      $region52: #{encoder_forward.1} parent=11 // pred_fallthru
        _
      // Predicated region
      $region53: #{encoder_forward.1} parent=11 // pred_check
        %p480 = pneg %p283
      $region54: #{encoder_forward.1} parent=11 // pred_check_branch
        %482 = sbr.rel (%p480) target = $region56
      $region55: #{encoder_forward.1} parent=11 // pred_region
        _
      $region56: #{encoder_forward.1} parent=11 // pred_fallthru
        _
      // Predicated region
      $region57: #{encoder_forward.1} parent=11 // pred_check
        %p483 = pneg %p304
      $region58: #{encoder_forward.1} parent=11 // pred_check_branch
        %485 = sbr.rel (%p483) target = $region60
      $region59: #{encoder_forward.1} parent=11 // pred_region
        _
      $region60: #{encoder_forward.1} parent=11 // pred_fallthru
        _
      // Predicated region
      $region61: #{encoder_forward.1} parent=11 // pred_check
        %p486 = pneg %p325
      $region62: #{encoder_forward.1} parent=11 // pred_check_branch
        %488 = sbr.rel (%p486) target = $region64
      $region63: #{encoder_forward.1} parent=11 // pred_region
        _
      $region64: #{encoder_forward.1} parent=11 // pred_fallthru
        _
      // Predicated region
      $region65: #{encoder_forward.1} parent=11 // pred_check
        %p489 = pneg %p346
      $region66: #{encoder_forward.1} parent=11 // pred_check_branch
        %491 = sbr.rel (%p489) target = $region68
      $region67: #{encoder_forward.1} parent=11 // pred_region
        _
      $region68: #{encoder_forward.1} parent=11 // pred_fallthru
        _
      // Predicated region
      $region69: #{encoder_forward.1} parent=11 // pred_check
        %p492 = pneg %p367
      $region70: #{encoder_forward.1} parent=11 // pred_check_branch
        %494 = sbr.rel (%p492) target = $region72
      $region71: #{encoder_forward.1} parent=11 // pred_region
        _
      $region72: #{encoder_forward.1} parent=11 // pred_fallthru
        _
      // Predicated region
      $region73: #{encoder_forward.1} parent=11 // pred_check
        %p495 = pneg %p388
      $region74: #{encoder_forward.1} parent=11 // pred_check_branch
        %497 = sbr.rel (%p495) target = $region76
      $region75: #{encoder_forward.1} parent=11 // pred_region
        _
      $region76: #{encoder_forward.1} parent=11 // pred_fallthru
        _
      // Predicated region
      $region77: #{encoder_forward.1} parent=11 // pred_check
        %p498 = pneg %p409
      $region78: #{encoder_forward.1} parent=11 // pred_check_branch
        %500 = sbr.rel (%p498) target = $region80
      $region79: #{encoder_forward.1} parent=11 // pred_region
        _
      $region80: #{encoder_forward.1} parent=11 // pred_fallthru
        _
    $region12: #{encoder_forward.1} parent=5 // pred_fallthru
      _
    %p501 = scmp.lt.s32.totalorder %s26, 2
    // Predicated region
    $region81: #{encoder_forward.1} parent=5 // pred_check
      %p502 = pneg %p501
    $region82: #{encoder_forward.1} parent=5 // pred_check_branch
      %504 = sbr.rel (%p502) target = $region84
    $region83: #{encoder_forward.1} parent=5 // pred_region
      // Predicated region
      $region85: #{encoder_forward.1} parent=83 // pred_check
        %p505 = pneg %p46
      $region86: #{encoder_forward.1} parent=83 // pred_check_branch
        %507 = sbr.rel (%p505) target = $region88
      $region87: #{encoder_forward.1} parent=83 // pred_region
        %p508 = scmp.lt.s32.totalorder %s26, 1
        %s509 = scalar_select %p508, %s26, 1
        %s510 = smul.addr %s509, 4
        %s511 = smul.addr %s510, 8
        %s512 = scalar_lea.vmem %s0, %s511
      $region88: #{encoder_forward.1} parent=83 // pred_fallthru
        _
    $region84: #{encoder_forward.1} parent=5 // pred_fallthru
      _
    %p513 = scmp.le.s32.totalorder 1, %s26
    %p514 = scmp.lt.s32.totalorder %s26, 3
    %p515 = pnand %p513, %p514
    %p516 = pneg %p515
    // Predicated region
    $region89: #{encoder_forward.1} parent=5 // pred_check
      _
    $region90: #{encoder_forward.1} parent=5 // pred_check_branch
      %518 = sbr.rel (%p515) target = $region92
    $region91: #{encoder_forward.1} parent=5 // pred_region
      %s519 = ssub.s32 %s26, 1
      %p520 = scmp.lt.s32.totalorder %s31, 1
      %s521 = scalar_select %p520, %s31, 1
      %s522 = smul.addr %s521, 4
      %s523 = smul.addr %s522, 8
      %s524 = scalar_lea.vmem %s0, %s523
      %p525 = pneg %p52
      %p526 = pneg %p49
      %p527 = pneg %p73
      %p528 = pneg %p70
      %p529 = pneg %p94
      %p530 = pneg %p91
      %p531 = pneg %p115
      %p532 = pneg %p112
      %p533 = pneg %p136
      %p534 = pneg %p133
      %p535 = pneg %p157
      %p536 = pneg %p154
      %p537 = pneg %p178
      %p538 = pneg %p175
      %p539 = pneg %p199
      %p540 = pneg %p196
      %p541 = pneg %p220
      %p542 = pneg %p217
      %p543 = pneg %p241
      %p544 = pneg %p238
      %p545 = pneg %p262
      %p546 = pneg %p259
      %p547 = pneg %p283
      %p548 = pneg %p280
      %p549 = pneg %p304
      %p550 = pneg %p301
      %p551 = pneg %p325
      %p552 = pneg %p322
      %p553 = pneg %p346
      %p554 = pneg %p343
      %p555 = pneg %p367
      %p556 = pneg %p364
      %p557 = pneg %p388
      %p558 = pneg %p385
      %p559 = pneg %p409
      %p560 = pneg %p406
      %p561 = pneg %p435
      %p562 = pneg %p432
      %p563 = scmp.lt.s32.totalorder %s31, 1
      %s564 = scalar_select %p563, %s31, 1
      %s565 = scalar_lea.vmem %s18, %s564
      %p566 = scmp.lt.s32.totalorder %s31, 1
      %s567 = scalar_select %p566, %s31, 1
      %s568 = smul.addr %s567, 4
      %s569 = smul.addr %s568, 8
      %s570 = scalar_lea.vmem %s0, %s569
      %p571 = scmp.lt.s32.totalorder %s31, 1
      %s572 = scalar_select %p571, %s31, 1
      %s573 = scalar_lea.vmem %s18, %s572
      %v574 = vld [vmem:[%s570] sm:$0xff]
      %v575 = vld [vmem:[%s570 + $0x8] sm:$0xff]
      %v576 = vld [vmem:[%s570 + $0x10] sm:$0xff]
      %v577 = vld [vmem:[%s570 + $0x18] sm:$0xff]
      %578 = vrot.lane.b32.xlu0 %v574, 73
      %v579 = vpop.permute.xlu0 %578
      %580 = vrot.lane.b32.xlu0 %v575, 73
      %v581 = vpop.permute.xlu0 %580
      %582 = vrot.lane.b32.xlu0 %v576, 73
      %v583 = vpop.permute.xlu0 %582
      %584 = vrot.lane.b32.xlu0 %v577, 73
      %v585 = vpop.permute.xlu0 %584
      %v586 = vlaneseq
      %v587 = vand.u32 %v586, 127
      %vm588 = vcmp.lt.s32.totalorder %v587, 73
      %v589 = vsel %vm588, %v583, %v585
      %v590 = vsel %vm588, %v581, %v583
      %v591 = vsel %vm588, %v579, %v581
      %v592 = vsel %vm588, %v585, %v579
      %v593 = vld [vmem:[%s1] ss:$8 sm:$0xf]
      %v595 = vlaneseq
      %v596 = vshrl.u32 %v595, 7
      %v597 = vsub.s32 0, %v596
      %v598 = vrot.slane %v593, %v597
      %v599 = vlaneseq
      %v600 = vshrl.u32 %v599, 7
      %v601 = vsub.s32 1, %v600
      %v602 = vrot.slane %v593, %v601
      %v603 = vlaneseq
      %v604 = vshrl.u32 %v603, 7
      %v605 = vsub.s32 2, %v604
      %v606 = vrot.slane %v593, %v605
      %v607 = vlaneseq
      %v608 = vshrl.u32 %v607, 7
      %v609 = vsub.s32 3, %v608
      %v610 = vrot.slane %v593, %v609
      %v615 = vmul.f32 %v592, %v598
      %v616 = vmul.f32 %v591, %v602
      %v617 = vmul.f32 %v590, %v606
      %v618 = vmul.f32 %v589, %v610
      %619 = vst [vmem:[#allocation2] sm:$0xff] %v615
      %620 = vst [vmem:[#allocation2 + $0x8] sm:$0xff] %v616
      %621 = vst [vmem:[#allocation2 + $0x10] sm:$0xff] %v617
      %622 = vst [vmem:[#allocation2 + $0x18] sm:$0xff] %v618
      %623 = vrot.lane.b32.xlu0 %v574, 72
      %v624 = vpop.permute.xlu0 %623
      %625 = vrot.lane.b32.xlu0 %v575, 72
      %v626 = vpop.permute.xlu0 %625
      %627 = vrot.lane.b32.xlu0 %v576, 72
      %v628 = vpop.permute.xlu0 %627
      %629 = vrot.lane.b32.xlu0 %v577, 72
      %v630 = vpop.permute.xlu0 %629
      %vm631 = vcmp.lt.s32.totalorder %v587, 72
      %v632 = vsel %vm631, %v628, %v630
      %v633 = vsel %vm631, %v626, %v628
      %v634 = vsel %vm631, %v624, %v626
      %v635 = vsel %vm631, %v630, %v624
      %s636 = scalar_lea.vmem %s1, 1
      %v637 = vld [vmem:[%s636] ss:$8 sm:$0xf]
      %v639 = vlaneseq
      %v640 = vshrl.u32 %v639, 7
      %v641 = vsub.s32 0, %v640
      %v642 = vrot.slane %v637, %v641
      %v643 = vlaneseq
      %v644 = vshrl.u32 %v643, 7
      %v645 = vsub.s32 1, %v644
      %v646 = vrot.slane %v637, %v645
      %v647 = vlaneseq
      %v648 = vshrl.u32 %v647, 7
      %v649 = vsub.s32 2, %v648
      %v650 = vrot.slane %v637, %v649
      %v651 = vlaneseq
      %v652 = vshrl.u32 %v651, 7
      %v653 = vsub.s32 3, %v652
      %v654 = vrot.slane %v637, %v653
      %v659 = vmul.f32 %v635, %v642
      %v660 = vmul.f32 %v634, %v646
      %v661 = vmul.f32 %v633, %v650
      %v662 = vmul.f32 %v632, %v654
      %663 = vst [vmem:[#allocation2 + $0x20] sm:$0xff] %v659
      %664 = vst [vmem:[#allocation2 + $0x28] sm:$0xff] %v660
      %665 = vst [vmem:[#allocation2 + $0x30] sm:$0xff] %v661
      %666 = vst [vmem:[#allocation2 + $0x38] sm:$0xff] %v662
      %667 = vrot.lane.b32.xlu0 %v574, 71
      %v668 = vpop.permute.xlu0 %667
      %669 = vrot.lane.b32.xlu0 %v575, 71
      %v670 = vpop.permute.xlu0 %669
      %671 = vrot.lane.b32.xlu0 %v576, 71
      %v672 = vpop.permute.xlu0 %671
      %673 = vrot.lane.b32.xlu0 %v577, 71
      %v674 = vpop.permute.xlu0 %673
      %vm675 = vcmp.lt.s32.totalorder %v587, 71
      %v676 = vsel %vm675, %v672, %v674
      %v677 = vsel %vm675, %v670, %v672
      %v678 = vsel %vm675, %v668, %v670
      %v679 = vsel %vm675, %v674, %v668
      %s680 = scalar_lea.vmem %s1, 2
      %v681 = vld [vmem:[%s680] ss:$8 sm:$0xf]
      %v683 = vlaneseq
      %v684 = vshrl.u32 %v683, 7
      %v685 = vsub.s32 0, %v684
      %v686 = vrot.slane %v681, %v685
      %v687 = vlaneseq
      %v688 = vshrl.u32 %v687, 7
      %v689 = vsub.s32 1, %v688
      %v690 = vrot.slane %v681, %v689
      %v691 = vlaneseq
      %v692 = vshrl.u32 %v691, 7
      %v693 = vsub.s32 2, %v692
      %v694 = vrot.slane %v681, %v693
      %v695 = vlaneseq
      %v696 = vshrl.u32 %v695, 7
      %v697 = vsub.s32 3, %v696
      %v698 = vrot.slane %v681, %v697
      %v703 = vmul.f32 %v679, %v686
      %v704 = vmul.f32 %v678, %v690
      %v705 = vmul.f32 %v677, %v694
      %v706 = vmul.f32 %v676, %v698
      %707 = vst [vmem:[#allocation2 + $0x40] sm:$0xff] %v703
      %708 = vst [vmem:[#allocation2 + $0x48] sm:$0xff] %v704
      %709 = vst [vmem:[#allocation2 + $0x50] sm:$0xff] %v705
      %710 = vst [vmem:[#allocation2 + $0x58] sm:$0xff] %v706
      %711 = vrot.lane.b32.xlu0 %v574, 65
      %v712 = vpop.permute.xlu0 %711
      %713 = vrot.lane.b32.xlu0 %v575, 65
      %v714 = vpop.permute.xlu0 %713
      %715 = vrot.lane.b32.xlu0 %v576, 65
      %v716 = vpop.permute.xlu0 %715
      %717 = vrot.lane.b32.xlu0 %v577, 65
      %v718 = vpop.permute.xlu0 %717
      %vm719 = vcmp.lt.s32.totalorder %v587, 65
      %v720 = vsel %vm719, %v716, %v718
      %v721 = vsel %vm719, %v714, %v716
      %v722 = vsel %vm719, %v712, %v714
      %v723 = vsel %vm719, %v718, %v712
      %s724 = scalar_lea.vmem %s1, 3
      %v725 = vld [vmem:[%s724] ss:$8 sm:$0xf]
      %v727 = vlaneseq
      %v728 = vshrl.u32 %v727, 7
      %v729 = vsub.s32 0, %v728
      %v730 = vrot.slane %v725, %v729
      %v731 = vlaneseq
      %v732 = vshrl.u32 %v731, 7
      %v733 = vsub.s32 1, %v732
      %v734 = vrot.slane %v725, %v733
      %v735 = vlaneseq
      %v736 = vshrl.u32 %v735, 7
      %v737 = vsub.s32 2, %v736
      %v738 = vrot.slane %v725, %v737
      %v739 = vlaneseq
      %v740 = vshrl.u32 %v739, 7
      %v741 = vsub.s32 3, %v740
      %v742 = vrot.slane %v725, %v741
      %v747 = vmul.f32 %v723, %v730
      %v748 = vmul.f32 %v722, %v734
      %v749 = vmul.f32 %v721, %v738
      %v750 = vmul.f32 %v720, %v742
      %751 = vst [vmem:[#allocation2 + $0x60] sm:$0xff] %v747
      %752 = vst [vmem:[#allocation2 + $0x68] sm:$0xff] %v748
      %753 = vst [vmem:[#allocation2 + $0x70] sm:$0xff] %v749
      %754 = vst [vmem:[#allocation2 + $0x78] sm:$0xff] %v750
      %755 = vrot.lane.b32.xlu0 %v574, 64
      %v756 = vpop.permute.xlu0 %755
      %757 = vrot.lane.b32.xlu0 %v575, 64
      %v758 = vpop.permute.xlu0 %757
      %759 = vrot.lane.b32.xlu0 %v576, 64
      %v760 = vpop.permute.xlu0 %759
      %761 = vrot.lane.b32.xlu0 %v577, 64
      %v762 = vpop.permute.xlu0 %761
      %vm763 = vcmp.lt.s32.totalorder %v587, 64
      %v764 = vsel %vm763, %v760, %v762
      %v765 = vsel %vm763, %v758, %v760
      %v766 = vsel %vm763, %v756, %v758
      %v767 = vsel %vm763, %v762, %v756
      %s768 = scalar_lea.vmem %s1, 4
      %v769 = vld [vmem:[%s768] ss:$8 sm:$0xf]
      %v771 = vlaneseq
      %v772 = vshrl.u32 %v771, 7
      %v773 = vsub.s32 0, %v772
      %v774 = vrot.slane %v769, %v773
      %v775 = vlaneseq
      %v776 = vshrl.u32 %v775, 7
      %v777 = vsub.s32 1, %v776
      %v778 = vrot.slane %v769, %v777
      %v779 = vlaneseq
      %v780 = vshrl.u32 %v779, 7
      %v781 = vsub.s32 2, %v780
      %v782 = vrot.slane %v769, %v781
      %v783 = vlaneseq
      %v784 = vshrl.u32 %v783, 7
      %v785 = vsub.s32 3, %v784
      %v786 = vrot.slane %v769, %v785
      %v791 = vmul.f32 %v767, %v774
      %v792 = vmul.f32 %v766, %v778
      %v793 = vmul.f32 %v765, %v782
      %v794 = vmul.f32 %v764, %v786
      %795 = vst [vmem:[#allocation2 + $0x80] sm:$0xff] %v791
      %796 = vst [vmem:[#allocation2 + $0x88] sm:$0xff] %v792
      %797 = vst [vmem:[#allocation2 + $0x90] sm:$0xff] %v793
      %798 = vst [vmem:[#allocation2 + $0x98] sm:$0xff] %v794
      %799 = vrot.lane.b32.xlu0 %v574, 63
      %v800 = vpop.permute.xlu0 %799
      %801 = vrot.lane.b32.xlu0 %v575, 63
      %v802 = vpop.permute.xlu0 %801
      %803 = vrot.lane.b32.xlu0 %v576, 63
      %v804 = vpop.permute.xlu0 %803
      %805 = vrot.lane.b32.xlu0 %v577, 63
      %v806 = vpop.permute.xlu0 %805
      %vm807 = vcmp.lt.s32.totalorder %v587, 63
      %v808 = vsel %vm807, %v804, %v806
      %v809 = vsel %vm807, %v802, %v804
      %v810 = vsel %vm807, %v800, %v802
      %v811 = vsel %vm807, %v806, %v800
      %s812 = scalar_lea.vmem %s1, 5
      %v813 = vld [vmem:[%s812] ss:$8 sm:$0xf]
      %v815 = vlaneseq
      %v816 = vshrl.u32 %v815, 7
      %v817 = vsub.s32 0, %v816
      %v818 = vrot.slane %v813, %v817
      %v819 = vlaneseq
      %v820 = vshrl.u32 %v819, 7
      %v821 = vsub.s32 1, %v820
      %v822 = vrot.slane %v813, %v821
      %v823 = vlaneseq
      %v824 = vshrl.u32 %v823, 7
      %v825 = vsub.s32 2, %v824
      %v826 = vrot.slane %v813, %v825
      %v827 = vlaneseq
      %v828 = vshrl.u32 %v827, 7
      %v829 = vsub.s32 3, %v828
      %v830 = vrot.slane %v813, %v829
      %v835 = vmul.f32 %v811, %v818
      %v836 = vmul.f32 %v810, %v822
      %v837 = vmul.f32 %v809, %v826
      %v838 = vmul.f32 %v808, %v830
      %839 = vst [vmem:[#allocation2 + $0xa0] sm:$0xff] %v835
      %840 = vst [vmem:[#allocation2 + $0xa8] sm:$0xff] %v836
      %841 = vst [vmem:[#allocation2 + $0xb0] sm:$0xff] %v837
      %842 = vst [vmem:[#allocation2 + $0xb8] sm:$0xff] %v838
      %843 = vrot.lane.b32.xlu0 %v574, 57
      %v844 = vpop.permute.xlu0 %843
      %845 = vrot.lane.b32.xlu0 %v575, 57
      %v846 = vpop.permute.xlu0 %845
      %847 = vrot.lane.b32.xlu0 %v576, 57
      %v848 = vpop.permute.xlu0 %847
      %849 = vrot.lane.b32.xlu0 %v577, 57
      %v850 = vpop.permute.xlu0 %849
      %vm851 = vcmp.lt.s32.totalorder %v587, 57
      %v852 = vsel %vm851, %v848, %v850
      %v853 = vsel %vm851, %v846, %v848
      %v854 = vsel %vm851, %v844, %v846
      %v855 = vsel %vm851, %v850, %v844
      %s856 = scalar_lea.vmem %s1, 6
      %v857 = vld [vmem:[%s856] ss:$8 sm:$0xf]
      %v859 = vlaneseq
      %v860 = vshrl.u32 %v859, 7
      %v861 = vsub.s32 0, %v860
      %v862 = vrot.slane %v857, %v861
      %v863 = vlaneseq
      %v864 = vshrl.u32 %v863, 7
      %v865 = vsub.s32 1, %v864
      %v866 = vrot.slane %v857, %v865
      %v867 = vlaneseq
      %v868 = vshrl.u32 %v867, 7
      %v869 = vsub.s32 2, %v868
      %v870 = vrot.slane %v857, %v869
      %v871 = vlaneseq
      %v872 = vshrl.u32 %v871, 7
      %v873 = vsub.s32 3, %v872
      %v874 = vrot.slane %v857, %v873
      %v879 = vmul.f32 %v855, %v862
      %v880 = vmul.f32 %v854, %v866
      %v881 = vmul.f32 %v853, %v870
      %v882 = vmul.f32 %v852, %v874
      %883 = vst [vmem:[#allocation2 + $0xc0] sm:$0xff] %v879
      %884 = vst [vmem:[#allocation2 + $0xc8] sm:$0xff] %v880
      %885 = vst [vmem:[#allocation2 + $0xd0] sm:$0xff] %v881
      %886 = vst [vmem:[#allocation2 + $0xd8] sm:$0xff] %v882
      %887 = vrot.lane.b32.xlu0 %v574, 56
      %v888 = vpop.permute.xlu0 %887
      %889 = vrot.lane.b32.xlu0 %v575, 56
      %v890 = vpop.permute.xlu0 %889
      %891 = vrot.lane.b32.xlu0 %v576, 56
      %v892 = vpop.permute.xlu0 %891
      %893 = vrot.lane.b32.xlu0 %v577, 56
      %v894 = vpop.permute.xlu0 %893
      %vm895 = vcmp.lt.s32.totalorder %v587, 56
      %v896 = vsel %vm895, %v892, %v894
      %v897 = vsel %vm895, %v890, %v892
      %v898 = vsel %vm895, %v888, %v890
      %v899 = vsel %vm895, %v894, %v888
      %s900 = scalar_lea.vmem %s1, 7
      %v901 = vld [vmem:[%s900] ss:$8 sm:$0xf]
      %v903 = vlaneseq
      %v904 = vshrl.u32 %v903, 7
      %v905 = vsub.s32 0, %v904
      %v906 = vrot.slane %v901, %v905
      %v907 = vlaneseq
      %v908 = vshrl.u32 %v907, 7
      %v909 = vsub.s32 1, %v908
      %v910 = vrot.slane %v901, %v909
      %v911 = vlaneseq
      %v912 = vshrl.u32 %v911, 7
      %v913 = vsub.s32 2, %v912
      %v914 = vrot.slane %v901, %v913
      %v915 = vlaneseq
      %v916 = vshrl.u32 %v915, 7
      %v917 = vsub.s32 3, %v916
      %v918 = vrot.slane %v901, %v917
      %v923 = vmul.f32 %v899, %v906
      %v924 = vmul.f32 %v898, %v910
      %v925 = vmul.f32 %v897, %v914
      %v926 = vmul.f32 %v896, %v918
      %927 = vst [vmem:[#allocation2 + $0xe0] sm:$0xff] %v923
      %928 = vst [vmem:[#allocation2 + $0xe8] sm:$0xff] %v924
      %929 = vst [vmem:[#allocation2 + $0xf0] sm:$0xff] %v925
      %930 = vst [vmem:[#allocation2 + $0xf8] sm:$0xff] %v926
      %931 = vrot.lane.b32.xlu0 %v574, 55
      %v932 = vpop.permute.xlu0 %931
      %933 = vrot.lane.b32.xlu0 %v575, 55
      %v934 = vpop.permute.xlu0 %933
      %935 = vrot.lane.b32.xlu0 %v576, 55
      %v936 = vpop.permute.xlu0 %935
      %937 = vrot.lane.b32.xlu0 %v577, 55
      %v938 = vpop.permute.xlu0 %937
      %vm939 = vcmp.lt.s32.totalorder %v587, 55
      %v940 = vsel %vm939, %v936, %v938
      %v941 = vsel %vm939, %v934, %v936
      %v942 = vsel %vm939, %v932, %v934
      %v943 = vsel %vm939, %v938, %v932
      %s944 = scalar_lea.vmem %s1, 32
      %v945 = vld [vmem:[%s944] ss:$8 sm:$0xf]
      %v947 = vlaneseq
      %v948 = vshrl.u32 %v947, 7
      %v949 = vsub.s32 0, %v948
      %v950 = vrot.slane %v945, %v949
      %v951 = vlaneseq
      %v952 = vshrl.u32 %v951, 7
      %v953 = vsub.s32 1, %v952
      %v954 = vrot.slane %v945, %v953
      %v955 = vlaneseq
      %v956 = vshrl.u32 %v955, 7
      %v957 = vsub.s32 2, %v956
      %v958 = vrot.slane %v945, %v957
      %v959 = vlaneseq
      %v960 = vshrl.u32 %v959, 7
      %v961 = vsub.s32 3, %v960
      %v962 = vrot.slane %v945, %v961
      %v967 = vmul.f32 %v943, %v950
      %v968 = vmul.f32 %v942, %v954
      %v969 = vmul.f32 %v941, %v958
      %v970 = vmul.f32 %v940, %v962
      %971 = vst [vmem:[#allocation2 + $0x100] sm:$0xff] %v967
      %972 = vst [vmem:[#allocation2 + $0x108] sm:$0xff] %v968
      %973 = vst [vmem:[#allocation2 + $0x110] sm:$0xff] %v969
      %974 = vst [vmem:[#allocation2 + $0x118] sm:$0xff] %v970
      %975 = vrot.lane.b32.xlu0 %v574, 9
      %v976 = vpop.permute.xlu0 %975
      %977 = vrot.lane.b32.xlu0 %v575, 9
      %v978 = vpop.permute.xlu0 %977
      %979 = vrot.lane.b32.xlu0 %v576, 9
      %v980 = vpop.permute.xlu0 %979
      %981 = vrot.lane.b32.xlu0 %v577, 9
      %v982 = vpop.permute.xlu0 %981
      %vm983 = vcmp.lt.s32.totalorder %v587, 9
      %v984 = vsel %vm983, %v980, %v982
      %v985 = vsel %vm983, %v978, %v980
      %v986 = vsel %vm983, %v976, %v978
      %v987 = vsel %vm983, %v982, %v976
      %s988 = scalar_lea.vmem %s1, 33
      %v989 = vld [vmem:[%s988] ss:$8 sm:$0xf]
      %v991 = vlaneseq
      %v992 = vshrl.u32 %v991, 7
      %v993 = vsub.s32 0, %v992
      %v994 = vrot.slane %v989, %v993
      %v995 = vlaneseq
      %v996 = vshrl.u32 %v995, 7
      %v997 = vsub.s32 1, %v996
      %v998 = vrot.slane %v989, %v997
      %v999 = vlaneseq
      %v1000 = vshrl.u32 %v999, 7
      %v1001 = vsub.s32 2, %v1000
      %v1002 = vrot.slane %v989, %v1001
      %v1003 = vlaneseq
      %v1004 = vshrl.u32 %v1003, 7
      %v1005 = vsub.s32 3, %v1004
      %v1006 = vrot.slane %v989, %v1005
      %v1011 = vmul.f32 %v987, %v994
      %v1012 = vmul.f32 %v986, %v998
      %v1013 = vmul.f32 %v985, %v1002
      %v1014 = vmul.f32 %v984, %v1006
      %1015 = vst [vmem:[#allocation2 + $0x120] sm:$0xff] %v1011
      %1016 = vst [vmem:[#allocation2 + $0x128] sm:$0xff] %v1012
      %1017 = vst [vmem:[#allocation2 + $0x130] sm:$0xff] %v1013
      %1018 = vst [vmem:[#allocation2 + $0x138] sm:$0xff] %v1014
      %1019 = vrot.lane.b32.xlu0 %v574, 8
      %v1020 = vpop.permute.xlu0 %1019
      %1021 = vrot.lane.b32.xlu0 %v575, 8
      %v1022 = vpop.permute.xlu0 %1021
      %1023 = vrot.lane.b32.xlu0 %v576, 8
      %v1024 = vpop.permute.xlu0 %1023
      %1025 = vrot.lane.b32.xlu0 %v577, 8
      %v1026 = vpop.permute.xlu0 %1025
      %vm1027 = vcmp.lt.s32.totalorder %v587, 8
      %v1028 = vsel %vm1027, %v1024, %v1026
      %v1029 = vsel %vm1027, %v1022, %v1024
      %v1030 = vsel %vm1027, %v1020, %v1022
      %v1031 = vsel %vm1027, %v1026, %v1020
      %s1032 = scalar_lea.vmem %s1, 34
      %v1033 = vld [vmem:[%s1032] ss:$8 sm:$0xf]
      %v1035 = vlaneseq
      %v1036 = vshrl.u32 %v1035, 7
      %v1037 = vsub.s32 0, %v1036
      %v1038 = vrot.slane %v1033, %v1037
      %v1039 = vlaneseq
      %v1040 = vshrl.u32 %v1039, 7
      %v1041 = vsub.s32 1, %v1040
      %v1042 = vrot.slane %v1033, %v1041
      %v1043 = vlaneseq
      %v1044 = vshrl.u32 %v1043, 7
      %v1045 = vsub.s32 2, %v1044
      %v1046 = vrot.slane %v1033, %v1045
      %v1047 = vlaneseq
      %v1048 = vshrl.u32 %v1047, 7
      %v1049 = vsub.s32 3, %v1048
      %v1050 = vrot.slane %v1033, %v1049
      %v1055 = vmul.f32 %v1031, %v1038
      %v1056 = vmul.f32 %v1030, %v1042
      %v1057 = vmul.f32 %v1029, %v1046
      %v1058 = vmul.f32 %v1028, %v1050
      %1059 = vst [vmem:[#allocation2 + $0x140] sm:$0xff] %v1055
      %1060 = vst [vmem:[#allocation2 + $0x148] sm:$0xff] %v1056
      %1061 = vst [vmem:[#allocation2 + $0x150] sm:$0xff] %v1057
      %1062 = vst [vmem:[#allocation2 + $0x158] sm:$0xff] %v1058
      %1063 = vrot.lane.b32.xlu0 %v574, 7
      %v1064 = vpop.permute.xlu0 %1063
      %1065 = vrot.lane.b32.xlu0 %v575, 7
      %v1066 = vpop.permute.xlu0 %1065
      %1067 = vrot.lane.b32.xlu0 %v576, 7
      %v1068 = vpop.permute.xlu0 %1067
      %1069 = vrot.lane.b32.xlu0 %v577, 7
      %v1070 = vpop.permute.xlu0 %1069
      %vm1071 = vcmp.lt.s32.totalorder %v587, 7
      %v1072 = vsel %vm1071, %v1068, %v1070
      %v1073 = vsel %vm1071, %v1066, %v1068
      %v1074 = vsel %vm1071, %v1064, %v1066
      %v1075 = vsel %vm1071, %v1070, %v1064
      %s1076 = scalar_lea.vmem %s1, 35
      %v1077 = vld [vmem:[%s1076] ss:$8 sm:$0xf]
      %v1079 = vlaneseq
      %v1080 = vshrl.u32 %v1079, 7
      %v1081 = vsub.s32 0, %v1080
      %v1082 = vrot.slane %v1077, %v1081
      %v1083 = vlaneseq
      %v1084 = vshrl.u32 %v1083, 7
      %v1085 = vsub.s32 1, %v1084
      %v1086 = vrot.slane %v1077, %v1085
      %v1087 = vlaneseq
      %v1088 = vshrl.u32 %v1087, 7
      %v1089 = vsub.s32 2, %v1088
      %v1090 = vrot.slane %v1077, %v1089
      %v1091 = vlaneseq
      %v1092 = vshrl.u32 %v1091, 7
      %v1093 = vsub.s32 3, %v1092
      %v1094 = vrot.slane %v1077, %v1093
      %v1099 = vmul.f32 %v1075, %v1082
      %v1100 = vmul.f32 %v1074, %v1086
      %v1101 = vmul.f32 %v1073, %v1090
      %v1102 = vmul.f32 %v1072, %v1094
      %1103 = vst [vmem:[#allocation2 + $0x160] sm:$0xff] %v1099
      %1104 = vst [vmem:[#allocation2 + $0x168] sm:$0xff] %v1100
      %1105 = vst [vmem:[#allocation2 + $0x170] sm:$0xff] %v1101
      %1106 = vst [vmem:[#allocation2 + $0x178] sm:$0xff] %v1102
      %1107 = vrot.lane.b32.xlu0 %v574, 1
      %v1108 = vpop.permute.xlu0 %1107
      %1109 = vrot.lane.b32.xlu0 %v575, 1
      %v1110 = vpop.permute.xlu0 %1109
      %1111 = vrot.lane.b32.xlu0 %v576, 1
      %v1112 = vpop.permute.xlu0 %1111
      %1113 = vrot.lane.b32.xlu0 %v577, 1
      %v1114 = vpop.permute.xlu0 %1113
      %vm1115 = vcmp.lt.s32.totalorder %v587, 1
      %v1116 = vsel %vm1115, %v1112, %v1114
      %v1117 = vsel %vm1115, %v1110, %v1112
      %v1118 = vsel %vm1115, %v1108, %v1110
      %v1119 = vsel %vm1115, %v1114, %v1108
      %s1120 = scalar_lea.vmem %s1, 36
      %v1121 = vld [vmem:[%s1120] ss:$8 sm:$0xf]
      %v1123 = vlaneseq
      %v1124 = vshrl.u32 %v1123, 7
      %v1125 = vsub.s32 0, %v1124
      %v1126 = vrot.slane %v1121, %v1125
      %v1127 = vlaneseq
      %v1128 = vshrl.u32 %v1127, 7
      %v1129 = vsub.s32 1, %v1128
      %v1130 = vrot.slane %v1121, %v1129
      %v1131 = vlaneseq
      %v1132 = vshrl.u32 %v1131, 7
      %v1133 = vsub.s32 2, %v1132
      %v1134 = vrot.slane %v1121, %v1133
      %v1135 = vlaneseq
      %v1136 = vshrl.u32 %v1135, 7
      %v1137 = vsub.s32 3, %v1136
      %v1138 = vrot.slane %v1121, %v1137
      %v1143 = vmul.f32 %v1119, %v1126
      %v1144 = vmul.f32 %v1118, %v1130
      %v1145 = vmul.f32 %v1117, %v1134
      %v1146 = vmul.f32 %v1116, %v1138
      %1147 = vst [vmem:[#allocation2 + $0x180] sm:$0xff] %v1143
      %1148 = vst [vmem:[#allocation2 + $0x188] sm:$0xff] %v1144
      %1149 = vst [vmem:[#allocation2 + $0x190] sm:$0xff] %v1145
      %1150 = vst [vmem:[#allocation2 + $0x198] sm:$0xff] %v1146
      %1151 = vst [vmem:[#allocation2 + $0x1a0] sm:$0xff] %v574
      %1152 = vst [vmem:[#allocation2 + $0x1a8] sm:$0xff] %v575
      %1153 = vst [vmem:[#allocation2 + $0x1b0] sm:$0xff] %v576
      %1154 = vst [vmem:[#allocation2 + $0x1b8] sm:$0xff] %v577
      %1155 = vrot.lane.b32.xlu0 %v574, 127
      %v1156 = vpop.permute.xlu0 %1155
      %1157 = vrot.lane.b32.xlu0 %v575, 127
      %v1158 = vpop.permute.xlu0 %1157
      %1159 = vrot.lane.b32.xlu0 %v576, 127
      %v1160 = vpop.permute.xlu0 %1159
      %1161 = vrot.lane.b32.xlu0 %v577, 127
      %v1162 = vpop.permute.xlu0 %1161
      %vm1163 = vcmp.lt.s32.totalorder %v587, 127
      %v1164 = vsel %vm1163, %v1160, %v1162
      %v1165 = vsel %vm1163, %v1158, %v1160
      %v1166 = vsel %vm1163, %v1156, %v1158
      %v1167 = vsel %vm1163, %v1162, %v1156
      %s1168 = scalar_lea.vmem %s1, 38
      %v1169 = vld [vmem:[%s1168] ss:$8 sm:$0xf]
      %v1171 = vlaneseq
      %v1172 = vshrl.u32 %v1171, 7
      %v1173 = vsub.s32 0, %v1172
      %v1174 = vrot.slane %v1169, %v1173
      %v1175 = vlaneseq
      %v1176 = vshrl.u32 %v1175, 7
      %v1177 = vsub.s32 1, %v1176
      %v1178 = vrot.slane %v1169, %v1177
      %v1179 = vlaneseq
      %v1180 = vshrl.u32 %v1179, 7
      %v1181 = vsub.s32 2, %v1180
      %v1182 = vrot.slane %v1169, %v1181
      %v1183 = vlaneseq
      %v1184 = vshrl.u32 %v1183, 7
      %v1185 = vsub.s32 3, %v1184
      %v1186 = vrot.slane %v1169, %v1185
      %v1191 = vmul.f32 %v1166, %v1174
      %v1192 = vmul.f32 %v1165, %v1178
      %v1193 = vmul.f32 %v1164, %v1182
      %v1194 = vmul.f32 %v1167, %v1186
      %1195 = vst [vmem:[#allocation2 + $0x1c0] sm:$0xff] %v1191
      %1196 = vst [vmem:[#allocation2 + $0x1c8] sm:$0xff] %v1192
      %1197 = vst [vmem:[#allocation2 + $0x1d0] sm:$0xff] %v1193
      %1198 = vst [vmem:[#allocation2 + $0x1d8] sm:$0xff] %v1194
      %1199 = vrot.lane.b32.xlu0 %v574, 121
      %v1200 = vpop.permute.xlu0 %1199
      %1201 = vrot.lane.b32.xlu0 %v575, 121
      %v1202 = vpop.permute.xlu0 %1201
      %1203 = vrot.lane.b32.xlu0 %v576, 121
      %v1204 = vpop.permute.xlu0 %1203
      %1205 = vrot.lane.b32.xlu0 %v577, 121
      %v1206 = vpop.permute.xlu0 %1205
      %vm1207 = vcmp.lt.s32.totalorder %v587, 121
      %v1208 = vsel %vm1207, %v1204, %v1206
      %v1209 = vsel %vm1207, %v1202, %v1204
      %v1210 = vsel %vm1207, %v1200, %v1202
      %v1211 = vsel %vm1207, %v1206, %v1200
      %s1212 = scalar_lea.vmem %s1, 39
      %v1213 = vld [vmem:[%s1212] ss:$8 sm:$0xf]
      %v1215 = vlaneseq
      %v1216 = vshrl.u32 %v1215, 7
      %v1217 = vsub.s32 0, %v1216
      %v1218 = vrot.slane %v1213, %v1217
      %v1219 = vlaneseq
      %v1220 = vshrl.u32 %v1219, 7
      %v1221 = vsub.s32 1, %v1220
      %v1222 = vrot.slane %v1213, %v1221
      %v1223 = vlaneseq
      %v1224 = vshrl.u32 %v1223, 7
      %v1225 = vsub.s32 2, %v1224
      %v1226 = vrot.slane %v1213, %v1225
      %v1227 = vlaneseq
      %v1228 = vshrl.u32 %v1227, 7
      %v1229 = vsub.s32 3, %v1228
      %v1230 = vrot.slane %v1213, %v1229
      %v1235 = vmul.f32 %v1210, %v1218
      %v1236 = vmul.f32 %v1209, %v1222
      %v1237 = vmul.f32 %v1208, %v1226
      %v1238 = vmul.f32 %v1211, %v1230
      %1239 = vst [vmem:[#allocation2 + $0x1e0] sm:$0xff] %v1235
      %1240 = vst [vmem:[#allocation2 + $0x1e8] sm:$0xff] %v1236
      %1241 = vst [vmem:[#allocation2 + $0x1f0] sm:$0xff] %v1237
      %1242 = vst [vmem:[#allocation2 + $0x1f8] sm:$0xff] %v1238
      %1243 = vrot.lane.b32.xlu0 %v574, 120
      %v1244 = vpop.permute.xlu0 %1243
      %1245 = vrot.lane.b32.xlu0 %v575, 120
      %v1246 = vpop.permute.xlu0 %1245
      %1247 = vrot.lane.b32.xlu0 %v576, 120
      %v1248 = vpop.permute.xlu0 %1247
      %1249 = vrot.lane.b32.xlu0 %v577, 120
      %v1250 = vpop.permute.xlu0 %1249
      %vm1251 = vcmp.lt.s32.totalorder %v587, 120
      %v1252 = vsel %vm1251, %v1248, %v1250
      %v1253 = vsel %vm1251, %v1246, %v1248
      %v1254 = vsel %vm1251, %v1244, %v1246
      %v1255 = vsel %vm1251, %v1250, %v1244
      %s1256 = scalar_lea.vmem %s1, 64
      %v1257 = vld [vmem:[%s1256] ss:$8 sm:$0xf]
      %v1259 = vlaneseq
      %v1260 = vshrl.u32 %v1259, 7
      %v1261 = vsub.s32 0, %v1260
      %v1262 = vrot.slane %v1257, %v1261
      %v1263 = vlaneseq
      %v1264 = vshrl.u32 %v1263, 7
      %v1265 = vsub.s32 1, %v1264
      %v1266 = vrot.slane %v1257, %v1265
      %v1267 = vlaneseq
      %v1268 = vshrl.u32 %v1267, 7
      %v1269 = vsub.s32 2, %v1268
      %v1270 = vrot.slane %v1257, %v1269
      %v1271 = vlaneseq
      %v1272 = vshrl.u32 %v1271, 7
      %v1273 = vsub.s32 3, %v1272
      %v1274 = vrot.slane %v1257, %v1273
      %v1279 = vmul.f32 %v1254, %v1262
      %v1280 = vmul.f32 %v1253, %v1266
      %v1281 = vmul.f32 %v1252, %v1270
      %v1282 = vmul.f32 %v1255, %v1274
      %1283 = vst [vmem:[#allocation2 + $0x200] sm:$0xff] %v1279
      %1284 = vst [vmem:[#allocation2 + $0x208] sm:$0xff] %v1280
      %1285 = vst [vmem:[#allocation2 + $0x210] sm:$0xff] %v1281
      %1286 = vst [vmem:[#allocation2 + $0x218] sm:$0xff] %v1282
      %1287 = vrot.lane.b32.xlu0 %v574, 119
      %v1288 = vpop.permute.xlu0 %1287
      %1289 = vrot.lane.b32.xlu0 %v575, 119
      %v1290 = vpop.permute.xlu0 %1289
      %1291 = vrot.lane.b32.xlu0 %v576, 119
      %v1292 = vpop.permute.xlu0 %1291
      %1293 = vrot.lane.b32.xlu0 %v577, 119
      %v1294 = vpop.permute.xlu0 %1293
      %vm1295 = vcmp.lt.s32.totalorder %v587, 119
      %v1296 = vsel %vm1295, %v1292, %v1294
      %v1297 = vsel %vm1295, %v1290, %v1292
      %v1298 = vsel %vm1295, %v1288, %v1290
      %v1299 = vsel %vm1295, %v1294, %v1288
      %s1300 = scalar_lea.vmem %s1, 65
      %v1301 = vld [vmem:[%s1300] ss:$8 sm:$0xf]
      %v1303 = vlaneseq
      %v1304 = vshrl.u32 %v1303, 7
      %v1305 = vsub.s32 0, %v1304
      %v1306 = vrot.slane %v1301, %v1305
      %v1307 = vlaneseq
      %v1308 = vshrl.u32 %v1307, 7
      %v1309 = vsub.s32 1, %v1308
      %v1310 = vrot.slane %v1301, %v1309
      %v1311 = vlaneseq
      %v1312 = vshrl.u32 %v1311, 7
      %v1313 = vsub.s32 2, %v1312
      %v1314 = vrot.slane %v1301, %v1313
      %v1315 = vlaneseq
      %v1316 = vshrl.u32 %v1315, 7
      %v1317 = vsub.s32 3, %v1316
      %v1318 = vrot.slane %v1301, %v1317
      %v1323 = vmul.f32 %v1298, %v1306
      %v1324 = vmul.f32 %v1297, %v1310
      %v1325 = vmul.f32 %v1296, %v1314
      %v1326 = vmul.f32 %v1299, %v1318
      %1327 = vst [vmem:[#allocation2 + $0x220] sm:$0xff] %v1323
      %1328 = vst [vmem:[#allocation2 + $0x228] sm:$0xff] %v1324
      %1329 = vst [vmem:[#allocation2 + $0x230] sm:$0xff] %v1325
      %1330 = vst [vmem:[#allocation2 + $0x238] sm:$0xff] %v1326
      %s1331 = scalar_lea.vmem %s1, 66
      %v1332 = vld [vmem:[%s1331] ss:$8 sm:$0xf]
      %v1334 = vlaneseq
      %v1335 = vshrl.u32 %v1334, 7
      %v1336 = vsub.s32 0, %v1335
      %v1337 = vrot.slane %v1332, %v1336
      %v1338 = vlaneseq
      %v1339 = vshrl.u32 %v1338, 7
      %v1340 = vsub.s32 1, %v1339
      %v1341 = vrot.slane %v1332, %v1340
      %v1342 = vlaneseq
      %v1343 = vshrl.u32 %v1342, 7
      %v1344 = vsub.s32 2, %v1343
      %v1345 = vrot.slane %v1332, %v1344
      %v1346 = vlaneseq
      %v1347 = vshrl.u32 %v1346, 7
      %v1348 = vsub.s32 3, %v1347
      %v1349 = vrot.slane %v1332, %v1348
      %v1354 = vmul.f32 %v591, %v1337
      %v1355 = vmul.f32 %v590, %v1341
      %v1356 = vmul.f32 %v589, %v1345
      %v1357 = vmul.f32 %v592, %v1349
      %1358 = vst [vmem:[#allocation2 + $0x240] sm:$0xff] %v1354
      %1359 = vst [vmem:[#allocation2 + $0x248] sm:$0xff] %v1355
      %1360 = vst [vmem:[#allocation2 + $0x250] sm:$0xff] %v1356
      %1361 = vst [vmem:[#allocation2 + $0x258] sm:$0xff] %v1357
      %s1362 = scalar_lea.vmem %s1, 67
      %v1363 = vld [vmem:[%s1362] ss:$8 sm:$0xf]
      %v1365 = vlaneseq
      %v1366 = vshrl.u32 %v1365, 7
      %v1367 = vsub.s32 0, %v1366
      %v1368 = vrot.slane %v1363, %v1367
      %v1369 = vlaneseq
      %v1370 = vshrl.u32 %v1369, 7
      %v1371 = vsub.s32 1, %v1370
      %v1372 = vrot.slane %v1363, %v1371
      %v1373 = vlaneseq
      %v1374 = vshrl.u32 %v1373, 7
      %v1375 = vsub.s32 2, %v1374
      %v1376 = vrot.slane %v1363, %v1375
      %v1377 = vlaneseq
      %v1378 = vshrl.u32 %v1377, 7
      %v1379 = vsub.s32 3, %v1378
      %v1380 = vrot.slane %v1363, %v1379
      %v1385 = vmul.f32 %v634, %v1368
      %v1386 = vmul.f32 %v633, %v1372
      %v1387 = vmul.f32 %v632, %v1376
      %v1388 = vmul.f32 %v635, %v1380
      %1389 = vst [vmem:[#allocation2 + $0x260] sm:$0xff] %v1385
      %1390 = vst [vmem:[#allocation2 + $0x268] sm:$0xff] %v1386
      %1391 = vst [vmem:[#allocation2 + $0x270] sm:$0xff] %v1387
      %1392 = vst [vmem:[#allocation2 + $0x278] sm:$0xff] %v1388
      %s1393 = scalar_lea.vmem %s1, 68
      %v1394 = vld [vmem:[%s1393] ss:$8 sm:$0xf]
      %v1396 = vlaneseq
      %v1397 = vshrl.u32 %v1396, 7
      %v1398 = vsub.s32 0, %v1397
      %v1399 = vrot.slane %v1394, %v1398
      %v1400 = vlaneseq
      %v1401 = vshrl.u32 %v1400, 7
      %v1402 = vsub.s32 1, %v1401
      %v1403 = vrot.slane %v1394, %v1402
      %v1404 = vlaneseq
      %v1405 = vshrl.u32 %v1404, 7
      %v1406 = vsub.s32 2, %v1405
      %v1407 = vrot.slane %v1394, %v1406
      %v1408 = vlaneseq
      %v1409 = vshrl.u32 %v1408, 7
      %v1410 = vsub.s32 3, %v1409
      %v1411 = vrot.slane %v1394, %v1410
      %v1416 = vmul.f32 %v678, %v1399
      %v1417 = vmul.f32 %v677, %v1403
      %v1418 = vmul.f32 %v676, %v1407
      %v1419 = vmul.f32 %v679, %v1411
      %1420 = vst [vmem:[#allocation2 + $0x280] sm:$0xff] %v1416
      %1421 = vst [vmem:[#allocation2 + $0x288] sm:$0xff] %v1417
      %1422 = vst [vmem:[#allocation2 + $0x290] sm:$0xff] %v1418
      %1423 = vst [vmem:[#allocation2 + $0x298] sm:$0xff] %v1419
      %s1424 = scalar_lea.vmem %s1, 69
      %v1425 = vld [vmem:[%s1424] ss:$8 sm:$0xf]
      %v1427 = vlaneseq
      %v1428 = vshrl.u32 %v1427, 7
      %v1429 = vsub.s32 0, %v1428
      %v1430 = vrot.slane %v1425, %v1429
      %v1431 = vlaneseq
      %v1432 = vshrl.u32 %v1431, 7
      %v1433 = vsub.s32 1, %v1432
      %v1434 = vrot.slane %v1425, %v1433
      %v1435 = vlaneseq
      %v1436 = vshrl.u32 %v1435, 7
      %v1437 = vsub.s32 2, %v1436
      %v1438 = vrot.slane %v1425, %v1437
      %v1439 = vlaneseq
      %v1440 = vshrl.u32 %v1439, 7
      %v1441 = vsub.s32 3, %v1440
      %v1442 = vrot.slane %v1425, %v1441
      %v1447 = vmul.f32 %v722, %v1430
      %v1448 = vmul.f32 %v721, %v1434
      %v1449 = vmul.f32 %v720, %v1438
      %v1450 = vmul.f32 %v723, %v1442
      %1451 = vst [vmem:[#allocation2 + $0x2a0] sm:$0xff] %v1447
      %1452 = vst [vmem:[#allocation2 + $0x2a8] sm:$0xff] %v1448
      %1453 = vst [vmem:[#allocation2 + $0x2b0] sm:$0xff] %v1449
      %1454 = vst [vmem:[#allocation2 + $0x2b8] sm:$0xff] %v1450
      %s1455 = scalar_lea.vmem %s1, 70
      %v1456 = vld [vmem:[%s1455] ss:$8 sm:$0xf]
      %v1458 = vlaneseq
      %v1459 = vshrl.u32 %v1458, 7
      %v1460 = vsub.s32 0, %v1459
      %v1461 = vrot.slane %v1456, %v1460
      %v1462 = vlaneseq
      %v1463 = vshrl.u32 %v1462, 7
      %v1464 = vsub.s32 1, %v1463
      %v1465 = vrot.slane %v1456, %v1464
      %v1466 = vlaneseq
      %v1467 = vshrl.u32 %v1466, 7
      %v1468 = vsub.s32 2, %v1467
      %v1469 = vrot.slane %v1456, %v1468
      %v1470 = vlaneseq
      %v1471 = vshrl.u32 %v1470, 7
      %v1472 = vsub.s32 3, %v1471
      %v1473 = vrot.slane %v1456, %v1472
      %v1478 = vmul.f32 %v766, %v1461
      %v1479 = vmul.f32 %v765, %v1465
      %v1480 = vmul.f32 %v764, %v1469
      %v1481 = vmul.f32 %v767, %v1473
      %1482 = vst [vmem:[#allocation2 + $0x2c0] sm:$0xff] %v1478
      %1483 = vst [vmem:[#allocation2 + $0x2c8] sm:$0xff] %v1479
      %1484 = vst [vmem:[#allocation2 + $0x2d0] sm:$0xff] %v1480
      %1485 = vst [vmem:[#allocation2 + $0x2d8] sm:$0xff] %v1481
      %s1486 = scalar_lea.vmem %s1, 71
      %v1487 = vld [vmem:[%s1486] ss:$8 sm:$0xf]
      %v1489 = vlaneseq
      %v1490 = vshrl.u32 %v1489, 7
      %v1491 = vsub.s32 0, %v1490
      %v1492 = vrot.slane %v1487, %v1491
      %v1493 = vlaneseq
      %v1494 = vshrl.u32 %v1493, 7
      %v1495 = vsub.s32 1, %v1494
      %v1496 = vrot.slane %v1487, %v1495
      %v1497 = vlaneseq
      %v1498 = vshrl.u32 %v1497, 7
      %v1499 = vsub.s32 2, %v1498
      %v1500 = vrot.slane %v1487, %v1499
      %v1501 = vlaneseq
      %v1502 = vshrl.u32 %v1501, 7
      %v1503 = vsub.s32 3, %v1502
      %v1504 = vrot.slane %v1487, %v1503
      %v1509 = vmul.f32 %v810, %v1492
      %v1510 = vmul.f32 %v809, %v1496
      %v1511 = vmul.f32 %v808, %v1500
      %v1512 = vmul.f32 %v811, %v1504
      %1513 = vst [vmem:[#allocation2 + $0x2e0] sm:$0xff] %v1509
      %1514 = vst [vmem:[#allocation2 + $0x2e8] sm:$0xff] %v1510
      %1515 = vst [vmem:[#allocation2 + $0x2f0] sm:$0xff] %v1511
      %1516 = vst [vmem:[#allocation2 + $0x2f8] sm:$0xff] %v1512
      %s1517 = scalar_lea.vmem %s1, 96
      %v1518 = vld [vmem:[%s1517] ss:$8 sm:$0xf]
      %v1520 = vlaneseq
      %v1521 = vshrl.u32 %v1520, 7
      %v1522 = vsub.s32 0, %v1521
      %v1523 = vrot.slane %v1518, %v1522
      %v1524 = vlaneseq
      %v1525 = vshrl.u32 %v1524, 7
      %v1526 = vsub.s32 1, %v1525
      %v1527 = vrot.slane %v1518, %v1526
      %v1528 = vlaneseq
      %v1529 = vshrl.u32 %v1528, 7
      %v1530 = vsub.s32 2, %v1529
      %v1531 = vrot.slane %v1518, %v1530
      %v1532 = vlaneseq
      %v1533 = vshrl.u32 %v1532, 7
      %v1534 = vsub.s32 3, %v1533
      %v1535 = vrot.slane %v1518, %v1534
      %v1540 = vmul.f32 %v854, %v1523
      %v1541 = vmul.f32 %v853, %v1527
      %v1542 = vmul.f32 %v852, %v1531
      %v1543 = vmul.f32 %v855, %v1535
      %1544 = vst [vmem:[#allocation2 + $0x300] sm:$0xff] %v1540
      %1545 = vst [vmem:[#allocation2 + $0x308] sm:$0xff] %v1541
      %1546 = vst [vmem:[#allocation2 + $0x310] sm:$0xff] %v1542
      %1547 = vst [vmem:[#allocation2 + $0x318] sm:$0xff] %v1543
      %s1548 = scalar_lea.vmem %s1, 97
      %v1549 = vld [vmem:[%s1548] ss:$8 sm:$0xf]
      %v1551 = vlaneseq
      %v1552 = vshrl.u32 %v1551, 7
      %v1553 = vsub.s32 0, %v1552
      %v1554 = vrot.slane %v1549, %v1553
      %v1555 = vlaneseq
      %v1556 = vshrl.u32 %v1555, 7
      %v1557 = vsub.s32 1, %v1556
      %v1558 = vrot.slane %v1549, %v1557
      %v1559 = vlaneseq
      %v1560 = vshrl.u32 %v1559, 7
      %v1561 = vsub.s32 2, %v1560
      %v1562 = vrot.slane %v1549, %v1561
      %v1563 = vlaneseq
      %v1564 = vshrl.u32 %v1563, 7
      %v1565 = vsub.s32 3, %v1564
      %v1566 = vrot.slane %v1549, %v1565
      %v1571 = vmul.f32 %v898, %v1554
      %v1572 = vmul.f32 %v897, %v1558
      %v1573 = vmul.f32 %v896, %v1562
      %v1574 = vmul.f32 %v899, %v1566
      %1575 = vst [vmem:[#allocation2 + $0x320] sm:$0xff] %v1571
      %1576 = vst [vmem:[#allocation2 + $0x328] sm:$0xff] %v1572
      %1577 = vst [vmem:[#allocation2 + $0x330] sm:$0xff] %v1573
      %1578 = vst [vmem:[#allocation2 + $0x338] sm:$0xff] %v1574
      %s1579 = scalar_lea.vmem %s1, 98
      %v1580 = vld [vmem:[%s1579] ss:$8 sm:$0xf]
      %v1582 = vlaneseq
      %v1583 = vshrl.u32 %v1582, 7
      %v1584 = vsub.s32 0, %v1583
      %v1585 = vrot.slane %v1580, %v1584
      %v1586 = vlaneseq
      %v1587 = vshrl.u32 %v1586, 7
      %v1588 = vsub.s32 1, %v1587
      %v1589 = vrot.slane %v1580, %v1588
      %v1590 = vlaneseq
      %v1591 = vshrl.u32 %v1590, 7
      %v1592 = vsub.s32 2, %v1591
      %v1593 = vrot.slane %v1580, %v1592
      %v1594 = vlaneseq
      %v1595 = vshrl.u32 %v1594, 7
      %v1596 = vsub.s32 3, %v1595
      %v1597 = vrot.slane %v1580, %v1596
      %v1602 = vmul.f32 %v942, %v1585
      %v1603 = vmul.f32 %v941, %v1589
      %v1604 = vmul.f32 %v940, %v1593
      %v1605 = vmul.f32 %v943, %v1597
      %1606 = vst [vmem:[#allocation2 + $0x340] sm:$0xff] %v1602
      %1607 = vst [vmem:[#allocation2 + $0x348] sm:$0xff] %v1603
      %1608 = vst [vmem:[#allocation2 + $0x350] sm:$0xff] %v1604
      %1609 = vst [vmem:[#allocation2 + $0x358] sm:$0xff] %v1605
      %v1610 = vld [vmem:[%s4] sm:$0xff]
      %v1611 = vld [vmem:[%s4 + $0x8] sm:$0xff]
      %v1612 = vld [vmem:[#allocation2] sm:$0xff]
      %v1613 = vld [vmem:[#allocation2 + $0x8] sm:$0xff]
      %v1614 = vld [vmem:[#allocation2 + $0x10] sm:$0xff]
      %v1615 = vld [vmem:[#allocation2 + $0x18] sm:$0xff]
      %v1616 = vld [vmem:[#allocation2 + $0x20] sm:$0xff]
      %v1617 = vld [vmem:[#allocation2 + $0x28] sm:$0xff]
      %v1618 = vld [vmem:[#allocation2 + $0x30] sm:$0xff]
      %v1619 = vld [vmem:[#allocation2 + $0x38] sm:$0xff]
      %v1620 = vld [vmem:[#allocation2 + $0x40] sm:$0xff]
      %v1621 = vld [vmem:[#allocation2 + $0x48] sm:$0xff]
      %v1622 = vld [vmem:[#allocation2 + $0x50] sm:$0xff]
      %v1623 = vld [vmem:[#allocation2 + $0x58] sm:$0xff]
      %v1624 = vld [vmem:[#allocation2 + $0x60] sm:$0xff]
      %v1625 = vld [vmem:[#allocation2 + $0x68] sm:$0xff]
      %v1626 = vld [vmem:[#allocation2 + $0x70] sm:$0xff]
      %v1627 = vld [vmem:[#allocation2 + $0x78] sm:$0xff]
      %v1628 = vld [vmem:[#allocation2 + $0x80] sm:$0xff]
      %v1629 = vld [vmem:[#allocation2 + $0x88] sm:$0xff]
      %v1630 = vld [vmem:[#allocation2 + $0x90] sm:$0xff]
      %v1631 = vld [vmem:[#allocation2 + $0x98] sm:$0xff]
      %v1632 = vld [vmem:[#allocation2 + $0xa0] sm:$0xff]
      %v1633 = vld [vmem:[#allocation2 + $0xa8] sm:$0xff]
      %v1634 = vld [vmem:[#allocation2 + $0xb0] sm:$0xff]
      %v1635 = vld [vmem:[#allocation2 + $0xb8] sm:$0xff]
      %v1636 = vld [vmem:[#allocation2 + $0xc0] sm:$0xff]
      %v1637 = vld [vmem:[#allocation2 + $0xc8] sm:$0xff]
      %v1638 = vld [vmem:[#allocation2 + $0xd0] sm:$0xff]
      %v1639 = vld [vmem:[#allocation2 + $0xd8] sm:$0xff]
      %v1640 = vld [vmem:[#allocation2 + $0xe0] sm:$0xff]
      %v1641 = vld [vmem:[#allocation2 + $0xe8] sm:$0xff]
      %v1642 = vld [vmem:[#allocation2 + $0xf0] sm:$0xff]
      %v1643 = vld [vmem:[#allocation2 + $0xf8] sm:$0xff]
      %v1644 = vld [vmem:[#allocation2 + $0x100] sm:$0xff]
      %v1645 = vld [vmem:[#allocation2 + $0x108] sm:$0xff]
      %v1646 = vld [vmem:[#allocation2 + $0x110] sm:$0xff]
      %v1647 = vld [vmem:[#allocation2 + $0x118] sm:$0xff]
      %v1648 = vld [vmem:[#allocation2 + $0x120] sm:$0xff]
      %v1649 = vld [vmem:[#allocation2 + $0x128] sm:$0xff]
      %v1650 = vld [vmem:[#allocation2 + $0x130] sm:$0xff]
      %v1651 = vld [vmem:[#allocation2 + $0x138] sm:$0xff]
      %v1652 = vld [vmem:[#allocation2 + $0x140] sm:$0xff]
      %v1653 = vld [vmem:[#allocation2 + $0x148] sm:$0xff]
      %v1654 = vld [vmem:[#allocation2 + $0x150] sm:$0xff]
      %v1655 = vld [vmem:[#allocation2 + $0x158] sm:$0xff]
      %v1656 = vld [vmem:[#allocation2 + $0x160] sm:$0xff]
      %v1657 = vld [vmem:[#allocation2 + $0x168] sm:$0xff]
      %v1658 = vld [vmem:[#allocation2 + $0x170] sm:$0xff]
      %v1659 = vld [vmem:[#allocation2 + $0x178] sm:$0xff]
      %v1660 = vld [vmem:[#allocation2 + $0x180] sm:$0xff]
      %v1661 = vld [vmem:[#allocation2 + $0x188] sm:$0xff]
      %v1662 = vld [vmem:[#allocation2 + $0x190] sm:$0xff]
      %v1663 = vld [vmem:[#allocation2 + $0x198] sm:$0xff]
      %v1664 = vld [vmem:[#allocation2 + $0x1a0] sm:$0xff]
      %v1665 = vld [vmem:[#allocation2 + $0x1a8] sm:$0xff]
      %v1666 = vld [vmem:[#allocation2 + $0x1b0] sm:$0xff]
      %v1667 = vld [vmem:[#allocation2 + $0x1b8] sm:$0xff]
      %v1668 = vld [vmem:[#allocation2 + $0x1c0] sm:$0xff]
      %v1669 = vld [vmem:[#allocation2 + $0x1c8] sm:$0xff]
      %v1670 = vld [vmem:[#allocation2 + $0x1d0] sm:$0xff]
      %v1671 = vld [vmem:[#allocation2 + $0x1d8] sm:$0xff]
      %v1672 = vld [vmem:[#allocation2 + $0x1e0] sm:$0xff]
      %v1673 = vld [vmem:[#allocation2 + $0x1e8] sm:$0xff]
      %v1674 = vld [vmem:[#allocation2 + $0x1f0] sm:$0xff]
      %v1675 = vld [vmem:[#allocation2 + $0x1f8] sm:$0xff]
      %v1676 = vld [vmem:[#allocation2 + $0x200] sm:$0xff]
      %v1677 = vld [vmem:[#allocation2 + $0x208] sm:$0xff]
      %v1678 = vld [vmem:[#allocation2 + $0x210] sm:$0xff]
      %v1679 = vld [vmem:[#allocation2 + $0x218] sm:$0xff]
      %v1680 = vld [vmem:[#allocation2 + $0x220] sm:$0xff]
      %v1681 = vld [vmem:[#allocation2 + $0x228] sm:$0xff]
      %v1682 = vld [vmem:[#allocation2 + $0x230] sm:$0xff]
      %v1683 = vld [vmem:[#allocation2 + $0x238] sm:$0xff]
      %v1684 = vld [vmem:[#allocation2 + $0x240] sm:$0xff]
      %v1685 = vld [vmem:[#allocation2 + $0x248] sm:$0xff]
      %v1686 = vld [vmem:[#allocation2 + $0x250] sm:$0xff]
      %v1687 = vld [vmem:[#allocation2 + $0x258] sm:$0xff]
      %v1688 = vld [vmem:[#allocation2 + $0x260] sm:$0xff]
      %v1689 = vld [vmem:[#allocation2 + $0x268] sm:$0xff]
      %v1690 = vld [vmem:[#allocation2 + $0x270] sm:$0xff]
      %v1691 = vld [vmem:[#allocation2 + $0x278] sm:$0xff]
      %v1692 = vld [vmem:[#allocation2 + $0x280] sm:$0xff]
      %v1693 = vld [vmem:[#allocation2 + $0x288] sm:$0xff]
      %v1694 = vld [vmem:[#allocation2 + $0x290] sm:$0xff]
      %v1695 = vld [vmem:[#allocation2 + $0x298] sm:$0xff]
      %v1696 = vld [vmem:[#allocation2 + $0x2a0] sm:$0xff]
      %v1697 = vld [vmem:[#allocation2 + $0x2a8] sm:$0xff]
      %v1698 = vld [vmem:[#allocation2 + $0x2b0] sm:$0xff]
      %v1699 = vld [vmem:[#allocation2 + $0x2b8] sm:$0xff]
      %v1700 = vld [vmem:[#allocation2 + $0x2c0] sm:$0xff]
      %v1701 = vld [vmem:[#allocation2 + $0x2c8] sm:$0xff]
      %v1702 = vld [vmem:[#allocation2 + $0x2d0] sm:$0xff]
      %v1703 = vld [vmem:[#allocation2 + $0x2d8] sm:$0xff]
      %v1704 = vld [vmem:[#allocation2 + $0x2e0] sm:$0xff]
      %v1705 = vld [vmem:[#allocation2 + $0x2e8] sm:$0xff]
      %v1706 = vld [vmem:[#allocation2 + $0x2f0] sm:$0xff]
      %v1707 = vld [vmem:[#allocation2 + $0x2f8] sm:$0xff]
      %v1708 = vld [vmem:[#allocation2 + $0x300] sm:$0xff]
      %v1709 = vld [vmem:[#allocation2 + $0x308] sm:$0xff]
      %v1710 = vld [vmem:[#allocation2 + $0x310] sm:$0xff]
      %v1711 = vld [vmem:[#allocation2 + $0x318] sm:$0xff]
      %v1712 = vld [vmem:[#allocation2 + $0x320] sm:$0xff]
      %v1713 = vld [vmem:[#allocation2 + $0x328] sm:$0xff]
      %v1714 = vld [vmem:[#allocation2 + $0x330] sm:$0xff]
      %v1715 = vld [vmem:[#allocation2 + $0x338] sm:$0xff]
      %v1716 = vld [vmem:[#allocation2 + $0x340] sm:$0xff]
      %v1717 = vld [vmem:[#allocation2 + $0x348] sm:$0xff]
      %v1718 = vld [vmem:[#allocation2 + $0x350] sm:$0xff]
      %v1719 = vld [vmem:[#allocation2 + $0x358] sm:$0xff]
      %v1720 = vld [vmem:[%s5] sm:$0xff]
      %1722 = vset.pattern.permute.xlu0 0
      %1723 = vperm.xlu0 %1722, %v1720
      %v1724 = vpop.permute.xlu0 %1723
      %vm1726 = vcmask 719872
      %v1728 = vsel %vm1726, %v1611, 0
      %1730 = vmatprep.subr.mxu0 %v1673
      %1731 = vmatpush1.msra.mxu0 %v1672
      %1732 = vmatprep.subr.mxu0 %v1669
      %1733 = vmatpush1.msra.mxu0 %v1668
      %1734 = vmatprep.subr.mxu0 %v1665
      %1735 = vmatpush1.msra.mxu0 %v1664
      %1736 = vmatprep.subr.mxu0 %v1661
      %1737 = vmatpush1.msra.mxu0 %v1660
      %1738 = vmatprep.subr.mxu0 %v1657
      %1739 = vmatpush1.msra.mxu0 %v1656
      %1740 = vmatprep.subr.mxu0 %v1653
      %1741 = vmatpush1.msra.mxu0 %v1652
      %1742 = vmatprep.subr.mxu0 %v1649
      %1743 = vmatpush1.msra.mxu0 %v1648
      %1744 = vmatprep.subr.mxu0 %v1645
      %1745 = vmatpush1.msra.mxu0 %v1644
      %1746 = vmatprep.subr.mxu0 %v1641
      %1747 = vmatpush1.msra.mxu0 %v1640
      %1748 = vmatprep.subr.mxu0 %v1637
      %1749 = vmatpush1.msra.mxu0 %v1636
      %1750 = vmatprep.subr.mxu0 %v1633
      %1751 = vmatpush1.msra.mxu0 %v1632
      %1752 = vmatprep.subr.mxu0 %v1629
      %1753 = vmatpush1.msra.mxu0 %v1628
      %1754 = vmatprep.subr.mxu0 %v1625
      %1755 = vmatpush1.msra.mxu0 %v1624
      %1756 = vmatprep.subr.mxu0 %v1621
      %1757 = vmatpush1.msra.mxu0 %v1620
      %1758 = vmatprep.subr.mxu0 %v1617
      %1759 = vmatpush1.msra.mxu0 %v1616
      %1760 = vmatprep.subr.mxu0 %v1613
      %1761 = vmatpush1.msra.mxu0 %v1612
      %1762 = vmatprep.subr.mxu0 0.0
      %1763 = vmatpush2.msra.mxu0 0.0
      %1764 = vmatprep.subr.mxu0 0.0
      %1765 = vmatpush2.msra.mxu0 0.0
      %1766 = vmatprep.subr.mxu0 0.0
      %1767 = vmatpush2.msra.mxu0 0.0
      %1768 = vmatprep.subr.mxu0 0.0
      %1769 = vmatpush2.msra.mxu0 0.0
      %1770 = vmatprep.subr.mxu0 0.0
      %1771 = vmatpush2.msra.mxu0 0.0
      %1772 = vmatprep.subr.mxu0 %v1717
      %1773 = vmatpush2.msra.mxu0 %v1716
      %1774 = vmatprep.subr.mxu0 %v1713
      %1775 = vmatpush2.msra.mxu0 %v1712
      %1776 = vmatprep.subr.mxu0 %v1709
      %1777 = vmatpush2.msra.mxu0 %v1708
      %1778 = vmatprep.subr.mxu0 %v1705
      %1779 = vmatpush2.msra.mxu0 %v1704
      %1780 = vmatprep.subr.mxu0 %v1701
      %1781 = vmatpush2.msra.mxu0 %v1700
      %1782 = vmatprep.subr.mxu0 %v1697
      %1783 = vmatpush2.msra.mxu0 %v1696
      %1784 = vmatprep.subr.mxu0 %v1693
      %1785 = vmatpush2.msra.mxu0 %v1692
      %1786 = vmatprep.subr.mxu0 %v1689
      %1787 = vmatpush2.msra.mxu0 %v1688
      %1788 = vmatprep.subr.mxu0 %v1685
      %1789 = vmatpush2.msra.mxu0 %v1684
      %1790 = vmatprep.subr.mxu0 %v1681
      %1791 = vmatpush2.msra.mxu0 %v1680
      %1792 = vmatprep.subr.mxu0 %v1677
      %1793 = vmatpush2.msra.mxu0 %v1676
      %1794 = vmatprep.mubr.f32.mxu0 %v1728
      %1795 = vmatmul.mubr.f32.gmra.mxu0 %v1610
      %v1796 = vpop.f32.mrf.mxu0
      %v1797 = vadd.f32 %v1724, %v1796
      %v1798 = vpop.f32.mrf.mxu0
      %v1799 = vadd.f32 %v1724, %v1798
      %1800 = vdwg.mxu0
      %1801 = vmatprep.subr.mxu0 %v1675
      %1802 = vmatpush1.msra.mxu0 %v1674
      %1803 = vmatprep.subr.mxu0 %v1671
      %1804 = vmatpush1.msra.mxu0 %v1670
      %1805 = vmatprep.subr.mxu0 %v1667
      %1806 = vmatpush1.msra.mxu0 %v1666
      %1807 = vmatprep.subr.mxu0 %v1663
      %1808 = vmatpush1.msra.mxu0 %v1662
      %1809 = vmatprep.subr.mxu0 %v1659
      %1810 = vmatpush1.msra.mxu0 %v1658
      %1811 = vmatprep.subr.mxu0 %v1655
      %1812 = vmatpush1.msra.mxu0 %v1654
      %1813 = vmatprep.subr.mxu0 %v1651
      %1814 = vmatpush1.msra.mxu0 %v1650
      %1815 = vmatprep.subr.mxu0 %v1647
      %1816 = vmatpush1.msra.mxu0 %v1646
      %1817 = vmatprep.subr.mxu0 %v1643
      %1818 = vmatpush1.msra.mxu0 %v1642
      %1819 = vmatprep.subr.mxu0 %v1639
      %1820 = vmatpush1.msra.mxu0 %v1638
      %1821 = vmatprep.subr.mxu0 %v1635
      %1822 = vmatpush1.msra.mxu0 %v1634
      %1823 = vmatprep.subr.mxu0 %v1631
      %1824 = vmatpush1.msra.mxu0 %v1630
      %1825 = vmatprep.subr.mxu0 %v1627
      %1826 = vmatpush1.msra.mxu0 %v1626
      %1827 = vmatprep.subr.mxu0 %v1623
      %1828 = vmatpush1.msra.mxu0 %v1622
      %1829 = vmatprep.subr.mxu0 %v1619
      %1830 = vmatpush1.msra.mxu0 %v1618
      %1831 = vmatprep.subr.mxu0 %v1615
      %1832 = vmatpush1.msra.mxu0 %v1614
      %1833 = vmatprep.subr.mxu0 0.0
      %1834 = vmatpush2.msra.mxu0 0.0
      %1835 = vmatprep.subr.mxu0 0.0
      %1836 = vmatpush2.msra.mxu0 0.0
      %1837 = vmatprep.subr.mxu0 0.0
      %1838 = vmatpush2.msra.mxu0 0.0
      %1839 = vmatprep.subr.mxu0 0.0
      %1840 = vmatpush2.msra.mxu0 0.0
      %1841 = vmatprep.subr.mxu0 0.0
      %1842 = vmatpush2.msra.mxu0 0.0
      %1843 = vmatprep.subr.mxu0 %v1719
      %1844 = vmatpush2.msra.mxu0 %v1718
      %1845 = vmatprep.subr.mxu0 %v1715
      %1846 = vmatpush2.msra.mxu0 %v1714
      %1847 = vmatprep.subr.mxu0 %v1711
      %1848 = vmatpush2.msra.mxu0 %v1710
      %1849 = vmatprep.subr.mxu0 %v1707
      %1850 = vmatpush2.msra.mxu0 %v1706
      %1851 = vmatprep.subr.mxu0 %v1703
      %1852 = vmatpush2.msra.mxu0 %v1702
      %1853 = vmatprep.subr.mxu0 %v1699
      %1854 = vmatpush2.msra.mxu0 %v1698
      %1855 = vmatprep.subr.mxu0 %v1695
      %1856 = vmatpush2.msra.mxu0 %v1694
      %1857 = vmatprep.subr.mxu0 %v1691
      %1858 = vmatpush2.msra.mxu0 %v1690
      %1859 = vmatprep.subr.mxu0 %v1687
      %1860 = vmatpush2.msra.mxu0 %v1686
      %1861 = vmatprep.subr.mxu0 %v1683
      %1862 = vmatpush2.msra.mxu0 %v1682
      %1863 = vmatprep.subr.mxu0 %v1679
      %1864 = vmatpush2.msra.mxu0 %v1678
      %1865 = vmatprep.mubr.f32.mxu0 %v1728
      %1866 = vmatmul.mubr.f32.gmra.mxu0 %v1610
      %v1867 = vpop.f32.mrf.mxu0
      %v1868 = vadd.f32 %v1724, %v1867
      %v1869 = vpop.f32.mrf.mxu0
      %v1870 = vadd.f32 %v1724, %v1869
      %1871 = vdwg.mxu0
      %v1872 = vmax.f32 %v1797, 0.0
      %v1873 = vmax.f32 %v1799, 0.0
      %v1874 = vmax.f32 %v1868, 0.0
      %v1875 = vmax.f32 %v1870, 0.0
      %v1876 = vld [vmem:[%s6] sm:$0xff]
      %v1877 = vld [vmem:[%s7] sm:$0xff]
      %1879 = vset.pattern.permute.xlu0 0
      %1880 = vperm.xlu0 %1879, %v1877
      %v1881 = vpop.permute.xlu0 %1880
      %vm1883 = vcmask 64512
      %v1885 = vsel %vm1883, %v1876, 0
      %1887 = vmatprep.subr.mxu0 0.0
      %1888 = vmatpush1.msra.mxu0 0.0
      %1889 = vmatprep.subr.mxu0 0.0
      %1890 = vmatpush1.msra.mxu0 0.0
      %1891 = vmatprep.subr.mxu0 0.0
      %1892 = vmatpush1.msra.mxu0 0.0
      %1893 = vmatprep.subr.mxu0 0.0
      %1894 = vmatpush1.msra.mxu0 0.0
      %1895 = vmatprep.subr.mxu0 0.0
      %1896 = vmatpush1.msra.mxu0 0.0
      %1897 = vmatprep.subr.mxu0 0.0
      %1898 = vmatpush1.msra.mxu0 0.0
      %1899 = vmatprep.subr.mxu0 0.0
      %1900 = vmatpush1.msra.mxu0 0.0
      %1901 = vmatprep.subr.mxu0 0.0
      %1902 = vmatpush1.msra.mxu0 0.0
      %1903 = vmatprep.subr.mxu0 0.0
      %1904 = vmatpush1.msra.mxu0 0.0
      %1905 = vmatprep.subr.mxu0 0.0
      %1906 = vmatpush1.msra.mxu0 0.0
      %1907 = vmatprep.subr.mxu0 0.0
      %1908 = vmatpush1.msra.mxu0 0.0
      %1909 = vmatprep.subr.mxu0 0.0
      %1910 = vmatpush1.msra.mxu0 0.0
      %1911 = vmatprep.subr.mxu0 0.0
      %1912 = vmatpush1.msra.mxu0 0.0
      %1913 = vmatprep.subr.mxu0 0.0
      %1914 = vmatpush1.msra.mxu0 0.0
      %1915 = vmatprep.subr.mxu0 0.0
      %1916 = vmatpush1.msra.mxu0 0.0
      %1917 = vmatprep.subr.mxu0 %v1873
      %1918 = vmatpush1.msra.mxu0 %v1872
      %1919 = vmatprep.subr.mxu0 0.0
      %1920 = vmatpush2.msra.mxu0 0.0
      %1921 = vmatprep.subr.mxu0 0.0
      %1922 = vmatpush2.msra.mxu0 0.0
      %1923 = vmatprep.subr.mxu0 0.0
      %1924 = vmatpush2.msra.mxu0 0.0
      %1925 = vmatprep.subr.mxu0 0.0
      %1926 = vmatpush2.msra.mxu0 0.0
      %1927 = vmatprep.subr.mxu0 0.0
      %1928 = vmatpush2.msra.mxu0 0.0
      %1929 = vmatprep.subr.mxu0 0.0
      %1930 = vmatpush2.msra.mxu0 0.0
      %1931 = vmatprep.subr.mxu0 0.0
      %1932 = vmatpush2.msra.mxu0 0.0
      %1933 = vmatprep.subr.mxu0 0.0
      %1934 = vmatpush2.msra.mxu0 0.0
      %1935 = vmatprep.subr.mxu0 0.0
      %1936 = vmatpush2.msra.mxu0 0.0
      %1937 = vmatprep.subr.mxu0 0.0
      %1938 = vmatpush2.msra.mxu0 0.0
      %1939 = vmatprep.subr.mxu0 0.0
      %1940 = vmatpush2.msra.mxu0 0.0
      %1941 = vmatprep.subr.mxu0 0.0
      %1942 = vmatpush2.msra.mxu0 0.0
      %1943 = vmatprep.subr.mxu0 0.0
      %1944 = vmatpush2.msra.mxu0 0.0
      %1945 = vmatprep.subr.mxu0 0.0
      %1946 = vmatpush2.msra.mxu0 0.0
      %1947 = vmatprep.subr.mxu0 0.0
      %1948 = vmatpush2.msra.mxu0 0.0
      %1949 = vmatprep.subr.mxu0 0.0
      %1950 = vmatpush2.msra.mxu0 0.0
      %1951 = vmatprep.mubr.f32.mxu0 0.0
      %1952 = vmatmul.mubr.f32.gmra.mxu0 %v1885
      %v1953 = vpop.f32.mrf.mxu0
      %v1954 = vadd.f32 %v1881, %v1953
      %v1955 = vpop.f32.mrf.mxu0
      %v1956 = vadd.f32 %v1881, %v1955
      %1957 = vdwg.mxu0
      %1958 = vmatprep.subr.mxu0 0.0
      %1959 = vmatpush1.msra.mxu0 0.0
      %1960 = vmatprep.subr.mxu0 0.0
      %1961 = vmatpush1.msra.mxu0 0.0
      %1962 = vmatprep.subr.mxu0 0.0
      %1963 = vmatpush1.msra.mxu0 0.0
      %1964 = vmatprep.subr.mxu0 0.0
      %1965 = vmatpush1.msra.mxu0 0.0
      %1966 = vmatprep.subr.mxu0 0.0
      %1967 = vmatpush1.msra.mxu0 0.0
      %1968 = vmatprep.subr.mxu0 0.0
      %1969 = vmatpush1.msra.mxu0 0.0
      %1970 = vmatprep.subr.mxu0 0.0
      %1971 = vmatpush1.msra.mxu0 0.0
      %1972 = vmatprep.subr.mxu0 0.0
      %1973 = vmatpush1.msra.mxu0 0.0
      %1974 = vmatprep.subr.mxu0 0.0
      %1975 = vmatpush1.msra.mxu0 0.0
      %1976 = vmatprep.subr.mxu0 0.0
      %1977 = vmatpush1.msra.mxu0 0.0
      %1978 = vmatprep.subr.mxu0 0.0
      %1979 = vmatpush1.msra.mxu0 0.0
      %1980 = vmatprep.subr.mxu0 0.0
      %1981 = vmatpush1.msra.mxu0 0.0
      %1982 = vmatprep.subr.mxu0 0.0
      %1983 = vmatpush1.msra.mxu0 0.0
      %1984 = vmatprep.subr.mxu0 0.0
      %1985 = vmatpush1.msra.mxu0 0.0
      %1986 = vmatprep.subr.mxu0 0.0
      %1987 = vmatpush1.msra.mxu0 0.0
      %1988 = vmatprep.subr.mxu0 %v1875
      %1989 = vmatpush1.msra.mxu0 %v1874
      %1990 = vmatprep.subr.mxu0 0.0
      %1991 = vmatpush2.msra.mxu0 0.0
      %1992 = vmatprep.subr.mxu0 0.0
      %1993 = vmatpush2.msra.mxu0 0.0
      %1994 = vmatprep.subr.mxu0 0.0
      %1995 = vmatpush2.msra.mxu0 0.0
      %1996 = vmatprep.subr.mxu0 0.0
      %1997 = vmatpush2.msra.mxu0 0.0
      %1998 = vmatprep.subr.mxu0 0.0
      %1999 = vmatpush2.msra.mxu0 0.0
      %2000 = vmatprep.subr.mxu0 0.0
      %2001 = vmatpush2.msra.mxu0 0.0
      %2002 = vmatprep.subr.mxu0 0.0
      %2003 = vmatpush2.msra.mxu0 0.0
      %2004 = vmatprep.subr.mxu0 0.0
      %2005 = vmatpush2.msra.mxu0 0.0
      %2006 = vmatprep.subr.mxu0 0.0
      %2007 = vmatpush2.msra.mxu0 0.0
      %2008 = vmatprep.subr.mxu0 0.0
      %2009 = vmatpush2.msra.mxu0 0.0
      %2010 = vmatprep.subr.mxu0 0.0
      %2011 = vmatpush2.msra.mxu0 0.0
      %2012 = vmatprep.subr.mxu0 0.0
      %2013 = vmatpush2.msra.mxu0 0.0
      %2014 = vmatprep.subr.mxu0 0.0
      %2015 = vmatpush2.msra.mxu0 0.0
      %2016 = vmatprep.subr.mxu0 0.0
      %2017 = vmatpush2.msra.mxu0 0.0
      %2018 = vmatprep.subr.mxu0 0.0
      %2019 = vmatpush2.msra.mxu0 0.0
      %2020 = vmatprep.subr.mxu0 0.0
      %2021 = vmatpush2.msra.mxu0 0.0
      %2022 = vmatprep.mubr.f32.mxu0 0.0
      %2023 = vmatmul.mubr.f32.gmra.mxu0 %v1885
      %v2024 = vpop.f32.mrf.mxu0
      %v2025 = vadd.f32 %v1881, %v2024
      %v2026 = vpop.f32.mrf.mxu0
      %v2027 = vadd.f32 %v1881, %v2026
      %2028 = vdwg.mxu0
      %2029 = vrot.lane.b32.xlu0 %v1872, 73
      %v2030 = vpop.permute.xlu0 %2029
      %2031 = vrot.lane.b32.xlu0 %v1873, 73
      %v2032 = vpop.permute.xlu0 %2031
      %2033 = vrot.lane.b32.xlu0 %v1874, 73
      %v2034 = vpop.permute.xlu0 %2033
      %2035 = vrot.lane.b32.xlu0 %v1875, 73
      %v2036 = vpop.permute.xlu0 %2035
      %v2037 = vsel %vm588, %v2034, %v2036
      %v2038 = vsel %vm588, %v2032, %v2034
      %v2039 = vsel %vm588, %v2030, %v2032
      %v2040 = vsel %vm588, %v2036, %v2030
      %v2041 = vld [vmem:[%s1] ss:$8 sm:$0xf]
      %v2043 = vlaneseq
      %v2044 = vshrl.u32 %v2043, 7
      %v2045 = vsub.s32 0, %v2044
      %v2046 = vrot.slane %v2041, %v2045
      %v2047 = vlaneseq
      %v2048 = vshrl.u32 %v2047, 7
      %v2049 = vsub.s32 1, %v2048
      %v2050 = vrot.slane %v2041, %v2049
      %v2051 = vlaneseq
      %v2052 = vshrl.u32 %v2051, 7
      %v2053 = vsub.s32 2, %v2052
      %v2054 = vrot.slane %v2041, %v2053
      %v2055 = vlaneseq
      %v2056 = vshrl.u32 %v2055, 7
      %v2057 = vsub.s32 3, %v2056
      %v2058 = vrot.slane %v2041, %v2057
      %v2063 = vmul.f32 %v2040, %v2046
      %v2064 = vmul.f32 %v2039, %v2050
      %v2065 = vmul.f32 %v2038, %v2054
      %v2066 = vmul.f32 %v2037, %v2058
      %2067 = vst [vmem:[#allocation2] sm:$0xff] %v2063
      %2068 = vst [vmem:[#allocation2 + $0x8] sm:$0xff] %v2064
      %2069 = vst [vmem:[#allocation2 + $0x10] sm:$0xff] %v2065
      %2070 = vst [vmem:[#allocation2 + $0x18] sm:$0xff] %v2066
      %2071 = vrot.lane.b32.xlu0 %v1872, 72
      %v2072 = vpop.permute.xlu0 %2071
      %2073 = vrot.lane.b32.xlu0 %v1873, 72
      %v2074 = vpop.permute.xlu0 %2073
      %2075 = vrot.lane.b32.xlu0 %v1874, 72
      %v2076 = vpop.permute.xlu0 %2075
      %2077 = vrot.lane.b32.xlu0 %v1875, 72
      %v2078 = vpop.permute.xlu0 %2077
      %v2079 = vsel %vm631, %v2076, %v2078
      %v2080 = vsel %vm631, %v2074, %v2076
      %v2081 = vsel %vm631, %v2072, %v2074
      %v2082 = vsel %vm631, %v2078, %v2072
      %v2083 = vld [vmem:[%s636] ss:$8 sm:$0xf]
      %v2085 = vlaneseq
      %v2086 = vshrl.u32 %v2085, 7
      %v2087 = vsub.s32 0, %v2086
      %v2088 = vrot.slane %v2083, %v2087
      %v2089 = vlaneseq
      %v2090 = vshrl.u32 %v2089, 7
      %v2091 = vsub.s32 1, %v2090
      %v2092 = vrot.slane %v2083, %v2091
      %v2093 = vlaneseq
      %v2094 = vshrl.u32 %v2093, 7
      %v2095 = vsub.s32 2, %v2094
      %v2096 = vrot.slane %v2083, %v2095
      %v2097 = vlaneseq
      %v2098 = vshrl.u32 %v2097, 7
      %v2099 = vsub.s32 3, %v2098
      %v2100 = vrot.slane %v2083, %v2099
      %v2105 = vmul.f32 %v2082, %v2088
      %v2106 = vmul.f32 %v2081, %v2092
      %v2107 = vmul.f32 %v2080, %v2096
      %v2108 = vmul.f32 %v2079, %v2100
      %2109 = vst [vmem:[#allocation2 + $0x20] sm:$0xff] %v2105
      %2110 = vst [vmem:[#allocation2 + $0x28] sm:$0xff] %v2106
      %2111 = vst [vmem:[#allocation2 + $0x30] sm:$0xff] %v2107
      %2112 = vst [vmem:[#allocation2 + $0x38] sm:$0xff] %v2108
      %2113 = vrot.lane.b32.xlu0 %v1872, 71
      %v2114 = vpop.permute.xlu0 %2113
      %2115 = vrot.lane.b32.xlu0 %v1873, 71
      %v2116 = vpop.permute.xlu0 %2115
      %2117 = vrot.lane.b32.xlu0 %v1874, 71
      %v2118 = vpop.permute.xlu0 %2117
      %2119 = vrot.lane.b32.xlu0 %v1875, 71
      %v2120 = vpop.permute.xlu0 %2119
      %v2121 = vsel %vm675, %v2118, %v2120
      %v2122 = vsel %vm675, %v2116, %v2118
      %v2123 = vsel %vm675, %v2114, %v2116
      %v2124 = vsel %vm675, %v2120, %v2114
      %v2125 = vld [vmem:[%s680] ss:$8 sm:$0xf]
      %v2127 = vlaneseq
      %v2128 = vshrl.u32 %v2127, 7
      %v2129 = vsub.s32 0, %v2128
      %v2130 = vrot.slane %v2125, %v2129
      %v2131 = vlaneseq
      %v2132 = vshrl.u32 %v2131, 7
      %v2133 = vsub.s32 1, %v2132
      %v2134 = vrot.slane %v2125, %v2133
      %v2135 = vlaneseq
      %v2136 = vshrl.u32 %v2135, 7
      %v2137 = vsub.s32 2, %v2136
      %v2138 = vrot.slane %v2125, %v2137
      %v2139 = vlaneseq
      %v2140 = vshrl.u32 %v2139, 7
      %v2141 = vsub.s32 3, %v2140
      %v2142 = vrot.slane %v2125, %v2141
      %v2147 = vmul.f32 %v2124, %v2130
      %v2148 = vmul.f32 %v2123, %v2134
      %v2149 = vmul.f32 %v2122, %v2138
      %v2150 = vmul.f32 %v2121, %v2142
      %2151 = vst [vmem:[#allocation2 + $0x40] sm:$0xff] %v2147
      %2152 = vst [vmem:[#allocation2 + $0x48] sm:$0xff] %v2148
      %2153 = vst [vmem:[#allocation2 + $0x50] sm:$0xff] %v2149
      %2154 = vst [vmem:[#allocation2 + $0x58] sm:$0xff] %v2150
      %2155 = vrot.lane.b32.xlu0 %v1872, 65
      %v2156 = vpop.permute.xlu0 %2155
      %2157 = vrot.lane.b32.xlu0 %v1873, 65
      %v2158 = vpop.permute.xlu0 %2157
      %2159 = vrot.lane.b32.xlu0 %v1874, 65
      %v2160 = vpop.permute.xlu0 %2159
      %2161 = vrot.lane.b32.xlu0 %v1875, 65
      %v2162 = vpop.permute.xlu0 %2161
      %v2163 = vsel %vm719, %v2160, %v2162
      %v2164 = vsel %vm719, %v2158, %v2160
      %v2165 = vsel %vm719, %v2156, %v2158
      %v2166 = vsel %vm719, %v2162, %v2156
      %v2167 = vld [vmem:[%s724] ss:$8 sm:$0xf]
      %v2169 = vlaneseq
      %v2170 = vshrl.u32 %v2169, 7
      %v2171 = vsub.s32 0, %v2170
      %v2172 = vrot.slane %v2167, %v2171
      %v2173 = vlaneseq
      %v2174 = vshrl.u32 %v2173, 7
      %v2175 = vsub.s32 1, %v2174
      %v2176 = vrot.slane %v2167, %v2175
      %v2177 = vlaneseq
      %v2178 = vshrl.u32 %v2177, 7
      %v2179 = vsub.s32 2, %v2178
      %v2180 = vrot.slane %v2167, %v2179
      %v2181 = vlaneseq
      %v2182 = vshrl.u32 %v2181, 7
      %v2183 = vsub.s32 3, %v2182
      %v2184 = vrot.slane %v2167, %v2183
      %v2189 = vmul.f32 %v2166, %v2172
      %v2190 = vmul.f32 %v2165, %v2176
      %v2191 = vmul.f32 %v2164, %v2180
      %v2192 = vmul.f32 %v2163, %v2184
      %2193 = vst [vmem:[#allocation2 + $0x60] sm:$0xff] %v2189
      %2194 = vst [vmem:[#allocation2 + $0x68] sm:$0xff] %v2190
      %2195 = vst [vmem:[#allocation2 + $0x70] sm:$0xff] %v2191
      %2196 = vst [vmem:[#allocation2 + $0x78] sm:$0xff] %v2192
      %2197 = vrot.lane.b32.xlu0 %v1872, 64
      %v2198 = vpop.permute.xlu0 %2197
      %2199 = vrot.lane.b32.xlu0 %v1873, 64
      %v2200 = vpop.permute.xlu0 %2199
      %2201 = vrot.lane.b32.xlu0 %v1874, 64
      %v2202 = vpop.permute.xlu0 %2201
      %2203 = vrot.lane.b32.xlu0 %v1875, 64
      %v2204 = vpop.permute.xlu0 %2203
      %v2205 = vsel %vm763, %v2202, %v2204
      %v2206 = vsel %vm763, %v2200, %v2202
      %v2207 = vsel %vm763, %v2198, %v2200
      %v2208 = vsel %vm763, %v2204, %v2198
      %v2209 = vld [vmem:[%s768] ss:$8 sm:$0xf]
      %v2211 = vlaneseq
      %v2212 = vshrl.u32 %v2211, 7
      %v2213 = vsub.s32 0, %v2212
      %v2214 = vrot.slane %v2209, %v2213
      %v2215 = vlaneseq
      %v2216 = vshrl.u32 %v2215, 7
      %v2217 = vsub.s32 1, %v2216
      %v2218 = vrot.slane %v2209, %v2217
      %v2219 = vlaneseq
      %v2220 = vshrl.u32 %v2219, 7
      %v2221 = vsub.s32 2, %v2220
      %v2222 = vrot.slane %v2209, %v2221
      %v2223 = vlaneseq
      %v2224 = vshrl.u32 %v2223, 7
      %v2225 = vsub.s32 3, %v2224
      %v2226 = vrot.slane %v2209, %v2225
      %v2231 = vmul.f32 %v2208, %v2214
      %v2232 = vmul.f32 %v2207, %v2218
      %v2233 = vmul.f32 %v2206, %v2222
      %v2234 = vmul.f32 %v2205, %v2226
      %2235 = vst [vmem:[#allocation2 + $0x80] sm:$0xff] %v2231
      %2236 = vst [vmem:[#allocation2 + $0x88] sm:$0xff] %v2232
      %2237 = vst [vmem:[#allocation2 + $0x90] sm:$0xff] %v2233
      %2238 = vst [vmem:[#allocation2 + $0x98] sm:$0xff] %v2234
      %2239 = vrot.lane.b32.xlu0 %v1872, 63
      %v2240 = vpop.permute.xlu0 %2239
      %2241 = vrot.lane.b32.xlu0 %v1873, 63
      %v2242 = vpop.permute.xlu0 %2241
      %2243 = vrot.lane.b32.xlu0 %v1874, 63
      %v2244 = vpop.permute.xlu0 %2243
      %2245 = vrot.lane.b32.xlu0 %v1875, 63
      %v2246 = vpop.permute.xlu0 %2245
      %v2247 = vsel %vm807, %v2244, %v2246
      %v2248 = vsel %vm807, %v2242, %v2244
      %v2249 = vsel %vm807, %v2240, %v2242
      %v2250 = vsel %vm807, %v2246, %v2240
      %v2251 = vld [vmem:[%s812] ss:$8 sm:$0xf]
      %v2253 = vlaneseq
      %v2254 = vshrl.u32 %v2253, 7
      %v2255 = vsub.s32 0, %v2254
      %v2256 = vrot.slane %v2251, %v2255
      %v2257 = vlaneseq
      %v2258 = vshrl.u32 %v2257, 7
      %v2259 = vsub.s32 1, %v2258
      %v2260 = vrot.slane %v2251, %v2259
      %v2261 = vlaneseq
      %v2262 = vshrl.u32 %v2261, 7
      %v2263 = vsub.s32 2, %v2262
      %v2264 = vrot.slane %v2251, %v2263
      %v2265 = vlaneseq
      %v2266 = vshrl.u32 %v2265, 7
      %v2267 = vsub.s32 3, %v2266
      %v2268 = vrot.slane %v2251, %v2267
      %v2273 = vmul.f32 %v2250, %v2256
      %v2274 = vmul.f32 %v2249, %v2260
      %v2275 = vmul.f32 %v2248, %v2264
      %v2276 = vmul.f32 %v2247, %v2268
      %2277 = vst [vmem:[#allocation2 + $0xa0] sm:$0xff] %v2273
      %2278 = vst [vmem:[#allocation2 + $0xa8] sm:$0xff] %v2274
      %2279 = vst [vmem:[#allocation2 + $0xb0] sm:$0xff] %v2275
      %2280 = vst [vmem:[#allocation2 + $0xb8] sm:$0xff] %v2276
      %2281 = vrot.lane.b32.xlu0 %v1872, 57
      %v2282 = vpop.permute.xlu0 %2281
      %2283 = vrot.lane.b32.xlu0 %v1873, 57
      %v2284 = vpop.permute.xlu0 %2283
      %2285 = vrot.lane.b32.xlu0 %v1874, 57
      %v2286 = vpop.permute.xlu0 %2285
      %2287 = vrot.lane.b32.xlu0 %v1875, 57
      %v2288 = vpop.permute.xlu0 %2287
      %v2289 = vsel %vm851, %v2286, %v2288
      %v2290 = vsel %vm851, %v2284, %v2286
      %v2291 = vsel %vm851, %v2282, %v2284
      %v2292 = vsel %vm851, %v2288, %v2282
      %v2293 = vld [vmem:[%s856] ss:$8 sm:$0xf]
      %v2295 = vlaneseq
      %v2296 = vshrl.u32 %v2295, 7
      %v2297 = vsub.s32 0, %v2296
      %v2298 = vrot.slane %v2293, %v2297
      %v2299 = vlaneseq
      %v2300 = vshrl.u32 %v2299, 7
      %v2301 = vsub.s32 1, %v2300
      %v2302 = vrot.slane %v2293, %v2301
      %v2303 = vlaneseq
      %v2304 = vshrl.u32 %v2303, 7
      %v2305 = vsub.s32 2, %v2304
      %v2306 = vrot.slane %v2293, %v2305
      %v2307 = vlaneseq
      %v2308 = vshrl.u32 %v2307, 7
      %v2309 = vsub.s32 3, %v2308
      %v2310 = vrot.slane %v2293, %v2309
      %v2315 = vmul.f32 %v2292, %v2298
      %v2316 = vmul.f32 %v2291, %v2302
      %v2317 = vmul.f32 %v2290, %v2306
      %v2318 = vmul.f32 %v2289, %v2310
      %2319 = vst [vmem:[#allocation2 + $0xc0] sm:$0xff] %v2315
      %2320 = vst [vmem:[#allocation2 + $0xc8] sm:$0xff] %v2316
      %2321 = vst [vmem:[#allocation2 + $0xd0] sm:$0xff] %v2317
      %2322 = vst [vmem:[#allocation2 + $0xd8] sm:$0xff] %v2318
      %2323 = vrot.lane.b32.xlu0 %v1872, 56
      %v2324 = vpop.permute.xlu0 %2323
      %2325 = vrot.lane.b32.xlu0 %v1873, 56
      %v2326 = vpop.permute.xlu0 %2325
      %2327 = vrot.lane.b32.xlu0 %v1874, 56
      %v2328 = vpop.permute.xlu0 %2327
      %2329 = vrot.lane.b32.xlu0 %v1875, 56
      %v2330 = vpop.permute.xlu0 %2329
      %v2331 = vsel %vm895, %v2328, %v2330
      %v2332 = vsel %vm895, %v2326, %v2328
      %v2333 = vsel %vm895, %v2324, %v2326
      %v2334 = vsel %vm895, %v2330, %v2324
      %v2335 = vld [vmem:[%s900] ss:$8 sm:$0xf]
      %v2337 = vlaneseq
      %v2338 = vshrl.u32 %v2337, 7
      %v2339 = vsub.s32 0, %v2338
      %v2340 = vrot.slane %v2335, %v2339
      %v2341 = vlaneseq
      %v2342 = vshrl.u32 %v2341, 7
      %v2343 = vsub.s32 1, %v2342
      %v2344 = vrot.slane %v2335, %v2343
      %v2345 = vlaneseq
      %v2346 = vshrl.u32 %v2345, 7
      %v2347 = vsub.s32 2, %v2346
      %v2348 = vrot.slane %v2335, %v2347
      %v2349 = vlaneseq
      %v2350 = vshrl.u32 %v2349, 7
      %v2351 = vsub.s32 3, %v2350
      %v2352 = vrot.slane %v2335, %v2351
      %v2357 = vmul.f32 %v2334, %v2340
      %v2358 = vmul.f32 %v2333, %v2344
      %v2359 = vmul.f32 %v2332, %v2348
      %v2360 = vmul.f32 %v2331, %v2352
      %2361 = vst [vmem:[#allocation2 + $0xe0] sm:$0xff] %v2357
      %2362 = vst [vmem:[#allocation2 + $0xe8] sm:$0xff] %v2358
      %2363 = vst [vmem:[#allocation2 + $0xf0] sm:$0xff] %v2359
      %2364 = vst [vmem:[#allocation2 + $0xf8] sm:$0xff] %v2360
      %2365 = vrot.lane.b32.xlu0 %v1872, 55
      %v2366 = vpop.permute.xlu0 %2365
      %2367 = vrot.lane.b32.xlu0 %v1873, 55
      %v2368 = vpop.permute.xlu0 %2367
      %2369 = vrot.lane.b32.xlu0 %v1874, 55
      %v2370 = vpop.permute.xlu0 %2369
      %2371 = vrot.lane.b32.xlu0 %v1875, 55
      %v2372 = vpop.permute.xlu0 %2371
      %v2373 = vsel %vm939, %v2370, %v2372
      %v2374 = vsel %vm939, %v2368, %v2370
      %v2375 = vsel %vm939, %v2366, %v2368
      %v2376 = vsel %vm939, %v2372, %v2366
      %v2377 = vld [vmem:[%s944] ss:$8 sm:$0xf]
      %v2379 = vlaneseq
      %v2380 = vshrl.u32 %v2379, 7
      %v2381 = vsub.s32 0, %v2380
      %v2382 = vrot.slane %v2377, %v2381
      %v2383 = vlaneseq
      %v2384 = vshrl.u32 %v2383, 7
      %v2385 = vsub.s32 1, %v2384
      %v2386 = vrot.slane %v2377, %v2385
      %v2387 = vlaneseq
      %v2388 = vshrl.u32 %v2387, 7
      %v2389 = vsub.s32 2, %v2388
      %v2390 = vrot.slane %v2377, %v2389
      %v2391 = vlaneseq
      %v2392 = vshrl.u32 %v2391, 7
      %v2393 = vsub.s32 3, %v2392
      %v2394 = vrot.slane %v2377, %v2393
      %v2399 = vmul.f32 %v2376, %v2382
      %v2400 = vmul.f32 %v2375, %v2386
      %v2401 = vmul.f32 %v2374, %v2390
      %v2402 = vmul.f32 %v2373, %v2394
      %2403 = vst [vmem:[#allocation2 + $0x100] sm:$0xff] %v2399
      %2404 = vst [vmem:[#allocation2 + $0x108] sm:$0xff] %v2400
      %2405 = vst [vmem:[#allocation2 + $0x110] sm:$0xff] %v2401
      %2406 = vst [vmem:[#allocation2 + $0x118] sm:$0xff] %v2402
      %2407 = vrot.lane.b32.xlu0 %v1872, 9
      %v2408 = vpop.permute.xlu0 %2407
      %2409 = vrot.lane.b32.xlu0 %v1873, 9
      %v2410 = vpop.permute.xlu0 %2409
      %2411 = vrot.lane.b32.xlu0 %v1874, 9
      %v2412 = vpop.permute.xlu0 %2411
      %2413 = vrot.lane.b32.xlu0 %v1875, 9
      %v2414 = vpop.permute.xlu0 %2413
      %v2415 = vsel %vm983, %v2412, %v2414
      %v2416 = vsel %vm983, %v2410, %v2412
      %v2417 = vsel %vm983, %v2408, %v2410
      %v2418 = vsel %vm983, %v2414, %v2408
      %v2419 = vld [vmem:[%s988] ss:$8 sm:$0xf]
      %v2421 = vlaneseq
      %v2422 = vshrl.u32 %v2421, 7
      %v2423 = vsub.s32 0, %v2422
      %v2424 = vrot.slane %v2419, %v2423
      %v2425 = vlaneseq
      %v2426 = vshrl.u32 %v2425, 7
      %v2427 = vsub.s32 1, %v2426
      %v2428 = vrot.slane %v2419, %v2427
      %v2429 = vlaneseq
      %v2430 = vshrl.u32 %v2429, 7
      %v2431 = vsub.s32 2, %v2430
      %v2432 = vrot.slane %v2419, %v2431
      %v2433 = vlaneseq
      %v2434 = vshrl.u32 %v2433, 7
      %v2435 = vsub.s32 3, %v2434
      %v2436 = vrot.slane %v2419, %v2435
      %v2441 = vmul.f32 %v2418, %v2424
      %v2442 = vmul.f32 %v2417, %v2428
      %v2443 = vmul.f32 %v2416, %v2432
      %v2444 = vmul.f32 %v2415, %v2436
      %2445 = vst [vmem:[#allocation2 + $0x120] sm:$0xff] %v2441
      %2446 = vst [vmem:[#allocation2 + $0x128] sm:$0xff] %v2442
      %2447 = vst [vmem:[#allocation2 + $0x130] sm:$0xff] %v2443
      %2448 = vst [vmem:[#allocation2 + $0x138] sm:$0xff] %v2444
      %2449 = vrot.lane.b32.xlu0 %v1872, 8
      %v2450 = vpop.permute.xlu0 %2449
      %2451 = vrot.lane.b32.xlu0 %v1873, 8
      %v2452 = vpop.permute.xlu0 %2451
      %2453 = vrot.lane.b32.xlu0 %v1874, 8
      %v2454 = vpop.permute.xlu0 %2453
      %2455 = vrot.lane.b32.xlu0 %v1875, 8
      %v2456 = vpop.permute.xlu0 %2455
      %v2457 = vsel %vm1027, %v2454, %v2456
      %v2458 = vsel %vm1027, %v2452, %v2454
      %v2459 = vsel %vm1027, %v2450, %v2452
      %v2460 = vsel %vm1027, %v2456, %v2450
      %v2461 = vld [vmem:[%s1032] ss:$8 sm:$0xf]
      %v2463 = vlaneseq
      %v2464 = vshrl.u32 %v2463, 7
      %v2465 = vsub.s32 0, %v2464
      %v2466 = vrot.slane %v2461, %v2465
      %v2467 = vlaneseq
      %v2468 = vshrl.u32 %v2467, 7
      %v2469 = vsub.s32 1, %v2468
      %v2470 = vrot.slane %v2461, %v2469
      %v2471 = vlaneseq
      %v2472 = vshrl.u32 %v2471, 7
      %v2473 = vsub.s32 2, %v2472
      %v2474 = vrot.slane %v2461, %v2473
      %v2475 = vlaneseq
      %v2476 = vshrl.u32 %v2475, 7
      %v2477 = vsub.s32 3, %v2476
      %v2478 = vrot.slane %v2461, %v2477
      %v2483 = vmul.f32 %v2460, %v2466
      %v2484 = vmul.f32 %v2459, %v2470
      %v2485 = vmul.f32 %v2458, %v2474
      %v2486 = vmul.f32 %v2457, %v2478
      %2487 = vst [vmem:[#allocation2 + $0x140] sm:$0xff] %v2483
      %2488 = vst [vmem:[#allocation2 + $0x148] sm:$0xff] %v2484
      %2489 = vst [vmem:[#allocation2 + $0x150] sm:$0xff] %v2485
      %2490 = vst [vmem:[#allocation2 + $0x158] sm:$0xff] %v2486
      %2491 = vrot.lane.b32.xlu0 %v1872, 7
      %v2492 = vpop.permute.xlu0 %2491
      %2493 = vrot.lane.b32.xlu0 %v1873, 7
      %v2494 = vpop.permute.xlu0 %2493
      %2495 = vrot.lane.b32.xlu0 %v1874, 7
      %v2496 = vpop.permute.xlu0 %2495
      %2497 = vrot.lane.b32.xlu0 %v1875, 7
      %v2498 = vpop.permute.xlu0 %2497
      %v2499 = vsel %vm1071, %v2496, %v2498
      %v2500 = vsel %vm1071, %v2494, %v2496
      %v2501 = vsel %vm1071, %v2492, %v2494
      %v2502 = vsel %vm1071, %v2498, %v2492
      %v2503 = vld [vmem:[%s1076] ss:$8 sm:$0xf]
      %v2505 = vlaneseq
      %v2506 = vshrl.u32 %v2505, 7
      %v2507 = vsub.s32 0, %v2506
      %v2508 = vrot.slane %v2503, %v2507
      %v2509 = vlaneseq
      %v2510 = vshrl.u32 %v2509, 7
      %v2511 = vsub.s32 1, %v2510
      %v2512 = vrot.slane %v2503, %v2511
      %v2513 = vlaneseq
      %v2514 = vshrl.u32 %v2513, 7
      %v2515 = vsub.s32 2, %v2514
      %v2516 = vrot.slane %v2503, %v2515
      %v2517 = vlaneseq
      %v2518 = vshrl.u32 %v2517, 7
      %v2519 = vsub.s32 3, %v2518
      %v2520 = vrot.slane %v2503, %v2519
      %v2525 = vmul.f32 %v2502, %v2508
      %v2526 = vmul.f32 %v2501, %v2512
      %v2527 = vmul.f32 %v2500, %v2516
      %v2528 = vmul.f32 %v2499, %v2520
      %2529 = vst [vmem:[#allocation2 + $0x160] sm:$0xff] %v2525
      %2530 = vst [vmem:[#allocation2 + $0x168] sm:$0xff] %v2526
      %2531 = vst [vmem:[#allocation2 + $0x170] sm:$0xff] %v2527
      %2532 = vst [vmem:[#allocation2 + $0x178] sm:$0xff] %v2528
      %2533 = vrot.lane.b32.xlu0 %v1872, 1
      %v2534 = vpop.permute.xlu0 %2533
      %2535 = vrot.lane.b32.xlu0 %v1873, 1
      %v2536 = vpop.permute.xlu0 %2535
      %2537 = vrot.lane.b32.xlu0 %v1874, 1
      %v2538 = vpop.permute.xlu0 %2537
      %2539 = vrot.lane.b32.xlu0 %v1875, 1
      %v2540 = vpop.permute.xlu0 %2539
      %v2541 = vsel %vm1115, %v2538, %v2540
      %v2542 = vsel %vm1115, %v2536, %v2538
      %v2543 = vsel %vm1115, %v2534, %v2536
      %v2544 = vsel %vm1115, %v2540, %v2534
      %v2545 = vld [vmem:[%s1120] ss:$8 sm:$0xf]
      %v2547 = vlaneseq
      %v2548 = vshrl.u32 %v2547, 7
      %v2549 = vsub.s32 0, %v2548
      %v2550 = vrot.slane %v2545, %v2549
      %v2551 = vlaneseq
      %v2552 = vshrl.u32 %v2551, 7
      %v2553 = vsub.s32 1, %v2552
      %v2554 = vrot.slane %v2545, %v2553
      %v2555 = vlaneseq
      %v2556 = vshrl.u32 %v2555, 7
      %v2557 = vsub.s32 2, %v2556
      %v2558 = vrot.slane %v2545, %v2557
      %v2559 = vlaneseq
      %v2560 = vshrl.u32 %v2559, 7
      %v2561 = vsub.s32 3, %v2560
      %v2562 = vrot.slane %v2545, %v2561
      %v2567 = vmul.f32 %v2544, %v2550
      %v2568 = vmul.f32 %v2543, %v2554
      %v2569 = vmul.f32 %v2542, %v2558
      %v2570 = vmul.f32 %v2541, %v2562
      %2571 = vst [vmem:[#allocation2 + $0x180] sm:$0xff] %v2567
      %2572 = vst [vmem:[#allocation2 + $0x188] sm:$0xff] %v2568
      %2573 = vst [vmem:[#allocation2 + $0x190] sm:$0xff] %v2569
      %2574 = vst [vmem:[#allocation2 + $0x198] sm:$0xff] %v2570
      %2575 = vst [vmem:[#allocation2 + $0x1a0] sm:$0xff] %v1872
      %2576 = vst [vmem:[#allocation2 + $0x1a8] sm:$0xff] %v1873
      %2577 = vst [vmem:[#allocation2 + $0x1b0] sm:$0xff] %v1874
      %2578 = vst [vmem:[#allocation2 + $0x1b8] sm:$0xff] %v1875
      %2579 = vrot.lane.b32.xlu0 %v1872, 127
      %v2580 = vpop.permute.xlu0 %2579
      %2581 = vrot.lane.b32.xlu0 %v1873, 127
      %v2582 = vpop.permute.xlu0 %2581
      %2583 = vrot.lane.b32.xlu0 %v1874, 127
      %v2584 = vpop.permute.xlu0 %2583
      %2585 = vrot.lane.b32.xlu0 %v1875, 127
      %v2586 = vpop.permute.xlu0 %2585
      %v2587 = vsel %vm1163, %v2584, %v2586
      %v2588 = vsel %vm1163, %v2582, %v2584
      %v2589 = vsel %vm1163, %v2580, %v2582
      %v2590 = vsel %vm1163, %v2586, %v2580
      %v2591 = vld [vmem:[%s1168] ss:$8 sm:$0xf]
      %v2593 = vlaneseq
      %v2594 = vshrl.u32 %v2593, 7
      %v2595 = vsub.s32 0, %v2594
      %v2596 = vrot.slane %v2591, %v2595
      %v2597 = vlaneseq
      %v2598 = vshrl.u32 %v2597, 7
      %v2599 = vsub.s32 1, %v2598
      %v2600 = vrot.slane %v2591, %v2599
      %v2601 = vlaneseq
      %v2602 = vshrl.u32 %v2601, 7
      %v2603 = vsub.s32 2, %v2602
      %v2604 = vrot.slane %v2591, %v2603
      %v2605 = vlaneseq
      %v2606 = vshrl.u32 %v2605, 7
      %v2607 = vsub.s32 3, %v2606
      %v2608 = vrot.slane %v2591, %v2607
      %v2613 = vmul.f32 %v2589, %v2596
      %v2614 = vmul.f32 %v2588, %v2600
      %v2615 = vmul.f32 %v2587, %v2604
      %v2616 = vmul.f32 %v2590, %v2608
      %2617 = vst [vmem:[#allocation2 + $0x1c0] sm:$0xff] %v2613
      %2618 = vst [vmem:[#allocation2 + $0x1c8] sm:$0xff] %v2614
      %2619 = vst [vmem:[#allocation2 + $0x1d0] sm:$0xff] %v2615
      %2620 = vst [vmem:[#allocation2 + $0x1d8] sm:$0xff] %v2616
      %2621 = vrot.lane.b32.xlu0 %v1872, 121
      %v2622 = vpop.permute.xlu0 %2621
      %2623 = vrot.lane.b32.xlu0 %v1873, 121
      %v2624 = vpop.permute.xlu0 %2623
      %2625 = vrot.lane.b32.xlu0 %v1874, 121
      %v2626 = vpop.permute.xlu0 %2625
      %2627 = vrot.lane.b32.xlu0 %v1875, 121
      %v2628 = vpop.permute.xlu0 %2627
      %v2629 = vsel %vm1207, %v2626, %v2628
      %v2630 = vsel %vm1207, %v2624, %v2626
      %v2631 = vsel %vm1207, %v2622, %v2624
      %v2632 = vsel %vm1207, %v2628, %v2622
      %v2633 = vld [vmem:[%s1212] ss:$8 sm:$0xf]
      %v2635 = vlaneseq
      %v2636 = vshrl.u32 %v2635, 7
      %v2637 = vsub.s32 0, %v2636
      %v2638 = vrot.slane %v2633, %v2637
      %v2639 = vlaneseq
      %v2640 = vshrl.u32 %v2639, 7
      %v2641 = vsub.s32 1, %v2640
      %v2642 = vrot.slane %v2633, %v2641
      %v2643 = vlaneseq
      %v2644 = vshrl.u32 %v2643, 7
      %v2645 = vsub.s32 2, %v2644
      %v2646 = vrot.slane %v2633, %v2645
      %v2647 = vlaneseq
      %v2648 = vshrl.u32 %v2647, 7
      %v2649 = vsub.s32 3, %v2648
      %v2650 = vrot.slane %v2633, %v2649
      %v2655 = vmul.f32 %v2631, %v2638
      %v2656 = vmul.f32 %v2630, %v2642
      %v2657 = vmul.f32 %v2629, %v2646
      %v2658 = vmul.f32 %v2632, %v2650
      %2659 = vst [vmem:[#allocation2 + $0x1e0] sm:$0xff] %v2655
      %2660 = vst [vmem:[#allocation2 + $0x1e8] sm:$0xff] %v2656
      %2661 = vst [vmem:[#allocation2 + $0x1f0] sm:$0xff] %v2657
      %2662 = vst [vmem:[#allocation2 + $0x1f8] sm:$0xff] %v2658
      %2663 = vrot.lane.b32.xlu0 %v1872, 120
      %v2664 = vpop.permute.xlu0 %2663
      %2665 = vrot.lane.b32.xlu0 %v1873, 120
      %v2666 = vpop.permute.xlu0 %2665
      %2667 = vrot.lane.b32.xlu0 %v1874, 120
      %v2668 = vpop.permute.xlu0 %2667
      %2669 = vrot.lane.b32.xlu0 %v1875, 120
      %v2670 = vpop.permute.xlu0 %2669
      %v2671 = vsel %vm1251, %v2668, %v2670
      %v2672 = vsel %vm1251, %v2666, %v2668
      %v2673 = vsel %vm1251, %v2664, %v2666
      %v2674 = vsel %vm1251, %v2670, %v2664
      %v2675 = vld [vmem:[%s1256] ss:$8 sm:$0xf]
      %v2677 = vlaneseq
      %v2678 = vshrl.u32 %v2677, 7
      %v2679 = vsub.s32 0, %v2678
      %v2680 = vrot.slane %v2675, %v2679
      %v2681 = vlaneseq
      %v2682 = vshrl.u32 %v2681, 7
      %v2683 = vsub.s32 1, %v2682
      %v2684 = vrot.slane %v2675, %v2683
      %v2685 = vlaneseq
      %v2686 = vshrl.u32 %v2685, 7
      %v2687 = vsub.s32 2, %v2686
      %v2688 = vrot.slane %v2675, %v2687
      %v2689 = vlaneseq
      %v2690 = vshrl.u32 %v2689, 7
      %v2691 = vsub.s32 3, %v2690
      %v2692 = vrot.slane %v2675, %v2691
      %v2697 = vmul.f32 %v2673, %v2680
      %v2698 = vmul.f32 %v2672, %v2684
      %v2699 = vmul.f32 %v2671, %v2688
      %v2700 = vmul.f32 %v2674, %v2692
      %2701 = vst [vmem:[#allocation2 + $0x200] sm:$0xff] %v2697
      %2702 = vst [vmem:[#allocation2 + $0x208] sm:$0xff] %v2698
      %2703 = vst [vmem:[#allocation2 + $0x210] sm:$0xff] %v2699
      %2704 = vst [vmem:[#allocation2 + $0x218] sm:$0xff] %v2700
      %2705 = vrot.lane.b32.xlu0 %v1872, 119
      %v2706 = vpop.permute.xlu0 %2705
      %2707 = vrot.lane.b32.xlu0 %v1873, 119
      %v2708 = vpop.permute.xlu0 %2707
      %2709 = vrot.lane.b32.xlu0 %v1874, 119
      %v2710 = vpop.permute.xlu0 %2709
      %2711 = vrot.lane.b32.xlu0 %v1875, 119
      %v2712 = vpop.permute.xlu0 %2711
      %v2713 = vsel %vm1295, %v2710, %v2712
      %v2714 = vsel %vm1295, %v2708, %v2710
      %v2715 = vsel %vm1295, %v2706, %v2708
      %v2716 = vsel %vm1295, %v2712, %v2706
      %v2717 = vld [vmem:[%s1300] ss:$8 sm:$0xf]
      %v2719 = vlaneseq
      %v2720 = vshrl.u32 %v2719, 7
      %v2721 = vsub.s32 0, %v2720
      %v2722 = vrot.slane %v2717, %v2721
      %v2723 = vlaneseq
      %v2724 = vshrl.u32 %v2723, 7
      %v2725 = vsub.s32 1, %v2724
      %v2726 = vrot.slane %v2717, %v2725
      %v2727 = vlaneseq
      %v2728 = vshrl.u32 %v2727, 7
      %v2729 = vsub.s32 2, %v2728
      %v2730 = vrot.slane %v2717, %v2729
      %v2731 = vlaneseq
      %v2732 = vshrl.u32 %v2731, 7
      %v2733 = vsub.s32 3, %v2732
      %v2734 = vrot.slane %v2717, %v2733
      %v2739 = vmul.f32 %v2715, %v2722
      %v2740 = vmul.f32 %v2714, %v2726
      %v2741 = vmul.f32 %v2713, %v2730
      %v2742 = vmul.f32 %v2716, %v2734
      %2743 = vst [vmem:[#allocation2 + $0x220] sm:$0xff] %v2739
      %2744 = vst [vmem:[#allocation2 + $0x228] sm:$0xff] %v2740
      %2745 = vst [vmem:[#allocation2 + $0x230] sm:$0xff] %v2741
      %2746 = vst [vmem:[#allocation2 + $0x238] sm:$0xff] %v2742
      %v2747 = vld [vmem:[%s1331] ss:$8 sm:$0xf]
      %v2749 = vlaneseq
      %v2750 = vshrl.u32 %v2749, 7
      %v2751 = vsub.s32 0, %v2750
      %v2752 = vrot.slane %v2747, %v2751
      %v2753 = vlaneseq
      %v2754 = vshrl.u32 %v2753, 7
      %v2755 = vsub.s32 1, %v2754
      %v2756 = vrot.slane %v2747, %v2755
      %v2757 = vlaneseq
      %v2758 = vshrl.u32 %v2757, 7
      %v2759 = vsub.s32 2, %v2758
      %v2760 = vrot.slane %v2747, %v2759
      %v2761 = vlaneseq
      %v2762 = vshrl.u32 %v2761, 7
      %v2763 = vsub.s32 3, %v2762
      %v2764 = vrot.slane %v2747, %v2763
      %v2769 = vmul.f32 %v2039, %v2752
      %v2770 = vmul.f32 %v2038, %v2756
      %v2771 = vmul.f32 %v2037, %v2760
      %v2772 = vmul.f32 %v2040, %v2764
      %2773 = vst [vmem:[#allocation2 + $0x240] sm:$0xff] %v2769
      %2774 = vst [vmem:[#allocation2 + $0x248] sm:$0xff] %v2770
      %2775 = vst [vmem:[#allocation2 + $0x250] sm:$0xff] %v2771
      %2776 = vst [vmem:[#allocation2 + $0x258] sm:$0xff] %v2772
      %v2777 = vld [vmem:[%s1362] ss:$8 sm:$0xf]
      %v2779 = vlaneseq
      %v2780 = vshrl.u32 %v2779, 7
      %v2781 = vsub.s32 0, %v2780
      %v2782 = vrot.slane %v2777, %v2781
      %v2783 = vlaneseq
      %v2784 = vshrl.u32 %v2783, 7
      %v2785 = vsub.s32 1, %v2784
      %v2786 = vrot.slane %v2777, %v2785
      %v2787 = vlaneseq
      %v2788 = vshrl.u32 %v2787, 7
      %v2789 = vsub.s32 2, %v2788
      %v2790 = vrot.slane %v2777, %v2789
      %v2791 = vlaneseq
      %v2792 = vshrl.u32 %v2791, 7
      %v2793 = vsub.s32 3, %v2792
      %v2794 = vrot.slane %v2777, %v2793
      %v2799 = vmul.f32 %v2081, %v2782
      %v2800 = vmul.f32 %v2080, %v2786
      %v2801 = vmul.f32 %v2079, %v2790
      %v2802 = vmul.f32 %v2082, %v2794
      %2803 = vst [vmem:[#allocation2 + $0x260] sm:$0xff] %v2799
      %2804 = vst [vmem:[#allocation2 + $0x268] sm:$0xff] %v2800
      %2805 = vst [vmem:[#allocation2 + $0x270] sm:$0xff] %v2801
      %2806 = vst [vmem:[#allocation2 + $0x278] sm:$0xff] %v2802
      %v2807 = vld [vmem:[%s1393] ss:$8 sm:$0xf]
      %v2809 = vlaneseq
      %v2810 = vshrl.u32 %v2809, 7
      %v2811 = vsub.s32 0, %v2810
      %v2812 = vrot.slane %v2807, %v2811
      %v2813 = vlaneseq
      %v2814 = vshrl.u32 %v2813, 7
      %v2815 = vsub.s32 1, %v2814
      %v2816 = vrot.slane %v2807, %v2815
      %v2817 = vlaneseq
      %v2818 = vshrl.u32 %v2817, 7
      %v2819 = vsub.s32 2, %v2818
      %v2820 = vrot.slane %v2807, %v2819
      %v2821 = vlaneseq
      %v2822 = vshrl.u32 %v2821, 7
      %v2823 = vsub.s32 3, %v2822
      %v2824 = vrot.slane %v2807, %v2823
      %v2829 = vmul.f32 %v2123, %v2812
      %v2830 = vmul.f32 %v2122, %v2816
      %v2831 = vmul.f32 %v2121, %v2820
      %v2832 = vmul.f32 %v2124, %v2824
      %2833 = vst [vmem:[#allocation2 + $0x280] sm:$0xff] %v2829
      %2834 = vst [vmem:[#allocation2 + $0x288] sm:$0xff] %v2830
      %2835 = vst [vmem:[#allocation2 + $0x290] sm:$0xff] %v2831
      %2836 = vst [vmem:[#allocation2 + $0x298] sm:$0xff] %v2832
      %v2837 = vld [vmem:[%s1424] ss:$8 sm:$0xf]
      %v2839 = vlaneseq
      %v2840 = vshrl.u32 %v2839, 7
      %v2841 = vsub.s32 0, %v2840
      %v2842 = vrot.slane %v2837, %v2841
      %v2843 = vlaneseq
      %v2844 = vshrl.u32 %v2843, 7
      %v2845 = vsub.s32 1, %v2844
      %v2846 = vrot.slane %v2837, %v2845
      %v2847 = vlaneseq
      %v2848 = vshrl.u32 %v2847, 7
      %v2849 = vsub.s32 2, %v2848
      %v2850 = vrot.slane %v2837, %v2849
      %v2851 = vlaneseq
      %v2852 = vshrl.u32 %v2851, 7
      %v2853 = vsub.s32 3, %v2852
      %v2854 = vrot.slane %v2837, %v2853
      %v2859 = vmul.f32 %v2165, %v2842
      %v2860 = vmul.f32 %v2164, %v2846
      %v2861 = vmul.f32 %v2163, %v2850
      %v2862 = vmul.f32 %v2166, %v2854
      %2863 = vst [vmem:[#allocation2 + $0x2a0] sm:$0xff] %v2859
      %2864 = vst [vmem:[#allocation2 + $0x2a8] sm:$0xff] %v2860
      %2865 = vst [vmem:[#allocation2 + $0x2b0] sm:$0xff] %v2861
      %2866 = vst [vmem:[#allocation2 + $0x2b8] sm:$0xff] %v2862
      %v2867 = vld [vmem:[%s1455] ss:$8 sm:$0xf]
      %v2869 = vlaneseq
      %v2870 = vshrl.u32 %v2869, 7
      %v2871 = vsub.s32 0, %v2870
      %v2872 = vrot.slane %v2867, %v2871
      %v2873 = vlaneseq
      %v2874 = vshrl.u32 %v2873, 7
      %v2875 = vsub.s32 1, %v2874
      %v2876 = vrot.slane %v2867, %v2875
      %v2877 = vlaneseq
      %v2878 = vshrl.u32 %v2877, 7
      %v2879 = vsub.s32 2, %v2878
      %v2880 = vrot.slane %v2867, %v2879
      %v2881 = vlaneseq
      %v2882 = vshrl.u32 %v2881, 7
      %v2883 = vsub.s32 3, %v2882
      %v2884 = vrot.slane %v2867, %v2883
      %v2889 = vmul.f32 %v2207, %v2872
      %v2890 = vmul.f32 %v2206, %v2876
      %v2891 = vmul.f32 %v2205, %v2880
      %v2892 = vmul.f32 %v2208, %v2884
      %2893 = vst [vmem:[#allocation2 + $0x2c0] sm:$0xff] %v2889
      %2894 = vst [vmem:[#allocation2 + $0x2c8] sm:$0xff] %v2890
      %2895 = vst [vmem:[#allocation2 + $0x2d0] sm:$0xff] %v2891
      %2896 = vst [vmem:[#allocation2 + $0x2d8] sm:$0xff] %v2892
      %v2897 = vld [vmem:[%s1486] ss:$8 sm:$0xf]
      %v2899 = vlaneseq
      %v2900 = vshrl.u32 %v2899, 7
      %v2901 = vsub.s32 0, %v2900
      %v2902 = vrot.slane %v2897, %v2901
      %v2903 = vlaneseq
      %v2904 = vshrl.u32 %v2903, 7
      %v2905 = vsub.s32 1, %v2904
      %v2906 = vrot.slane %v2897, %v2905
      %v2907 = vlaneseq
      %v2908 = vshrl.u32 %v2907, 7
      %v2909 = vsub.s32 2, %v2908
      %v2910 = vrot.slane %v2897, %v2909
      %v2911 = vlaneseq
      %v2912 = vshrl.u32 %v2911, 7
      %v2913 = vsub.s32 3, %v2912
      %v2914 = vrot.slane %v2897, %v2913
      %v2919 = vmul.f32 %v2249, %v2902
      %v2920 = vmul.f32 %v2248, %v2906
      %v2921 = vmul.f32 %v2247, %v2910
      %v2922 = vmul.f32 %v2250, %v2914
      %2923 = vst [vmem:[#allocation2 + $0x2e0] sm:$0xff] %v2919
      %2924 = vst [vmem:[#allocation2 + $0x2e8] sm:$0xff] %v2920
      %2925 = vst [vmem:[#allocation2 + $0x2f0] sm:$0xff] %v2921
      %2926 = vst [vmem:[#allocation2 + $0x2f8] sm:$0xff] %v2922
      %v2927 = vld [vmem:[%s1517] ss:$8 sm:$0xf]
      %v2929 = vlaneseq
      %v2930 = vshrl.u32 %v2929, 7
      %v2931 = vsub.s32 0, %v2930
      %v2932 = vrot.slane %v2927, %v2931
      %v2933 = vlaneseq
      %v2934 = vshrl.u32 %v2933, 7
      %v2935 = vsub.s32 1, %v2934
      %v2936 = vrot.slane %v2927, %v2935
      %v2937 = vlaneseq
      %v2938 = vshrl.u32 %v2937, 7
      %v2939 = vsub.s32 2, %v2938
      %v2940 = vrot.slane %v2927, %v2939
      %v2941 = vlaneseq
      %v2942 = vshrl.u32 %v2941, 7
      %v2943 = vsub.s32 3, %v2942
      %v2944 = vrot.slane %v2927, %v2943
      %v2949 = vmul.f32 %v2291, %v2932
      %v2950 = vmul.f32 %v2290, %v2936
      %v2951 = vmul.f32 %v2289, %v2940
      %v2952 = vmul.f32 %v2292, %v2944
      %2953 = vst [vmem:[#allocation2 + $0x300] sm:$0xff] %v2949
      %2954 = vst [vmem:[#allocation2 + $0x308] sm:$0xff] %v2950
      %2955 = vst [vmem:[#allocation2 + $0x310] sm:$0xff] %v2951
      %2956 = vst [vmem:[#allocation2 + $0x318] sm:$0xff] %v2952
      %v2957 = vld [vmem:[%s1548] ss:$8 sm:$0xf]
      %v2959 = vlaneseq
      %v2960 = vshrl.u32 %v2959, 7
      %v2961 = vsub.s32 0, %v2960
      %v2962 = vrot.slane %v2957, %v2961
      %v2963 = vlaneseq
      %v2964 = vshrl.u32 %v2963, 7
      %v2965 = vsub.s32 1, %v2964
      %v2966 = vrot.slane %v2957, %v2965
      %v2967 = vlaneseq
      %v2968 = vshrl.u32 %v2967, 7
      %v2969 = vsub.s32 2, %v2968
      %v2970 = vrot.slane %v2957, %v2969
      %v2971 = vlaneseq
      %v2972 = vshrl.u32 %v2971, 7
      %v2973 = vsub.s32 3, %v2972
      %v2974 = vrot.slane %v2957, %v2973
      %v2979 = vmul.f32 %v2333, %v2962
      %v2980 = vmul.f32 %v2332, %v2966
      %v2981 = vmul.f32 %v2331, %v2970
      %v2982 = vmul.f32 %v2334, %v2974
      %2983 = vst [vmem:[#allocation2 + $0x320] sm:$0xff] %v2979
      %2984 = vst [vmem:[#allocation2 + $0x328] sm:$0xff] %v2980
      %2985 = vst [vmem:[#allocation2 + $0x330] sm:$0xff] %v2981
      %2986 = vst [vmem:[#allocation2 + $0x338] sm:$0xff] %v2982
      %v2987 = vld [vmem:[%s1579] ss:$8 sm:$0xf]
      %v2989 = vlaneseq
      %v2990 = vshrl.u32 %v2989, 7
      %v2991 = vsub.s32 0, %v2990
      %v2992 = vrot.slane %v2987, %v2991
      %v2993 = vlaneseq
      %v2994 = vshrl.u32 %v2993, 7
      %v2995 = vsub.s32 1, %v2994
      %v2996 = vrot.slane %v2987, %v2995
      %v2997 = vlaneseq
      %v2998 = vshrl.u32 %v2997, 7
      %v2999 = vsub.s32 2, %v2998
      %v3000 = vrot.slane %v2987, %v2999
      %v3001 = vlaneseq
      %v3002 = vshrl.u32 %v3001, 7
      %v3003 = vsub.s32 3, %v3002
      %v3004 = vrot.slane %v2987, %v3003
      %v3009 = vmul.f32 %v2375, %v2992
      %v3010 = vmul.f32 %v2374, %v2996
      %v3011 = vmul.f32 %v2373, %v3000
      %v3012 = vmul.f32 %v2376, %v3004
      %3013 = vst [vmem:[#allocation2 + $0x340] sm:$0xff] %v3009
      %3014 = vst [vmem:[#allocation2 + $0x348] sm:$0xff] %v3010
      %3015 = vst [vmem:[#allocation2 + $0x350] sm:$0xff] %v3011
      %3016 = vst [vmem:[#allocation2 + $0x358] sm:$0xff] %v3012
      %v3017 = vld [vmem:[%s8] sm:$0xff]
      %v3018 = vld [vmem:[%s8 + $0x8] sm:$0xff]
      %v3019 = vld [vmem:[#allocation2] sm:$0xff]
      %v3020 = vld [vmem:[#allocation2 + $0x8] sm:$0xff]
      %v3021 = vld [vmem:[#allocation2 + $0x10] sm:$0xff]
      %v3022 = vld [vmem:[#allocation2 + $0x18] sm:$0xff]
      %v3023 = vld [vmem:[#allocation2 + $0x20] sm:$0xff]
      %v3024 = vld [vmem:[#allocation2 + $0x28] sm:$0xff]
      %v3025 = vld [vmem:[#allocation2 + $0x30] sm:$0xff]
      %v3026 = vld [vmem:[#allocation2 + $0x38] sm:$0xff]
      %v3027 = vld [vmem:[#allocation2 + $0x40] sm:$0xff]
      %v3028 = vld [vmem:[#allocation2 + $0x48] sm:$0xff]
      %v3029 = vld [vmem:[#allocation2 + $0x50] sm:$0xff]
      %v3030 = vld [vmem:[#allocation2 + $0x58] sm:$0xff]
      %v3031 = vld [vmem:[#allocation2 + $0x60] sm:$0xff]
      %v3032 = vld [vmem:[#allocation2 + $0x68] sm:$0xff]
      %v3033 = vld [vmem:[#allocation2 + $0x70] sm:$0xff]
      %v3034 = vld [vmem:[#allocation2 + $0x78] sm:$0xff]
      %v3035 = vld [vmem:[#allocation2 + $0x80] sm:$0xff]
      %v3036 = vld [vmem:[#allocation2 + $0x88] sm:$0xff]
      %v3037 = vld [vmem:[#allocation2 + $0x90] sm:$0xff]
      %v3038 = vld [vmem:[#allocation2 + $0x98] sm:$0xff]
      %v3039 = vld [vmem:[#allocation2 + $0xa0] sm:$0xff]
      %v3040 = vld [vmem:[#allocation2 + $0xa8] sm:$0xff]
      %v3041 = vld [vmem:[#allocation2 + $0xb0] sm:$0xff]
      %v3042 = vld [vmem:[#allocation2 + $0xb8] sm:$0xff]
      %v3043 = vld [vmem:[#allocation2 + $0xc0] sm:$0xff]
      %v3044 = vld [vmem:[#allocation2 + $0xc8] sm:$0xff]
      %v3045 = vld [vmem:[#allocation2 + $0xd0] sm:$0xff]
      %v3046 = vld [vmem:[#allocation2 + $0xd8] sm:$0xff]
      %v3047 = vld [vmem:[#allocation2 + $0xe0] sm:$0xff]
      %v3048 = vld [vmem:[#allocation2 + $0xe8] sm:$0xff]
      %v3049 = vld [vmem:[#allocation2 + $0xf0] sm:$0xff]
      %v3050 = vld [vmem:[#allocation2 + $0xf8] sm:$0xff]
      %v3051 = vld [vmem:[#allocation2 + $0x100] sm:$0xff]
      %v3052 = vld [vmem:[#allocation2 + $0x108] sm:$0xff]
      %v3053 = vld [vmem:[#allocation2 + $0x110] sm:$0xff]
      %v3054 = vld [vmem:[#allocation2 + $0x118] sm:$0xff]
      %v3055 = vld [vmem:[#allocation2 + $0x120] sm:$0xff]
      %v3056 = vld [vmem:[#allocation2 + $0x128] sm:$0xff]
      %v3057 = vld [vmem:[#allocation2 + $0x130] sm:$0xff]
      %v3058 = vld [vmem:[#allocation2 + $0x138] sm:$0xff]
      %v3059 = vld [vmem:[#allocation2 + $0x140] sm:$0xff]
      %v3060 = vld [vmem:[#allocation2 + $0x148] sm:$0xff]
      %v3061 = vld [vmem:[#allocation2 + $0x150] sm:$0xff]
      %v3062 = vld [vmem:[#allocation2 + $0x158] sm:$0xff]
      %v3063 = vld [vmem:[#allocation2 + $0x160] sm:$0xff]
      %v3064 = vld [vmem:[#allocation2 + $0x168] sm:$0xff]
      %v3065 = vld [vmem:[#allocation2 + $0x170] sm:$0xff]
      %v3066 = vld [vmem:[#allocation2 + $0x178] sm:$0xff]
      %v3067 = vld [vmem:[#allocation2 + $0x180] sm:$0xff]
      %v3068 = vld [vmem:[#allocation2 + $0x188] sm:$0xff]
      %v3069 = vld [vmem:[#allocation2 + $0x190] sm:$0xff]
      %v3070 = vld [vmem:[#allocation2 + $0x198] sm:$0xff]
      %v3071 = vld [vmem:[#allocation2 + $0x1a0] sm:$0xff]
      %v3072 = vld [vmem:[#allocation2 + $0x1a8] sm:$0xff]
      %v3073 = vld [vmem:[#allocation2 + $0x1b0] sm:$0xff]
      %v3074 = vld [vmem:[#allocation2 + $0x1b8] sm:$0xff]
      %v3075 = vld [vmem:[#allocation2 + $0x1c0] sm:$0xff]
      %v3076 = vld [vmem:[#allocation2 + $0x1c8] sm:$0xff]
      %v3077 = vld [vmem:[#allocation2 + $0x1d0] sm:$0xff]
      %v3078 = vld [vmem:[#allocation2 + $0x1d8] sm:$0xff]
      %v3079 = vld [vmem:[#allocation2 + $0x1e0] sm:$0xff]
      %v3080 = vld [vmem:[#allocation2 + $0x1e8] sm:$0xff]
      %v3081 = vld [vmem:[#allocation2 + $0x1f0] sm:$0xff]
      %v3082 = vld [vmem:[#allocation2 + $0x1f8] sm:$0xff]
      %v3083 = vld [vmem:[#allocation2 + $0x200] sm:$0xff]
      %v3084 = vld [vmem:[#allocation2 + $0x208] sm:$0xff]
      %v3085 = vld [vmem:[#allocation2 + $0x210] sm:$0xff]
      %v3086 = vld [vmem:[#allocation2 + $0x218] sm:$0xff]
      %v3087 = vld [vmem:[#allocation2 + $0x220] sm:$0xff]
      %v3088 = vld [vmem:[#allocation2 + $0x228] sm:$0xff]
      %v3089 = vld [vmem:[#allocation2 + $0x230] sm:$0xff]
      %v3090 = vld [vmem:[#allocation2 + $0x238] sm:$0xff]
      %v3091 = vld [vmem:[#allocation2 + $0x240] sm:$0xff]
      %v3092 = vld [vmem:[#allocation2 + $0x248] sm:$0xff]
      %v3093 = vld [vmem:[#allocation2 + $0x250] sm:$0xff]
      %v3094 = vld [vmem:[#allocation2 + $0x258] sm:$0xff]
      %v3095 = vld [vmem:[#allocation2 + $0x260] sm:$0xff]
      %v3096 = vld [vmem:[#allocation2 + $0x268] sm:$0xff]
      %v3097 = vld [vmem:[#allocation2 + $0x270] sm:$0xff]
      %v3098 = vld [vmem:[#allocation2 + $0x278] sm:$0xff]
      %v3099 = vld [vmem:[#allocation2 + $0x280] sm:$0xff]
      %v3100 = vld [vmem:[#allocation2 + $0x288] sm:$0xff]
      %v3101 = vld [vmem:[#allocation2 + $0x290] sm:$0xff]
      %v3102 = vld [vmem:[#allocation2 + $0x298] sm:$0xff]
      %v3103 = vld [vmem:[#allocation2 + $0x2a0] sm:$0xff]
      %v3104 = vld [vmem:[#allocation2 + $0x2a8] sm:$0xff]
      %v3105 = vld [vmem:[#allocation2 + $0x2b0] sm:$0xff]
      %v3106 = vld [vmem:[#allocation2 + $0x2b8] sm:$0xff]
      %v3107 = vld [vmem:[#allocation2 + $0x2c0] sm:$0xff]
      %v3108 = vld [vmem:[#allocation2 + $0x2c8] sm:$0xff]
      %v3109 = vld [vmem:[#allocation2 + $0x2d0] sm:$0xff]
      %v3110 = vld [vmem:[#allocation2 + $0x2d8] sm:$0xff]
      %v3111 = vld [vmem:[#allocation2 + $0x2e0] sm:$0xff]
      %v3112 = vld [vmem:[#allocation2 + $0x2e8] sm:$0xff]
      %v3113 = vld [vmem:[#allocation2 + $0x2f0] sm:$0xff]
      %v3114 = vld [vmem:[#allocation2 + $0x2f8] sm:$0xff]
      %v3115 = vld [vmem:[#allocation2 + $0x300] sm:$0xff]
      %v3116 = vld [vmem:[#allocation2 + $0x308] sm:$0xff]
      %v3117 = vld [vmem:[#allocation2 + $0x310] sm:$0xff]
      %v3118 = vld [vmem:[#allocation2 + $0x318] sm:$0xff]
      %v3119 = vld [vmem:[#allocation2 + $0x320] sm:$0xff]
      %v3120 = vld [vmem:[#allocation2 + $0x328] sm:$0xff]
      %v3121 = vld [vmem:[#allocation2 + $0x330] sm:$0xff]
      %v3122 = vld [vmem:[#allocation2 + $0x338] sm:$0xff]
      %v3123 = vld [vmem:[#allocation2 + $0x340] sm:$0xff]
      %v3124 = vld [vmem:[#allocation2 + $0x348] sm:$0xff]
      %v3125 = vld [vmem:[#allocation2 + $0x350] sm:$0xff]
      %v3126 = vld [vmem:[#allocation2 + $0x358] sm:$0xff]
      %v3127 = vld [vmem:[%s9] sm:$0xff]
      %3129 = vset.pattern.permute.xlu0 0
      %3130 = vperm.xlu0 %3129, %v3127
      %v3131 = vpop.permute.xlu0 %3130
      %v3134 = vsel %vm1726, %v3018, 0
      %3136 = vmatprep.subr.mxu0 %v3080
      %3137 = vmatpush1.msra.mxu0 %v3079
      %3138 = vmatprep.subr.mxu0 %v3076
      %3139 = vmatpush1.msra.mxu0 %v3075
      %3140 = vmatprep.subr.mxu0 %v3072
      %3141 = vmatpush1.msra.mxu0 %v3071
      %3142 = vmatprep.subr.mxu0 %v3068
      %3143 = vmatpush1.msra.mxu0 %v3067
      %3144 = vmatprep.subr.mxu0 %v3064
      %3145 = vmatpush1.msra.mxu0 %v3063
      %3146 = vmatprep.subr.mxu0 %v3060
      %3147 = vmatpush1.msra.mxu0 %v3059
      %3148 = vmatprep.subr.mxu0 %v3056
      %3149 = vmatpush1.msra.mxu0 %v3055
      %3150 = vmatprep.subr.mxu0 %v3052
      %3151 = vmatpush1.msra.mxu0 %v3051
      %3152 = vmatprep.subr.mxu0 %v3048
      %3153 = vmatpush1.msra.mxu0 %v3047
      %3154 = vmatprep.subr.mxu0 %v3044
      %3155 = vmatpush1.msra.mxu0 %v3043
      %3156 = vmatprep.subr.mxu0 %v3040
      %3157 = vmatpush1.msra.mxu0 %v3039
      %3158 = vmatprep.subr.mxu0 %v3036
      %3159 = vmatpush1.msra.mxu0 %v3035
      %3160 = vmatprep.subr.mxu0 %v3032
      %3161 = vmatpush1.msra.mxu0 %v3031
      %3162 = vmatprep.subr.mxu0 %v3028
      %3163 = vmatpush1.msra.mxu0 %v3027
      %3164 = vmatprep.subr.mxu0 %v3024
      %3165 = vmatpush1.msra.mxu0 %v3023
      %3166 = vmatprep.subr.mxu0 %v3020
      %3167 = vmatpush1.msra.mxu0 %v3019
      %3168 = vmatprep.subr.mxu0 0.0
      %3169 = vmatpush2.msra.mxu0 0.0
      %3170 = vmatprep.subr.mxu0 0.0
      %3171 = vmatpush2.msra.mxu0 0.0
      %3172 = vmatprep.subr.mxu0 0.0
      %3173 = vmatpush2.msra.mxu0 0.0
      %3174 = vmatprep.subr.mxu0 0.0
      %3175 = vmatpush2.msra.mxu0 0.0
      %3176 = vmatprep.subr.mxu0 0.0
      %3177 = vmatpush2.msra.mxu0 0.0
      %3178 = vmatprep.subr.mxu0 %v3124
      %3179 = vmatpush2.msra.mxu0 %v3123
      %3180 = vmatprep.subr.mxu0 %v3120
      %3181 = vmatpush2.msra.mxu0 %v3119
      %3182 = vmatprep.subr.mxu0 %v3116
      %3183 = vmatpush2.msra.mxu0 %v3115
      %3184 = vmatprep.subr.mxu0 %v3112
      %3185 = vmatpush2.msra.mxu0 %v3111
      %3186 = vmatprep.subr.mxu0 %v3108
      %3187 = vmatpush2.msra.mxu0 %v3107
      %3188 = vmatprep.subr.mxu0 %v3104
      %3189 = vmatpush2.msra.mxu0 %v3103
      %3190 = vmatprep.subr.mxu0 %v3100
      %3191 = vmatpush2.msra.mxu0 %v3099
      %3192 = vmatprep.subr.mxu0 %v3096
      %3193 = vmatpush2.msra.mxu0 %v3095
      %3194 = vmatprep.subr.mxu0 %v3092
      %3195 = vmatpush2.msra.mxu0 %v3091
      %3196 = vmatprep.subr.mxu0 %v3088
      %3197 = vmatpush2.msra.mxu0 %v3087
      %3198 = vmatprep.subr.mxu0 %v3084
      %3199 = vmatpush2.msra.mxu0 %v3083
      %3200 = vmatprep.mubr.f32.mxu0 %v3134
      %3201 = vmatmul.mubr.f32.gmra.mxu0 %v3017
      %v3202 = vpop.f32.mrf.mxu0
      %v3203 = vadd.f32 %v3131, %v3202
      %v3204 = vpop.f32.mrf.mxu0
      %v3205 = vadd.f32 %v3131, %v3204
      %3206 = vdwg.mxu0
      %3207 = vmatprep.subr.mxu0 %v3082
      %3208 = vmatpush1.msra.mxu0 %v3081
      %3209 = vmatprep.subr.mxu0 %v3078
      %3210 = vmatpush1.msra.mxu0 %v3077
      %3211 = vmatprep.subr.mxu0 %v3074
      %3212 = vmatpush1.msra.mxu0 %v3073
      %3213 = vmatprep.subr.mxu0 %v3070
      %3214 = vmatpush1.msra.mxu0 %v3069
      %3215 = vmatprep.subr.mxu0 %v3066
      %3216 = vmatpush1.msra.mxu0 %v3065
      %3217 = vmatprep.subr.mxu0 %v3062
      %3218 = vmatpush1.msra.mxu0 %v3061
      %3219 = vmatprep.subr.mxu0 %v3058
      %3220 = vmatpush1.msra.mxu0 %v3057
      %3221 = vmatprep.subr.mxu0 %v3054
      %3222 = vmatpush1.msra.mxu0 %v3053
      %3223 = vmatprep.subr.mxu0 %v3050
      %3224 = vmatpush1.msra.mxu0 %v3049
      %3225 = vmatprep.subr.mxu0 %v3046
      %3226 = vmatpush1.msra.mxu0 %v3045
      %3227 = vmatprep.subr.mxu0 %v3042
      %3228 = vmatpush1.msra.mxu0 %v3041
      %3229 = vmatprep.subr.mxu0 %v3038
      %3230 = vmatpush1.msra.mxu0 %v3037
      %3231 = vmatprep.subr.mxu0 %v3034
      %3232 = vmatpush1.msra.mxu0 %v3033
      %3233 = vmatprep.subr.mxu0 %v3030
      %3234 = vmatpush1.msra.mxu0 %v3029
      %3235 = vmatprep.subr.mxu0 %v3026
      %3236 = vmatpush1.msra.mxu0 %v3025
      %3237 = vmatprep.subr.mxu0 %v3022
      %3238 = vmatpush1.msra.mxu0 %v3021
      %3239 = vmatprep.subr.mxu0 0.0
      %3240 = vmatpush2.msra.mxu0 0.0
      %3241 = vmatprep.subr.mxu0 0.0
      %3242 = vmatpush2.msra.mxu0 0.0
      %3243 = vmatprep.subr.mxu0 0.0
      %3244 = vmatpush2.msra.mxu0 0.0
      %3245 = vmatprep.subr.mxu0 0.0
      %3246 = vmatpush2.msra.mxu0 0.0
      %3247 = vmatprep.subr.mxu0 0.0
      %3248 = vmatpush2.msra.mxu0 0.0
      %3249 = vmatprep.subr.mxu0 %v3126
      %3250 = vmatpush2.msra.mxu0 %v3125
      %3251 = vmatprep.subr.mxu0 %v3122
      %3252 = vmatpush2.msra.mxu0 %v3121
      %3253 = vmatprep.subr.mxu0 %v3118
      %3254 = vmatpush2.msra.mxu0 %v3117
      %3255 = vmatprep.subr.mxu0 %v3114
      %3256 = vmatpush2.msra.mxu0 %v3113
      %3257 = vmatprep.subr.mxu0 %v3110
      %3258 = vmatpush2.msra.mxu0 %v3109
      %3259 = vmatprep.subr.mxu0 %v3106
      %3260 = vmatpush2.msra.mxu0 %v3105
      %3261 = vmatprep.subr.mxu0 %v3102
      %3262 = vmatpush2.msra.mxu0 %v3101
      %3263 = vmatprep.subr.mxu0 %v3098
      %3264 = vmatpush2.msra.mxu0 %v3097
      %3265 = vmatprep.subr.mxu0 %v3094
      %3266 = vmatpush2.msra.mxu0 %v3093
      %3267 = vmatprep.subr.mxu0 %v3090
      %3268 = vmatpush2.msra.mxu0 %v3089
      %3269 = vmatprep.subr.mxu0 %v3086
      %3270 = vmatpush2.msra.mxu0 %v3085
      %3271 = vmatprep.mubr.f32.mxu0 %v3134
      %3272 = vmatmul.mubr.f32.gmra.mxu0 %v3017
      %v3273 = vpop.f32.mrf.mxu0
      %v3274 = vadd.f32 %v3131, %v3273
      %v3275 = vpop.f32.mrf.mxu0
      %v3276 = vadd.f32 %v3131, %v3275
      %3277 = vdwg.mxu0
      %v3278 = vmax.f32 %v3203, 0.0
      %v3279 = vmax.f32 %v3205, 0.0
      %v3280 = vmax.f32 %v3274, 0.0
      %v3281 = vmax.f32 %v3276, 0.0
      %3282 = vrot.lane.b32.xlu0 %v3278, 73
      %v3283 = vpop.permute.xlu0 %3282
      %3284 = vrot.lane.b32.xlu0 %v3279, 73
      %v3285 = vpop.permute.xlu0 %3284
      %3286 = vrot.lane.b32.xlu0 %v3280, 73
      %v3287 = vpop.permute.xlu0 %3286
      %3288 = vrot.lane.b32.xlu0 %v3281, 73
      %v3289 = vpop.permute.xlu0 %3288
      %v3290 = vsel %vm588, %v3287, %v3289
      %v3291 = vsel %vm588, %v3285, %v3287
      %v3292 = vsel %vm588, %v3283, %v3285
      %v3293 = vsel %vm588, %v3289, %v3283
      %v3294 = vld [vmem:[%s1] ss:$8 sm:$0xf]
      %v3296 = vlaneseq
      %v3297 = vshrl.u32 %v3296, 7
      %v3298 = vsub.s32 0, %v3297
      %v3299 = vrot.slane %v3294, %v3298
      %v3300 = vlaneseq
      %v3301 = vshrl.u32 %v3300, 7
      %v3302 = vsub.s32 1, %v3301
      %v3303 = vrot.slane %v3294, %v3302
      %v3304 = vlaneseq
      %v3305 = vshrl.u32 %v3304, 7
      %v3306 = vsub.s32 2, %v3305
      %v3307 = vrot.slane %v3294, %v3306
      %v3308 = vlaneseq
      %v3309 = vshrl.u32 %v3308, 7
      %v3310 = vsub.s32 3, %v3309
      %v3311 = vrot.slane %v3294, %v3310
      %v3316 = vmul.f32 %v3293, %v3299
      %v3317 = vmul.f32 %v3292, %v3303
      %v3318 = vmul.f32 %v3291, %v3307
      %v3319 = vmul.f32 %v3290, %v3311
      %3320 = vst [vmem:[#allocation2] sm:$0xff] %v3316
      %3321 = vst [vmem:[#allocation2 + $0x8] sm:$0xff] %v3317
      %3322 = vst [vmem:[#allocation2 + $0x10] sm:$0xff] %v3318
      %3323 = vst [vmem:[#allocation2 + $0x18] sm:$0xff] %v3319
      %3324 = vrot.lane.b32.xlu0 %v3278, 72
      %v3325 = vpop.permute.xlu0 %3324
      %3326 = vrot.lane.b32.xlu0 %v3279, 72
      %v3327 = vpop.permute.xlu0 %3326
      %3328 = vrot.lane.b32.xlu0 %v3280, 72
      %v3329 = vpop.permute.xlu0 %3328
      %3330 = vrot.lane.b32.xlu0 %v3281, 72
      %v3331 = vpop.permute.xlu0 %3330
      %v3332 = vsel %vm631, %v3329, %v3331
      %v3333 = vsel %vm631, %v3327, %v3329
      %v3334 = vsel %vm631, %v3325, %v3327
      %v3335 = vsel %vm631, %v3331, %v3325
      %v3336 = vld [vmem:[%s636] ss:$8 sm:$0xf]
      %v3338 = vlaneseq
      %v3339 = vshrl.u32 %v3338, 7
      %v3340 = vsub.s32 0, %v3339
      %v3341 = vrot.slane %v3336, %v3340
      %v3342 = vlaneseq
      %v3343 = vshrl.u32 %v3342, 7
      %v3344 = vsub.s32 1, %v3343
      %v3345 = vrot.slane %v3336, %v3344
      %v3346 = vlaneseq
      %v3347 = vshrl.u32 %v3346, 7
      %v3348 = vsub.s32 2, %v3347
      %v3349 = vrot.slane %v3336, %v3348
      %v3350 = vlaneseq
      %v3351 = vshrl.u32 %v3350, 7
      %v3352 = vsub.s32 3, %v3351
      %v3353 = vrot.slane %v3336, %v3352
      %v3358 = vmul.f32 %v3335, %v3341
      %v3359 = vmul.f32 %v3334, %v3345
      %v3360 = vmul.f32 %v3333, %v3349
      %v3361 = vmul.f32 %v3332, %v3353
      %3362 = vst [vmem:[#allocation2 + $0x20] sm:$0xff] %v3358
      %3363 = vst [vmem:[#allocation2 + $0x28] sm:$0xff] %v3359
      %3364 = vst [vmem:[#allocation2 + $0x30] sm:$0xff] %v3360
      %3365 = vst [vmem:[#allocation2 + $0x38] sm:$0xff] %v3361
      %3366 = vrot.lane.b32.xlu0 %v3278, 71
      %v3367 = vpop.permute.xlu0 %3366
      %3368 = vrot.lane.b32.xlu0 %v3279, 71
      %v3369 = vpop.permute.xlu0 %3368
      %3370 = vrot.lane.b32.xlu0 %v3280, 71
      %v3371 = vpop.permute.xlu0 %3370
      %3372 = vrot.lane.b32.xlu0 %v3281, 71
      %v3373 = vpop.permute.xlu0 %3372
      %v3374 = vsel %vm675, %v3371, %v3373
      %v3375 = vsel %vm675, %v3369, %v3371
      %v3376 = vsel %vm675, %v3367, %v3369
      %v3377 = vsel %vm675, %v3373, %v3367
      %v3378 = vld [vmem:[%s680] ss:$8 sm:$0xf]
      %v3380 = vlaneseq
      %v3381 = vshrl.u32 %v3380, 7
      %v3382 = vsub.s32 0, %v3381
      %v3383 = vrot.slane %v3378, %v3382
      %v3384 = vlaneseq
      %v3385 = vshrl.u32 %v3384, 7
      %v3386 = vsub.s32 1, %v3385
      %v3387 = vrot.slane %v3378, %v3386
      %v3388 = vlaneseq
      %v3389 = vshrl.u32 %v3388, 7
      %v3390 = vsub.s32 2, %v3389
      %v3391 = vrot.slane %v3378, %v3390
      %v3392 = vlaneseq
      %v3393 = vshrl.u32 %v3392, 7
      %v3394 = vsub.s32 3, %v3393
      %v3395 = vrot.slane %v3378, %v3394
      %v3400 = vmul.f32 %v3377, %v3383
      %v3401 = vmul.f32 %v3376, %v3387
      %v3402 = vmul.f32 %v3375, %v3391
      %v3403 = vmul.f32 %v3374, %v3395
      %3404 = vst [vmem:[#allocation2 + $0x40] sm:$0xff] %v3400
      %3405 = vst [vmem:[#allocation2 + $0x48] sm:$0xff] %v3401
      %3406 = vst [vmem:[#allocation2 + $0x50] sm:$0xff] %v3402
      %3407 = vst [vmem:[#allocation2 + $0x58] sm:$0xff] %v3403
      %3408 = vrot.lane.b32.xlu0 %v3278, 65
      %v3409 = vpop.permute.xlu0 %3408
      %3410 = vrot.lane.b32.xlu0 %v3279, 65
      %v3411 = vpop.permute.xlu0 %3410
      %3412 = vrot.lane.b32.xlu0 %v3280, 65
      %v3413 = vpop.permute.xlu0 %3412
      %3414 = vrot.lane.b32.xlu0 %v3281, 65
      %v3415 = vpop.permute.xlu0 %3414
      %v3416 = vsel %vm719, %v3413, %v3415
      %v3417 = vsel %vm719, %v3411, %v3413
      %v3418 = vsel %vm719, %v3409, %v3411
      %v3419 = vsel %vm719, %v3415, %v3409
      %v3420 = vld [vmem:[%s724] ss:$8 sm:$0xf]
      %v3422 = vlaneseq
      %v3423 = vshrl.u32 %v3422, 7
      %v3424 = vsub.s32 0, %v3423
      %v3425 = vrot.slane %v3420, %v3424
      %v3426 = vlaneseq
      %v3427 = vshrl.u32 %v3426, 7
      %v3428 = vsub.s32 1, %v3427
      %v3429 = vrot.slane %v3420, %v3428
      %v3430 = vlaneseq
      %v3431 = vshrl.u32 %v3430, 7
      %v3432 = vsub.s32 2, %v3431
      %v3433 = vrot.slane %v3420, %v3432
      %v3434 = vlaneseq
      %v3435 = vshrl.u32 %v3434, 7
      %v3436 = vsub.s32 3, %v3435
      %v3437 = vrot.slane %v3420, %v3436
      %v3442 = vmul.f32 %v3419, %v3425
      %v3443 = vmul.f32 %v3418, %v3429
      %v3444 = vmul.f32 %v3417, %v3433
      %v3445 = vmul.f32 %v3416, %v3437
      %3446 = vst [vmem:[#allocation2 + $0x60] sm:$0xff] %v3442
      %3447 = vst [vmem:[#allocation2 + $0x68] sm:$0xff] %v3443
      %3448 = vst [vmem:[#allocation2 + $0x70] sm:$0xff] %v3444
      %3449 = vst [vmem:[#allocation2 + $0x78] sm:$0xff] %v3445
      %3450 = vrot.lane.b32.xlu0 %v3278, 64
      %v3451 = vpop.permute.xlu0 %3450
      %3452 = vrot.lane.b32.xlu0 %v3279, 64
      %v3453 = vpop.permute.xlu0 %3452
      %3454 = vrot.lane.b32.xlu0 %v3280, 64
      %v3455 = vpop.permute.xlu0 %3454
      %3456 = vrot.lane.b32.xlu0 %v3281, 64
      %v3457 = vpop.permute.xlu0 %3456
      %v3458 = vsel %vm763, %v3455, %v3457
      %v3459 = vsel %vm763, %v3453, %v3455
      %v3460 = vsel %vm763, %v3451, %v3453
      %v3461 = vsel %vm763, %v3457, %v3451
      %v3462 = vld [vmem:[%s768] ss:$8 sm:$0xf]
      %v3464 = vlaneseq
      %v3465 = vshrl.u32 %v3464, 7
      %v3466 = vsub.s32 0, %v3465
      %v3467 = vrot.slane %v3462, %v3466
      %v3468 = vlaneseq
      %v3469 = vshrl.u32 %v3468, 7
      %v3470 = vsub.s32 1, %v3469
      %v3471 = vrot.slane %v3462, %v3470
      %v3472 = vlaneseq
      %v3473 = vshrl.u32 %v3472, 7
      %v3474 = vsub.s32 2, %v3473
      %v3475 = vrot.slane %v3462, %v3474
      %v3476 = vlaneseq
      %v3477 = vshrl.u32 %v3476, 7
      %v3478 = vsub.s32 3, %v3477
      %v3479 = vrot.slane %v3462, %v3478
      %v3484 = vmul.f32 %v3461, %v3467
      %v3485 = vmul.f32 %v3460, %v3471
      %v3486 = vmul.f32 %v3459, %v3475
      %v3487 = vmul.f32 %v3458, %v3479
      %3488 = vst [vmem:[#allocation2 + $0x80] sm:$0xff] %v3484
      %3489 = vst [vmem:[#allocation2 + $0x88] sm:$0xff] %v3485
      %3490 = vst [vmem:[#allocation2 + $0x90] sm:$0xff] %v3486
      %3491 = vst [vmem:[#allocation2 + $0x98] sm:$0xff] %v3487
      %3492 = vrot.lane.b32.xlu0 %v3278, 63
      %v3493 = vpop.permute.xlu0 %3492
      %3494 = vrot.lane.b32.xlu0 %v3279, 63
      %v3495 = vpop.permute.xlu0 %3494
      %3496 = vrot.lane.b32.xlu0 %v3280, 63
      %v3497 = vpop.permute.xlu0 %3496
      %3498 = vrot.lane.b32.xlu0 %v3281, 63
      %v3499 = vpop.permute.xlu0 %3498
      %v3500 = vsel %vm807, %v3497, %v3499
      %v3501 = vsel %vm807, %v3495, %v3497
      %v3502 = vsel %vm807, %v3493, %v3495
      %v3503 = vsel %vm807, %v3499, %v3493
      %v3504 = vld [vmem:[%s812] ss:$8 sm:$0xf]
      %v3506 = vlaneseq
      %v3507 = vshrl.u32 %v3506, 7
      %v3508 = vsub.s32 0, %v3507
      %v3509 = vrot.slane %v3504, %v3508
      %v3510 = vlaneseq
      %v3511 = vshrl.u32 %v3510, 7
      %v3512 = vsub.s32 1, %v3511
      %v3513 = vrot.slane %v3504, %v3512
      %v3514 = vlaneseq
      %v3515 = vshrl.u32 %v3514, 7
      %v3516 = vsub.s32 2, %v3515
      %v3517 = vrot.slane %v3504, %v3516
      %v3518 = vlaneseq
      %v3519 = vshrl.u32 %v3518, 7
      %v3520 = vsub.s32 3, %v3519
      %v3521 = vrot.slane %v3504, %v3520
      %v3526 = vmul.f32 %v3503, %v3509
      %v3527 = vmul.f32 %v3502, %v3513
      %v3528 = vmul.f32 %v3501, %v3517
      %v3529 = vmul.f32 %v3500, %v3521
      %3530 = vst [vmem:[#allocation2 + $0xa0] sm:$0xff] %v3526
      %3531 = vst [vmem:[#allocation2 + $0xa8] sm:$0xff] %v3527
      %3532 = vst [vmem:[#allocation2 + $0xb0] sm:$0xff] %v3528
      %3533 = vst [vmem:[#allocation2 + $0xb8] sm:$0xff] %v3529
      %3534 = vrot.lane.b32.xlu0 %v3278, 57
      %v3535 = vpop.permute.xlu0 %3534
      %3536 = vrot.lane.b32.xlu0 %v3279, 57
      %v3537 = vpop.permute.xlu0 %3536
      %3538 = vrot.lane.b32.xlu0 %v3280, 57
      %v3539 = vpop.permute.xlu0 %3538
      %3540 = vrot.lane.b32.xlu0 %v3281, 57
      %v3541 = vpop.permute.xlu0 %3540
      %v3542 = vsel %vm851, %v3539, %v3541
      %v3543 = vsel %vm851, %v3537, %v3539
      %v3544 = vsel %vm851, %v3535, %v3537
      %v3545 = vsel %vm851, %v3541, %v3535
      %v3546 = vld [vmem:[%s856] ss:$8 sm:$0xf]
      %v3548 = vlaneseq
      %v3549 = vshrl.u32 %v3548, 7
      %v3550 = vsub.s32 0, %v3549
      %v3551 = vrot.slane %v3546, %v3550
      %v3552 = vlaneseq
      %v3553 = vshrl.u32 %v3552, 7
      %v3554 = vsub.s32 1, %v3553
      %v3555 = vrot.slane %v3546, %v3554
      %v3556 = vlaneseq
      %v3557 = vshrl.u32 %v3556, 7
      %v3558 = vsub.s32 2, %v3557
      %v3559 = vrot.slane %v3546, %v3558
      %v3560 = vlaneseq
      %v3561 = vshrl.u32 %v3560, 7
      %v3562 = vsub.s32 3, %v3561
      %v3563 = vrot.slane %v3546, %v3562
      %v3568 = vmul.f32 %v3545, %v3551
      %v3569 = vmul.f32 %v3544, %v3555
      %v3570 = vmul.f32 %v3543, %v3559
      %v3571 = vmul.f32 %v3542, %v3563
      %3572 = vst [vmem:[#allocation2 + $0xc0] sm:$0xff] %v3568
      %3573 = vst [vmem:[#allocation2 + $0xc8] sm:$0xff] %v3569
      %3574 = vst [vmem:[#allocation2 + $0xd0] sm:$0xff] %v3570
      %3575 = vst [vmem:[#allocation2 + $0xd8] sm:$0xff] %v3571
      %3576 = vrot.lane.b32.xlu0 %v3278, 56
      %v3577 = vpop.permute.xlu0 %3576
      %3578 = vrot.lane.b32.xlu0 %v3279, 56
      %v3579 = vpop.permute.xlu0 %3578
      %3580 = vrot.lane.b32.xlu0 %v3280, 56
      %v3581 = vpop.permute.xlu0 %3580
      %3582 = vrot.lane.b32.xlu0 %v3281, 56
      %v3583 = vpop.permute.xlu0 %3582
      %v3584 = vsel %vm895, %v3581, %v3583
      %v3585 = vsel %vm895, %v3579, %v3581
      %v3586 = vsel %vm895, %v3577, %v3579
      %v3587 = vsel %vm895, %v3583, %v3577
      %v3588 = vld [vmem:[%s900] ss:$8 sm:$0xf]
      %v3590 = vlaneseq
      %v3591 = vshrl.u32 %v3590, 7
      %v3592 = vsub.s32 0, %v3591
      %v3593 = vrot.slane %v3588, %v3592
      %v3594 = vlaneseq
      %v3595 = vshrl.u32 %v3594, 7
      %v3596 = vsub.s32 1, %v3595
      %v3597 = vrot.slane %v3588, %v3596
      %v3598 = vlaneseq
      %v3599 = vshrl.u32 %v3598, 7
      %v3600 = vsub.s32 2, %v3599
      %v3601 = vrot.slane %v3588, %v3600
      %v3602 = vlaneseq
      %v3603 = vshrl.u32 %v3602, 7
      %v3604 = vsub.s32 3, %v3603
      %v3605 = vrot.slane %v3588, %v3604
      %v3610 = vmul.f32 %v3587, %v3593
      %v3611 = vmul.f32 %v3586, %v3597
      %v3612 = vmul.f32 %v3585, %v3601
      %v3613 = vmul.f32 %v3584, %v3605
      %3614 = vst [vmem:[#allocation2 + $0xe0] sm:$0xff] %v3610
      %3615 = vst [vmem:[#allocation2 + $0xe8] sm:$0xff] %v3611
      %3616 = vst [vmem:[#allocation2 + $0xf0] sm:$0xff] %v3612
      %3617 = vst [vmem:[#allocation2 + $0xf8] sm:$0xff] %v3613
      %3618 = vrot.lane.b32.xlu0 %v3278, 55
      %v3619 = vpop.permute.xlu0 %3618
      %3620 = vrot.lane.b32.xlu0 %v3279, 55
      %v3621 = vpop.permute.xlu0 %3620
      %3622 = vrot.lane.b32.xlu0 %v3280, 55
      %v3623 = vpop.permute.xlu0 %3622
      %3624 = vrot.lane.b32.xlu0 %v3281, 55
      %v3625 = vpop.permute.xlu0 %3624
      %v3626 = vsel %vm939, %v3623, %v3625
      %v3627 = vsel %vm939, %v3621, %v3623
      %v3628 = vsel %vm939, %v3619, %v3621
      %v3629 = vsel %vm939, %v3625, %v3619
      %v3630 = vld [vmem:[%s944] ss:$8 sm:$0xf]
      %v3632 = vlaneseq
      %v3633 = vshrl.u32 %v3632, 7
      %v3634 = vsub.s32 0, %v3633
      %v3635 = vrot.slane %v3630, %v3634
      %v3636 = vlaneseq
      %v3637 = vshrl.u32 %v3636, 7
      %v3638 = vsub.s32 1, %v3637
      %v3639 = vrot.slane %v3630, %v3638
      %v3640 = vlaneseq
      %v3641 = vshrl.u32 %v3640, 7
      %v3642 = vsub.s32 2, %v3641
      %v3643 = vrot.slane %v3630, %v3642
      %v3644 = vlaneseq
      %v3645 = vshrl.u32 %v3644, 7
      %v3646 = vsub.s32 3, %v3645
      %v3647 = vrot.slane %v3630, %v3646
      %v3652 = vmul.f32 %v3629, %v3635
      %v3653 = vmul.f32 %v3628, %v3639
      %v3654 = vmul.f32 %v3627, %v3643
      %v3655 = vmul.f32 %v3626, %v3647
      %3656 = vst [vmem:[#allocation2 + $0x100] sm:$0xff] %v3652
      %3657 = vst [vmem:[#allocation2 + $0x108] sm:$0xff] %v3653
      %3658 = vst [vmem:[#allocation2 + $0x110] sm:$0xff] %v3654
      %3659 = vst [vmem:[#allocation2 + $0x118] sm:$0xff] %v3655
      %3660 = vrot.lane.b32.xlu0 %v3278, 9
      %v3661 = vpop.permute.xlu0 %3660
      %3662 = vrot.lane.b32.xlu0 %v3279, 9
      %v3663 = vpop.permute.xlu0 %3662
      %3664 = vrot.lane.b32.xlu0 %v3280, 9
      %v3665 = vpop.permute.xlu0 %3664
      %3666 = vrot.lane.b32.xlu0 %v3281, 9
      %v3667 = vpop.permute.xlu0 %3666
      %v3668 = vsel %vm983, %v3665, %v3667
      %v3669 = vsel %vm983, %v3663, %v3665
      %v3670 = vsel %vm983, %v3661, %v3663
      %v3671 = vsel %vm983, %v3667, %v3661
      %v3672 = vld [vmem:[%s988] ss:$8 sm:$0xf]
      %v3674 = vlaneseq
      %v3675 = vshrl.u32 %v3674, 7
      %v3676 = vsub.s32 0, %v3675
      %v3677 = vrot.slane %v3672, %v3676
      %v3678 = vlaneseq
      %v3679 = vshrl.u32 %v3678, 7
      %v3680 = vsub.s32 1, %v3679
      %v3681 = vrot.slane %v3672, %v3680
      %v3682 = vlaneseq
      %v3683 = vshrl.u32 %v3682, 7
      %v3684 = vsub.s32 2, %v3683
      %v3685 = vrot.slane %v3672, %v3684
      %v3686 = vlaneseq
      %v3687 = vshrl.u32 %v3686, 7
      %v3688 = vsub.s32 3, %v3687
      %v3689 = vrot.slane %v3672, %v3688
      %v3694 = vmul.f32 %v3671, %v3677
      %v3695 = vmul.f32 %v3670, %v3681
      %v3696 = vmul.f32 %v3669, %v3685
      %v3697 = vmul.f32 %v3668, %v3689
      %3698 = vst [vmem:[#allocation2 + $0x120] sm:$0xff] %v3694
      %3699 = vst [vmem:[#allocation2 + $0x128] sm:$0xff] %v3695
      %3700 = vst [vmem:[#allocation2 + $0x130] sm:$0xff] %v3696
      %3701 = vst [vmem:[#allocation2 + $0x138] sm:$0xff] %v3697
      %3702 = vrot.lane.b32.xlu0 %v3278, 8
      %v3703 = vpop.permute.xlu0 %3702
      %3704 = vrot.lane.b32.xlu0 %v3279, 8
      %v3705 = vpop.permute.xlu0 %3704
      %3706 = vrot.lane.b32.xlu0 %v3280, 8
      %v3707 = vpop.permute.xlu0 %3706
      %3708 = vrot.lane.b32.xlu0 %v3281, 8
      %v3709 = vpop.permute.xlu0 %3708
      %v3710 = vsel %vm1027, %v3707, %v3709
      %v3711 = vsel %vm1027, %v3705, %v3707
      %v3712 = vsel %vm1027, %v3703, %v3705
      %v3713 = vsel %vm1027, %v3709, %v3703
      %v3714 = vld [vmem:[%s1032] ss:$8 sm:$0xf]
      %v3716 = vlaneseq
      %v3717 = vshrl.u32 %v3716, 7
      %v3718 = vsub.s32 0, %v3717
      %v3719 = vrot.slane %v3714, %v3718
      %v3720 = vlaneseq
      %v3721 = vshrl.u32 %v3720, 7
      %v3722 = vsub.s32 1, %v3721
      %v3723 = vrot.slane %v3714, %v3722
      %v3724 = vlaneseq
      %v3725 = vshrl.u32 %v3724, 7
      %v3726 = vsub.s32 2, %v3725
      %v3727 = vrot.slane %v3714, %v3726
      %v3728 = vlaneseq
      %v3729 = vshrl.u32 %v3728, 7
      %v3730 = vsub.s32 3, %v3729
      %v3731 = vrot.slane %v3714, %v3730
      %v3736 = vmul.f32 %v3713, %v3719
      %v3737 = vmul.f32 %v3712, %v3723
      %v3738 = vmul.f32 %v3711, %v3727
      %v3739 = vmul.f32 %v3710, %v3731
      %3740 = vst [vmem:[#allocation2 + $0x140] sm:$0xff] %v3736
      %3741 = vst [vmem:[#allocation2 + $0x148] sm:$0xff] %v3737
      %3742 = vst [vmem:[#allocation2 + $0x150] sm:$0xff] %v3738
      %3743 = vst [vmem:[#allocation2 + $0x158] sm:$0xff] %v3739
      %3744 = vrot.lane.b32.xlu0 %v3278, 7
      %v3745 = vpop.permute.xlu0 %3744
      %3746 = vrot.lane.b32.xlu0 %v3279, 7
      %v3747 = vpop.permute.xlu0 %3746
      %3748 = vrot.lane.b32.xlu0 %v3280, 7
      %v3749 = vpop.permute.xlu0 %3748
      %3750 = vrot.lane.b32.xlu0 %v3281, 7
      %v3751 = vpop.permute.xlu0 %3750
      %v3752 = vsel %vm1071, %v3749, %v3751
      %v3753 = vsel %vm1071, %v3747, %v3749
      %v3754 = vsel %vm1071, %v3745, %v3747
      %v3755 = vsel %vm1071, %v3751, %v3745
      %v3756 = vld [vmem:[%s1076] ss:$8 sm:$0xf]
      %v3758 = vlaneseq
      %v3759 = vshrl.u32 %v3758, 7
      %v3760 = vsub.s32 0, %v3759
      %v3761 = vrot.slane %v3756, %v3760
      %v3762 = vlaneseq
      %v3763 = vshrl.u32 %v3762, 7
      %v3764 = vsub.s32 1, %v3763
      %v3765 = vrot.slane %v3756, %v3764
      %v3766 = vlaneseq
      %v3767 = vshrl.u32 %v3766, 7
      %v3768 = vsub.s32 2, %v3767
      %v3769 = vrot.slane %v3756, %v3768
      %v3770 = vlaneseq
      %v3771 = vshrl.u32 %v3770, 7
      %v3772 = vsub.s32 3, %v3771
      %v3773 = vrot.slane %v3756, %v3772
      %v3778 = vmul.f32 %v3755, %v3761
      %v3779 = vmul.f32 %v3754, %v3765
      %v3780 = vmul.f32 %v3753, %v3769
      %v3781 = vmul.f32 %v3752, %v3773
      %3782 = vst [vmem:[#allocation2 + $0x160] sm:$0xff] %v3778
      %3783 = vst [vmem:[#allocation2 + $0x168] sm:$0xff] %v3779
      %3784 = vst [vmem:[#allocation2 + $0x170] sm:$0xff] %v3780
      %3785 = vst [vmem:[#allocation2 + $0x178] sm:$0xff] %v3781
      %3786 = vrot.lane.b32.xlu0 %v3278, 1
      %v3787 = vpop.permute.xlu0 %3786
      %3788 = vrot.lane.b32.xlu0 %v3279, 1
      %v3789 = vpop.permute.xlu0 %3788
      %3790 = vrot.lane.b32.xlu0 %v3280, 1
      %v3791 = vpop.permute.xlu0 %3790
      %3792 = vrot.lane.b32.xlu0 %v3281, 1
      %v3793 = vpop.permute.xlu0 %3792
      %v3794 = vsel %vm1115, %v3791, %v3793
      %v3795 = vsel %vm1115, %v3789, %v3791
      %v3796 = vsel %vm1115, %v3787, %v3789
      %v3797 = vsel %vm1115, %v3793, %v3787
      %v3798 = vld [vmem:[%s1120] ss:$8 sm:$0xf]
      %v3800 = vlaneseq
      %v3801 = vshrl.u32 %v3800, 7
      %v3802 = vsub.s32 0, %v3801
      %v3803 = vrot.slane %v3798, %v3802
      %v3804 = vlaneseq
      %v3805 = vshrl.u32 %v3804, 7
      %v3806 = vsub.s32 1, %v3805
      %v3807 = vrot.slane %v3798, %v3806
      %v3808 = vlaneseq
      %v3809 = vshrl.u32 %v3808, 7
      %v3810 = vsub.s32 2, %v3809
      %v3811 = vrot.slane %v3798, %v3810
      %v3812 = vlaneseq
      %v3813 = vshrl.u32 %v3812, 7
      %v3814 = vsub.s32 3, %v3813
      %v3815 = vrot.slane %v3798, %v3814
      %v3820 = vmul.f32 %v3797, %v3803
      %v3821 = vmul.f32 %v3796, %v3807
      %v3822 = vmul.f32 %v3795, %v3811
      %v3823 = vmul.f32 %v3794, %v3815
      %3824 = vst [vmem:[#allocation2 + $0x180] sm:$0xff] %v3820
      %3825 = vst [vmem:[#allocation2 + $0x188] sm:$0xff] %v3821
      %3826 = vst [vmem:[#allocation2 + $0x190] sm:$0xff] %v3822
      %3827 = vst [vmem:[#allocation2 + $0x198] sm:$0xff] %v3823
      %3828 = vst [vmem:[#allocation2 + $0x1a0] sm:$0xff] %v3278
      %3829 = vst [vmem:[#allocation2 + $0x1a8] sm:$0xff] %v3279
      %3830 = vst [vmem:[#allocation2 + $0x1b0] sm:$0xff] %v3280
      %3831 = vst [vmem:[#allocation2 + $0x1b8] sm:$0xff] %v3281
      %3832 = vrot.lane.b32.xlu0 %v3278, 127
      %v3833 = vpop.permute.xlu0 %3832
      %3834 = vrot.lane.b32.xlu0 %v3279, 127
      %v3835 = vpop.permute.xlu0 %3834
      %3836 = vrot.lane.b32.xlu0 %v3280, 127
      %v3837 = vpop.permute.xlu0 %3836
      %3838 = vrot.lane.b32.xlu0 %v3281, 127
      %v3839 = vpop.permute.xlu0 %3838
      %v3840 = vsel %vm1163, %v3837, %v3839
      %v3841 = vsel %vm1163, %v3835, %v3837
      %v3842 = vsel %vm1163, %v3833, %v3835
      %v3843 = vsel %vm1163, %v3839, %v3833
      %v3844 = vld [vmem:[%s1168] ss:$8 sm:$0xf]
      %v3846 = vlaneseq
      %v3847 = vshrl.u32 %v3846, 7
      %v3848 = vsub.s32 0, %v3847
      %v3849 = vrot.slane %v3844, %v3848
      %v3850 = vlaneseq
      %v3851 = vshrl.u32 %v3850, 7
      %v3852 = vsub.s32 1, %v3851
      %v3853 = vrot.slane %v3844, %v3852
      %v3854 = vlaneseq
      %v3855 = vshrl.u32 %v3854, 7
      %v3856 = vsub.s32 2, %v3855
      %v3857 = vrot.slane %v3844, %v3856
      %v3858 = vlaneseq
      %v3859 = vshrl.u32 %v3858, 7
      %v3860 = vsub.s32 3, %v3859
      %v3861 = vrot.slane %v3844, %v3860
      %v3866 = vmul.f32 %v3842, %v3849
      %v3867 = vmul.f32 %v3841, %v3853
      %v3868 = vmul.f32 %v3840, %v3857
      %v3869 = vmul.f32 %v3843, %v3861
      %3870 = vst [vmem:[#allocation2 + $0x1c0] sm:$0xff] %v3866
      %3871 = vst [vmem:[#allocation2 + $0x1c8] sm:$0xff] %v3867
      %3872 = vst [vmem:[#allocation2 + $0x1d0] sm:$0xff] %v3868
      %3873 = vst [vmem:[#allocation2 + $0x1d8] sm:$0xff] %v3869
      %3874 = vrot.lane.b32.xlu0 %v3278, 121
      %v3875 = vpop.permute.xlu0 %3874
      %3876 = vrot.lane.b32.xlu0 %v3279, 121
      %v3877 = vpop.permute.xlu0 %3876
      %3878 = vrot.lane.b32.xlu0 %v3280, 121
      %v3879 = vpop.permute.xlu0 %3878
      %3880 = vrot.lane.b32.xlu0 %v3281, 121
      %v3881 = vpop.permute.xlu0 %3880
      %v3882 = vsel %vm1207, %v3879, %v3881
      %v3883 = vsel %vm1207, %v3877, %v3879
      %v3884 = vsel %vm1207, %v3875, %v3877
      %v3885 = vsel %vm1207, %v3881, %v3875
      %v3886 = vld [vmem:[%s1212] ss:$8 sm:$0xf]
      %v3888 = vlaneseq
      %v3889 = vshrl.u32 %v3888, 7
      %v3890 = vsub.s32 0, %v3889
      %v3891 = vrot.slane %v3886, %v3890
      %v3892 = vlaneseq
      %v3893 = vshrl.u32 %v3892, 7
      %v3894 = vsub.s32 1, %v3893
      %v3895 = vrot.slane %v3886, %v3894
      %v3896 = vlaneseq
      %v3897 = vshrl.u32 %v3896, 7
      %v3898 = vsub.s32 2, %v3897
      %v3899 = vrot.slane %v3886, %v3898
      %v3900 = vlaneseq
      %v3901 = vshrl.u32 %v3900, 7
      %v3902 = vsub.s32 3, %v3901
      %v3903 = vrot.slane %v3886, %v3902
      %v3908 = vmul.f32 %v3884, %v3891
      %v3909 = vmul.f32 %v3883, %v3895
      %v3910 = vmul.f32 %v3882, %v3899
      %v3911 = vmul.f32 %v3885, %v3903
      %3912 = vst [vmem:[#allocation2 + $0x1e0] sm:$0xff] %v3908
      %3913 = vst [vmem:[#allocation2 + $0x1e8] sm:$0xff] %v3909
      %3914 = vst [vmem:[#allocation2 + $0x1f0] sm:$0xff] %v3910
      %3915 = vst [vmem:[#allocation2 + $0x1f8] sm:$0xff] %v3911
      %3916 = vrot.lane.b32.xlu0 %v3278, 120
      %v3917 = vpop.permute.xlu0 %3916
      %3918 = vrot.lane.b32.xlu0 %v3279, 120
      %v3919 = vpop.permute.xlu0 %3918
      %3920 = vrot.lane.b32.xlu0 %v3280, 120
      %v3921 = vpop.permute.xlu0 %3920
      %3922 = vrot.lane.b32.xlu0 %v3281, 120
      %v3923 = vpop.permute.xlu0 %3922
      %v3924 = vsel %vm1251, %v3921, %v3923
      %v3925 = vsel %vm1251, %v3919, %v3921
      %v3926 = vsel %vm1251, %v3917, %v3919
      %v3927 = vsel %vm1251, %v3923, %v3917
      %v3928 = vld [vmem:[%s1256] ss:$8 sm:$0xf]
      %v3930 = vlaneseq
      %v3931 = vshrl.u32 %v3930, 7
      %v3932 = vsub.s32 0, %v3931
      %v3933 = vrot.slane %v3928, %v3932
      %v3934 = vlaneseq
      %v3935 = vshrl.u32 %v3934, 7
      %v3936 = vsub.s32 1, %v3935
      %v3937 = vrot.slane %v3928, %v3936
      %v3938 = vlaneseq
      %v3939 = vshrl.u32 %v3938, 7
      %v3940 = vsub.s32 2, %v3939
      %v3941 = vrot.slane %v3928, %v3940
      %v3942 = vlaneseq
      %v3943 = vshrl.u32 %v3942, 7
      %v3944 = vsub.s32 3, %v3943
      %v3945 = vrot.slane %v3928, %v3944
      %v3950 = vmul.f32 %v3926, %v3933
      %v3951 = vmul.f32 %v3925, %v3937
      %v3952 = vmul.f32 %v3924, %v3941
      %v3953 = vmul.f32 %v3927, %v3945
      %3954 = vst [vmem:[#allocation2 + $0x200] sm:$0xff] %v3950
      %3955 = vst [vmem:[#allocation2 + $0x208] sm:$0xff] %v3951
      %3956 = vst [vmem:[#allocation2 + $0x210] sm:$0xff] %v3952
      %3957 = vst [vmem:[#allocation2 + $0x218] sm:$0xff] %v3953
      %3958 = vrot.lane.b32.xlu0 %v3278, 119
      %v3959 = vpop.permute.xlu0 %3958
      %3960 = vrot.lane.b32.xlu0 %v3279, 119
      %v3961 = vpop.permute.xlu0 %3960
      %3962 = vrot.lane.b32.xlu0 %v3280, 119
      %v3963 = vpop.permute.xlu0 %3962
      %3964 = vrot.lane.b32.xlu0 %v3281, 119
      %v3965 = vpop.permute.xlu0 %3964
      %v3966 = vsel %vm1295, %v3963, %v3965
      %v3967 = vsel %vm1295, %v3961, %v3963
      %v3968 = vsel %vm1295, %v3959, %v3961
      %v3969 = vsel %vm1295, %v3965, %v3959
      %v3970 = vld [vmem:[%s1300] ss:$8 sm:$0xf]
      %v3972 = vlaneseq
      %v3973 = vshrl.u32 %v3972, 7
      %v3974 = vsub.s32 0, %v3973
      %v3975 = vrot.slane %v3970, %v3974
      %v3976 = vlaneseq
      %v3977 = vshrl.u32 %v3976, 7
      %v3978 = vsub.s32 1, %v3977
      %v3979 = vrot.slane %v3970, %v3978
      %v3980 = vlaneseq
      %v3981 = vshrl.u32 %v3980, 7
      %v3982 = vsub.s32 2, %v3981
      %v3983 = vrot.slane %v3970, %v3982
      %v3984 = vlaneseq
      %v3985 = vshrl.u32 %v3984, 7
      %v3986 = vsub.s32 3, %v3985
      %v3987 = vrot.slane %v3970, %v3986
      %v3992 = vmul.f32 %v3968, %v3975
      %v3993 = vmul.f32 %v3967, %v3979
      %v3994 = vmul.f32 %v3966, %v3983
      %v3995 = vmul.f32 %v3969, %v3987
      %3996 = vst [vmem:[#allocation2 + $0x220] sm:$0xff] %v3992
      %3997 = vst [vmem:[#allocation2 + $0x228] sm:$0xff] %v3993
      %3998 = vst [vmem:[#allocation2 + $0x230] sm:$0xff] %v3994
      %3999 = vst [vmem:[#allocation2 + $0x238] sm:$0xff] %v3995
      %v4000 = vld [vmem:[%s1331] ss:$8 sm:$0xf]
      %v4002 = vlaneseq
      %v4003 = vshrl.u32 %v4002, 7
      %v4004 = vsub.s32 0, %v4003
      %v4005 = vrot.slane %v4000, %v4004
      %v4006 = vlaneseq
      %v4007 = vshrl.u32 %v4006, 7
      %v4008 = vsub.s32 1, %v4007
      %v4009 = vrot.slane %v4000, %v4008
      %v4010 = vlaneseq
      %v4011 = vshrl.u32 %v4010, 7
      %v4012 = vsub.s32 2, %v4011
      %v4013 = vrot.slane %v4000, %v4012
      %v4014 = vlaneseq
      %v4015 = vshrl.u32 %v4014, 7
      %v4016 = vsub.s32 3, %v4015
      %v4017 = vrot.slane %v4000, %v4016
      %v4022 = vmul.f32 %v3292, %v4005
      %v4023 = vmul.f32 %v3291, %v4009
      %v4024 = vmul.f32 %v3290, %v4013
      %v4025 = vmul.f32 %v3293, %v4017
      %4026 = vst [vmem:[#allocation2 + $0x240] sm:$0xff] %v4022
      %4027 = vst [vmem:[#allocation2 + $0x248] sm:$0xff] %v4023
      %4028 = vst [vmem:[#allocation2 + $0x250] sm:$0xff] %v4024
      %4029 = vst [vmem:[#allocation2 + $0x258] sm:$0xff] %v4025
      %v4030 = vld [vmem:[%s1362] ss:$8 sm:$0xf]
      %v4032 = vlaneseq
      %v4033 = vshrl.u32 %v4032, 7
      %v4034 = vsub.s32 0, %v4033
      %v4035 = vrot.slane %v4030, %v4034
      %v4036 = vlaneseq
      %v4037 = vshrl.u32 %v4036, 7
      %v4038 = vsub.s32 1, %v4037
      %v4039 = vrot.slane %v4030, %v4038
      %v4040 = vlaneseq
      %v4041 = vshrl.u32 %v4040, 7
      %v4042 = vsub.s32 2, %v4041
      %v4043 = vrot.slane %v4030, %v4042
      %v4044 = vlaneseq
      %v4045 = vshrl.u32 %v4044, 7
      %v4046 = vsub.s32 3, %v4045
      %v4047 = vrot.slane %v4030, %v4046
      %v4052 = vmul.f32 %v3334, %v4035
      %v4053 = vmul.f32 %v3333, %v4039
      %v4054 = vmul.f32 %v3332, %v4043
      %v4055 = vmul.f32 %v3335, %v4047
      %4056 = vst [vmem:[#allocation2 + $0x260] sm:$0xff] %v4052
      %4057 = vst [vmem:[#allocation2 + $0x268] sm:$0xff] %v4053
      %4058 = vst [vmem:[#allocation2 + $0x270] sm:$0xff] %v4054
      %4059 = vst [vmem:[#allocation2 + $0x278] sm:$0xff] %v4055
      %v4060 = vld [vmem:[%s1393] ss:$8 sm:$0xf]
      %v4062 = vlaneseq
      %v4063 = vshrl.u32 %v4062, 7
      %v4064 = vsub.s32 0, %v4063
      %v4065 = vrot.slane %v4060, %v4064
      %v4066 = vlaneseq
      %v4067 = vshrl.u32 %v4066, 7
      %v4068 = vsub.s32 1, %v4067
      %v4069 = vrot.slane %v4060, %v4068
      %v4070 = vlaneseq
      %v4071 = vshrl.u32 %v4070, 7
      %v4072 = vsub.s32 2, %v4071
      %v4073 = vrot.slane %v4060, %v4072
      %v4074 = vlaneseq
      %v4075 = vshrl.u32 %v4074, 7
      %v4076 = vsub.s32 3, %v4075
      %v4077 = vrot.slane %v4060, %v4076
      %v4082 = vmul.f32 %v3376, %v4065
      %v4083 = vmul.f32 %v3375, %v4069
      %v4084 = vmul.f32 %v3374, %v4073
      %v4085 = vmul.f32 %v3377, %v4077
      %4086 = vst [vmem:[#allocation2 + $0x280] sm:$0xff] %v4082
      %4087 = vst [vmem:[#allocation2 + $0x288] sm:$0xff] %v4083
      %4088 = vst [vmem:[#allocation2 + $0x290] sm:$0xff] %v4084
      %4089 = vst [vmem:[#allocation2 + $0x298] sm:$0xff] %v4085
      %v4090 = vld [vmem:[%s1424] ss:$8 sm:$0xf]
      %v4092 = vlaneseq
      %v4093 = vshrl.u32 %v4092, 7
      %v4094 = vsub.s32 0, %v4093
      %v4095 = vrot.slane %v4090, %v4094
      %v4096 = vlaneseq
      %v4097 = vshrl.u32 %v4096, 7
      %v4098 = vsub.s32 1, %v4097
      %v4099 = vrot.slane %v4090, %v4098
      %v4100 = vlaneseq
      %v4101 = vshrl.u32 %v4100, 7
      %v4102 = vsub.s32 2, %v4101
      %v4103 = vrot.slane %v4090, %v4102
      %v4104 = vlaneseq
      %v4105 = vshrl.u32 %v4104, 7
      %v4106 = vsub.s32 3, %v4105
      %v4107 = vrot.slane %v4090, %v4106
      %v4112 = vmul.f32 %v3418, %v4095
      %v4113 = vmul.f32 %v3417, %v4099
      %v4114 = vmul.f32 %v3416, %v4103
      %v4115 = vmul.f32 %v3419, %v4107
      %4116 = vst [vmem:[#allocation2 + $0x2a0] sm:$0xff] %v4112
      %4117 = vst [vmem:[#allocation2 + $0x2a8] sm:$0xff] %v4113
      %4118 = vst [vmem:[#allocation2 + $0x2b0] sm:$0xff] %v4114
      %4119 = vst [vmem:[#allocation2 + $0x2b8] sm:$0xff] %v4115
      %v4120 = vld [vmem:[%s1455] ss:$8 sm:$0xf]
      %v4122 = vlaneseq
      %v4123 = vshrl.u32 %v4122, 7
      %v4124 = vsub.s32 0, %v4123
      %v4125 = vrot.slane %v4120, %v4124
      %v4126 = vlaneseq
      %v4127 = vshrl.u32 %v4126, 7
      %v4128 = vsub.s32 1, %v4127
      %v4129 = vrot.slane %v4120, %v4128
      %v4130 = vlaneseq
      %v4131 = vshrl.u32 %v4130, 7
      %v4132 = vsub.s32 2, %v4131
      %v4133 = vrot.slane %v4120, %v4132
      %v4134 = vlaneseq
      %v4135 = vshrl.u32 %v4134, 7
      %v4136 = vsub.s32 3, %v4135
      %v4137 = vrot.slane %v4120, %v4136
      %v4142 = vmul.f32 %v3460, %v4125
      %v4143 = vmul.f32 %v3459, %v4129
      %v4144 = vmul.f32 %v3458, %v4133
      %v4145 = vmul.f32 %v3461, %v4137
      %4146 = vst [vmem:[#allocation2 + $0x2c0] sm:$0xff] %v4142
      %4147 = vst [vmem:[#allocation2 + $0x2c8] sm:$0xff] %v4143
      %4148 = vst [vmem:[#allocation2 + $0x2d0] sm:$0xff] %v4144
      %4149 = vst [vmem:[#allocation2 + $0x2d8] sm:$0xff] %v4145
      %v4150 = vld [vmem:[%s1486] ss:$8 sm:$0xf]
      %v4152 = vlaneseq
      %v4153 = vshrl.u32 %v4152, 7
      %v4154 = vsub.s32 0, %v4153
      %v4155 = vrot.slane %v4150, %v4154
      %v4156 = vlaneseq
      %v4157 = vshrl.u32 %v4156, 7
      %v4158 = vsub.s32 1, %v4157
      %v4159 = vrot.slane %v4150, %v4158
      %v4160 = vlaneseq
      %v4161 = vshrl.u32 %v4160, 7
      %v4162 = vsub.s32 2, %v4161
      %v4163 = vrot.slane %v4150, %v4162
      %v4164 = vlaneseq
      %v4165 = vshrl.u32 %v4164, 7
      %v4166 = vsub.s32 3, %v4165
      %v4167 = vrot.slane %v4150, %v4166
      %v4172 = vmul.f32 %v3502, %v4155
      %v4173 = vmul.f32 %v3501, %v4159
      %v4174 = vmul.f32 %v3500, %v4163
      %v4175 = vmul.f32 %v3503, %v4167
      %4176 = vst [vmem:[#allocation2 + $0x2e0] sm:$0xff] %v4172
      %4177 = vst [vmem:[#allocation2 + $0x2e8] sm:$0xff] %v4173
      %4178 = vst [vmem:[#allocation2 + $0x2f0] sm:$0xff] %v4174
      %4179 = vst [vmem:[#allocation2 + $0x2f8] sm:$0xff] %v4175
      %v4180 = vld [vmem:[%s1517] ss:$8 sm:$0xf]
      %v4182 = vlaneseq
      %v4183 = vshrl.u32 %v4182, 7
      %v4184 = vsub.s32 0, %v4183
      %v4185 = vrot.slane %v4180, %v4184
      %v4186 = vlaneseq
      %v4187 = vshrl.u32 %v4186, 7
      %v4188 = vsub.s32 1, %v4187
      %v4189 = vrot.slane %v4180, %v4188
      %v4190 = vlaneseq
      %v4191 = vshrl.u32 %v4190, 7
      %v4192 = vsub.s32 2, %v4191
      %v4193 = vrot.slane %v4180, %v4192
      %v4194 = vlaneseq
      %v4195 = vshrl.u32 %v4194, 7
      %v4196 = vsub.s32 3, %v4195
      %v4197 = vrot.slane %v4180, %v4196
      %v4202 = vmul.f32 %v3544, %v4185
      %v4203 = vmul.f32 %v3543, %v4189
      %v4204 = vmul.f32 %v3542, %v4193
      %v4205 = vmul.f32 %v3545, %v4197
      %4206 = vst [vmem:[#allocation2 + $0x300] sm:$0xff] %v4202
      %4207 = vst [vmem:[#allocation2 + $0x308] sm:$0xff] %v4203
      %4208 = vst [vmem:[#allocation2 + $0x310] sm:$0xff] %v4204
      %4209 = vst [vmem:[#allocation2 + $0x318] sm:$0xff] %v4205
      %v4210 = vld [vmem:[%s1548] ss:$8 sm:$0xf]
      %v4212 = vlaneseq
      %v4213 = vshrl.u32 %v4212, 7
      %v4214 = vsub.s32 0, %v4213
      %v4215 = vrot.slane %v4210, %v4214
      %v4216 = vlaneseq
      %v4217 = vshrl.u32 %v4216, 7
      %v4218 = vsub.s32 1, %v4217
      %v4219 = vrot.slane %v4210, %v4218
      %v4220 = vlaneseq
      %v4221 = vshrl.u32 %v4220, 7
      %v4222 = vsub.s32 2, %v4221
      %v4223 = vrot.slane %v4210, %v4222
      %v4224 = vlaneseq
      %v4225 = vshrl.u32 %v4224, 7
      %v4226 = vsub.s32 3, %v4225
      %v4227 = vrot.slane %v4210, %v4226
      %v4232 = vmul.f32 %v3586, %v4215
      %v4233 = vmul.f32 %v3585, %v4219
      %v4234 = vmul.f32 %v3584, %v4223
      %v4235 = vmul.f32 %v3587, %v4227
      %4236 = vst [vmem:[#allocation2 + $0x320] sm:$0xff] %v4232
      %4237 = vst [vmem:[#allocation2 + $0x328] sm:$0xff] %v4233
      %4238 = vst [vmem:[#allocation2 + $0x330] sm:$0xff] %v4234
      %4239 = vst [vmem:[#allocation2 + $0x338] sm:$0xff] %v4235
      %v4240 = vld [vmem:[%s1579] ss:$8 sm:$0xf]
      %v4242 = vlaneseq
      %v4243 = vshrl.u32 %v4242, 7
      %v4244 = vsub.s32 0, %v4243
      %v4245 = vrot.slane %v4240, %v4244
      %v4246 = vlaneseq
      %v4247 = vshrl.u32 %v4246, 7
      %v4248 = vsub.s32 1, %v4247
      %v4249 = vrot.slane %v4240, %v4248
      %v4250 = vlaneseq
      %v4251 = vshrl.u32 %v4250, 7
      %v4252 = vsub.s32 2, %v4251
      %v4253 = vrot.slane %v4240, %v4252
      %v4254 = vlaneseq
      %v4255 = vshrl.u32 %v4254, 7
      %v4256 = vsub.s32 3, %v4255
      %v4257 = vrot.slane %v4240, %v4256
      %v4262 = vmul.f32 %v3628, %v4245
      %v4263 = vmul.f32 %v3627, %v4249
      %v4264 = vmul.f32 %v3626, %v4253
      %v4265 = vmul.f32 %v3629, %v4257
      %4266 = vst [vmem:[#allocation2 + $0x340] sm:$0xff] %v4262
      %4267 = vst [vmem:[#allocation2 + $0x348] sm:$0xff] %v4263
      %4268 = vst [vmem:[#allocation2 + $0x350] sm:$0xff] %v4264
      %4269 = vst [vmem:[#allocation2 + $0x358] sm:$0xff] %v4265
      %v4270 = vld [vmem:[%s10] sm:$0xff]
      %v4271 = vld [vmem:[%s10 + $0x8] sm:$0xff]
      %v4272 = vld [vmem:[#allocation2] sm:$0xff]
      %v4273 = vld [vmem:[#allocation2 + $0x8] sm:$0xff]
      %v4274 = vld [vmem:[#allocation2 + $0x10] sm:$0xff]
      %v4275 = vld [vmem:[#allocation2 + $0x18] sm:$0xff]
      %v4276 = vld [vmem:[#allocation2 + $0x20] sm:$0xff]
      %v4277 = vld [vmem:[#allocation2 + $0x28] sm:$0xff]
      %v4278 = vld [vmem:[#allocation2 + $0x30] sm:$0xff]
      %v4279 = vld [vmem:[#allocation2 + $0x38] sm:$0xff]
      %v4280 = vld [vmem:[#allocation2 + $0x40] sm:$0xff]
      %v4281 = vld [vmem:[#allocation2 + $0x48] sm:$0xff]
      %v4282 = vld [vmem:[#allocation2 + $0x50] sm:$0xff]
      %v4283 = vld [vmem:[#allocation2 + $0x58] sm:$0xff]
      %v4284 = vld [vmem:[#allocation2 + $0x60] sm:$0xff]
      %v4285 = vld [vmem:[#allocation2 + $0x68] sm:$0xff]
      %v4286 = vld [vmem:[#allocation2 + $0x70] sm:$0xff]
      %v4287 = vld [vmem:[#allocation2 + $0x78] sm:$0xff]
      %v4288 = vld [vmem:[#allocation2 + $0x80] sm:$0xff]
      %v4289 = vld [vmem:[#allocation2 + $0x88] sm:$0xff]
      %v4290 = vld [vmem:[#allocation2 + $0x90] sm:$0xff]
      %v4291 = vld [vmem:[#allocation2 + $0x98] sm:$0xff]
      %v4292 = vld [vmem:[#allocation2 + $0xa0] sm:$0xff]
      %v4293 = vld [vmem:[#allocation2 + $0xa8] sm:$0xff]
      %v4294 = vld [vmem:[#allocation2 + $0xb0] sm:$0xff]
      %v4295 = vld [vmem:[#allocation2 + $0xb8] sm:$0xff]
      %v4296 = vld [vmem:[#allocation2 + $0xc0] sm:$0xff]
      %v4297 = vld [vmem:[#allocation2 + $0xc8] sm:$0xff]
      %v4298 = vld [vmem:[#allocation2 + $0xd0] sm:$0xff]
      %v4299 = vld [vmem:[#allocation2 + $0xd8] sm:$0xff]
      %v4300 = vld [vmem:[#allocation2 + $0xe0] sm:$0xff]
      %v4301 = vld [vmem:[#allocation2 + $0xe8] sm:$0xff]
      %v4302 = vld [vmem:[#allocation2 + $0xf0] sm:$0xff]
      %v4303 = vld [vmem:[#allocation2 + $0xf8] sm:$0xff]
      %v4304 = vld [vmem:[#allocation2 + $0x100] sm:$0xff]
      %v4305 = vld [vmem:[#allocation2 + $0x108] sm:$0xff]
      %v4306 = vld [vmem:[#allocation2 + $0x110] sm:$0xff]
      %v4307 = vld [vmem:[#allocation2 + $0x118] sm:$0xff]
      %v4308 = vld [vmem:[#allocation2 + $0x120] sm:$0xff]
      %v4309 = vld [vmem:[#allocation2 + $0x128] sm:$0xff]
      %v4310 = vld [vmem:[#allocation2 + $0x130] sm:$0xff]
      %v4311 = vld [vmem:[#allocation2 + $0x138] sm:$0xff]
      %v4312 = vld [vmem:[#allocation2 + $0x140] sm:$0xff]
      %v4313 = vld [vmem:[#allocation2 + $0x148] sm:$0xff]
      %v4314 = vld [vmem:[#allocation2 + $0x150] sm:$0xff]
      %v4315 = vld [vmem:[#allocation2 + $0x158] sm:$0xff]
      %v4316 = vld [vmem:[#allocation2 + $0x160] sm:$0xff]
      %v4317 = vld [vmem:[#allocation2 + $0x168] sm:$0xff]
      %v4318 = vld [vmem:[#allocation2 + $0x170] sm:$0xff]
      %v4319 = vld [vmem:[#allocation2 + $0x178] sm:$0xff]
      %v4320 = vld [vmem:[#allocation2 + $0x180] sm:$0xff]
      %v4321 = vld [vmem:[#allocation2 + $0x188] sm:$0xff]
      %v4322 = vld [vmem:[#allocation2 + $0x190] sm:$0xff]
      %v4323 = vld [vmem:[#allocation2 + $0x198] sm:$0xff]
      %v4324 = vld [vmem:[#allocation2 + $0x1a0] sm:$0xff]
      %v4325 = vld [vmem:[#allocation2 + $0x1a8] sm:$0xff]
      %v4326 = vld [vmem:[#allocation2 + $0x1b0] sm:$0xff]
      %v4327 = vld [vmem:[#allocation2 + $0x1b8] sm:$0xff]
      %v4328 = vld [vmem:[#allocation2 + $0x1c0] sm:$0xff]
      %v4329 = vld [vmem:[#allocation2 + $0x1c8] sm:$0xff]
      %v4330 = vld [vmem:[#allocation2 + $0x1d0] sm:$0xff]
      %v4331 = vld [vmem:[#allocation2 + $0x1d8] sm:$0xff]
      %v4332 = vld [vmem:[#allocation2 + $0x1e0] sm:$0xff]
      %v4333 = vld [vmem:[#allocation2 + $0x1e8] sm:$0xff]
      %v4334 = vld [vmem:[#allocation2 + $0x1f0] sm:$0xff]
      %v4335 = vld [vmem:[#allocation2 + $0x1f8] sm:$0xff]
      %v4336 = vld [vmem:[#allocation2 + $0x200] sm:$0xff]
      %v4337 = vld [vmem:[#allocation2 + $0x208] sm:$0xff]
      %v4338 = vld [vmem:[#allocation2 + $0x210] sm:$0xff]
      %v4339 = vld [vmem:[#allocation2 + $0x218] sm:$0xff]
      %v4340 = vld [vmem:[#allocation2 + $0x220] sm:$0xff]
      %v4341 = vld [vmem:[#allocation2 + $0x228] sm:$0xff]
      %v4342 = vld [vmem:[#allocation2 + $0x230] sm:$0xff]
      %v4343 = vld [vmem:[#allocation2 + $0x238] sm:$0xff]
      %v4344 = vld [vmem:[#allocation2 + $0x240] sm:$0xff]
      %v4345 = vld [vmem:[#allocation2 + $0x248] sm:$0xff]
      %v4346 = vld [vmem:[#allocation2 + $0x250] sm:$0xff]
      %v4347 = vld [vmem:[#allocation2 + $0x258] sm:$0xff]
      %v4348 = vld [vmem:[#allocation2 + $0x260] sm:$0xff]
      %v4349 = vld [vmem:[#allocation2 + $0x268] sm:$0xff]
      %v4350 = vld [vmem:[#allocation2 + $0x270] sm:$0xff]
      %v4351 = vld [vmem:[#allocation2 + $0x278] sm:$0xff]
      %v4352 = vld [vmem:[#allocation2 + $0x280] sm:$0xff]
      %v4353 = vld [vmem:[#allocation2 + $0x288] sm:$0xff]
      %v4354 = vld [vmem:[#allocation2 + $0x290] sm:$0xff]
      %v4355 = vld [vmem:[#allocation2 + $0x298] sm:$0xff]
      %v4356 = vld [vmem:[#allocation2 + $0x2a0] sm:$0xff]
      %v4357 = vld [vmem:[#allocation2 + $0x2a8] sm:$0xff]
      %v4358 = vld [vmem:[#allocation2 + $0x2b0] sm:$0xff]
      %v4359 = vld [vmem:[#allocation2 + $0x2b8] sm:$0xff]
      %v4360 = vld [vmem:[#allocation2 + $0x2c0] sm:$0xff]
      %v4361 = vld [vmem:[#allocation2 + $0x2c8] sm:$0xff]
      %v4362 = vld [vmem:[#allocation2 + $0x2d0] sm:$0xff]
      %v4363 = vld [vmem:[#allocation2 + $0x2d8] sm:$0xff]
      %v4364 = vld [vmem:[#allocation2 + $0x2e0] sm:$0xff]
      %v4365 = vld [vmem:[#allocation2 + $0x2e8] sm:$0xff]
      %v4366 = vld [vmem:[#allocation2 + $0x2f0] sm:$0xff]
      %v4367 = vld [vmem:[#allocation2 + $0x2f8] sm:$0xff]
      %v4368 = vld [vmem:[#allocation2 + $0x300] sm:$0xff]
      %v4369 = vld [vmem:[#allocation2 + $0x308] sm:$0xff]
      %v4370 = vld [vmem:[#allocation2 + $0x310] sm:$0xff]
      %v4371 = vld [vmem:[#allocation2 + $0x318] sm:$0xff]
      %v4372 = vld [vmem:[#allocation2 + $0x320] sm:$0xff]
      %v4373 = vld [vmem:[#allocation2 + $0x328] sm:$0xff]
      %v4374 = vld [vmem:[#allocation2 + $0x330] sm:$0xff]
      %v4375 = vld [vmem:[#allocation2 + $0x338] sm:$0xff]
      %v4376 = vld [vmem:[#allocation2 + $0x340] sm:$0xff]
      %v4377 = vld [vmem:[#allocation2 + $0x348] sm:$0xff]
      %v4378 = vld [vmem:[#allocation2 + $0x350] sm:$0xff]
      %v4379 = vld [vmem:[#allocation2 + $0x358] sm:$0xff]
      %v4380 = vld [vmem:[%s11] sm:$0xff]
      %4382 = vset.pattern.permute.xlu0 0
      %4383 = vperm.xlu0 %4382, %v4380
      %v4384 = vpop.permute.xlu0 %4383
      %v4387 = vsel %vm1726, %v4271, 0
      %4389 = vmatprep.subr.mxu0 %v4333
      %4390 = vmatpush1.msra.mxu0 %v4332
      %4391 = vmatprep.subr.mxu0 %v4329
      %4392 = vmatpush1.msra.mxu0 %v4328
      %4393 = vmatprep.subr.mxu0 %v4325
      %4394 = vmatpush1.msra.mxu0 %v4324
      %4395 = vmatprep.subr.mxu0 %v4321
      %4396 = vmatpush1.msra.mxu0 %v4320
      %4397 = vmatprep.subr.mxu0 %v4317
      %4398 = vmatpush1.msra.mxu0 %v4316
      %4399 = vmatprep.subr.mxu0 %v4313
      %4400 = vmatpush1.msra.mxu0 %v4312
      %4401 = vmatprep.subr.mxu0 %v4309
      %4402 = vmatpush1.msra.mxu0 %v4308
      %4403 = vmatprep.subr.mxu0 %v4305
      %4404 = vmatpush1.msra.mxu0 %v4304
      %4405 = vmatprep.subr.mxu0 %v4301
      %4406 = vmatpush1.msra.mxu0 %v4300
      %4407 = vmatprep.subr.mxu0 %v4297
      %4408 = vmatpush1.msra.mxu0 %v4296
      %4409 = vmatprep.subr.mxu0 %v4293
      %4410 = vmatpush1.msra.mxu0 %v4292
      %4411 = vmatprep.subr.mxu0 %v4289
      %4412 = vmatpush1.msra.mxu0 %v4288
      %4413 = vmatprep.subr.mxu0 %v4285
      %4414 = vmatpush1.msra.mxu0 %v4284
      %4415 = vmatprep.subr.mxu0 %v4281
      %4416 = vmatpush1.msra.mxu0 %v4280
      %4417 = vmatprep.subr.mxu0 %v4277
      %4418 = vmatpush1.msra.mxu0 %v4276
      %4419 = vmatprep.subr.mxu0 %v4273
      %4420 = vmatpush1.msra.mxu0 %v4272
      %4421 = vmatprep.subr.mxu0 0.0
      %4422 = vmatpush2.msra.mxu0 0.0
      %4423 = vmatprep.subr.mxu0 0.0
      %4424 = vmatpush2.msra.mxu0 0.0
      %4425 = vmatprep.subr.mxu0 0.0
      %4426 = vmatpush2.msra.mxu0 0.0
      %4427 = vmatprep.subr.mxu0 0.0
      %4428 = vmatpush2.msra.mxu0 0.0
      %4429 = vmatprep.subr.mxu0 0.0
      %4430 = vmatpush2.msra.mxu0 0.0
      %4431 = vmatprep.subr.mxu0 %v4377
      %4432 = vmatpush2.msra.mxu0 %v4376
      %4433 = vmatprep.subr.mxu0 %v4373
      %4434 = vmatpush2.msra.mxu0 %v4372
      %4435 = vmatprep.subr.mxu0 %v4369
      %4436 = vmatpush2.msra.mxu0 %v4368
      %4437 = vmatprep.subr.mxu0 %v4365
      %4438 = vmatpush2.msra.mxu0 %v4364
      %4439 = vmatprep.subr.mxu0 %v4361
      %4440 = vmatpush2.msra.mxu0 %v4360
      %4441 = vmatprep.subr.mxu0 %v4357
      %4442 = vmatpush2.msra.mxu0 %v4356
      %4443 = vmatprep.subr.mxu0 %v4353
      %4444 = vmatpush2.msra.mxu0 %v4352
      %4445 = vmatprep.subr.mxu0 %v4349
      %4446 = vmatpush2.msra.mxu0 %v4348
      %4447 = vmatprep.subr.mxu0 %v4345
      %4448 = vmatpush2.msra.mxu0 %v4344
      %4449 = vmatprep.subr.mxu0 %v4341
      %4450 = vmatpush2.msra.mxu0 %v4340
      %4451 = vmatprep.subr.mxu0 %v4337
      %4452 = vmatpush2.msra.mxu0 %v4336
      %4453 = vmatprep.mubr.f32.mxu0 %v4387
      %4454 = vmatmul.mubr.f32.gmra.mxu0 %v4270
      %v4455 = vpop.f32.mrf.mxu0
      %v4456 = vadd.f32 %v4384, %v4455
      %v4457 = vpop.f32.mrf.mxu0
      %v4458 = vadd.f32 %v4384, %v4457
      %4459 = vdwg.mxu0
      %4460 = vmatprep.subr.mxu0 %v4335
      %4461 = vmatpush1.msra.mxu0 %v4334
      %4462 = vmatprep.subr.mxu0 %v4331
      %4463 = vmatpush1.msra.mxu0 %v4330
      %4464 = vmatprep.subr.mxu0 %v4327
      %4465 = vmatpush1.msra.mxu0 %v4326
      %4466 = vmatprep.subr.mxu0 %v4323
      %4467 = vmatpush1.msra.mxu0 %v4322
      %4468 = vmatprep.subr.mxu0 %v4319
      %4469 = vmatpush1.msra.mxu0 %v4318
      %4470 = vmatprep.subr.mxu0 %v4315
      %4471 = vmatpush1.msra.mxu0 %v4314
      %4472 = vmatprep.subr.mxu0 %v4311
      %4473 = vmatpush1.msra.mxu0 %v4310
      %4474 = vmatprep.subr.mxu0 %v4307
      %4475 = vmatpush1.msra.mxu0 %v4306
      %4476 = vmatprep.subr.mxu0 %v4303
      %4477 = vmatpush1.msra.mxu0 %v4302
      %4478 = vmatprep.subr.mxu0 %v4299
      %4479 = vmatpush1.msra.mxu0 %v4298
      %4480 = vmatprep.subr.mxu0 %v4295
      %4481 = vmatpush1.msra.mxu0 %v4294
      %4482 = vmatprep.subr.mxu0 %v4291
      %4483 = vmatpush1.msra.mxu0 %v4290
      %4484 = vmatprep.subr.mxu0 %v4287
      %4485 = vmatpush1.msra.mxu0 %v4286
      %4486 = vmatprep.subr.mxu0 %v4283
      %4487 = vmatpush1.msra.mxu0 %v4282
      %4488 = vmatprep.subr.mxu0 %v4279
      %4489 = vmatpush1.msra.mxu0 %v4278
      %4490 = vmatprep.subr.mxu0 %v4275
      %4491 = vmatpush1.msra.mxu0 %v4274
      %4492 = vmatprep.subr.mxu0 0.0
      %4493 = vmatpush2.msra.mxu0 0.0
      %4494 = vmatprep.subr.mxu0 0.0
      %4495 = vmatpush2.msra.mxu0 0.0
      %4496 = vmatprep.subr.mxu0 0.0
      %4497 = vmatpush2.msra.mxu0 0.0
      %4498 = vmatprep.subr.mxu0 0.0
      %4499 = vmatpush2.msra.mxu0 0.0
      %4500 = vmatprep.subr.mxu0 0.0
      %4501 = vmatpush2.msra.mxu0 0.0
      %4502 = vmatprep.subr.mxu0 %v4379
      %4503 = vmatpush2.msra.mxu0 %v4378
      %4504 = vmatprep.subr.mxu0 %v4375
      %4505 = vmatpush2.msra.mxu0 %v4374
      %4506 = vmatprep.subr.mxu0 %v4371
      %4507 = vmatpush2.msra.mxu0 %v4370
      %4508 = vmatprep.subr.mxu0 %v4367
      %4509 = vmatpush2.msra.mxu0 %v4366
      %4510 = vmatprep.subr.mxu0 %v4363
      %4511 = vmatpush2.msra.mxu0 %v4362
      %4512 = vmatprep.subr.mxu0 %v4359
      %4513 = vmatpush2.msra.mxu0 %v4358
      %4514 = vmatprep.subr.mxu0 %v4355
      %4515 = vmatpush2.msra.mxu0 %v4354
      %4516 = vmatprep.subr.mxu0 %v4351
      %4517 = vmatpush2.msra.mxu0 %v4350
      %4518 = vmatprep.subr.mxu0 %v4347
      %4519 = vmatpush2.msra.mxu0 %v4346
      %4520 = vmatprep.subr.mxu0 %v4343
      %4521 = vmatpush2.msra.mxu0 %v4342
      %4522 = vmatprep.subr.mxu0 %v4339
      %4523 = vmatpush2.msra.mxu0 %v4338
      %4524 = vmatprep.mubr.f32.mxu0 %v4387
      %4525 = vmatmul.mubr.f32.gmra.mxu0 %v4270
      %v4526 = vpop.f32.mrf.mxu0
      %v4527 = vadd.f32 %v4384, %v4526
      %v4528 = vpop.f32.mrf.mxu0
      %v4529 = vadd.f32 %v4384, %v4528
      %4530 = vdwg.mxu0
      %v4531 = vadd.f32 %v4456, %v1954
      %v4532 = vadd.f32 %v4458, %v1956
      %v4533 = vadd.f32 %v4527, %v2025
      %v4534 = vadd.f32 %v4529, %v2027
      %v4535 = vmax.f32 %v4531, 0.0
      %v4536 = vmax.f32 %v4532, 0.0
      %v4537 = vmax.f32 %v4533, 0.0
      %v4538 = vmax.f32 %v4534, 0.0
      %4539 = vrot.lane.b32.xlu0 %v4535, 73
      %v4540 = vpop.permute.xlu0 %4539
      %4541 = vrot.lane.b32.xlu0 %v4536, 73
      %v4542 = vpop.permute.xlu0 %4541
      %4543 = vrot.lane.b32.xlu0 %v4537, 73
      %v4544 = vpop.permute.xlu0 %4543
      %4545 = vrot.lane.b32.xlu0 %v4538, 73
      %v4546 = vpop.permute.xlu0 %4545
      %v4547 = vsel %vm588, %v4544, %v4546
      %v4548 = vsel %vm588, %v4542, %v4544
      %v4549 = vsel %vm588, %v4540, %v4542
      %v4550 = vsel %vm588, %v4546, %v4540
      %v4551 = vld [vmem:[%s1] ss:$8 sm:$0xf]
      %v4553 = vlaneseq
      %v4554 = vshrl.u32 %v4553, 7
      %v4555 = vsub.s32 0, %v4554
      %v4556 = vrot.slane %v4551, %v4555
      %v4557 = vlaneseq
      %v4558 = vshrl.u32 %v4557, 7
      %v4559 = vsub.s32 1, %v4558
      %v4560 = vrot.slane %v4551, %v4559
      %v4561 = vlaneseq
      %v4562 = vshrl.u32 %v4561, 7
      %v4563 = vsub.s32 2, %v4562
      %v4564 = vrot.slane %v4551, %v4563
      %v4565 = vlaneseq
      %v4566 = vshrl.u32 %v4565, 7
      %v4567 = vsub.s32 3, %v4566
      %v4568 = vrot.slane %v4551, %v4567
      %v4573 = vmul.f32 %v4550, %v4556
      %v4574 = vmul.f32 %v4549, %v4560
      %v4575 = vmul.f32 %v4548, %v4564
      %v4576 = vmul.f32 %v4547, %v4568
      %4577 = vst [vmem:[#allocation2] sm:$0xff] %v4573
      %4578 = vst [vmem:[#allocation2 + $0x8] sm:$0xff] %v4574
      %4579 = vst [vmem:[#allocation2 + $0x10] sm:$0xff] %v4575
      %4580 = vst [vmem:[#allocation2 + $0x18] sm:$0xff] %v4576
      %4581 = vrot.lane.b32.xlu0 %v4535, 72
      %v4582 = vpop.permute.xlu0 %4581
      %4583 = vrot.lane.b32.xlu0 %v4536, 72
      %v4584 = vpop.permute.xlu0 %4583
      %4585 = vrot.lane.b32.xlu0 %v4537, 72
      %v4586 = vpop.permute.xlu0 %4585
      %4587 = vrot.lane.b32.xlu0 %v4538, 72
      %v4588 = vpop.permute.xlu0 %4587
      %v4589 = vsel %vm631, %v4586, %v4588
      %v4590 = vsel %vm631, %v4584, %v4586
      %v4591 = vsel %vm631, %v4582, %v4584
      %v4592 = vsel %vm631, %v4588, %v4582
      %v4593 = vld [vmem:[%s636] ss:$8 sm:$0xf]
      %v4595 = vlaneseq
      %v4596 = vshrl.u32 %v4595, 7
      %v4597 = vsub.s32 0, %v4596
      %v4598 = vrot.slane %v4593, %v4597
      %v4599 = vlaneseq
      %v4600 = vshrl.u32 %v4599, 7
      %v4601 = vsub.s32 1, %v4600
      %v4602 = vrot.slane %v4593, %v4601
      %v4603 = vlaneseq
      %v4604 = vshrl.u32 %v4603, 7
      %v4605 = vsub.s32 2, %v4604
      %v4606 = vrot.slane %v4593, %v4605
      %v4607 = vlaneseq
      %v4608 = vshrl.u32 %v4607, 7
      %v4609 = vsub.s32 3, %v4608
      %v4610 = vrot.slane %v4593, %v4609
      %v4615 = vmul.f32 %v4592, %v4598
      %v4616 = vmul.f32 %v4591, %v4602
      %v4617 = vmul.f32 %v4590, %v4606
      %v4618 = vmul.f32 %v4589, %v4610
      %4619 = vst [vmem:[#allocation2 + $0x20] sm:$0xff] %v4615
      %4620 = vst [vmem:[#allocation2 + $0x28] sm:$0xff] %v4616
      %4621 = vst [vmem:[#allocation2 + $0x30] sm:$0xff] %v4617
      %4622 = vst [vmem:[#allocation2 + $0x38] sm:$0xff] %v4618
      %4623 = vrot.lane.b32.xlu0 %v4535, 71
      %v4624 = vpop.permute.xlu0 %4623
      %4625 = vrot.lane.b32.xlu0 %v4536, 71
      %v4626 = vpop.permute.xlu0 %4625
      %4627 = vrot.lane.b32.xlu0 %v4537, 71
      %v4628 = vpop.permute.xlu0 %4627
      %4629 = vrot.lane.b32.xlu0 %v4538, 71
      %v4630 = vpop.permute.xlu0 %4629
      %v4631 = vsel %vm675, %v4628, %v4630
      %v4632 = vsel %vm675, %v4626, %v4628
      %v4633 = vsel %vm675, %v4624, %v4626
      %v4634 = vsel %vm675, %v4630, %v4624
      %v4635 = vld [vmem:[%s680] ss:$8 sm:$0xf]
      %v4637 = vlaneseq
      %v4638 = vshrl.u32 %v4637, 7
      %v4639 = vsub.s32 0, %v4638
      %v4640 = vrot.slane %v4635, %v4639
      %v4641 = vlaneseq
      %v4642 = vshrl.u32 %v4641, 7
      %v4643 = vsub.s32 1, %v4642
      %v4644 = vrot.slane %v4635, %v4643
      %v4645 = vlaneseq
      %v4646 = vshrl.u32 %v4645, 7
      %v4647 = vsub.s32 2, %v4646
      %v4648 = vrot.slane %v4635, %v4647
      %v4649 = vlaneseq
      %v4650 = vshrl.u32 %v4649, 7
      %v4651 = vsub.s32 3, %v4650
      %v4652 = vrot.slane %v4635, %v4651
      %v4657 = vmul.f32 %v4634, %v4640
      %v4658 = vmul.f32 %v4633, %v4644
      %v4659 = vmul.f32 %v4632, %v4648
      %v4660 = vmul.f32 %v4631, %v4652
      %4661 = vst [vmem:[#allocation2 + $0x40] sm:$0xff] %v4657
      %4662 = vst [vmem:[#allocation2 + $0x48] sm:$0xff] %v4658
      %4663 = vst [vmem:[#allocation2 + $0x50] sm:$0xff] %v4659
      %4664 = vst [vmem:[#allocation2 + $0x58] sm:$0xff] %v4660
      %4665 = vrot.lane.b32.xlu0 %v4535, 65
      %v4666 = vpop.permute.xlu0 %4665
      %4667 = vrot.lane.b32.xlu0 %v4536, 65
      %v4668 = vpop.permute.xlu0 %4667
      %4669 = vrot.lane.b32.xlu0 %v4537, 65
      %v4670 = vpop.permute.xlu0 %4669
      %4671 = vrot.lane.b32.xlu0 %v4538, 65
      %v4672 = vpop.permute.xlu0 %4671
      %v4673 = vsel %vm719, %v4670, %v4672
      %v4674 = vsel %vm719, %v4668, %v4670
      %v4675 = vsel %vm719, %v4666, %v4668
      %v4676 = vsel %vm719, %v4672, %v4666
      %v4677 = vld [vmem:[%s724] ss:$8 sm:$0xf]
      %v4679 = vlaneseq
      %v4680 = vshrl.u32 %v4679, 7
      %v4681 = vsub.s32 0, %v4680
      %v4682 = vrot.slane %v4677, %v4681
      %v4683 = vlaneseq
      %v4684 = vshrl.u32 %v4683, 7
      %v4685 = vsub.s32 1, %v4684
      %v4686 = vrot.slane %v4677, %v4685
      %v4687 = vlaneseq
      %v4688 = vshrl.u32 %v4687, 7
      %v4689 = vsub.s32 2, %v4688
      %v4690 = vrot.slane %v4677, %v4689
      %v4691 = vlaneseq
      %v4692 = vshrl.u32 %v4691, 7
      %v4693 = vsub.s32 3, %v4692
      %v4694 = vrot.slane %v4677, %v4693
      %v4699 = vmul.f32 %v4676, %v4682
      %v4700 = vmul.f32 %v4675, %v4686
      %v4701 = vmul.f32 %v4674, %v4690
      %v4702 = vmul.f32 %v4673, %v4694
      %4703 = vst [vmem:[#allocation2 + $0x60] sm:$0xff] %v4699
      %4704 = vst [vmem:[#allocation2 + $0x68] sm:$0xff] %v4700
      %4705 = vst [vmem:[#allocation2 + $0x70] sm:$0xff] %v4701
      %4706 = vst [vmem:[#allocation2 + $0x78] sm:$0xff] %v4702
      %4707 = vrot.lane.b32.xlu0 %v4535, 64
      %v4708 = vpop.permute.xlu0 %4707
      %4709 = vrot.lane.b32.xlu0 %v4536, 64
      %v4710 = vpop.permute.xlu0 %4709
      %4711 = vrot.lane.b32.xlu0 %v4537, 64
      %v4712 = vpop.permute.xlu0 %4711
      %4713 = vrot.lane.b32.xlu0 %v4538, 64
      %v4714 = vpop.permute.xlu0 %4713
      %v4715 = vsel %vm763, %v4712, %v4714
      %v4716 = vsel %vm763, %v4710, %v4712
      %v4717 = vsel %vm763, %v4708, %v4710
      %v4718 = vsel %vm763, %v4714, %v4708
      %v4719 = vld [vmem:[%s768] ss:$8 sm:$0xf]
      %v4721 = vlaneseq
      %v4722 = vshrl.u32 %v4721, 7
      %v4723 = vsub.s32 0, %v4722
      %v4724 = vrot.slane %v4719, %v4723
      %v4725 = vlaneseq
      %v4726 = vshrl.u32 %v4725, 7
      %v4727 = vsub.s32 1, %v4726
      %v4728 = vrot.slane %v4719, %v4727
      %v4729 = vlaneseq
      %v4730 = vshrl.u32 %v4729, 7
      %v4731 = vsub.s32 2, %v4730
      %v4732 = vrot.slane %v4719, %v4731
      %v4733 = vlaneseq
      %v4734 = vshrl.u32 %v4733, 7
      %v4735 = vsub.s32 3, %v4734
      %v4736 = vrot.slane %v4719, %v4735
      %v4741 = vmul.f32 %v4718, %v4724
      %v4742 = vmul.f32 %v4717, %v4728
      %v4743 = vmul.f32 %v4716, %v4732
      %v4744 = vmul.f32 %v4715, %v4736
      %4745 = vst [vmem:[#allocation2 + $0x80] sm:$0xff] %v4741
      %4746 = vst [vmem:[#allocation2 + $0x88] sm:$0xff] %v4742
      %4747 = vst [vmem:[#allocation2 + $0x90] sm:$0xff] %v4743
      %4748 = vst [vmem:[#allocation2 + $0x98] sm:$0xff] %v4744
      %4749 = vrot.lane.b32.xlu0 %v4535, 63
      %v4750 = vpop.permute.xlu0 %4749
      %4751 = vrot.lane.b32.xlu0 %v4536, 63
      %v4752 = vpop.permute.xlu0 %4751
      %4753 = vrot.lane.b32.xlu0 %v4537, 63
      %v4754 = vpop.permute.xlu0 %4753
      %4755 = vrot.lane.b32.xlu0 %v4538, 63
      %v4756 = vpop.permute.xlu0 %4755
      %v4757 = vsel %vm807, %v4754, %v4756
      %v4758 = vsel %vm807, %v4752, %v4754
      %v4759 = vsel %vm807, %v4750, %v4752
      %v4760 = vsel %vm807, %v4756, %v4750
      %v4761 = vld [vmem:[%s812] ss:$8 sm:$0xf]
      %v4763 = vlaneseq
      %v4764 = vshrl.u32 %v4763, 7
      %v4765 = vsub.s32 0, %v4764
      %v4766 = vrot.slane %v4761, %v4765
      %v4767 = vlaneseq
      %v4768 = vshrl.u32 %v4767, 7
      %v4769 = vsub.s32 1, %v4768
      %v4770 = vrot.slane %v4761, %v4769
      %v4771 = vlaneseq
      %v4772 = vshrl.u32 %v4771, 7
      %v4773 = vsub.s32 2, %v4772
      %v4774 = vrot.slane %v4761, %v4773
      %v4775 = vlaneseq
      %v4776 = vshrl.u32 %v4775, 7
      %v4777 = vsub.s32 3, %v4776
      %v4778 = vrot.slane %v4761, %v4777
      %v4783 = vmul.f32 %v4760, %v4766
      %v4784 = vmul.f32 %v4759, %v4770
      %v4785 = vmul.f32 %v4758, %v4774
      %v4786 = vmul.f32 %v4757, %v4778
      %4787 = vst [vmem:[#allocation2 + $0xa0] sm:$0xff] %v4783
      %4788 = vst [vmem:[#allocation2 + $0xa8] sm:$0xff] %v4784
      %4789 = vst [vmem:[#allocation2 + $0xb0] sm:$0xff] %v4785
      %4790 = vst [vmem:[#allocation2 + $0xb8] sm:$0xff] %v4786
      %4791 = vrot.lane.b32.xlu0 %v4535, 57
      %v4792 = vpop.permute.xlu0 %4791
      %4793 = vrot.lane.b32.xlu0 %v4536, 57
      %v4794 = vpop.permute.xlu0 %4793
      %4795 = vrot.lane.b32.xlu0 %v4537, 57
      %v4796 = vpop.permute.xlu0 %4795
      %4797 = vrot.lane.b32.xlu0 %v4538, 57
      %v4798 = vpop.permute.xlu0 %4797
      %v4799 = vsel %vm851, %v4796, %v4798
      %v4800 = vsel %vm851, %v4794, %v4796
      %v4801 = vsel %vm851, %v4792, %v4794
      %v4802 = vsel %vm851, %v4798, %v4792
      %v4803 = vld [vmem:[%s856] ss:$8 sm:$0xf]
      %v4805 = vlaneseq
      %v4806 = vshrl.u32 %v4805, 7
      %v4807 = vsub.s32 0, %v4806
      %v4808 = vrot.slane %v4803, %v4807
      %v4809 = vlaneseq
      %v4810 = vshrl.u32 %v4809, 7
      %v4811 = vsub.s32 1, %v4810
      %v4812 = vrot.slane %v4803, %v4811
      %v4813 = vlaneseq
      %v4814 = vshrl.u32 %v4813, 7
      %v4815 = vsub.s32 2, %v4814
      %v4816 = vrot.slane %v4803, %v4815
      %v4817 = vlaneseq
      %v4818 = vshrl.u32 %v4817, 7
      %v4819 = vsub.s32 3, %v4818
      %v4820 = vrot.slane %v4803, %v4819
      %v4825 = vmul.f32 %v4802, %v4808
      %v4826 = vmul.f32 %v4801, %v4812
      %v4827 = vmul.f32 %v4800, %v4816
      %v4828 = vmul.f32 %v4799, %v4820
      %4829 = vst [vmem:[#allocation2 + $0xc0] sm:$0xff] %v4825
      %4830 = vst [vmem:[#allocation2 + $0xc8] sm:$0xff] %v4826
      %4831 = vst [vmem:[#allocation2 + $0xd0] sm:$0xff] %v4827
      %4832 = vst [vmem:[#allocation2 + $0xd8] sm:$0xff] %v4828
      %4833 = vrot.lane.b32.xlu0 %v4535, 56
      %v4834 = vpop.permute.xlu0 %4833
      %4835 = vrot.lane.b32.xlu0 %v4536, 56
      %v4836 = vpop.permute.xlu0 %4835
      %4837 = vrot.lane.b32.xlu0 %v4537, 56
      %v4838 = vpop.permute.xlu0 %4837
      %4839 = vrot.lane.b32.xlu0 %v4538, 56
      %v4840 = vpop.permute.xlu0 %4839
      %v4841 = vsel %vm895, %v4838, %v4840
      %v4842 = vsel %vm895, %v4836, %v4838
      %v4843 = vsel %vm895, %v4834, %v4836
      %v4844 = vsel %vm895, %v4840, %v4834
      %v4845 = vld [vmem:[%s900] ss:$8 sm:$0xf]
      %v4847 = vlaneseq
      %v4848 = vshrl.u32 %v4847, 7
      %v4849 = vsub.s32 0, %v4848
      %v4850 = vrot.slane %v4845, %v4849
      %v4851 = vlaneseq
      %v4852 = vshrl.u32 %v4851, 7
      %v4853 = vsub.s32 1, %v4852
      %v4854 = vrot.slane %v4845, %v4853
      %v4855 = vlaneseq
      %v4856 = vshrl.u32 %v4855, 7
      %v4857 = vsub.s32 2, %v4856
      %v4858 = vrot.slane %v4845, %v4857
      %v4859 = vlaneseq
      %v4860 = vshrl.u32 %v4859, 7
      %v4861 = vsub.s32 3, %v4860
      %v4862 = vrot.slane %v4845, %v4861
      %v4867 = vmul.f32 %v4844, %v4850
      %v4868 = vmul.f32 %v4843, %v4854
      %v4869 = vmul.f32 %v4842, %v4858
      %v4870 = vmul.f32 %v4841, %v4862
      %4871 = vst [vmem:[#allocation2 + $0xe0] sm:$0xff] %v4867
      %4872 = vst [vmem:[#allocation2 + $0xe8] sm:$0xff] %v4868
      %4873 = vst [vmem:[#allocation2 + $0xf0] sm:$0xff] %v4869
      %4874 = vst [vmem:[#allocation2 + $0xf8] sm:$0xff] %v4870
      %4875 = vrot.lane.b32.xlu0 %v4535, 55
      %v4876 = vpop.permute.xlu0 %4875
      %4877 = vrot.lane.b32.xlu0 %v4536, 55
      %v4878 = vpop.permute.xlu0 %4877
      %4879 = vrot.lane.b32.xlu0 %v4537, 55
      %v4880 = vpop.permute.xlu0 %4879
      %4881 = vrot.lane.b32.xlu0 %v4538, 55
      %v4882 = vpop.permute.xlu0 %4881
      %v4883 = vsel %vm939, %v4880, %v4882
      %v4884 = vsel %vm939, %v4878, %v4880
      %v4885 = vsel %vm939, %v4876, %v4878
      %v4886 = vsel %vm939, %v4882, %v4876
      %v4887 = vld [vmem:[%s944] ss:$8 sm:$0xf]
      %v4889 = vlaneseq
      %v4890 = vshrl.u32 %v4889, 7
      %v4891 = vsub.s32 0, %v4890
      %v4892 = vrot.slane %v4887, %v4891
      %v4893 = vlaneseq
      %v4894 = vshrl.u32 %v4893, 7
      %v4895 = vsub.s32 1, %v4894
      %v4896 = vrot.slane %v4887, %v4895
      %v4897 = vlaneseq
      %v4898 = vshrl.u32 %v4897, 7
      %v4899 = vsub.s32 2, %v4898
      %v4900 = vrot.slane %v4887, %v4899
      %v4901 = vlaneseq
      %v4902 = vshrl.u32 %v4901, 7
      %v4903 = vsub.s32 3, %v4902
      %v4904 = vrot.slane %v4887, %v4903
      %v4909 = vmul.f32 %v4886, %v4892
      %v4910 = vmul.f32 %v4885, %v4896
      %v4911 = vmul.f32 %v4884, %v4900
      %v4912 = vmul.f32 %v4883, %v4904
      %4913 = vst [vmem:[#allocation2 + $0x100] sm:$0xff] %v4909
      %4914 = vst [vmem:[#allocation2 + $0x108] sm:$0xff] %v4910
      %4915 = vst [vmem:[#allocation2 + $0x110] sm:$0xff] %v4911
      %4916 = vst [vmem:[#allocation2 + $0x118] sm:$0xff] %v4912
      %4917 = vrot.lane.b32.xlu0 %v4535, 9
      %v4918 = vpop.permute.xlu0 %4917
      %4919 = vrot.lane.b32.xlu0 %v4536, 9
      %v4920 = vpop.permute.xlu0 %4919
      %4921 = vrot.lane.b32.xlu0 %v4537, 9
      %v4922 = vpop.permute.xlu0 %4921
      %4923 = vrot.lane.b32.xlu0 %v4538, 9
      %v4924 = vpop.permute.xlu0 %4923
      %v4925 = vsel %vm983, %v4922, %v4924
      %v4926 = vsel %vm983, %v4920, %v4922
      %v4927 = vsel %vm983, %v4918, %v4920
      %v4928 = vsel %vm983, %v4924, %v4918
      %v4929 = vld [vmem:[%s988] ss:$8 sm:$0xf]
      %v4931 = vlaneseq
      %v4932 = vshrl.u32 %v4931, 7
      %v4933 = vsub.s32 0, %v4932
      %v4934 = vrot.slane %v4929, %v4933
      %v4935 = vlaneseq
      %v4936 = vshrl.u32 %v4935, 7
      %v4937 = vsub.s32 1, %v4936
      %v4938 = vrot.slane %v4929, %v4937
      %v4939 = vlaneseq
      %v4940 = vshrl.u32 %v4939, 7
      %v4941 = vsub.s32 2, %v4940
      %v4942 = vrot.slane %v4929, %v4941
      %v4943 = vlaneseq
      %v4944 = vshrl.u32 %v4943, 7
      %v4945 = vsub.s32 3, %v4944
      %v4946 = vrot.slane %v4929, %v4945
      %v4951 = vmul.f32 %v4928, %v4934
      %v4952 = vmul.f32 %v4927, %v4938
      %v4953 = vmul.f32 %v4926, %v4942
      %v4954 = vmul.f32 %v4925, %v4946
      %4955 = vst [vmem:[#allocation2 + $0x120] sm:$0xff] %v4951
      %4956 = vst [vmem:[#allocation2 + $0x128] sm:$0xff] %v4952
      %4957 = vst [vmem:[#allocation2 + $0x130] sm:$0xff] %v4953
      %4958 = vst [vmem:[#allocation2 + $0x138] sm:$0xff] %v4954
      %4959 = vrot.lane.b32.xlu0 %v4535, 8
      %v4960 = vpop.permute.xlu0 %4959
      %4961 = vrot.lane.b32.xlu0 %v4536, 8
      %v4962 = vpop.permute.xlu0 %4961
      %4963 = vrot.lane.b32.xlu0 %v4537, 8
      %v4964 = vpop.permute.xlu0 %4963
      %4965 = vrot.lane.b32.xlu0 %v4538, 8
      %v4966 = vpop.permute.xlu0 %4965
      %v4967 = vsel %vm1027, %v4964, %v4966
      %v4968 = vsel %vm1027, %v4962, %v4964
      %v4969 = vsel %vm1027, %v4960, %v4962
      %v4970 = vsel %vm1027, %v4966, %v4960
      %v4971 = vld [vmem:[%s1032] ss:$8 sm:$0xf]
      %v4973 = vlaneseq
      %v4974 = vshrl.u32 %v4973, 7
      %v4975 = vsub.s32 0, %v4974
      %v4976 = vrot.slane %v4971, %v4975
      %v4977 = vlaneseq
      %v4978 = vshrl.u32 %v4977, 7
      %v4979 = vsub.s32 1, %v4978
      %v4980 = vrot.slane %v4971, %v4979
      %v4981 = vlaneseq
      %v4982 = vshrl.u32 %v4981, 7
      %v4983 = vsub.s32 2, %v4982
      %v4984 = vrot.slane %v4971, %v4983
      %v4985 = vlaneseq
      %v4986 = vshrl.u32 %v4985, 7
      %v4987 = vsub.s32 3, %v4986
      %v4988 = vrot.slane %v4971, %v4987
      %v4993 = vmul.f32 %v4970, %v4976
      %v4994 = vmul.f32 %v4969, %v4980
      %v4995 = vmul.f32 %v4968, %v4984
      %v4996 = vmul.f32 %v4967, %v4988
      %4997 = vst [vmem:[#allocation2 + $0x140] sm:$0xff] %v4993
      %4998 = vst [vmem:[#allocation2 + $0x148] sm:$0xff] %v4994
      %4999 = vst [vmem:[#allocation2 + $0x150] sm:$0xff] %v4995
      %5000 = vst [vmem:[#allocation2 + $0x158] sm:$0xff] %v4996
      %5001 = vrot.lane.b32.xlu0 %v4535, 7
      %v5002 = vpop.permute.xlu0 %5001
      %5003 = vrot.lane.b32.xlu0 %v4536, 7
      %v5004 = vpop.permute.xlu0 %5003
      %5005 = vrot.lane.b32.xlu0 %v4537, 7
      %v5006 = vpop.permute.xlu0 %5005
      %5007 = vrot.lane.b32.xlu0 %v4538, 7
      %v5008 = vpop.permute.xlu0 %5007
      %v5009 = vsel %vm1071, %v5006, %v5008
      %v5010 = vsel %vm1071, %v5004, %v5006
      %v5011 = vsel %vm1071, %v5002, %v5004
      %v5012 = vsel %vm1071, %v5008, %v5002
      %v5013 = vld [vmem:[%s1076] ss:$8 sm:$0xf]
      %v5015 = vlaneseq
      %v5016 = vshrl.u32 %v5015, 7
      %v5017 = vsub.s32 0, %v5016
      %v5018 = vrot.slane %v5013, %v5017
      %v5019 = vlaneseq
      %v5020 = vshrl.u32 %v5019, 7
      %v5021 = vsub.s32 1, %v5020
      %v5022 = vrot.slane %v5013, %v5021
      %v5023 = vlaneseq
      %v5024 = vshrl.u32 %v5023, 7
      %v5025 = vsub.s32 2, %v5024
      %v5026 = vrot.slane %v5013, %v5025
      %v5027 = vlaneseq
      %v5028 = vshrl.u32 %v5027, 7
      %v5029 = vsub.s32 3, %v5028
      %v5030 = vrot.slane %v5013, %v5029
      %v5035 = vmul.f32 %v5012, %v5018
      %v5036 = vmul.f32 %v5011, %v5022
      %v5037 = vmul.f32 %v5010, %v5026
      %v5038 = vmul.f32 %v5009, %v5030
      %5039 = vst [vmem:[#allocation2 + $0x160] sm:$0xff] %v5035
      %5040 = vst [vmem:[#allocation2 + $0x168] sm:$0xff] %v5036
      %5041 = vst [vmem:[#allocation2 + $0x170] sm:$0xff] %v5037
      %5042 = vst [vmem:[#allocation2 + $0x178] sm:$0xff] %v5038
      %5043 = vrot.lane.b32.xlu0 %v4535, 1
      %v5044 = vpop.permute.xlu0 %5043
      %5045 = vrot.lane.b32.xlu0 %v4536, 1
      %v5046 = vpop.permute.xlu0 %5045
      %5047 = vrot.lane.b32.xlu0 %v4537, 1
      %v5048 = vpop.permute.xlu0 %5047
      %5049 = vrot.lane.b32.xlu0 %v4538, 1
      %v5050 = vpop.permute.xlu0 %5049
      %v5051 = vsel %vm1115, %v5048, %v5050
      %v5052 = vsel %vm1115, %v5046, %v5048
      %v5053 = vsel %vm1115, %v5044, %v5046
      %v5054 = vsel %vm1115, %v5050, %v5044
      %v5055 = vld [vmem:[%s1120] ss:$8 sm:$0xf]
      %v5057 = vlaneseq
      %v5058 = vshrl.u32 %v5057, 7
      %v5059 = vsub.s32 0, %v5058
      %v5060 = vrot.slane %v5055, %v5059
      %v5061 = vlaneseq
      %v5062 = vshrl.u32 %v5061, 7
      %v5063 = vsub.s32 1, %v5062
      %v5064 = vrot.slane %v5055, %v5063
      %v5065 = vlaneseq
      %v5066 = vshrl.u32 %v5065, 7
      %v5067 = vsub.s32 2, %v5066
      %v5068 = vrot.slane %v5055, %v5067
      %v5069 = vlaneseq
      %v5070 = vshrl.u32 %v5069, 7
      %v5071 = vsub.s32 3, %v5070
      %v5072 = vrot.slane %v5055, %v5071
      %v5077 = vmul.f32 %v5054, %v5060
      %v5078 = vmul.f32 %v5053, %v5064
      %v5079 = vmul.f32 %v5052, %v5068
      %v5080 = vmul.f32 %v5051, %v5072
      %5081 = vst [vmem:[#allocation2 + $0x180] sm:$0xff] %v5077
      %5082 = vst [vmem:[#allocation2 + $0x188] sm:$0xff] %v5078
      %5083 = vst [vmem:[#allocation2 + $0x190] sm:$0xff] %v5079
      %5084 = vst [vmem:[#allocation2 + $0x198] sm:$0xff] %v5080
      %5085 = vst [vmem:[#allocation2 + $0x1a0] sm:$0xff] %v4535
      %5086 = vst [vmem:[#allocation2 + $0x1a8] sm:$0xff] %v4536
      %5087 = vst [vmem:[#allocation2 + $0x1b0] sm:$0xff] %v4537
      %5088 = vst [vmem:[#allocation2 + $0x1b8] sm:$0xff] %v4538
      %5089 = vrot.lane.b32.xlu0 %v4535, 127
      %v5090 = vpop.permute.xlu0 %5089
      %5091 = vrot.lane.b32.xlu0 %v4536, 127
      %v5092 = vpop.permute.xlu0 %5091
      %5093 = vrot.lane.b32.xlu0 %v4537, 127
      %v5094 = vpop.permute.xlu0 %5093
      %5095 = vrot.lane.b32.xlu0 %v4538, 127
      %v5096 = vpop.permute.xlu0 %5095
      %v5097 = vsel %vm1163, %v5094, %v5096
      %v5098 = vsel %vm1163, %v5092, %v5094
      %v5099 = vsel %vm1163, %v5090, %v5092
      %v5100 = vsel %vm1163, %v5096, %v5090
      %v5101 = vld [vmem:[%s1168] ss:$8 sm:$0xf]
      %v5103 = vlaneseq
      %v5104 = vshrl.u32 %v5103, 7
      %v5105 = vsub.s32 0, %v5104
      %v5106 = vrot.slane %v5101, %v5105
      %v5107 = vlaneseq
      %v5108 = vshrl.u32 %v5107, 7
      %v5109 = vsub.s32 1, %v5108
      %v5110 = vrot.slane %v5101, %v5109
      %v5111 = vlaneseq
      %v5112 = vshrl.u32 %v5111, 7
      %v5113 = vsub.s32 2, %v5112
      %v5114 = vrot.slane %v5101, %v5113
      %v5115 = vlaneseq
      %v5116 = vshrl.u32 %v5115, 7
      %v5117 = vsub.s32 3, %v5116
      %v5118 = vrot.slane %v5101, %v5117
      %v5123 = vmul.f32 %v5099, %v5106
      %v5124 = vmul.f32 %v5098, %v5110
      %v5125 = vmul.f32 %v5097, %v5114
      %v5126 = vmul.f32 %v5100, %v5118
      %5127 = vst [vmem:[#allocation2 + $0x1c0] sm:$0xff] %v5123
      %5128 = vst [vmem:[#allocation2 + $0x1c8] sm:$0xff] %v5124
      %5129 = vst [vmem:[#allocation2 + $0x1d0] sm:$0xff] %v5125
      %5130 = vst [vmem:[#allocation2 + $0x1d8] sm:$0xff] %v5126
      %5131 = vrot.lane.b32.xlu0 %v4535, 121
      %v5132 = vpop.permute.xlu0 %5131
      %5133 = vrot.lane.b32.xlu0 %v4536, 121
      %v5134 = vpop.permute.xlu0 %5133
      %5135 = vrot.lane.b32.xlu0 %v4537, 121
      %v5136 = vpop.permute.xlu0 %5135
      %5137 = vrot.lane.b32.xlu0 %v4538, 121
      %v5138 = vpop.permute.xlu0 %5137
      %v5139 = vsel %vm1207, %v5136, %v5138
      %v5140 = vsel %vm1207, %v5134, %v5136
      %v5141 = vsel %vm1207, %v5132, %v5134
      %v5142 = vsel %vm1207, %v5138, %v5132
      %v5143 = vld [vmem:[%s1212] ss:$8 sm:$0xf]
      %v5145 = vlaneseq
      %v5146 = vshrl.u32 %v5145, 7
      %v5147 = vsub.s32 0, %v5146
      %v5148 = vrot.slane %v5143, %v5147
      %v5149 = vlaneseq
      %v5150 = vshrl.u32 %v5149, 7
      %v5151 = vsub.s32 1, %v5150
      %v5152 = vrot.slane %v5143, %v5151
      %v5153 = vlaneseq
      %v5154 = vshrl.u32 %v5153, 7
      %v5155 = vsub.s32 2, %v5154
      %v5156 = vrot.slane %v5143, %v5155
      %v5157 = vlaneseq
      %v5158 = vshrl.u32 %v5157, 7
      %v5159 = vsub.s32 3, %v5158
      %v5160 = vrot.slane %v5143, %v5159
      %v5165 = vmul.f32 %v5141, %v5148
      %v5166 = vmul.f32 %v5140, %v5152
      %v5167 = vmul.f32 %v5139, %v5156
      %v5168 = vmul.f32 %v5142, %v5160
      %5169 = vst [vmem:[#allocation2 + $0x1e0] sm:$0xff] %v5165
      %5170 = vst [vmem:[#allocation2 + $0x1e8] sm:$0xff] %v5166
      %5171 = vst [vmem:[#allocation2 + $0x1f0] sm:$0xff] %v5167
      %5172 = vst [vmem:[#allocation2 + $0x1f8] sm:$0xff] %v5168
      %5173 = vrot.lane.b32.xlu0 %v4535, 120
      %v5174 = vpop.permute.xlu0 %5173
      %5175 = vrot.lane.b32.xlu0 %v4536, 120
      %v5176 = vpop.permute.xlu0 %5175
      %5177 = vrot.lane.b32.xlu0 %v4537, 120
      %v5178 = vpop.permute.xlu0 %5177
      %5179 = vrot.lane.b32.xlu0 %v4538, 120
      %v5180 = vpop.permute.xlu0 %5179
      %v5181 = vsel %vm1251, %v5178, %v5180
      %v5182 = vsel %vm1251, %v5176, %v5178
      %v5183 = vsel %vm1251, %v5174, %v5176
      %v5184 = vsel %vm1251, %v5180, %v5174
      %v5185 = vld [vmem:[%s1256] ss:$8 sm:$0xf]
      %v5187 = vlaneseq
      %v5188 = vshrl.u32 %v5187, 7
      %v5189 = vsub.s32 0, %v5188
      %v5190 = vrot.slane %v5185, %v5189
      %v5191 = vlaneseq
      %v5192 = vshrl.u32 %v5191, 7
      %v5193 = vsub.s32 1, %v5192
      %v5194 = vrot.slane %v5185, %v5193
      %v5195 = vlaneseq
      %v5196 = vshrl.u32 %v5195, 7
      %v5197 = vsub.s32 2, %v5196
      %v5198 = vrot.slane %v5185, %v5197
      %v5199 = vlaneseq
      %v5200 = vshrl.u32 %v5199, 7
      %v5201 = vsub.s32 3, %v5200
      %v5202 = vrot.slane %v5185, %v5201
      %v5207 = vmul.f32 %v5183, %v5190
      %v5208 = vmul.f32 %v5182, %v5194
      %v5209 = vmul.f32 %v5181, %v5198
      %v5210 = vmul.f32 %v5184, %v5202
      %5211 = vst [vmem:[#allocation2 + $0x200] sm:$0xff] %v5207
      %5212 = vst [vmem:[#allocation2 + $0x208] sm:$0xff] %v5208
      %5213 = vst [vmem:[#allocation2 + $0x210] sm:$0xff] %v5209
      %5214 = vst [vmem:[#allocation2 + $0x218] sm:$0xff] %v5210
      %5215 = vrot.lane.b32.xlu0 %v4535, 119
      %v5216 = vpop.permute.xlu0 %5215
      %5217 = vrot.lane.b32.xlu0 %v4536, 119
      %v5218 = vpop.permute.xlu0 %5217
      %5219 = vrot.lane.b32.xlu0 %v4537, 119
      %v5220 = vpop.permute.xlu0 %5219
      %5221 = vrot.lane.b32.xlu0 %v4538, 119
      %v5222 = vpop.permute.xlu0 %5221
      %v5223 = vsel %vm1295, %v5220, %v5222
      %v5224 = vsel %vm1295, %v5218, %v5220
      %v5225 = vsel %vm1295, %v5216, %v5218
      %v5226 = vsel %vm1295, %v5222, %v5216
      %v5227 = vld [vmem:[%s1300] ss:$8 sm:$0xf]
      %v5229 = vlaneseq
      %v5230 = vshrl.u32 %v5229, 7
      %v5231 = vsub.s32 0, %v5230
      %v5232 = vrot.slane %v5227, %v5231
      %v5233 = vlaneseq
      %v5234 = vshrl.u32 %v5233, 7
      %v5235 = vsub.s32 1, %v5234
      %v5236 = vrot.slane %v5227, %v5235
      %v5237 = vlaneseq
      %v5238 = vshrl.u32 %v5237, 7
      %v5239 = vsub.s32 2, %v5238
      %v5240 = vrot.slane %v5227, %v5239
      %v5241 = vlaneseq
      %v5242 = vshrl.u32 %v5241, 7
      %v5243 = vsub.s32 3, %v5242
      %v5244 = vrot.slane %v5227, %v5243
      %v5249 = vmul.f32 %v5225, %v5232
      %v5250 = vmul.f32 %v5224, %v5236
      %v5251 = vmul.f32 %v5223, %v5240
      %v5252 = vmul.f32 %v5226, %v5244
      %5253 = vst [vmem:[#allocation2 + $0x220] sm:$0xff] %v5249
      %5254 = vst [vmem:[#allocation2 + $0x228] sm:$0xff] %v5250
      %5255 = vst [vmem:[#allocation2 + $0x230] sm:$0xff] %v5251
      %5256 = vst [vmem:[#allocation2 + $0x238] sm:$0xff] %v5252
      %v5257 = vld [vmem:[%s1331] ss:$8 sm:$0xf]
      %v5259 = vlaneseq
      %v5260 = vshrl.u32 %v5259, 7
      %v5261 = vsub.s32 0, %v5260
      %v5262 = vrot.slane %v5257, %v5261
      %v5263 = vlaneseq
      %v5264 = vshrl.u32 %v5263, 7
      %v5265 = vsub.s32 1, %v5264
      %v5266 = vrot.slane %v5257, %v5265
      %v5267 = vlaneseq
      %v5268 = vshrl.u32 %v5267, 7
      %v5269 = vsub.s32 2, %v5268
      %v5270 = vrot.slane %v5257, %v5269
      %v5271 = vlaneseq
      %v5272 = vshrl.u32 %v5271, 7
      %v5273 = vsub.s32 3, %v5272
      %v5274 = vrot.slane %v5257, %v5273
      %v5279 = vmul.f32 %v4549, %v5262
      %v5280 = vmul.f32 %v4548, %v5266
      %v5281 = vmul.f32 %v4547, %v5270
      %v5282 = vmul.f32 %v4550, %v5274
      %5283 = vst [vmem:[#allocation2 + $0x240] sm:$0xff] %v5279
      %5284 = vst [vmem:[#allocation2 + $0x248] sm:$0xff] %v5280
      %5285 = vst [vmem:[#allocation2 + $0x250] sm:$0xff] %v5281
      %5286 = vst [vmem:[#allocation2 + $0x258] sm:$0xff] %v5282
      %v5287 = vld [vmem:[%s1362] ss:$8 sm:$0xf]
      %v5289 = vlaneseq
      %v5290 = vshrl.u32 %v5289, 7
      %v5291 = vsub.s32 0, %v5290
      %v5292 = vrot.slane %v5287, %v5291
      %v5293 = vlaneseq
      %v5294 = vshrl.u32 %v5293, 7
      %v5295 = vsub.s32 1, %v5294
      %v5296 = vrot.slane %v5287, %v5295
      %v5297 = vlaneseq
      %v5298 = vshrl.u32 %v5297, 7
      %v5299 = vsub.s32 2, %v5298
      %v5300 = vrot.slane %v5287, %v5299
      %v5301 = vlaneseq
      %v5302 = vshrl.u32 %v5301, 7
      %v5303 = vsub.s32 3, %v5302
      %v5304 = vrot.slane %v5287, %v5303
      %v5309 = vmul.f32 %v4591, %v5292
      %v5310 = vmul.f32 %v4590, %v5296
      %v5311 = vmul.f32 %v4589, %v5300
      %v5312 = vmul.f32 %v4592, %v5304
      %5313 = vst [vmem:[#allocation2 + $0x260] sm:$0xff] %v5309
      %5314 = vst [vmem:[#allocation2 + $0x268] sm:$0xff] %v5310
      %5315 = vst [vmem:[#allocation2 + $0x270] sm:$0xff] %v5311
      %5316 = vst [vmem:[#allocation2 + $0x278] sm:$0xff] %v5312
      %v5317 = vld [vmem:[%s1393] ss:$8 sm:$0xf]
      %v5319 = vlaneseq
      %v5320 = vshrl.u32 %v5319, 7
      %v5321 = vsub.s32 0, %v5320
      %v5322 = vrot.slane %v5317, %v5321
      %v5323 = vlaneseq
      %v5324 = vshrl.u32 %v5323, 7
      %v5325 = vsub.s32 1, %v5324
      %v5326 = vrot.slane %v5317, %v5325
      %v5327 = vlaneseq
      %v5328 = vshrl.u32 %v5327, 7
      %v5329 = vsub.s32 2, %v5328
      %v5330 = vrot.slane %v5317, %v5329
      %v5331 = vlaneseq
      %v5332 = vshrl.u32 %v5331, 7
      %v5333 = vsub.s32 3, %v5332
      %v5334 = vrot.slane %v5317, %v5333
      %v5339 = vmul.f32 %v4633, %v5322
      %v5340 = vmul.f32 %v4632, %v5326
      %v5341 = vmul.f32 %v4631, %v5330
      %v5342 = vmul.f32 %v4634, %v5334
      %5343 = vst [vmem:[#allocation2 + $0x280] sm:$0xff] %v5339
      %5344 = vst [vmem:[#allocation2 + $0x288] sm:$0xff] %v5340
      %5345 = vst [vmem:[#allocation2 + $0x290] sm:$0xff] %v5341
      %5346 = vst [vmem:[#allocation2 + $0x298] sm:$0xff] %v5342
      %v5347 = vld [vmem:[%s1424] ss:$8 sm:$0xf]
      %v5349 = vlaneseq
      %v5350 = vshrl.u32 %v5349, 7
      %v5351 = vsub.s32 0, %v5350
      %v5352 = vrot.slane %v5347, %v5351
      %v5353 = vlaneseq
      %v5354 = vshrl.u32 %v5353, 7
      %v5355 = vsub.s32 1, %v5354
      %v5356 = vrot.slane %v5347, %v5355
      %v5357 = vlaneseq
      %v5358 = vshrl.u32 %v5357, 7
      %v5359 = vsub.s32 2, %v5358
      %v5360 = vrot.slane %v5347, %v5359
      %v5361 = vlaneseq
      %v5362 = vshrl.u32 %v5361, 7
      %v5363 = vsub.s32 3, %v5362
      %v5364 = vrot.slane %v5347, %v5363
      %v5369 = vmul.f32 %v4675, %v5352
      %v5370 = vmul.f32 %v4674, %v5356
      %v5371 = vmul.f32 %v4673, %v5360
      %v5372 = vmul.f32 %v4676, %v5364
      %5373 = vst [vmem:[#allocation2 + $0x2a0] sm:$0xff] %v5369
      %5374 = vst [vmem:[#allocation2 + $0x2a8] sm:$0xff] %v5370
      %5375 = vst [vmem:[#allocation2 + $0x2b0] sm:$0xff] %v5371
      %5376 = vst [vmem:[#allocation2 + $0x2b8] sm:$0xff] %v5372
      %v5377 = vld [vmem:[%s1455] ss:$8 sm:$0xf]
      %v5379 = vlaneseq
      %v5380 = vshrl.u32 %v5379, 7
      %v5381 = vsub.s32 0, %v5380
      %v5382 = vrot.slane %v5377, %v5381
      %v5383 = vlaneseq
      %v5384 = vshrl.u32 %v5383, 7
      %v5385 = vsub.s32 1, %v5384
      %v5386 = vrot.slane %v5377, %v5385
      %v5387 = vlaneseq
      %v5388 = vshrl.u32 %v5387, 7
      %v5389 = vsub.s32 2, %v5388
      %v5390 = vrot.slane %v5377, %v5389
      %v5391 = vlaneseq
      %v5392 = vshrl.u32 %v5391, 7
      %v5393 = vsub.s32 3, %v5392
      %v5394 = vrot.slane %v5377, %v5393
      %v5399 = vmul.f32 %v4717, %v5382
      %v5400 = vmul.f32 %v4716, %v5386
      %v5401 = vmul.f32 %v4715, %v5390
      %v5402 = vmul.f32 %v4718, %v5394
      %5403 = vst [vmem:[#allocation2 + $0x2c0] sm:$0xff] %v5399
      %5404 = vst [vmem:[#allocation2 + $0x2c8] sm:$0xff] %v5400
      %5405 = vst [vmem:[#allocation2 + $0x2d0] sm:$0xff] %v5401
      %5406 = vst [vmem:[#allocation2 + $0x2d8] sm:$0xff] %v5402
      %v5407 = vld [vmem:[%s1486] ss:$8 sm:$0xf]
      %v5409 = vlaneseq
      %v5410 = vshrl.u32 %v5409, 7
      %v5411 = vsub.s32 0, %v5410
      %v5412 = vrot.slane %v5407, %v5411
      %v5413 = vlaneseq
      %v5414 = vshrl.u32 %v5413, 7
      %v5415 = vsub.s32 1, %v5414
      %v5416 = vrot.slane %v5407, %v5415
      %v5417 = vlaneseq
      %v5418 = vshrl.u32 %v5417, 7
      %v5419 = vsub.s32 2, %v5418
      %v5420 = vrot.slane %v5407, %v5419
      %v5421 = vlaneseq
      %v5422 = vshrl.u32 %v5421, 7
      %v5423 = vsub.s32 3, %v5422
      %v5424 = vrot.slane %v5407, %v5423
      %v5429 = vmul.f32 %v4759, %v5412
      %v5430 = vmul.f32 %v4758, %v5416
      %v5431 = vmul.f32 %v4757, %v5420
      %v5432 = vmul.f32 %v4760, %v5424
      %5433 = vst [vmem:[#allocation2 + $0x2e0] sm:$0xff] %v5429
      %5434 = vst [vmem:[#allocation2 + $0x2e8] sm:$0xff] %v5430
      %5435 = vst [vmem:[#allocation2 + $0x2f0] sm:$0xff] %v5431
      %5436 = vst [vmem:[#allocation2 + $0x2f8] sm:$0xff] %v5432
      %v5437 = vld [vmem:[%s1517] ss:$8 sm:$0xf]
      %v5439 = vlaneseq
      %v5440 = vshrl.u32 %v5439, 7
      %v5441 = vsub.s32 0, %v5440
      %v5442 = vrot.slane %v5437, %v5441
      %v5443 = vlaneseq
      %v5444 = vshrl.u32 %v5443, 7
      %v5445 = vsub.s32 1, %v5444
      %v5446 = vrot.slane %v5437, %v5445
      %v5447 = vlaneseq
      %v5448 = vshrl.u32 %v5447, 7
      %v5449 = vsub.s32 2, %v5448
      %v5450 = vrot.slane %v5437, %v5449
      %v5451 = vlaneseq
      %v5452 = vshrl.u32 %v5451, 7
      %v5453 = vsub.s32 3, %v5452
      %v5454 = vrot.slane %v5437, %v5453
      %v5459 = vmul.f32 %v4801, %v5442
      %v5460 = vmul.f32 %v4800, %v5446
      %v5461 = vmul.f32 %v4799, %v5450
      %v5462 = vmul.f32 %v4802, %v5454
      %5463 = vst [vmem:[#allocation2 + $0x300] sm:$0xff] %v5459
      %5464 = vst [vmem:[#allocation2 + $0x308] sm:$0xff] %v5460
      %5465 = vst [vmem:[#allocation2 + $0x310] sm:$0xff] %v5461
      %5466 = vst [vmem:[#allocation2 + $0x318] sm:$0xff] %v5462
      %v5467 = vld [vmem:[%s1548] ss:$8 sm:$0xf]
      %v5469 = vlaneseq
      %v5470 = vshrl.u32 %v5469, 7
      %v5471 = vsub.s32 0, %v5470
      %v5472 = vrot.slane %v5467, %v5471
      %v5473 = vlaneseq
      %v5474 = vshrl.u32 %v5473, 7
      %v5475 = vsub.s32 1, %v5474
      %v5476 = vrot.slane %v5467, %v5475
      %v5477 = vlaneseq
      %v5478 = vshrl.u32 %v5477, 7
      %v5479 = vsub.s32 2, %v5478
      %v5480 = vrot.slane %v5467, %v5479
      %v5481 = vlaneseq
      %v5482 = vshrl.u32 %v5481, 7
      %v5483 = vsub.s32 3, %v5482
      %v5484 = vrot.slane %v5467, %v5483
      %v5489 = vmul.f32 %v4843, %v5472
      %v5490 = vmul.f32 %v4842, %v5476
      %v5491 = vmul.f32 %v4841, %v5480
      %v5492 = vmul.f32 %v4844, %v5484
      %5493 = vst [vmem:[#allocation2 + $0x320] sm:$0xff] %v5489
      %5494 = vst [vmem:[#allocation2 + $0x328] sm:$0xff] %v5490
      %5495 = vst [vmem:[#allocation2 + $0x330] sm:$0xff] %v5491
      %5496 = vst [vmem:[#allocation2 + $0x338] sm:$0xff] %v5492
      %v5497 = vld [vmem:[%s1579] ss:$8 sm:$0xf]
      %v5499 = vlaneseq
      %v5500 = vshrl.u32 %v5499, 7
      %v5501 = vsub.s32 0, %v5500
      %v5502 = vrot.slane %v5497, %v5501
      %v5503 = vlaneseq
      %v5504 = vshrl.u32 %v5503, 7
      %v5505 = vsub.s32 1, %v5504
      %v5506 = vrot.slane %v5497, %v5505
      %v5507 = vlaneseq
      %v5508 = vshrl.u32 %v5507, 7
      %v5509 = vsub.s32 2, %v5508
      %v5510 = vrot.slane %v5497, %v5509
      %v5511 = vlaneseq
      %v5512 = vshrl.u32 %v5511, 7
      %v5513 = vsub.s32 3, %v5512
      %v5514 = vrot.slane %v5497, %v5513
      %v5519 = vmul.f32 %v4885, %v5502
      %v5520 = vmul.f32 %v4884, %v5506
      %v5521 = vmul.f32 %v4883, %v5510
      %v5522 = vmul.f32 %v4886, %v5514
      %5523 = vst [vmem:[#allocation2 + $0x340] sm:$0xff] %v5519
      %5524 = vst [vmem:[#allocation2 + $0x348] sm:$0xff] %v5520
      %5525 = vst [vmem:[#allocation2 + $0x350] sm:$0xff] %v5521
      %5526 = vst [vmem:[#allocation2 + $0x358] sm:$0xff] %v5522
      %v5527 = vld [vmem:[%s12] sm:$0xff]
      %v5528 = vld [vmem:[%s12 + $0x8] sm:$0xff]
      %v5529 = vld [vmem:[%s12 + $0x10] sm:$0xff]
      %v5530 = vld [vmem:[%s12 + $0x18] sm:$0xff]
      %v5531 = vld [vmem:[#allocation2] sm:$0xff]
      %v5532 = vld [vmem:[#allocation2 + $0x8] sm:$0xff]
      %v5533 = vld [vmem:[#allocation2 + $0x10] sm:$0xff]
      %v5534 = vld [vmem:[#allocation2 + $0x18] sm:$0xff]
      %v5535 = vld [vmem:[#allocation2 + $0x20] sm:$0xff]
      %v5536 = vld [vmem:[#allocation2 + $0x28] sm:$0xff]
      %v5537 = vld [vmem:[#allocation2 + $0x30] sm:$0xff]
      %v5538 = vld [vmem:[#allocation2 + $0x38] sm:$0xff]
      %v5539 = vld [vmem:[#allocation2 + $0x40] sm:$0xff]
      %v5540 = vld [vmem:[#allocation2 + $0x48] sm:$0xff]
      %v5541 = vld [vmem:[#allocation2 + $0x50] sm:$0xff]
      %v5542 = vld [vmem:[#allocation2 + $0x58] sm:$0xff]
      %v5543 = vld [vmem:[#allocation2 + $0x60] sm:$0xff]
      %v5544 = vld [vmem:[#allocation2 + $0x68] sm:$0xff]
      %v5545 = vld [vmem:[#allocation2 + $0x70] sm:$0xff]
      %v5546 = vld [vmem:[#allocation2 + $0x78] sm:$0xff]
      %v5547 = vld [vmem:[#allocation2 + $0x80] sm:$0xff]
      %v5548 = vld [vmem:[#allocation2 + $0x88] sm:$0xff]
      %v5549 = vld [vmem:[#allocation2 + $0x90] sm:$0xff]
      %v5550 = vld [vmem:[#allocation2 + $0x98] sm:$0xff]
      %v5551 = vld [vmem:[#allocation2 + $0xa0] sm:$0xff]
      %v5552 = vld [vmem:[#allocation2 + $0xa8] sm:$0xff]
      %v5553 = vld [vmem:[#allocation2 + $0xb0] sm:$0xff]
      %v5554 = vld [vmem:[#allocation2 + $0xb8] sm:$0xff]
      %v5555 = vld [vmem:[#allocation2 + $0xc0] sm:$0xff]
      %v5556 = vld [vmem:[#allocation2 + $0xc8] sm:$0xff]
      %v5557 = vld [vmem:[#allocation2 + $0xd0] sm:$0xff]
      %v5558 = vld [vmem:[#allocation2 + $0xd8] sm:$0xff]
      %v5559 = vld [vmem:[#allocation2 + $0xe0] sm:$0xff]
      %v5560 = vld [vmem:[#allocation2 + $0xe8] sm:$0xff]
      %v5561 = vld [vmem:[#allocation2 + $0xf0] sm:$0xff]
      %v5562 = vld [vmem:[#allocation2 + $0xf8] sm:$0xff]
      %v5563 = vld [vmem:[#allocation2 + $0x100] sm:$0xff]
      %v5564 = vld [vmem:[#allocation2 + $0x108] sm:$0xff]
      %v5565 = vld [vmem:[#allocation2 + $0x110] sm:$0xff]
      %v5566 = vld [vmem:[#allocation2 + $0x118] sm:$0xff]
      %v5567 = vld [vmem:[#allocation2 + $0x120] sm:$0xff]
      %v5568 = vld [vmem:[#allocation2 + $0x128] sm:$0xff]
      %v5569 = vld [vmem:[#allocation2 + $0x130] sm:$0xff]
      %v5570 = vld [vmem:[#allocation2 + $0x138] sm:$0xff]
      %v5571 = vld [vmem:[#allocation2 + $0x140] sm:$0xff]
      %v5572 = vld [vmem:[#allocation2 + $0x148] sm:$0xff]
      %v5573 = vld [vmem:[#allocation2 + $0x150] sm:$0xff]
      %v5574 = vld [vmem:[#allocation2 + $0x158] sm:$0xff]
      %v5575 = vld [vmem:[#allocation2 + $0x160] sm:$0xff]
      %v5576 = vld [vmem:[#allocation2 + $0x168] sm:$0xff]
      %v5577 = vld [vmem:[#allocation2 + $0x170] sm:$0xff]
      %v5578 = vld [vmem:[#allocation2 + $0x178] sm:$0xff]
      %v5579 = vld [vmem:[#allocation2 + $0x180] sm:$0xff]
      %v5580 = vld [vmem:[#allocation2 + $0x188] sm:$0xff]
      %v5581 = vld [vmem:[#allocation2 + $0x190] sm:$0xff]
      %v5582 = vld [vmem:[#allocation2 + $0x198] sm:$0xff]
      %v5583 = vld [vmem:[#allocation2 + $0x1a0] sm:$0xff]
      %v5584 = vld [vmem:[#allocation2 + $0x1a8] sm:$0xff]
      %v5585 = vld [vmem:[#allocation2 + $0x1b0] sm:$0xff]
      %v5586 = vld [vmem:[#allocation2 + $0x1b8] sm:$0xff]
      %v5587 = vld [vmem:[#allocation2 + $0x1c0] sm:$0xff]
      %v5588 = vld [vmem:[#allocation2 + $0x1c8] sm:$0xff]
      %v5589 = vld [vmem:[#allocation2 + $0x1d0] sm:$0xff]
      %v5590 = vld [vmem:[#allocation2 + $0x1d8] sm:$0xff]
      %v5591 = vld [vmem:[#allocation2 + $0x1e0] sm:$0xff]
      %v5592 = vld [vmem:[#allocation2 + $0x1e8] sm:$0xff]
      %v5593 = vld [vmem:[#allocation2 + $0x1f0] sm:$0xff]
      %v5594 = vld [vmem:[#allocation2 + $0x1f8] sm:$0xff]
      %v5595 = vld [vmem:[#allocation2 + $0x200] sm:$0xff]
      %v5596 = vld [vmem:[#allocation2 + $0x208] sm:$0xff]
      %v5597 = vld [vmem:[#allocation2 + $0x210] sm:$0xff]
      %v5598 = vld [vmem:[#allocation2 + $0x218] sm:$0xff]
      %v5599 = vld [vmem:[#allocation2 + $0x220] sm:$0xff]
      %v5600 = vld [vmem:[#allocation2 + $0x228] sm:$0xff]
      %v5601 = vld [vmem:[#allocation2 + $0x230] sm:$0xff]
      %v5602 = vld [vmem:[#allocation2 + $0x238] sm:$0xff]
      %v5603 = vld [vmem:[#allocation2 + $0x240] sm:$0xff]
      %v5604 = vld [vmem:[#allocation2 + $0x248] sm:$0xff]
      %v5605 = vld [vmem:[#allocation2 + $0x250] sm:$0xff]
      %v5606 = vld [vmem:[#allocation2 + $0x258] sm:$0xff]
      %v5607 = vld [vmem:[#allocation2 + $0x260] sm:$0xff]
      %v5608 = vld [vmem:[#allocation2 + $0x268] sm:$0xff]
      %v5609 = vld [vmem:[#allocation2 + $0x270] sm:$0xff]
      %v5610 = vld [vmem:[#allocation2 + $0x278] sm:$0xff]
      %v5611 = vld [vmem:[#allocation2 + $0x280] sm:$0xff]
      %v5612 = vld [vmem:[#allocation2 + $0x288] sm:$0xff]
      %v5613 = vld [vmem:[#allocation2 + $0x290] sm:$0xff]
      %v5614 = vld [vmem:[#allocation2 + $0x298] sm:$0xff]
      %v5615 = vld [vmem:[#allocation2 + $0x2a0] sm:$0xff]
      %v5616 = vld [vmem:[#allocation2 + $0x2a8] sm:$0xff]
      %v5617 = vld [vmem:[#allocation2 + $0x2b0] sm:$0xff]
      %v5618 = vld [vmem:[#allocation2 + $0x2b8] sm:$0xff]
      %v5619 = vld [vmem:[#allocation2 + $0x2c0] sm:$0xff]
      %v5620 = vld [vmem:[#allocation2 + $0x2c8] sm:$0xff]
      %v5621 = vld [vmem:[#allocation2 + $0x2d0] sm:$0xff]
      %v5622 = vld [vmem:[#allocation2 + $0x2d8] sm:$0xff]
      %v5623 = vld [vmem:[#allocation2 + $0x2e0] sm:$0xff]
      %v5624 = vld [vmem:[#allocation2 + $0x2e8] sm:$0xff]
      %v5625 = vld [vmem:[#allocation2 + $0x2f0] sm:$0xff]
      %v5626 = vld [vmem:[#allocation2 + $0x2f8] sm:$0xff]
      %v5627 = vld [vmem:[#allocation2 + $0x300] sm:$0xff]
      %v5628 = vld [vmem:[#allocation2 + $0x308] sm:$0xff]
      %v5629 = vld [vmem:[#allocation2 + $0x310] sm:$0xff]
      %v5630 = vld [vmem:[#allocation2 + $0x318] sm:$0xff]
      %v5631 = vld [vmem:[#allocation2 + $0x320] sm:$0xff]
      %v5632 = vld [vmem:[#allocation2 + $0x328] sm:$0xff]
      %v5633 = vld [vmem:[#allocation2 + $0x330] sm:$0xff]
      %v5634 = vld [vmem:[#allocation2 + $0x338] sm:$0xff]
      %v5635 = vld [vmem:[#allocation2 + $0x340] sm:$0xff]
      %v5636 = vld [vmem:[#allocation2 + $0x348] sm:$0xff]
      %v5637 = vld [vmem:[#allocation2 + $0x350] sm:$0xff]
      %v5638 = vld [vmem:[#allocation2 + $0x358] sm:$0xff]
      %v5639 = vld [vmem:[%s13] sm:$0xff]
      %v5640 = vld [vmem:[%s13 + $0x8] sm:$0xff]
      %5642 = vset.pattern.permute.xlu0 0
      %5643 = vperm.xlu0 %5642, %v5639
      %v5644 = vpop.permute.xlu0 %5643
      %5647 = vset.pattern.permute.xlu0 0
      %5648 = vperm.xlu0 %5647, %v5640
      %v5649 = vpop.permute.xlu0 %5648
      %v5652 = vsel %vm1726, %v5528, 0
      %v5655 = vsel %vm1726, %v5530, 0
      %5657 = vmatprep.subr.mxu0 %v5592
      %5658 = vmatpush1.msra.mxu0 %v5591
      %5659 = vmatprep.subr.mxu0 %v5588
      %5660 = vmatpush1.msra.mxu0 %v5587
      %5661 = vmatprep.subr.mxu0 %v5584
      %5662 = vmatpush1.msra.mxu0 %v5583
      %5663 = vmatprep.subr.mxu0 %v5580
      %5664 = vmatpush1.msra.mxu0 %v5579
      %5665 = vmatprep.subr.mxu0 %v5576
      %5666 = vmatpush1.msra.mxu0 %v5575
      %5667 = vmatprep.subr.mxu0 %v5572
      %5668 = vmatpush1.msra.mxu0 %v5571
      %5669 = vmatprep.subr.mxu0 %v5568
      %5670 = vmatpush1.msra.mxu0 %v5567
      %5671 = vmatprep.subr.mxu0 %v5564
      %5672 = vmatpush1.msra.mxu0 %v5563
      %5673 = vmatprep.subr.mxu0 %v5560
      %5674 = vmatpush1.msra.mxu0 %v5559
      %5675 = vmatprep.subr.mxu0 %v5556
      %5676 = vmatpush1.msra.mxu0 %v5555
      %5677 = vmatprep.subr.mxu0 %v5552
      %5678 = vmatpush1.msra.mxu0 %v5551
      %5679 = vmatprep.subr.mxu0 %v5548
      %5680 = vmatpush1.msra.mxu0 %v5547
      %5681 = vmatprep.subr.mxu0 %v5544
      %5682 = vmatpush1.msra.mxu0 %v5543
      %5683 = vmatprep.subr.mxu0 %v5540
      %5684 = vmatpush1.msra.mxu0 %v5539
      %5685 = vmatprep.subr.mxu0 %v5536
      %5686 = vmatpush1.msra.mxu0 %v5535
      %5687 = vmatprep.subr.mxu0 %v5532
      %5688 = vmatpush1.msra.mxu0 %v5531
      %5689 = vmatprep.subr.mxu0 0.0
      %5690 = vmatpush2.msra.mxu0 0.0
      %5691 = vmatprep.subr.mxu0 0.0
      %5692 = vmatpush2.msra.mxu0 0.0
      %5693 = vmatprep.subr.mxu0 0.0
      %5694 = vmatpush2.msra.mxu0 0.0
      %5695 = vmatprep.subr.mxu0 0.0
      %5696 = vmatpush2.msra.mxu0 0.0
      %5697 = vmatprep.subr.mxu0 0.0
      %5698 = vmatpush2.msra.mxu0 0.0
      %5699 = vmatprep.subr.mxu0 %v5636
      %5700 = vmatpush2.msra.mxu0 %v5635
      %5701 = vmatprep.subr.mxu0 %v5632
      %5702 = vmatpush2.msra.mxu0 %v5631
      %5703 = vmatprep.subr.mxu0 %v5628
      %5704 = vmatpush2.msra.mxu0 %v5627
      %5705 = vmatprep.subr.mxu0 %v5624
      %5706 = vmatpush2.msra.mxu0 %v5623
      %5707 = vmatprep.subr.mxu0 %v5620
      %5708 = vmatpush2.msra.mxu0 %v5619
      %5709 = vmatprep.subr.mxu0 %v5616
      %5710 = vmatpush2.msra.mxu0 %v5615
      %5711 = vmatprep.subr.mxu0 %v5612
      %5712 = vmatpush2.msra.mxu0 %v5611
      %5713 = vmatprep.subr.mxu0 %v5608
      %5714 = vmatpush2.msra.mxu0 %v5607
      %5715 = vmatprep.subr.mxu0 %v5604
      %5716 = vmatpush2.msra.mxu0 %v5603
      %5717 = vmatprep.subr.mxu0 %v5600
      %5718 = vmatpush2.msra.mxu0 %v5599
      %5719 = vmatprep.subr.mxu0 %v5596
      %5720 = vmatpush2.msra.mxu0 %v5595
      %5721 = vmatprep.mubr.f32.mxu0 %v5652
      %5722 = vmatmul.mubr.f32.gmra.mxu0 %v5527
      %v5723 = vpop.f32.mrf.mxu0
      %v5724 = vadd.f32 %v5644, %v5723
      %v5725 = vpop.f32.mrf.mxu0
      %v5726 = vadd.f32 %v5644, %v5725
      %5727 = vmatprep.mubr.f32.mxu0 %v5655
      %5728 = vmatmul.mubr.f32.gmra.mxu0 %v5529
      %v5729 = vpop.f32.mrf.mxu0
      %v5730 = vadd.f32 %v5649, %v5729
      %v5731 = vpop.f32.mrf.mxu0
      %v5732 = vadd.f32 %v5649, %v5731
      %5733 = vdwg.mxu0
      %5734 = vmatprep.subr.mxu0 %v5594
      %5735 = vmatpush1.msra.mxu0 %v5593
      %5736 = vmatprep.subr.mxu0 %v5590
      %5737 = vmatpush1.msra.mxu0 %v5589
      %5738 = vmatprep.subr.mxu0 %v5586
      %5739 = vmatpush1.msra.mxu0 %v5585
      %5740 = vmatprep.subr.mxu0 %v5582
      %5741 = vmatpush1.msra.mxu0 %v5581
      %5742 = vmatprep.subr.mxu0 %v5578
      %5743 = vmatpush1.msra.mxu0 %v5577
      %5744 = vmatprep.subr.mxu0 %v5574
      %5745 = vmatpush1.msra.mxu0 %v5573
      %5746 = vmatprep.subr.mxu0 %v5570
      %5747 = vmatpush1.msra.mxu0 %v5569
      %5748 = vmatprep.subr.mxu0 %v5566
      %5749 = vmatpush1.msra.mxu0 %v5565
      %5750 = vmatprep.subr.mxu0 %v5562
      %5751 = vmatpush1.msra.mxu0 %v5561
      %5752 = vmatprep.subr.mxu0 %v5558
      %5753 = vmatpush1.msra.mxu0 %v5557
      %5754 = vmatprep.subr.mxu0 %v5554
      %5755 = vmatpush1.msra.mxu0 %v5553
      %5756 = vmatprep.subr.mxu0 %v5550
      %5757 = vmatpush1.msra.mxu0 %v5549
      %5758 = vmatprep.subr.mxu0 %v5546
      %5759 = vmatpush1.msra.mxu0 %v5545
      %5760 = vmatprep.subr.mxu0 %v5542
      %5761 = vmatpush1.msra.mxu0 %v5541
      %5762 = vmatprep.subr.mxu0 %v5538
      %5763 = vmatpush1.msra.mxu0 %v5537
      %5764 = vmatprep.subr.mxu0 %v5534
      %5765 = vmatpush1.msra.mxu0 %v5533
      %5766 = vmatprep.subr.mxu0 0.0
      %5767 = vmatpush2.msra.mxu0 0.0
      %5768 = vmatprep.subr.mxu0 0.0
      %5769 = vmatpush2.msra.mxu0 0.0
      %5770 = vmatprep.subr.mxu0 0.0
      %5771 = vmatpush2.msra.mxu0 0.0
      %5772 = vmatprep.subr.mxu0 0.0
      %5773 = vmatpush2.msra.mxu0 0.0
      %5774 = vmatprep.subr.mxu0 0.0
      %5775 = vmatpush2.msra.mxu0 0.0
      %5776 = vmatprep.subr.mxu0 %v5638
      %5777 = vmatpush2.msra.mxu0 %v5637
      %5778 = vmatprep.subr.mxu0 %v5634
      %5779 = vmatpush2.msra.mxu0 %v5633
      %5780 = vmatprep.subr.mxu0 %v5630
      %5781 = vmatpush2.msra.mxu0 %v5629
      %5782 = vmatprep.subr.mxu0 %v5626
      %5783 = vmatpush2.msra.mxu0 %v5625
      %5784 = vmatprep.subr.mxu0 %v5622
      %5785 = vmatpush2.msra.mxu0 %v5621
      %5786 = vmatprep.subr.mxu0 %v5618
      %5787 = vmatpush2.msra.mxu0 %v5617
      %5788 = vmatprep.subr.mxu0 %v5614
      %5789 = vmatpush2.msra.mxu0 %v5613
      %5790 = vmatprep.subr.mxu0 %v5610
      %5791 = vmatpush2.msra.mxu0 %v5609
      %5792 = vmatprep.subr.mxu0 %v5606
      %5793 = vmatpush2.msra.mxu0 %v5605
      %5794 = vmatprep.subr.mxu0 %v5602
      %5795 = vmatpush2.msra.mxu0 %v5601
      %5796 = vmatprep.subr.mxu0 %v5598
      %5797 = vmatpush2.msra.mxu0 %v5597
      %5798 = vmatprep.mubr.f32.mxu0 %v5652
      %5799 = vmatmul.mubr.f32.gmra.mxu0 %v5527
      %v5800 = vpop.f32.mrf.mxu0
      %v5801 = vadd.f32 %v5644, %v5800
      %v5802 = vpop.f32.mrf.mxu0
      %v5803 = vadd.f32 %v5644, %v5802
      %5804 = vmatprep.mubr.f32.mxu0 %v5655
      %5805 = vmatmul.mubr.f32.gmra.mxu0 %v5529
      %v5806 = vpop.f32.mrf.mxu0
      %v5807 = vadd.f32 %v5649, %v5806
      %v5808 = vpop.f32.mrf.mxu0
      %v5809 = vadd.f32 %v5649, %v5808
      %5810 = vdwg.mxu0
      %v5811 = vmax.f32 %v5724, 0.0
      %v5812 = vmax.f32 %v5726, 0.0
      %v5813 = vmax.f32 %v5801, 0.0
      %v5814 = vmax.f32 %v5803, 0.0
      %v5815 = vmax.f32 %v5730, 0.0
      %v5816 = vmax.f32 %v5732, 0.0
      %v5817 = vmax.f32 %v5807, 0.0
      %v5818 = vmax.f32 %v5809, 0.0
      %v5819 = vld [vmem:[%s3] sm:$0xff]
      %v5820 = vld [vmem:[%s3 + $0x8] sm:$0xff]
      %v5821 = vld [vmem:[%s3 + $0x10] sm:$0xff]
      %v5822 = vld [vmem:[%s3 + $0x18] sm:$0xff]
      %v5823 = vld [vmem:[%s3 + $0x20] sm:$0xff]
      %v5824 = vld [vmem:[%s3 + $0x28] sm:$0xff]
      %v5825 = vld [vmem:[%s3 + $0x30] sm:$0xff]
      %v5826 = vld [vmem:[%s3 + $0x38] sm:$0xff]
      %v5827 = vld [vmem:[%s3 + $0x40] sm:$0xff]
      %v5828 = vld [vmem:[%s3 + $0x48] sm:$0xff]
      %v5829 = vld [vmem:[%s3 + $0x50] sm:$0xff]
      %v5830 = vld [vmem:[%s3 + $0x58] sm:$0xff]
      %v5831 = vld [vmem:[%s3 + $0x60] sm:$0xff]
      %v5832 = vld [vmem:[%s3 + $0x68] sm:$0xff]
      %v5833 = vld [vmem:[%s3 + $0x70] sm:$0xff]
      %v5834 = vld [vmem:[%s3 + $0x78] sm:$0xff]
      %v5835 = vld [vmem:[%s3 + $0x80] sm:$0xff]
      %v5836 = vld [vmem:[%s3 + $0x88] sm:$0xff]
      %v5837 = vld [vmem:[%s3 + $0x90] sm:$0xff]
      %v5838 = vld [vmem:[%s3 + $0x98] sm:$0xff]
      %v5839 = vld [vmem:[%s3 + $0xa0] sm:$0xff]
      %v5840 = vld [vmem:[%s3 + $0xa8] sm:$0xff]
      %v5841 = vld [vmem:[%s3 + $0xb0] sm:$0xff]
      %v5842 = vld [vmem:[%s3 + $0xb8] sm:$0xff]
      %v5843 = vld [vmem:[%s3 + $0xc0] sm:$0xff]
      %v5844 = vld [vmem:[%s3 + $0xc8] sm:$0xff]
      %v5845 = vld [vmem:[%s3 + $0xd0] sm:$0xff]
      %v5846 = vld [vmem:[%s3 + $0xd8] sm:$0xff]
      %v5847 = vld [vmem:[%s3 + $0xe0] sm:$0xff]
      %v5848 = vld [vmem:[%s3 + $0xe8] sm:$0xff]
      %v5849 = vld [vmem:[%s3 + $0xf0] sm:$0xff]
      %v5850 = vld [vmem:[%s3 + $0xf8] sm:$0xff]
      %v5851 = vld [vmem:[%s3 + $0x100] sm:$0xff]
      %v5852 = vld [vmem:[%s3 + $0x108] sm:$0xff]
      %v5853 = vld [vmem:[%s3 + $0x110] sm:$0xff]
      %v5854 = vld [vmem:[%s3 + $0x118] sm:$0xff]
      %v5855 = vld [vmem:[%s3 + $0x120] sm:$0xff]
      %v5856 = vld [vmem:[%s3 + $0x128] sm:$0xff]
      %v5857 = vld [vmem:[%s3 + $0x130] sm:$0xff]
      %v5858 = vld [vmem:[%s3 + $0x138] sm:$0xff]
      %v5859 = vld [vmem:[%s3 + $0x140] sm:$0xff]
      %v5860 = vld [vmem:[%s3 + $0x148] sm:$0xff]
      %v5861 = vld [vmem:[%s3 + $0x150] sm:$0xff]
      %v5862 = vld [vmem:[%s3 + $0x158] sm:$0xff]
      %v5863 = vld [vmem:[%s3 + $0x160] sm:$0xff]
      %v5864 = vld [vmem:[%s3 + $0x168] sm:$0xff]
      %v5865 = vld [vmem:[%s3 + $0x170] sm:$0xff]
      %v5866 = vld [vmem:[%s3 + $0x178] sm:$0xff]
      %v5867 = vld [vmem:[%s3 + $0x180] sm:$0xff]
      %v5868 = vld [vmem:[%s3 + $0x188] sm:$0xff]
      %v5869 = vld [vmem:[%s3 + $0x190] sm:$0xff]
      %v5870 = vld [vmem:[%s3 + $0x198] sm:$0xff]
      %v5871 = vld [vmem:[%s3 + $0x1a0] sm:$0xff]
      %v5872 = vld [vmem:[%s3 + $0x1a8] sm:$0xff]
      %v5873 = vld [vmem:[%s3 + $0x1b0] sm:$0xff]
      %v5874 = vld [vmem:[%s3 + $0x1b8] sm:$0xff]
      %v5875 = vld [vmem:[%s3 + $0x1c0] sm:$0xff]
      %v5876 = vld [vmem:[%s3 + $0x1c8] sm:$0xff]
      %v5877 = vld [vmem:[%s3 + $0x1d0] sm:$0xff]
      %v5878 = vld [vmem:[%s3 + $0x1d8] sm:$0xff]
      %v5879 = vld [vmem:[%s3 + $0x1e0] sm:$0xff]
      %v5880 = vld [vmem:[%s3 + $0x1e8] sm:$0xff]
      %v5881 = vld [vmem:[%s3 + $0x1f0] sm:$0xff]
      %v5882 = vld [vmem:[%s3 + $0x1f8] sm:$0xff]
      %5883 = vmatprep.subr.mxu0 0.0
      %5884 = vmatpush1.msra.mxu0 %v5834
      %5885 = vmatprep.subr.mxu0 0.0
      %5886 = vmatpush1.msra.mxu0 %v5833
      %5887 = vmatprep.subr.mxu0 0.0
      %5888 = vmatpush1.msra.mxu0 %v5832
      %5889 = vmatprep.subr.mxu0 0.0
      %5890 = vmatpush1.msra.mxu0 %v5831
      %5891 = vmatprep.subr.mxu0 0.0
      %5892 = vmatpush1.msra.mxu0 %v5830
      %5893 = vmatprep.subr.mxu0 0.0
      %5894 = vmatpush1.msra.mxu0 %v5829
      %5895 = vmatprep.subr.mxu0 0.0
      %5896 = vmatpush1.msra.mxu0 %v5828
      %5897 = vmatprep.subr.mxu0 0.0
      %5898 = vmatpush1.msra.mxu0 %v5827
      %5899 = vmatprep.subr.mxu0 0.0
      %5900 = vmatpush1.msra.mxu0 %v5826
      %5901 = vmatprep.subr.mxu0 0.0
      %5902 = vmatpush1.msra.mxu0 %v5825
      %5903 = vmatprep.subr.mxu0 0.0
      %5904 = vmatpush1.msra.mxu0 %v5824
      %5905 = vmatprep.subr.mxu0 0.0
      %5906 = vmatpush1.msra.mxu0 %v5823
      %5907 = vmatprep.subr.mxu0 0.0
      %5908 = vmatpush1.msra.mxu0 %v5822
      %5909 = vmatprep.subr.mxu0 0.0
      %5910 = vmatpush1.msra.mxu0 %v5821
      %5911 = vmatprep.subr.mxu0 0.0
      %5912 = vmatpush1.msra.mxu0 %v5820
      %5913 = vmatprep.subr.mxu0 0.0
      %5914 = vmatpush1.msra.mxu0 %v5819
      %5915 = vmatprep.subr.mxu0 0.0
      %5916 = vmatpush2.msra.mxu0 %v5850
      %5917 = vmatprep.subr.mxu0 0.0
      %5918 = vmatpush2.msra.mxu0 %v5849
      %5919 = vmatprep.subr.mxu0 0.0
      %5920 = vmatpush2.msra.mxu0 %v5848
      %5921 = vmatprep.subr.mxu0 0.0
      %5922 = vmatpush2.msra.mxu0 %v5847
      %5923 = vmatprep.subr.mxu0 0.0
      %5924 = vmatpush2.msra.mxu0 %v5846
      %5925 = vmatprep.subr.mxu0 0.0
      %5926 = vmatpush2.msra.mxu0 %v5845
      %5927 = vmatprep.subr.mxu0 0.0
      %5928 = vmatpush2.msra.mxu0 %v5844
      %5929 = vmatprep.subr.mxu0 0.0
      %5930 = vmatpush2.msra.mxu0 %v5843
      %5931 = vmatprep.subr.mxu0 0.0
      %5932 = vmatpush2.msra.mxu0 %v5842
      %5933 = vmatprep.subr.mxu0 0.0
      %5934 = vmatpush2.msra.mxu0 %v5841
      %5935 = vmatprep.subr.mxu0 0.0
      %5936 = vmatpush2.msra.mxu0 %v5840
      %5937 = vmatprep.subr.mxu0 0.0
      %5938 = vmatpush2.msra.mxu0 %v5839
      %5939 = vmatprep.subr.mxu0 0.0
      %5940 = vmatpush2.msra.mxu0 %v5838
      %5941 = vmatprep.subr.mxu0 0.0
      %5942 = vmatpush2.msra.mxu0 %v5837
      %5943 = vmatprep.subr.mxu0 0.0
      %5944 = vmatpush2.msra.mxu0 %v5836
      %5945 = vmatprep.subr.mxu0 0.0
      %5946 = vmatpush2.msra.mxu0 %v5835
      %5947 = vmatprep.mubr.f32.mxu0 %v5812
      %5948 = vmatmul.mubr.f32.gmra.mxu0 %v5811
      %v5949 = vpop.f32.mrf.mxu0
      %v5950 = vadd.f32 0.0, %v5949
      %v5951 = vpop.f32.mrf.mxu0
      %5952 = vmatprep.mubr.f32.mxu0 %v5816
      %5953 = vmatmul.mubr.f32.gmra.mxu0 %v5815
      %v5954 = vpop.f32.mrf.mxu0
      %v5955 = vadd.f32 0.0, %v5954
      %v5956 = vpop.f32.mrf.mxu0
      %5957 = vdwg.mxu0
      %5958 = vmatprep.subr.mxu0 0.0
      %5959 = vmatpush1.msra.mxu0 %v5866
      %5960 = vmatprep.subr.mxu0 0.0
      %5961 = vmatpush1.msra.mxu0 %v5865
      %5962 = vmatprep.subr.mxu0 0.0
      %5963 = vmatpush1.msra.mxu0 %v5864
      %5964 = vmatprep.subr.mxu0 0.0
      %5965 = vmatpush1.msra.mxu0 %v5863
      %5966 = vmatprep.subr.mxu0 0.0
      %5967 = vmatpush1.msra.mxu0 %v5862
      %5968 = vmatprep.subr.mxu0 0.0
      %5969 = vmatpush1.msra.mxu0 %v5861
      %5970 = vmatprep.subr.mxu0 0.0
      %5971 = vmatpush1.msra.mxu0 %v5860
      %5972 = vmatprep.subr.mxu0 0.0
      %5973 = vmatpush1.msra.mxu0 %v5859
      %5974 = vmatprep.subr.mxu0 0.0
      %5975 = vmatpush1.msra.mxu0 %v5858
      %5976 = vmatprep.subr.mxu0 0.0
      %5977 = vmatpush1.msra.mxu0 %v5857
      %5978 = vmatprep.subr.mxu0 0.0
      %5979 = vmatpush1.msra.mxu0 %v5856
      %5980 = vmatprep.subr.mxu0 0.0
      %5981 = vmatpush1.msra.mxu0 %v5855
      %5982 = vmatprep.subr.mxu0 0.0
      %5983 = vmatpush1.msra.mxu0 %v5854
      %5984 = vmatprep.subr.mxu0 0.0
      %5985 = vmatpush1.msra.mxu0 %v5853
      %5986 = vmatprep.subr.mxu0 0.0
      %5987 = vmatpush1.msra.mxu0 %v5852
      %5988 = vmatprep.subr.mxu0 0.0
      %5989 = vmatpush1.msra.mxu0 %v5851
      %5990 = vmatprep.subr.mxu0 0.0
      %5991 = vmatpush2.msra.mxu0 %v5882
      %5992 = vmatprep.subr.mxu0 0.0
      %5993 = vmatpush2.msra.mxu0 %v5881
      %5994 = vmatprep.subr.mxu0 0.0
      %5995 = vmatpush2.msra.mxu0 %v5880
      %5996 = vmatprep.subr.mxu0 0.0
      %5997 = vmatpush2.msra.mxu0 %v5879
      %5998 = vmatprep.subr.mxu0 0.0
      %5999 = vmatpush2.msra.mxu0 %v5878
      %6000 = vmatprep.subr.mxu0 0.0
      %6001 = vmatpush2.msra.mxu0 %v5877
      %6002 = vmatprep.subr.mxu0 0.0
      %6003 = vmatpush2.msra.mxu0 %v5876
      %6004 = vmatprep.subr.mxu0 0.0
      %6005 = vmatpush2.msra.mxu0 %v5875
      %6006 = vmatprep.subr.mxu0 0.0
      %6007 = vmatpush2.msra.mxu0 %v5874
      %6008 = vmatprep.subr.mxu0 0.0
      %6009 = vmatpush2.msra.mxu0 %v5873
      %6010 = vmatprep.subr.mxu0 0.0
      %6011 = vmatpush2.msra.mxu0 %v5872
      %6012 = vmatprep.subr.mxu0 0.0
      %6013 = vmatpush2.msra.mxu0 %v5871
      %6014 = vmatprep.subr.mxu0 0.0
      %6015 = vmatpush2.msra.mxu0 %v5870
      %6016 = vmatprep.subr.mxu0 0.0
      %6017 = vmatpush2.msra.mxu0 %v5869
      %6018 = vmatprep.subr.mxu0 0.0
      %6019 = vmatpush2.msra.mxu0 %v5868
      %6020 = vmatprep.subr.mxu0 0.0
      %6021 = vmatpush2.msra.mxu0 %v5867
      %6022 = vmatprep.mubr.f32.mxu0 %v5814
      %6023 = vmatmul.mubr.f32.gmra.mxu0 %v5813
      %v6024 = vpop.f32.mrf.mxu0
      %v6025 = vadd.f32 %v5950, %v6024
      %v6026 = vpop.f32.mrf.mxu0
      %6027 = vmatprep.mubr.f32.mxu0 %v5818
      %6028 = vmatmul.mubr.f32.gmra.mxu0 %v5817
      %v6029 = vpop.f32.mrf.mxu0
      %v6030 = vadd.f32 %v5955, %v6029
      %v6031 = vpop.f32.mrf.mxu0
      %6032 = vdwg.mxu0
      %6033 = vrot.lane.b32.xlu0 %v6025, 41
      %v6034 = vpop.permute.xlu0 %6033
      %6035 = vrot.lane.b32.xlu0 %v6030, 41
      %v6036 = vpop.permute.xlu0 %6035
      %v6037 = vld [vmem:[%s2] sm:$0x1]
      %v6038 = vlaneseq
      %v6039 = vshrl.u32 %v6038, 7
      %v6040 = vsub.s32 0, %v6039
      %v6041 = vrot.slane %v6037, %v6040
      %v6042 = vmul.f32 %v6034, %v6041
      %v6043 = vmul.f32 %v6036, %v6041
      %6044 = vst [vmem:[#allocation3] sm:$0xff] %v6042
      %6045 = vst [vmem:[#allocation3 + $0x8] sm:$0xff] %v6043
      %6046 = vrot.lane.b32.xlu0 %v6025, 40
      %v6047 = vpop.permute.xlu0 %6046
      %6048 = vrot.lane.b32.xlu0 %v6030, 40
      %v6049 = vpop.permute.xlu0 %6048
      %v6050 = vld [vmem:[%s2 + $0x1] sm:$0x1]
      %v6051 = vlaneseq
      %v6052 = vshrl.u32 %v6051, 7
      %v6053 = vsub.s32 0, %v6052
      %v6054 = vrot.slane %v6050, %v6053
      %v6055 = vmul.f32 %v6047, %v6054
      %v6056 = vmul.f32 %v6049, %v6054
      %6057 = vst [vmem:[#allocation3 + $0x10] sm:$0xff] %v6055
      %6058 = vst [vmem:[#allocation3 + $0x18] sm:$0xff] %v6056
      %6059 = vrot.lane.b32.xlu0 %v6025, 39
      %v6060 = vpop.permute.xlu0 %6059
      %6061 = vrot.lane.b32.xlu0 %v6030, 39
      %v6062 = vpop.permute.xlu0 %6061
      %v6063 = vld [vmem:[%s2 + $0x2] sm:$0x1]
      %v6064 = vlaneseq
      %v6065 = vshrl.u32 %v6064, 7
      %v6066 = vsub.s32 0, %v6065
      %v6067 = vrot.slane %v6063, %v6066
      %v6068 = vmul.f32 %v6060, %v6067
      %v6069 = vmul.f32 %v6062, %v6067
      %6070 = vst [vmem:[#allocation3 + $0x20] sm:$0xff] %v6068
      %6071 = vst [vmem:[#allocation3 + $0x28] sm:$0xff] %v6069
      %6072 = vrot.lane.b32.xlu0 %v6025, 33
      %v6073 = vpop.permute.xlu0 %6072
      %6074 = vrot.lane.b32.xlu0 %v6030, 33
      %v6075 = vpop.permute.xlu0 %6074
      %v6076 = vld [vmem:[%s2 + $0x3] sm:$0x1]
      %v6077 = vlaneseq
      %v6078 = vshrl.u32 %v6077, 7
      %v6079 = vsub.s32 0, %v6078
      %v6080 = vrot.slane %v6076, %v6079
      %v6081 = vmul.f32 %v6073, %v6080
      %v6082 = vmul.f32 %v6075, %v6080
      %6083 = vst [vmem:[#allocation3 + $0x30] sm:$0xff] %v6081
      %6084 = vst [vmem:[#allocation3 + $0x38] sm:$0xff] %v6082
      %6085 = vrot.lane.b32.xlu0 %v6025, 32
      %v6086 = vpop.permute.xlu0 %6085
      %6087 = vrot.lane.b32.xlu0 %v6030, 32
      %v6088 = vpop.permute.xlu0 %6087
      %v6089 = vld [vmem:[%s2 + $0x4] sm:$0x1]
      %v6090 = vlaneseq
      %v6091 = vshrl.u32 %v6090, 7
      %v6092 = vsub.s32 0, %v6091
      %v6093 = vrot.slane %v6089, %v6092
      %v6094 = vmul.f32 %v6086, %v6093
      %v6095 = vmul.f32 %v6088, %v6093
      %6096 = vst [vmem:[#allocation3 + $0x40] sm:$0xff] %v6094
      %6097 = vst [vmem:[#allocation3 + $0x48] sm:$0xff] %v6095
      %6098 = vrot.lane.b32.xlu0 %v6025, 31
      %v6099 = vpop.permute.xlu0 %6098
      %6100 = vrot.lane.b32.xlu0 %v6030, 31
      %v6101 = vpop.permute.xlu0 %6100
      %v6102 = vld [vmem:[%s2 + $0x5] sm:$0x1]
      %v6103 = vlaneseq
      %v6104 = vshrl.u32 %v6103, 7
      %v6105 = vsub.s32 0, %v6104
      %v6106 = vrot.slane %v6102, %v6105
      %v6107 = vmul.f32 %v6099, %v6106
      %v6108 = vmul.f32 %v6101, %v6106
      %6109 = vst [vmem:[#allocation3 + $0x50] sm:$0xff] %v6107
      %6110 = vst [vmem:[#allocation3 + $0x58] sm:$0xff] %v6108
      %6111 = vrot.lane.b32.xlu0 %v6025, 25
      %v6112 = vpop.permute.xlu0 %6111
      %6113 = vrot.lane.b32.xlu0 %v6030, 25
      %v6114 = vpop.permute.xlu0 %6113
      %v6115 = vld [vmem:[%s2 + $0x6] sm:$0x1]
      %v6116 = vlaneseq
      %v6117 = vshrl.u32 %v6116, 7
      %v6118 = vsub.s32 0, %v6117
      %v6119 = vrot.slane %v6115, %v6118
      %v6120 = vmul.f32 %v6112, %v6119
      %v6121 = vmul.f32 %v6114, %v6119
      %6122 = vst [vmem:[#allocation3 + $0x60] sm:$0xff] %v6120
      %6123 = vst [vmem:[#allocation3 + $0x68] sm:$0xff] %v6121
      %6124 = vrot.lane.b32.xlu0 %v6025, 24
      %v6125 = vpop.permute.xlu0 %6124
      %6126 = vrot.lane.b32.xlu0 %v6030, 24
      %v6127 = vpop.permute.xlu0 %6126
      %v6128 = vld [vmem:[%s2 + $0x7] sm:$0x1]
      %v6129 = vlaneseq
      %v6130 = vshrl.u32 %v6129, 7
      %v6131 = vsub.s32 0, %v6130
      %v6132 = vrot.slane %v6128, %v6131
      %v6133 = vmul.f32 %v6125, %v6132
      %v6134 = vmul.f32 %v6127, %v6132
      %6135 = vst [vmem:[#allocation3 + $0x70] sm:$0xff] %v6133
      %6136 = vst [vmem:[#allocation3 + $0x78] sm:$0xff] %v6134
      %6137 = vrot.lane.b32.xlu0 %v6025, 23
      %v6138 = vpop.permute.xlu0 %6137
      %6139 = vrot.lane.b32.xlu0 %v6030, 23
      %v6140 = vpop.permute.xlu0 %6139
      %v6141 = vld [vmem:[%s2 + $0x8] sm:$0x1]
      %v6142 = vlaneseq
      %v6143 = vshrl.u32 %v6142, 7
      %v6144 = vsub.s32 0, %v6143
      %v6145 = vrot.slane %v6141, %v6144
      %v6146 = vmul.f32 %v6138, %v6145
      %v6147 = vmul.f32 %v6140, %v6145
      %6148 = vst [vmem:[#allocation3 + $0x80] sm:$0xff] %v6146
      %6149 = vst [vmem:[#allocation3 + $0x88] sm:$0xff] %v6147
      %6150 = vrot.lane.b32.xlu0 %v6025, 9
      %v6151 = vpop.permute.xlu0 %6150
      %6152 = vrot.lane.b32.xlu0 %v6030, 9
      %v6153 = vpop.permute.xlu0 %6152
      %v6154 = vld [vmem:[%s2 + $0x9] sm:$0x1]
      %v6155 = vlaneseq
      %v6156 = vshrl.u32 %v6155, 7
      %v6157 = vsub.s32 0, %v6156
      %v6158 = vrot.slane %v6154, %v6157
      %v6159 = vmul.f32 %v6151, %v6158
      %v6160 = vmul.f32 %v6153, %v6158
      %6161 = vst [vmem:[#allocation3 + $0x90] sm:$0xff] %v6159
      %6162 = vst [vmem:[#allocation3 + $0x98] sm:$0xff] %v6160
      %6163 = vrot.lane.b32.xlu0 %v6025, 8
      %v6164 = vpop.permute.xlu0 %6163
      %6165 = vrot.lane.b32.xlu0 %v6030, 8
      %v6166 = vpop.permute.xlu0 %6165
      %v6167 = vld [vmem:[%s2 + $0xa] sm:$0x1]
      %v6168 = vlaneseq
      %v6169 = vshrl.u32 %v6168, 7
      %v6170 = vsub.s32 0, %v6169
      %v6171 = vrot.slane %v6167, %v6170
      %v6172 = vmul.f32 %v6164, %v6171
      %v6173 = vmul.f32 %v6166, %v6171
      %6174 = vst [vmem:[#allocation3 + $0xa0] sm:$0xff] %v6172
      %6175 = vst [vmem:[#allocation3 + $0xa8] sm:$0xff] %v6173
      %6176 = vrot.lane.b32.xlu0 %v6025, 7
      %v6177 = vpop.permute.xlu0 %6176
      %6178 = vrot.lane.b32.xlu0 %v6030, 7
      %v6179 = vpop.permute.xlu0 %6178
      %v6180 = vld [vmem:[%s2 + $0xb] sm:$0x1]
      %v6181 = vlaneseq
      %v6182 = vshrl.u32 %v6181, 7
      %v6183 = vsub.s32 0, %v6182
      %v6184 = vrot.slane %v6180, %v6183
      %v6185 = vmul.f32 %v6177, %v6184
      %v6186 = vmul.f32 %v6179, %v6184
      %6187 = vst [vmem:[#allocation3 + $0xb0] sm:$0xff] %v6185
      %6188 = vst [vmem:[#allocation3 + $0xb8] sm:$0xff] %v6186
      %6189 = vrot.lane.b32.xlu0 %v6025, 1
      %v6190 = vpop.permute.xlu0 %6189
      %6191 = vrot.lane.b32.xlu0 %v6030, 1
      %v6192 = vpop.permute.xlu0 %6191
      %v6193 = vld [vmem:[%s2 + $0xc] sm:$0x1]
      %v6194 = vlaneseq
      %v6195 = vshrl.u32 %v6194, 7
      %v6196 = vsub.s32 0, %v6195
      %v6197 = vrot.slane %v6193, %v6196
      %v6198 = vmul.f32 %v6190, %v6197
      %v6199 = vmul.f32 %v6192, %v6197
      %6200 = vst [vmem:[#allocation3 + $0xc0] sm:$0xff] %v6198
      %6201 = vst [vmem:[#allocation3 + $0xc8] sm:$0xff] %v6199
      %6202 = vst [vmem:[#allocation3 + $0xd0] sm:$0xff] %v6025
      %6203 = vst [vmem:[#allocation3 + $0xd8] sm:$0xff] %v6030
      %6204 = vrot.lane.b32.xlu0 %v6025, 127
      %v6205 = vpop.permute.xlu0 %6204
      %6206 = vrot.lane.b32.xlu0 %v6030, 127
      %v6207 = vpop.permute.xlu0 %6206
      %v6208 = vld [vmem:[%s2 + $0xe] sm:$0x1]
      %v6209 = vlaneseq
      %v6210 = vshrl.u32 %v6209, 7
      %v6211 = vsub.s32 0, %v6210
      %v6212 = vrot.slane %v6208, %v6211
      %v6213 = vmul.f32 %v6205, %v6212
      %v6214 = vmul.f32 %v6207, %v6212
      %6215 = vst [vmem:[#allocation3 + $0xe0] sm:$0xff] %v6213
      %6216 = vst [vmem:[#allocation3 + $0xe8] sm:$0xff] %v6214
      %6217 = vrot.lane.b32.xlu0 %v6025, 121
      %v6218 = vpop.permute.xlu0 %6217
      %6219 = vrot.lane.b32.xlu0 %v6030, 121
      %v6220 = vpop.permute.xlu0 %6219
      %v6221 = vld [vmem:[%s2 + $0xf] sm:$0x1]
      %v6222 = vlaneseq
      %v6223 = vshrl.u32 %v6222, 7
      %v6224 = vsub.s32 0, %v6223
      %v6225 = vrot.slane %v6221, %v6224
      %v6226 = vmul.f32 %v6218, %v6225
      %v6227 = vmul.f32 %v6220, %v6225
      %6228 = vst [vmem:[#allocation3 + $0xf0] sm:$0xff] %v6226
      %6229 = vst [vmem:[#allocation3 + $0xf8] sm:$0xff] %v6227
      %6230 = vrot.lane.b32.xlu0 %v6025, 120
      %v6231 = vpop.permute.xlu0 %6230
      %6232 = vrot.lane.b32.xlu0 %v6030, 120
      %v6233 = vpop.permute.xlu0 %6232
      %v6234 = vld [vmem:[%s2 + $0x10] sm:$0x1]
      %v6235 = vlaneseq
      %v6236 = vshrl.u32 %v6235, 7
      %v6237 = vsub.s32 0, %v6236
      %v6238 = vrot.slane %v6234, %v6237
      %v6239 = vmul.f32 %v6231, %v6238
      %v6240 = vmul.f32 %v6233, %v6238
      %6241 = vst [vmem:[#allocation3 + $0x100] sm:$0xff] %v6239
      %6242 = vst [vmem:[#allocation3 + $0x108] sm:$0xff] %v6240
      %6243 = vrot.lane.b32.xlu0 %v6025, 119
      %v6244 = vpop.permute.xlu0 %6243
      %6245 = vrot.lane.b32.xlu0 %v6030, 119
      %v6246 = vpop.permute.xlu0 %6245
      %v6247 = vld [vmem:[%s2 + $0x11] sm:$0x1]
      %v6248 = vlaneseq
      %v6249 = vshrl.u32 %v6248, 7
      %v6250 = vsub.s32 0, %v6249
      %v6251 = vrot.slane %v6247, %v6250
      %v6252 = vmul.f32 %v6244, %v6251
      %v6253 = vmul.f32 %v6246, %v6251
      %6254 = vst [vmem:[#allocation3 + $0x110] sm:$0xff] %v6252
      %6255 = vst [vmem:[#allocation3 + $0x118] sm:$0xff] %v6253
      %6256 = vrot.lane.b32.xlu0 %v6025, 105
      %v6257 = vpop.permute.xlu0 %6256
      %6258 = vrot.lane.b32.xlu0 %v6030, 105
      %v6259 = vpop.permute.xlu0 %6258
      %v6260 = vld [vmem:[%s2 + $0x12] sm:$0x1]
      %v6261 = vlaneseq
      %v6262 = vshrl.u32 %v6261, 7
      %v6263 = vsub.s32 0, %v6262
      %v6264 = vrot.slane %v6260, %v6263
      %v6265 = vmul.f32 %v6257, %v6264
      %v6266 = vmul.f32 %v6259, %v6264
      %6267 = vst [vmem:[#allocation3 + $0x120] sm:$0xff] %v6265
      %6268 = vst [vmem:[#allocation3 + $0x128] sm:$0xff] %v6266
      %6269 = vrot.lane.b32.xlu0 %v6025, 104
      %v6270 = vpop.permute.xlu0 %6269
      %6271 = vrot.lane.b32.xlu0 %v6030, 104
      %v6272 = vpop.permute.xlu0 %6271
      %v6273 = vld [vmem:[%s2 + $0x13] sm:$0x1]
      %v6274 = vlaneseq
      %v6275 = vshrl.u32 %v6274, 7
      %v6276 = vsub.s32 0, %v6275
      %v6277 = vrot.slane %v6273, %v6276
      %v6278 = vmul.f32 %v6270, %v6277
      %v6279 = vmul.f32 %v6272, %v6277
      %6280 = vst [vmem:[#allocation3 + $0x130] sm:$0xff] %v6278
      %6281 = vst [vmem:[#allocation3 + $0x138] sm:$0xff] %v6279
      %6282 = vrot.lane.b32.xlu0 %v6025, 103
      %v6283 = vpop.permute.xlu0 %6282
      %6284 = vrot.lane.b32.xlu0 %v6030, 103
      %v6285 = vpop.permute.xlu0 %6284
      %v6286 = vld [vmem:[%s2 + $0x14] sm:$0x1]
      %v6287 = vlaneseq
      %v6288 = vshrl.u32 %v6287, 7
      %v6289 = vsub.s32 0, %v6288
      %v6290 = vrot.slane %v6286, %v6289
      %v6291 = vmul.f32 %v6283, %v6290
      %v6292 = vmul.f32 %v6285, %v6290
      %6293 = vst [vmem:[#allocation3 + $0x140] sm:$0xff] %v6291
      %6294 = vst [vmem:[#allocation3 + $0x148] sm:$0xff] %v6292
      %6295 = vrot.lane.b32.xlu0 %v6025, 97
      %v6296 = vpop.permute.xlu0 %6295
      %6297 = vrot.lane.b32.xlu0 %v6030, 97
      %v6298 = vpop.permute.xlu0 %6297
      %v6299 = vld [vmem:[%s2 + $0x15] sm:$0x1]
      %v6300 = vlaneseq
      %v6301 = vshrl.u32 %v6300, 7
      %v6302 = vsub.s32 0, %v6301
      %v6303 = vrot.slane %v6299, %v6302
      %v6304 = vmul.f32 %v6296, %v6303
      %v6305 = vmul.f32 %v6298, %v6303
      %6306 = vst [vmem:[#allocation3 + $0x150] sm:$0xff] %v6304
      %6307 = vst [vmem:[#allocation3 + $0x158] sm:$0xff] %v6305
      %6308 = vrot.lane.b32.xlu0 %v6025, 96
      %v6309 = vpop.permute.xlu0 %6308
      %6310 = vrot.lane.b32.xlu0 %v6030, 96
      %v6311 = vpop.permute.xlu0 %6310
      %v6312 = vld [vmem:[%s2 + $0x16] sm:$0x1]
      %v6313 = vlaneseq
      %v6314 = vshrl.u32 %v6313, 7
      %v6315 = vsub.s32 0, %v6314
      %v6316 = vrot.slane %v6312, %v6315
      %v6317 = vmul.f32 %v6309, %v6316
      %v6318 = vmul.f32 %v6311, %v6316
      %6319 = vst [vmem:[#allocation3 + $0x160] sm:$0xff] %v6317
      %6320 = vst [vmem:[#allocation3 + $0x168] sm:$0xff] %v6318
      %6321 = vrot.lane.b32.xlu0 %v6025, 95
      %v6322 = vpop.permute.xlu0 %6321
      %6323 = vrot.lane.b32.xlu0 %v6030, 95
      %v6324 = vpop.permute.xlu0 %6323
      %v6325 = vld [vmem:[%s2 + $0x17] sm:$0x1]
      %v6326 = vlaneseq
      %v6327 = vshrl.u32 %v6326, 7
      %v6328 = vsub.s32 0, %v6327
      %v6329 = vrot.slane %v6325, %v6328
      %v6330 = vmul.f32 %v6322, %v6329
      %v6331 = vmul.f32 %v6324, %v6329
      %6332 = vst [vmem:[#allocation3 + $0x170] sm:$0xff] %v6330
      %6333 = vst [vmem:[#allocation3 + $0x178] sm:$0xff] %v6331
      %6334 = vrot.lane.b32.xlu0 %v6025, 89
      %v6335 = vpop.permute.xlu0 %6334
      %6336 = vrot.lane.b32.xlu0 %v6030, 89
      %v6337 = vpop.permute.xlu0 %6336
      %v6338 = vld [vmem:[%s2 + $0x18] sm:$0x1]
      %v6339 = vlaneseq
      %v6340 = vshrl.u32 %v6339, 7
      %v6341 = vsub.s32 0, %v6340
      %v6342 = vrot.slane %v6338, %v6341
      %v6343 = vmul.f32 %v6335, %v6342
      %v6344 = vmul.f32 %v6337, %v6342
      %6345 = vst [vmem:[#allocation3 + $0x180] sm:$0xff] %v6343
      %6346 = vst [vmem:[#allocation3 + $0x188] sm:$0xff] %v6344
      %6347 = vrot.lane.b32.xlu0 %v6025, 88
      %v6348 = vpop.permute.xlu0 %6347
      %6349 = vrot.lane.b32.xlu0 %v6030, 88
      %v6350 = vpop.permute.xlu0 %6349
      %v6351 = vld [vmem:[%s2 + $0x19] sm:$0x1]
      %v6352 = vlaneseq
      %v6353 = vshrl.u32 %v6352, 7
      %v6354 = vsub.s32 0, %v6353
      %v6355 = vrot.slane %v6351, %v6354
      %v6356 = vmul.f32 %v6348, %v6355
      %v6357 = vmul.f32 %v6350, %v6355
      %6358 = vst [vmem:[#allocation3 + $0x190] sm:$0xff] %v6356
      %6359 = vst [vmem:[#allocation3 + $0x198] sm:$0xff] %v6357
      %6360 = vrot.lane.b32.xlu0 %v6025, 87
      %v6361 = vpop.permute.xlu0 %6360
      %6362 = vrot.lane.b32.xlu0 %v6030, 87
      %v6363 = vpop.permute.xlu0 %6362
      %v6364 = vld [vmem:[%s2 + $0x1a] sm:$0x1]
      %v6365 = vlaneseq
      %v6366 = vshrl.u32 %v6365, 7
      %v6367 = vsub.s32 0, %v6366
      %v6368 = vrot.slane %v6364, %v6367
      %v6369 = vmul.f32 %v6361, %v6368
      %v6370 = vmul.f32 %v6363, %v6368
      %6371 = vst [vmem:[#allocation3 + $0x1a0] sm:$0xff] %v6369
      %6372 = vst [vmem:[#allocation3 + $0x1a8] sm:$0xff] %v6370
      %v6373 = vld [vmem:[%s14] sm:$0xff]
      %v6374 = vld [vmem:[%s14 + $0x8] sm:$0xff]
      %v6375 = vld [vmem:[%s14 + $0x10] sm:$0xff]
      %v6376 = vld [vmem:[%s14 + $0x18] sm:$0xff]
      %v6377 = vld [vmem:[%s14 + $0x20] sm:$0xff]
      %v6378 = vld [vmem:[%s14 + $0x28] sm:$0xff]
      %v6379 = vld [vmem:[%s14 + $0x30] sm:$0xff]
      %v6380 = vld [vmem:[%s14 + $0x38] sm:$0xff]
      %v6381 = vld [vmem:[#allocation3] sm:$0xff]
      %v6382 = vld [vmem:[#allocation3 + $0x8] sm:$0xff]
      %v6383 = vld [vmem:[#allocation3 + $0x10] sm:$0xff]
      %v6384 = vld [vmem:[#allocation3 + $0x18] sm:$0xff]
      %v6385 = vld [vmem:[#allocation3 + $0x20] sm:$0xff]
      %v6386 = vld [vmem:[#allocation3 + $0x28] sm:$0xff]
      %v6387 = vld [vmem:[#allocation3 + $0x30] sm:$0xff]
      %v6388 = vld [vmem:[#allocation3 + $0x38] sm:$0xff]
      %v6389 = vld [vmem:[#allocation3 + $0x40] sm:$0xff]
      %v6390 = vld [vmem:[#allocation3 + $0x48] sm:$0xff]
      %v6391 = vld [vmem:[#allocation3 + $0x50] sm:$0xff]
      %v6392 = vld [vmem:[#allocation3 + $0x58] sm:$0xff]
      %v6393 = vld [vmem:[#allocation3 + $0x60] sm:$0xff]
      %v6394 = vld [vmem:[#allocation3 + $0x68] sm:$0xff]
      %v6395 = vld [vmem:[#allocation3 + $0x70] sm:$0xff]
      %v6396 = vld [vmem:[#allocation3 + $0x78] sm:$0xff]
      %v6397 = vld [vmem:[#allocation3 + $0x80] sm:$0xff]
      %v6398 = vld [vmem:[#allocation3 + $0x88] sm:$0xff]
      %v6399 = vld [vmem:[#allocation3 + $0x90] sm:$0xff]
      %v6400 = vld [vmem:[#allocation3 + $0x98] sm:$0xff]
      %v6401 = vld [vmem:[#allocation3 + $0xa0] sm:$0xff]
      %v6402 = vld [vmem:[#allocation3 + $0xa8] sm:$0xff]
      %v6403 = vld [vmem:[#allocation3 + $0xb0] sm:$0xff]
      %v6404 = vld [vmem:[#allocation3 + $0xb8] sm:$0xff]
      %v6405 = vld [vmem:[#allocation3 + $0xc0] sm:$0xff]
      %v6406 = vld [vmem:[#allocation3 + $0xc8] sm:$0xff]
      %v6407 = vld [vmem:[#allocation3 + $0xd0] sm:$0xff]
      %v6408 = vld [vmem:[#allocation3 + $0xd8] sm:$0xff]
      %v6409 = vld [vmem:[#allocation3 + $0xe0] sm:$0xff]
      %v6410 = vld [vmem:[#allocation3 + $0xe8] sm:$0xff]
      %v6411 = vld [vmem:[#allocation3 + $0xf0] sm:$0xff]
      %v6412 = vld [vmem:[#allocation3 + $0xf8] sm:$0xff]
      %v6413 = vld [vmem:[#allocation3 + $0x100] sm:$0xff]
      %v6414 = vld [vmem:[#allocation3 + $0x108] sm:$0xff]
      %v6415 = vld [vmem:[#allocation3 + $0x110] sm:$0xff]
      %v6416 = vld [vmem:[#allocation3 + $0x118] sm:$0xff]
      %v6417 = vld [vmem:[#allocation3 + $0x120] sm:$0xff]
      %v6418 = vld [vmem:[#allocation3 + $0x128] sm:$0xff]
      %v6419 = vld [vmem:[#allocation3 + $0x130] sm:$0xff]
      %v6420 = vld [vmem:[#allocation3 + $0x138] sm:$0xff]
      %v6421 = vld [vmem:[#allocation3 + $0x140] sm:$0xff]
      %v6422 = vld [vmem:[#allocation3 + $0x148] sm:$0xff]
      %v6423 = vld [vmem:[#allocation3 + $0x150] sm:$0xff]
      %v6424 = vld [vmem:[#allocation3 + $0x158] sm:$0xff]
      %v6425 = vld [vmem:[#allocation3 + $0x160] sm:$0xff]
      %v6426 = vld [vmem:[#allocation3 + $0x168] sm:$0xff]
      %v6427 = vld [vmem:[#allocation3 + $0x170] sm:$0xff]
      %v6428 = vld [vmem:[#allocation3 + $0x178] sm:$0xff]
      %v6429 = vld [vmem:[#allocation3 + $0x180] sm:$0xff]
      %v6430 = vld [vmem:[#allocation3 + $0x188] sm:$0xff]
      %v6431 = vld [vmem:[#allocation3 + $0x190] sm:$0xff]
      %v6432 = vld [vmem:[#allocation3 + $0x198] sm:$0xff]
      %v6433 = vld [vmem:[#allocation3 + $0x1a0] sm:$0xff]
      %v6434 = vld [vmem:[#allocation3 + $0x1a8] sm:$0xff]
      %v6435 = vld [vmem:[%s15] sm:$0xff]
      %v6436 = vld [vmem:[%s15 + $0x8] sm:$0xff]
      %6438 = vset.pattern.permute.xlu0 0
      %6439 = vperm.xlu0 %6438, %v6435
      %v6440 = vpop.permute.xlu0 %6439
      %6443 = vset.pattern.permute.xlu0 0
      %6444 = vperm.xlu0 %6443, %v6436
      %v6445 = vpop.permute.xlu0 %6444
      %vm6447 = vcmask 392192
      %v6449 = vsel %vm6447, %v6376, 0
      %v6452 = vsel %vm6447, %v6380, 0
      %6454 = vmatprep.subr.mxu0 0.0
      %6455 = vmatpush1.msra.mxu0 %v6396
      %6456 = vmatprep.subr.mxu0 0.0
      %6457 = vmatpush1.msra.mxu0 %v6395
      %6458 = vmatprep.subr.mxu0 0.0
      %6459 = vmatpush1.msra.mxu0 %v6394
      %6460 = vmatprep.subr.mxu0 0.0
      %6461 = vmatpush1.msra.mxu0 %v6393
      %6462 = vmatprep.subr.mxu0 0.0
      %6463 = vmatpush1.msra.mxu0 %v6392
      %6464 = vmatprep.subr.mxu0 0.0
      %6465 = vmatpush1.msra.mxu0 %v6391
      %6466 = vmatprep.subr.mxu0 0.0
      %6467 = vmatpush1.msra.mxu0 %v6390
      %6468 = vmatprep.subr.mxu0 0.0
      %6469 = vmatpush1.msra.mxu0 %v6389
      %6470 = vmatprep.subr.mxu0 0.0
      %6471 = vmatpush1.msra.mxu0 %v6388
      %6472 = vmatprep.subr.mxu0 0.0
      %6473 = vmatpush1.msra.mxu0 %v6387
      %6474 = vmatprep.subr.mxu0 0.0
      %6475 = vmatpush1.msra.mxu0 %v6386
      %6476 = vmatprep.subr.mxu0 0.0
      %6477 = vmatpush1.msra.mxu0 %v6385
      %6478 = vmatprep.subr.mxu0 0.0
      %6479 = vmatpush1.msra.mxu0 %v6384
      %6480 = vmatprep.subr.mxu0 0.0
      %6481 = vmatpush1.msra.mxu0 %v6383
      %6482 = vmatprep.subr.mxu0 0.0
      %6483 = vmatpush1.msra.mxu0 %v6382
      %6484 = vmatprep.subr.mxu0 0.0
      %6485 = vmatpush1.msra.mxu0 %v6381
      %6486 = vmatprep.subr.mxu0 0.0
      %6487 = vmatpush2.msra.mxu0 %v6412
      %6488 = vmatprep.subr.mxu0 0.0
      %6489 = vmatpush2.msra.mxu0 %v6411
      %6490 = vmatprep.subr.mxu0 0.0
      %6491 = vmatpush2.msra.mxu0 %v6410
      %6492 = vmatprep.subr.mxu0 0.0
      %6493 = vmatpush2.msra.mxu0 %v6409
      %6494 = vmatprep.subr.mxu0 0.0
      %6495 = vmatpush2.msra.mxu0 %v6408
      %6496 = vmatprep.subr.mxu0 0.0
      %6497 = vmatpush2.msra.mxu0 %v6407
      %6498 = vmatprep.subr.mxu0 0.0
      %6499 = vmatpush2.msra.mxu0 %v6406
      %6500 = vmatprep.subr.mxu0 0.0
      %6501 = vmatpush2.msra.mxu0 %v6405
      %6502 = vmatprep.subr.mxu0 0.0
      %6503 = vmatpush2.msra.mxu0 %v6404
      %6504 = vmatprep.subr.mxu0 0.0
      %6505 = vmatpush2.msra.mxu0 %v6403
      %6506 = vmatprep.subr.mxu0 0.0
      %6507 = vmatpush2.msra.mxu0 %v6402
      %6508 = vmatprep.subr.mxu0 0.0
      %6509 = vmatpush2.msra.mxu0 %v6401
      %6510 = vmatprep.subr.mxu0 0.0
      %6511 = vmatpush2.msra.mxu0 %v6400
      %6512 = vmatprep.subr.mxu0 0.0
      %6513 = vmatpush2.msra.mxu0 %v6399
      %6514 = vmatprep.subr.mxu0 0.0
      %6515 = vmatpush2.msra.mxu0 %v6398
      %6516 = vmatprep.subr.mxu0 0.0
      %6517 = vmatpush2.msra.mxu0 %v6397
      %6518 = vmatprep.mubr.f32.mxu0 %v6374
      %6519 = vmatmul.mubr.f32.gmra.mxu0 %v6373
      %v6520 = vpop.f32.mrf.mxu0
      %v6521 = vadd.f32 %v6440, %v6520
      %v6522 = vpop.f32.mrf.mxu0
      %6523 = vmatprep.mubr.f32.mxu0 %v6378
      %6524 = vmatmul.mubr.f32.gmra.mxu0 %v6377
      %v6525 = vpop.f32.mrf.mxu0
      %v6526 = vadd.f32 %v6445, %v6525
      %v6527 = vpop.f32.mrf.mxu0
      %6528 = vdwg.mxu0
      %6529 = vmatprep.subr.mxu0 0.0
      %6530 = vmatpush1.msra.mxu0 %v6428
      %6531 = vmatprep.subr.mxu0 0.0
      %6532 = vmatpush1.msra.mxu0 %v6427
      %6533 = vmatprep.subr.mxu0 0.0
      %6534 = vmatpush1.msra.mxu0 %v6426
      %6535 = vmatprep.subr.mxu0 0.0
      %6536 = vmatpush1.msra.mxu0 %v6425
      %6537 = vmatprep.subr.mxu0 0.0
      %6538 = vmatpush1.msra.mxu0 %v6424
      %6539 = vmatprep.subr.mxu0 0.0
      %6540 = vmatpush1.msra.mxu0 %v6423
      %6541 = vmatprep.subr.mxu0 0.0
      %6542 = vmatpush1.msra.mxu0 %v6422
      %6543 = vmatprep.subr.mxu0 0.0
      %6544 = vmatpush1.msra.mxu0 %v6421
      %6545 = vmatprep.subr.mxu0 0.0
      %6546 = vmatpush1.msra.mxu0 %v6420
      %6547 = vmatprep.subr.mxu0 0.0
      %6548 = vmatpush1.msra.mxu0 %v6419
      %6549 = vmatprep.subr.mxu0 0.0
      %6550 = vmatpush1.msra.mxu0 %v6418
      %6551 = vmatprep.subr.mxu0 0.0
      %6552 = vmatpush1.msra.mxu0 %v6417
      %6553 = vmatprep.subr.mxu0 0.0
      %6554 = vmatpush1.msra.mxu0 %v6416
      %6555 = vmatprep.subr.mxu0 0.0
      %6556 = vmatpush1.msra.mxu0 %v6415
      %6557 = vmatprep.subr.mxu0 0.0
      %6558 = vmatpush1.msra.mxu0 %v6414
      %6559 = vmatprep.subr.mxu0 0.0
      %6560 = vmatpush1.msra.mxu0 %v6413
      %6561 = vmatprep.subr.mxu0 0.0
      %6562 = vmatpush2.msra.mxu0 0.0
      %6563 = vmatprep.subr.mxu0 0.0
      %6564 = vmatpush2.msra.mxu0 0.0
      %6565 = vmatprep.subr.mxu0 0.0
      %6566 = vmatpush2.msra.mxu0 0.0
      %6567 = vmatprep.subr.mxu0 0.0
      %6568 = vmatpush2.msra.mxu0 0.0
      %6569 = vmatprep.subr.mxu0 0.0
      %6570 = vmatpush2.msra.mxu0 0.0
      %6571 = vmatprep.subr.mxu0 0.0
      %6572 = vmatpush2.msra.mxu0 0.0
      %6573 = vmatprep.subr.mxu0 0.0
      %6574 = vmatpush2.msra.mxu0 0.0
      %6575 = vmatprep.subr.mxu0 0.0
      %6576 = vmatpush2.msra.mxu0 0.0
      %6577 = vmatprep.subr.mxu0 0.0
      %6578 = vmatpush2.msra.mxu0 0.0
      %6579 = vmatprep.subr.mxu0 0.0
      %6580 = vmatpush2.msra.mxu0 0.0
      %6581 = vmatprep.subr.mxu0 0.0
      %6582 = vmatpush2.msra.mxu0 %v6434
      %6583 = vmatprep.subr.mxu0 0.0
      %6584 = vmatpush2.msra.mxu0 %v6433
      %6585 = vmatprep.subr.mxu0 0.0
      %6586 = vmatpush2.msra.mxu0 %v6432
      %6587 = vmatprep.subr.mxu0 0.0
      %6588 = vmatpush2.msra.mxu0 %v6431
      %6589 = vmatprep.subr.mxu0 0.0
      %6590 = vmatpush2.msra.mxu0 %v6430
      %6591 = vmatprep.subr.mxu0 0.0
      %6592 = vmatpush2.msra.mxu0 %v6429
      %6593 = vmatprep.mubr.f32.mxu0 %v6449
      %6594 = vmatmul.mubr.f32.gmra.mxu0 %v6375
      %v6595 = vpop.f32.mrf.mxu0
      %v6596 = vadd.f32 %v6521, %v6595
      %v6597 = vpop.f32.mrf.mxu0
      %6598 = vmatprep.mubr.f32.mxu0 %v6452
      %6599 = vmatmul.mubr.f32.gmra.mxu0 %v6379
      %v6600 = vpop.f32.mrf.mxu0
      %v6601 = vadd.f32 %v6526, %v6600
      %v6602 = vpop.f32.mrf.mxu0
      %6603 = vdwg.mxu0
      %v6604 = vmax.f32 %v6596, 0.0
      %v6605 = vmax.f32 %v6601, 0.0
      %v6606 = vld [vmem:[%s16] sm:$0xff]
      %v6607 = vld [vmem:[%s16 + $0x8] sm:$0xff]
      %6609 = vset.pattern.permute.xlu0 0
      %6610 = vperm.xlu0 %6609, %v6606
      %v6611 = vpop.permute.xlu0 %6610
      %6614 = vset.pattern.permute.xlu0 0
      %6615 = vperm.xlu0 %6614, %v6607
      %v6616 = vpop.permute.xlu0 %6615
      %v6618 = vmul.f32 %v6604, %v6611
      %v6619 = vmul.f32 %v6605, %v6616
      %v6620 = vadd.f32 %v6618, %v6619
      %v6621 = vrot.slane %v6620, 4
      %v6622 = vadd.f32 %v6620, %v6621
      %v6623 = vrot.slane %v6622, 2
      %v6624 = vadd.f32 %v6622, %v6623
      %v6625 = vrot.slane %v6624, 1
      %v6626 = vadd.f32 %v6624, %v6625
      %v6627 = vld [vmem:[#allocation4] sm:$0x1]
      %6629 = vset.pattern.permute.xlu0 0
      %6630 = vperm.xlu0 %6629, %v6627
      %v6631 = vpop.permute.xlu0 %6630
      %v6633 = vlaneseq
      %v6634 = vshrl.u32 %v6633, 7
      %v6635 = vsub.s32 0, %v6634
      %v6636 = vrot.slane %v6631, %v6635
      %v6637 = vadd.f32 %v6626, %v6636
      %6638 = vst [vmem:[%s573] sm:$0x1] %v6637
      %p6639 = scmp.lt.s32.totalorder %s31, 1
      %s6640 = scalar_select %p6639, %s31, 1
      %s6641 = scalar_lea.vmem %s18, %s6640
      // Predicated region
      $region93: #{encoder_forward.1} parent=91 // pred_check
        %p6642 = pneg %p432
      $region94: #{encoder_forward.1} parent=91 // pred_check_branch
        %6644 = sbr.rel (%p6642) target = $region96
      $region95: #{encoder_forward.1} parent=91 // pred_region
        _
      $region96: #{encoder_forward.1} parent=91 // pred_fallthru
        _
    $region92: #{encoder_forward.1} parent=5 // pred_fallthru
      _
    %p6645 = scmp.le.s32.totalorder 2, %s26
    // Predicated region
    $region97: #{encoder_forward.1} parent=5 // pred_check
      %p6646 = pneg %p6645
    $region98: #{encoder_forward.1} parent=5 // pred_check_branch
      %6648 = sbr.rel (%p6646) target = $region100
    $region99: #{encoder_forward.1} parent=5 // pred_region
      %s6649 = ssub.s32 %s26, 2
      // Predicated region
      $region101: #{encoder_forward.1} parent=99 // pred_check
        %p6650 = pneg %p438
      $region102: #{encoder_forward.1} parent=99 // pred_check_branch
        %6652 = sbr.rel (%p6650) target = $region104
      $region103: #{encoder_forward.1} parent=99 // pred_region
        %p6653 = scmp.lt.s32.totalorder %s32, 1
        %s6654 = scalar_select %p6653, %s32, 1
        %s6655 = scalar_lea.vmem %s18, %s6654
      $region104: #{encoder_forward.1} parent=99 // pred_fallthru
        _
    $region100: #{encoder_forward.1} parent=5 // pred_fallthru
      _
  $region6: #{encoder_forward.1} parent=0 // loop_footer
    %s30 = sadd.s32 1, %s26
  $region7: #{encoder_forward.1} parent=0 // loop_footer_branch
    %25 = sbr.rel target = $region3
  $region8: #{encoder_forward.1} parent=0 // loop_exit
    _

</llo_original>
